<compile_context>
chip_gen: v5e
topology: v5e:2x2
jax: 0.10.0
libtpu: 0.0.40
codegen_flags: <defaults>
</compile_context>

<pallas_src>
import math
import numpy as np

import jax
import jax.numpy as jnp
from jax.experimental import pallas as pl
from jax.experimental.pallas import tpu as pltpu


# ----------------------------- in-kernel helpers -----------------------------

def _sigmoid(x):
    return 1.0 / (1.0 + jnp.exp(-x))


def _softplus(x):
    # matches torch.nn.functional.softplus (beta=1, threshold=20).  The
    # log(1+exp) form underflows to 0 for x <~ -17 where the true value is
    # ~1e-8 -- negligible here, and it avoids relying on a log1p lowering.
    return jnp.where(x > 20.0, x, jnp.log(1.0 + jnp.exp(jnp.minimum(x, 20.0))))


def _erf(x):
    # Abramowitz & Stegun 7.1.26 polynomial (|err| < 1.5e-7); exp/elementwise
    # only so it lowers cleanly in Mosaic.
    a1, a2, a3, a4, a5 = (0.254829592, -0.284496736, 1.421413741,
                          -1.453152027, 1.061405429)
    p = 0.3275911
    sgn = jnp.where(x >= 0.0, 1.0, -1.0)
    ax = jnp.abs(x)
    t = 1.0 / (1.0 + p * ax)
    poly = ((((a5 * t + a4) * t + a3) * t + a2) * t + a1) * t
    return sgn * (1.0 - poly * jnp.exp(-ax * ax))


def _gelu_exact(x):
    # nn.GELU() default (approximate='none')
    return 0.5 * x * (1.0 + _erf(x * (1.0 / math.sqrt(2.0))))


# --------------------------------- kernel ------------------------------------

def hydra_block(x, p, *, state_dim, d_conv, dt_rank, lc=None, vmem_limit_mb=None):
    """Fused HydraBlock forward.  x: (B, L, E) float32."""
    B, L, E = x.shape
    N, K, R = state_dim, d_conv, dt_rank
    eps = 1e-5

    if lc is None:
        lc = min(L, 128)         # v5e/v7x default; pass lc=256 on v6e
    assert L % lc == 0, "sequence length must be divisible by the chunk size"
    assert (lc % 8 == 0) or (lc == L), "chunk size must be sublane-aligned"
    assert lc >= K - 1, "chunk must cover the conv left-context carry"
    C = L // lc
    # full unroll for short chunks, partial otherwise (LLO scheduler visibility)
    scan_unroll = True if lc <= 32 else 8
    if vmem_limit_mb is None:
        vmem_limit_mb = 96 if lc >= 256 else 40   # 40 MiB fits v7x's 64 MiB/TC

    # ------ host-side parameter preprocessing (pure functions of weights) -----
    bf16 = jnp.bfloat16
    wp = p["wp"]                                      # (E, R + 2N)
    # Fused input projection: [wz | wp_dt | wp_c] -> one MXU pass over norm1(x).
    # (B_proj slice of wp is dead in the reference module and dropped.)
    w_in = jnp.concatenate(
        [p["wz"], wp[:, :R], wp[:, R + N:R + 2 * N]], axis=1).astype(bf16)
    a_neg_t = (-jnp.exp(p["alog"])).T                 # (N, E);  A = -exp(A_log)
    a_recip_t = 1.0 / (a_neg_t + 1e-10)               # exact f32 reciprocal
    a_mask_t = (jnp.abs(a_neg_t) < 1e-5).astype(jnp.float32)

    weights = [
        p["g1"], p["be1"],                            # LayerNorm1
        w_in,                                         # fused z/dt/C projection
        p["wdt"], p["bdt"],                           # dt_proj (f32, VPU rank-1)
        p["wconv"],                                   # depthwise conv (K, E)
        a_neg_t, a_recip_t, a_mask_t,                 # discretization constants
        p["d"],                                       # D
        p["wout"].astype(bf16),                       # out_proj
        p["g2"], p["be2"],                            # LayerNorm2
        p["wm1"].astype(bf16), p["bm1"],              # MLP fc1
        p["wm2"].astype(bf16), p["bm2"],              # MLP fc2
    ]

    def kernel(x_ref,
               g1_ref, be1_ref, win_ref, wdt_ref, bdt_ref, wconv_ref,
               aneg_ref, arcp_ref, amsk_ref, d_ref, wout_ref,
               g2_ref, be2_ref, wm1_ref, bm1_ref, wm2_ref, bm2_ref,
               o_ref,
               xcat_scr, at_scr, bu_scr, h_scr, cc_scr):
        # NOTE: correctness of the carried scratch state (h_scr, cc_scr) relies
        # on the chunk axis (grid axis 1) being innermost, in-order and
        # "arbitrary" (sequential).  Do not reorder grid axes or mark it
        # parallel.
        c_id = pl.program_id(1)
        xin = x_ref[0]                                     # (Lc, E) f32

        def layernorm(v, g, b):
            mu = jnp.mean(v, axis=-1, keepdims=True)
            var = jnp.mean((v - mu) ** 2, axis=-1, keepdims=True)
            return (v - mu) * jax.lax.rsqrt(var + eps) * g + b

        xn = layernorm(xin, g1_ref[...], be1_ref[...])     # norm1 (f32)
        xn_b = xn.astype(jnp.bfloat16)

        # ---- fused projections: one MXU pass (bf16 in, f32 accumulate) ----
        proj = jnp.dot(xn_b, win_ref[...], preferred_element_type=jnp.float32)
        z = proj[:, :E]                                    # (Lc, E)
        dt_un = proj[:, E:E + R]                           # (Lc, R)
        c_proj = proj[:, E + R:E + R + N]                  # (Lc, N)

        # ---- dt_proj: R rank-1 VPU updates in f32 (depth-R MXU would waste it)
        dt_pre = dt_un[:, 0:1] * wdt_ref[0:1, :]
        for r in range(1, R):
            dt_pre = dt_pre + dt_un[:, r:r + 1] * wdt_ref[r:r + 1, :]
        dt = _softplus(dt_pre + bdt_ref[...])              # (Lc, E)

        # ---- depthwise causal conv: K shifted slices + VPU MACs ----
        @pl.when(c_id == 0)
        def _():
            cc_scr[...] = jnp.zeros_like(cc_scr)           # zero left context

        xcat_scr[pl.ds(0, K - 1), :] = cc_scr[...]         # previous-chunk tail
        xcat_scr[pl.ds(K - 1, lc), :] = xn
        cc_scr[...] = xn[lc - (K - 1):, :]                 # carry for next chunk

        # TODO(synk): shifted reads start at sublane offsets 1..K-1 (XLU
        # rotates); rework with pltpu.roll only if the XLU becomes binding.
        x_conv = xcat_scr[pl.ds(0, lc), :] * wconv_ref[pl.ds(0, 1), :]
        for k in range(1, K):
            x_conv = x_conv + xcat_scr[pl.ds(k, lc), :] * wconv_ref[pl.ds(k, 1), :]
        u = x_conv * _sigmoid(x_conv)                      # SiLU, (Lc, E)

        # ---- discretization, E-last layout (Lc, N, E), bf16 storage ----
        dt_b = dt[:, None, :]                              # (Lc, 1, E)
        a_t = jnp.exp(dt_b * aneg_ref[...][None, :, :])    # (Lc, N, E) f32
        b_t = jnp.where(amsk_ref[...][None, :, :] > 0.5,
                        dt_b,
                        (a_t - 1.0) * arcp_ref[...][None, :, :])
        at_scr[...] = a_t.astype(jnp.bfloat16)
        bu_scr[...] = (b_t * u[:, None, :]).astype(jnp.bfloat16)

        # h[0] = B_tilde[0]*u[0] at the very start of the sequence
        @pl.when(c_id == 0)
        def _():
            h_scr[...] = bu_scr[0].astype(jnp.float32)

        # ---- sequential scan (pure VPU): h[t+1] = A[t]*h[t] + B[t]*u[t].
        # bu_scr[t] is overwritten in place with h[t] (the readout state), so
        # it doubles as the h history: no per-step MXU dots, no extra VMEM.
        def scan_body(s, h_prev):
            bu_row = bu_scr[s].astype(jnp.float32)         # B_tilde[t]*u[t]
            at_row = at_scr[s].astype(jnp.float32)         # A_tilde[t]
            bu_scr[s] = h_prev.astype(jnp.bfloat16)        # stash h[t] for readout
            return at_row * h_prev + bu_row                # h[t+1]

        h_final = jax.lax.fori_loop(0, lc, scan_body, h_scr[...],
                                    unroll=scan_unroll)
        h_scr[...] = h_final                               # carry to next chunk

        # ---- vectorized y readout: y[t] = sum_n C[t,n] * h[t,n,:]  (VPU) ----
        y = c_proj[:, 0:1] * bu_scr[:, 0, :].astype(jnp.float32)
        for n in range(1, N):
            y = y + c_proj[:, n:n + 1] * bu_scr[:, n, :].astype(jnp.float32)

        y_ssm = y + u * d_ref[...]
        y_gated = y_ssm * (z * _sigmoid(z))
        ssm_out = jnp.dot(y_gated.astype(jnp.bfloat16), wout_ref[...],
                          preferred_element_type=jnp.float32)

        x1 = xin + ssm_out                                 # residual 1 (dropout1=id)

        # ---- MLP branch ----
        xn2 = layernorm(x1, g2_ref[...], be2_ref[...])     # norm2
        h1 = jnp.dot(xn2.astype(jnp.bfloat16), wm1_ref[...],
                     preferred_element_type=jnp.float32) + bm1_ref[...]
        h1 = _gelu_exact(h1)
        mlp = jnp.dot(h1.astype(jnp.bfloat16), wm2_ref[...],
                      preferred_element_type=jnp.float32) + bm2_ref[...]

        o_ref[0] = x1 + mlp                                # residual 2 (dropout2=id)

    def _call(single_buffer_weights):
        # Weight index maps are constant, so the blocks are never re-fetched;
        # Buffered(1) avoids allocating a second (dead) VMEM buffer per weight.
        spec_kwargs = ({"pipeline_mode": pl.Buffered(1)}
                       if single_buffer_weights else {})
        w_specs = [pl.BlockSpec(w.shape, lambda b, c: (0, 0), **spec_kwargs)
                   for w in weights]
        return pl.pallas_call(
            kernel,
            out_shape=jax.ShapeDtypeStruct((B, L, E), jnp.float32),
            grid=(B, C),
            in_specs=[pl.BlockSpec((1, lc, E), lambda b, c: (b, c, 0))] + w_specs,
            out_specs=pl.BlockSpec((1, lc, E), lambda b, c: (b, c, 0)),
            scratch_shapes=[
                pltpu.VMEM((lc + K - 1, E), jnp.float32),   # conv staging
                pltpu.VMEM((lc, N, E), jnp.bfloat16),       # A_tilde (chunk)
                pltpu.VMEM((lc, N, E), jnp.bfloat16),       # B_tilde*u -> h history
                pltpu.VMEM((N, E), jnp.float32),            # running SSM h carry
                pltpu.VMEM((K - 1, E), jnp.float32),        # conv left-context carry
            ],
            compiler_params=pltpu.CompilerParams(
                dimension_semantics=("parallel", "arbitrary"),
                vmem_limit_bytes=vmem_limit_mb * 1024 * 1024),
        )(x, *weights)

    try:
        return _call(True)
    except Exception:
        # This Pallas build's top-level pipeline rejected pipeline_mode=
        # pl.Buffered(1); fall back to default (double-buffered) weight specs.
        return _call(False)


# --------------------------- deterministic params ----------------------------

def init_params(key, E, N, K, R, mlp_mult=4):
    H = E * mlp_mult
    ks = jax.random.split(key, 10)

    def nrm(k, shape, scale):
        return jax.random.normal(k, shape, jnp.float32) * scale

    p = {}
    p["g1"] = jnp.ones((1, E), jnp.float32)      # LayerNorm1 weight
    p["be1"] = jnp.zeros((1, E), jnp.float32)    # LayerNorm1 bias
    p["g2"] = jnp.ones((1, E), jnp.float32)
    p["be2"] = jnp.zeros((1, E), jnp.float32)
    p["wz"] = nrm(ks[0], (E, E), E ** -0.5)                       # in_proj_z
    p["wp"] = nrm(ks[1], (E, R + 2 * N), E ** -0.5)               # in_proj_params
    dt_std = R ** -0.5 * 0.1
    p["wdt"] = jax.random.uniform(ks[2], (R, E), jnp.float32, -dt_std, dt_std)
    p["bdt"] = jnp.full((1, E), math.log(math.expm1(0.001)), jnp.float32)
    p["wconv"] = nrm(ks[3], (K, E), (1.0 / K) ** 0.5)             # depthwise conv (K, E)
    p["alog"] = jnp.tile(jnp.log(jnp.arange(1, N + 1, dtype=jnp.float32))[None, :],
                         (E, 1))                                  # A_log (E, N)
    p["d"] = jnp.ones((1, E), jnp.float32)                        # D
    p["wout"] = nrm(ks[4], (E, E), E ** -0.5)                     # out_proj
    p["wm1"] = nrm(ks[5], (E, H), E ** -0.5)                      # mlp[0]
    p["bm1"] = nrm(ks[6], (1, H), 0.02)
    p["wm2"] = nrm(ks[7], (H, E), H ** -0.5)                      # mlp[3]
    p["bm2"] = nrm(ks[8], (1, E), 0.02)
    return p


# ------------------------------ pure-JAX reference ---------------------------

def _mm(a, w):
    # mirrors the kernel's MXU precision: bf16 operands, f32 accumulation
    return jnp.dot(a.astype(jnp.bfloat16), w.astype(jnp.bfloat16),
                   preferred_element_type=jnp.float32)


def hydra_block_ref(x, p, *, state_dim, d_conv, dt_rank):
    N, K, R = state_dim, d_conv, dt_rank
    B, L, E = x.shape

    def ln(v, g, b):
        mu = v.mean(-1, keepdims=True)
        var = ((v - mu) ** 2).mean(-1, keepdims=True)
        return (v - mu) / jnp.sqrt(var + 1e-5) * g + b

    xn = ln(x, p["g1"][0], p["be1"][0])
    z = _mm(xn, p["wz"])
    prm = _mm(xn, p["wp"])
    dt_un = prm[..., :R]
    c_proj = prm[..., R + N:R + 2 * N]
    dt = jax.nn.softplus(jnp.dot(dt_un, p["wdt"]) + p["bdt"][0])   # f32 dt_proj
    xpad = jnp.pad(xn, ((0, 0), (K - 1, 0), (0, 0)))
    x_conv = sum(xpad[:, k:k + L, :] * p["wconv"][k][None, None, :]
                 for k in range(K))
    u = x_conv * jax.nn.sigmoid(x_conv)
    A = -jnp.exp(p["alog"])
    a_t = jnp.exp(dt[..., None] * A[None, None])
    b_t = jnp.where(jnp.abs(A)[None, None] < 1e-5, dt[..., None],
                    (a_t - 1.0) / (A[None, None] + 1e-10))
    bu = b_t * u[..., None]
    hs = [bu[:, 0]]
    for t in range(1, L):
        hs.append(a_t[:, t - 1] * hs[-1] + bu[:, t - 1])
    h = jnp.stack(hs, axis=1)
    y = jnp.einsum('bln,blen->ble', c_proj, h)
    y_ssm = y + u * p["d"][0]
    y_gated = y_ssm * (z * jax.nn.sigmoid(z))
    x1 = x + _mm(y_gated, p["wout"])
    xn2 = ln(x1, p["g2"][0], p["be2"][0])
    h1 = jax.nn.gelu(_mm(xn2, p["wm1"]) + p["bm1"][0], approximate=False)
    return x1 + _mm(h1, p["wm2"]) + p["bm2"][0]


# ----------------------------------- main -------------------------------------

if __name__ == "__main__":
    B, L, E = 2, 16, 32
    N, K = 16, 4
    R = math.ceil(E / 16)        # dt_rank='auto' -> 2

    key = jax.random.PRNGKey(0)
    kx, kp = jax.random.split(key)
    x = jax.random.normal(kx, (B, L, E), jnp.float32)
    params = init_params(kp, E, N, K, R)

    # lc=8 -> two sequence chunks: exercises the carried SSM state and the
    # carried conv left-context across the chunk boundary.
    out = hydra_block(x, params, state_dim=N, d_conv=K, dt_rank=R, lc=8)
    out = jax.block_until_ready(out)

    ref = jax.block_until_ready(
        hydra_block_ref(x, params, state_dim=N, d_conv=K, dt_rank=R))

    # 5e-3: kernel and reference share the bf16-matmul error; the kernel
    # additionally stores A_tilde / B_tilde*u / h-history in bf16.
    np.testing.assert_allclose(np.asarray(out), np.asarray(ref),
                               rtol=5e-3, atol=5e-3)
    print("KERNEL_OK")
</pallas_src>

<mosaic_0001>
module attributes {stable_mosaic.version = 11 : i64} {
  func.func @kernel(%arg0: i32, %arg1: i32, %arg2: memref<1x8x32xf32, #tpu.memory_space<vmem>>, %arg3: memref<1x32xf32, #tpu.memory_space<vmem>>, %arg4: memref<1x32xf32, #tpu.memory_space<vmem>>, %arg5: memref<32x50xbf16, #tpu.memory_space<vmem>>, %arg6: memref<2x32xf32, #tpu.memory_space<vmem>>, %arg7: memref<1x32xf32, #tpu.memory_space<vmem>>, %arg8: memref<4x32xf32, #tpu.memory_space<vmem>>, %arg9: memref<16x32xf32, #tpu.memory_space<vmem>>, %arg10: memref<16x32xf32, #tpu.memory_space<vmem>>, %arg11: memref<16x32xf32, #tpu.memory_space<vmem>>, %arg12: memref<1x32xf32, #tpu.memory_space<vmem>>, %arg13: memref<32x32xbf16, #tpu.memory_space<vmem>>, %arg14: memref<1x32xf32, #tpu.memory_space<vmem>>, %arg15: memref<1x32xf32, #tpu.memory_space<vmem>>, %arg16: memref<32x128xbf16, #tpu.memory_space<vmem>>, %arg17: memref<1x128xf32, #tpu.memory_space<vmem>>, %arg18: memref<128x32xbf16, #tpu.memory_space<vmem>>, %arg19: memref<1x32xf32, #tpu.memory_space<vmem>>, %arg20: memref<1x8x32xf32, #tpu.memory_space<vmem>>, %arg21: memref<11x32xf32, #tpu.memory_space<vmem>>, %arg22: memref<8x16x32xbf16, #tpu.memory_space<vmem>>, %arg23: memref<8x16x32xbf16, #tpu.memory_space<vmem>>, %arg24: memref<16x32xf32, #tpu.memory_space<vmem>>, %arg25: memref<3x32xf32, #tpu.memory_space<vmem>>) attributes {dimension_semantics = [#tpu.dimension_semantics<parallel>, #tpu.dimension_semantics<arbitrary>], iteration_bounds = array<i64: 2, 2>, scalar_prefetch = 0 : i64, scratch_operands = 5 : i64, tpu.core_type = #tpu.core_type<tc>, window_params = [{transform_indices = @transform_0, window_bounds = array<i64: 1, 8, 32>}, {pipeline_mode = #tpu.pipeline_mode<synchronous>, transform_indices = @transform_1, window_bounds = array<i64: 1, 32>}, {pipeline_mode = #tpu.pipeline_mode<synchronous>, transform_indices = @transform_2, window_bounds = array<i64: 1, 32>}, {pipeline_mode = #tpu.pipeline_mode<synchronous>, transform_indices = @transform_3, window_bounds = array<i64: 32, 50>}, {pipeline_mode = #tpu.pipeline_mode<synchronous>, transform_indices = @transform_4, window_bounds = array<i64: 2, 32>}, {pipeline_mode = #tpu.pipeline_mode<synchronous>, transform_indices = @transform_5, window_bounds = array<i64: 1, 32>}, {pipeline_mode = #tpu.pipeline_mode<synchronous>, transform_indices = @transform_6, window_bounds = array<i64: 4, 32>}, {pipeline_mode = #tpu.pipeline_mode<synchronous>, transform_indices = @transform_7, window_bounds = array<i64: 16, 32>}, {pipeline_mode = #tpu.pipeline_mode<synchronous>, transform_indices = @transform_8, window_bounds = array<i64: 16, 32>}, {pipeline_mode = #tpu.pipeline_mode<synchronous>, transform_indices = @transform_9, window_bounds = array<i64: 16, 32>}, {pipeline_mode = #tpu.pipeline_mode<synchronous>, transform_indices = @transform_10, window_bounds = array<i64: 1, 32>}, {pipeline_mode = #tpu.pipeline_mode<synchronous>, transform_indices = @transform_11, window_bounds = array<i64: 32, 32>}, {pipeline_mode = #tpu.pipeline_mode<synchronous>, transform_indices = @transform_12, window_bounds = array<i64: 1, 32>}, {pipeline_mode = #tpu.pipeline_mode<synchronous>, transform_indices = @transform_13, window_bounds = array<i64: 1, 32>}, {pipeline_mode = #tpu.pipeline_mode<synchronous>, transform_indices = @transform_14, window_bounds = array<i64: 32, 128>}, {pipeline_mode = #tpu.pipeline_mode<synchronous>, transform_indices = @transform_15, window_bounds = array<i64: 1, 128>}, {pipeline_mode = #tpu.pipeline_mode<synchronous>, transform_indices = @transform_16, window_bounds = array<i64: 128, 32>}, {pipeline_mode = #tpu.pipeline_mode<synchronous>, transform_indices = @transform_17, window_bounds = array<i64: 1, 32>}, {transform_indices = @transform_18, window_bounds = array<i64: 1, 8, 32>}]} {
    %c0 = arith.constant 0 : index
    %c0_0 = arith.constant 0 : index
    %c0_1 = arith.constant 0 : index
    %0 = vector.load %arg2[%c0, %c0_0, %c0_1] : memref<1x8x32xf32, #tpu.memory_space<vmem>>, vector<1x8x32xf32>
    %1 = vector.shape_cast %0 : vector<1x8x32xf32> to vector<8x32xf32>
    %c0_2 = arith.constant 0 : index
    %c0_3 = arith.constant 0 : index
    %2 = vector.load %arg3[%c0_2, %c0_3] : memref<1x32xf32, #tpu.memory_space<vmem>>, vector<1x32xf32>
    %c0_4 = arith.constant 0 : index
    %c0_5 = arith.constant 0 : index
    %3 = vector.load %arg4[%c0_4, %c0_5] : memref<1x32xf32, #tpu.memory_space<vmem>>, vector<1x32xf32>
    %cst = arith.constant dense<0.000000e+00> : vector<8xf32>
    %4 = vector.multi_reduction <add>, %1, %cst [1] : vector<8x32xf32> to vector<8xf32>
    %5 = vector.shape_cast %4 : vector<8xf32> to vector<8x1xf32>
    %cst_6 = arith.constant 3.200000e+01 : f32
    %6 = vector.broadcast %cst_6 : f32 to vector<8x1xf32>
    %7 = arith.divf %5, %6 : vector<8x1xf32>
    %8 = vector.broadcast %7 : vector<8x1xf32> to vector<8x32xf32>
    %9 = arith.subf %1, %8 : vector<8x32xf32>
    %10 = arith.mulf %9, %9 : vector<8x32xf32>
    %cst_7 = arith.constant dense<0.000000e+00> : vector<8xf32>
    %11 = vector.multi_reduction <add>, %10, %cst_7 [1] : vector<8x32xf32> to vector<8xf32>
    %12 = vector.shape_cast %11 : vector<8xf32> to vector<8x1xf32>
    %cst_8 = arith.constant 3.200000e+01 : f32
    %13 = vector.broadcast %cst_8 : f32 to vector<8x1xf32>
    %14 = arith.divf %12, %13 : vector<8x1xf32>
    %15 = vector.broadcast %7 : vector<8x1xf32> to vector<8x32xf32>
    %16 = arith.subf %1, %15 : vector<8x32xf32>
    %cst_9 = arith.constant 9.99999974E-6 : f32
    %17 = vector.broadcast %cst_9 : f32 to vector<8x1xf32>
    %18 = arith.addf %14, %17 : vector<8x1xf32>
    %19 = math.rsqrt %18 : vector<8x1xf32>
    %20 = vector.broadcast %19 : vector<8x1xf32> to vector<8x32xf32>
    %21 = arith.mulf %16, %20 : vector<8x32xf32>
    %22 = vector.broadcast %2 : vector<1x32xf32> to vector<8x32xf32>
    %23 = arith.mulf %21, %22 : vector<8x32xf32>
    %24 = vector.broadcast %3 : vector<1x32xf32> to vector<8x32xf32>
    %25 = arith.addf %23, %24 : vector<8x32xf32>
    %26 = arith.truncf %25 : vector<8x32xf32> to vector<8x32xbf16>
    %c0_10 = arith.constant 0 : index
    %c0_11 = arith.constant 0 : index
    %27 = vector.load %arg5[%c0_10, %c0_11] : memref<32x50xbf16, #tpu.memory_space<vmem>>, vector<32x50xbf16>
    %cst_12 = arith.constant dense<0.000000e+00> : vector<8x50xf32>
    %28 = tpu.matmul %26, %27, %cst_12 {dimension_numbers = #tpu.dot_dimension_numbers<[1], [0], [0], [1], [0, 0, 1, 1], [], []>} : vector<8x32xbf16>, vector<32x50xbf16>, vector<8x50xf32> -> vector<8x50xf32>
    %29 = vector.extract_strided_slice %28 {offsets = [0, 0], sizes = [8, 32], strides = [1, 1]} : vector<8x50xf32> to vector<8x32xf32>
    %30 = vector.extract_strided_slice %28 {offsets = [0, 32], sizes = [8, 2], strides = [1, 1]} : vector<8x50xf32> to vector<8x2xf32>
    %31 = vector.extract_strided_slice %28 {offsets = [0, 34], sizes = [8, 16], strides = [1, 1]} : vector<8x50xf32> to vector<8x16xf32>
    %32 = vector.extract_strided_slice %30 {offsets = [0, 0], sizes = [8, 1], strides = [1, 1]} : vector<8x2xf32> to vector<8x1xf32>
    %c0_13 = arith.constant 0 : index
    %c0_14 = arith.constant 0 : index
    %33 = vector.load %arg6[%c0_13, %c0_14] : memref<2x32xf32, #tpu.memory_space<vmem>>, vector<1x32xf32>
    %34 = vector.broadcast %32 : vector<8x1xf32> to vector<8x32xf32>
    %35 = vector.broadcast %33 : vector<1x32xf32> to vector<8x32xf32>
    %36 = arith.mulf %34, %35 : vector<8x32xf32>
    %37 = vector.extract_strided_slice %30 {offsets = [0, 1], sizes = [8, 1], strides = [1, 1]} : vector<8x2xf32> to vector<8x1xf32>
    %c1 = arith.constant 1 : index
    %c0_15 = arith.constant 0 : index
    %38 = vector.load %arg6[%c1, %c0_15] : memref<2x32xf32, #tpu.memory_space<vmem>>, vector<1x32xf32>
    %39 = vector.broadcast %37 : vector<8x1xf32> to vector<8x32xf32>
    %40 = vector.broadcast %38 : vector<1x32xf32> to vector<8x32xf32>
    %41 = arith.mulf %39, %40 : vector<8x32xf32>
    %42 = arith.addf %36, %41 : vector<8x32xf32>
    %c0_16 = arith.constant 0 : index
    %c0_17 = arith.constant 0 : index
    %43 = vector.load %arg7[%c0_16, %c0_17] : memref<1x32xf32, #tpu.memory_space<vmem>>, vector<1x32xf32>
    %44 = vector.broadcast %43 : vector<1x32xf32> to vector<8x32xf32>
    %45 = arith.addf %42, %44 : vector<8x32xf32>
    %cst_18 = arith.constant 2.000000e+01 : f32
    %46 = vector.broadcast %cst_18 : f32 to vector<8x32xf32>
    %47 = arith.cmpf ogt, %45, %46 : vector<8x32xf32>
    %cst_19 = arith.constant 2.000000e+01 : f32
    %48 = vector.broadcast %cst_19 : f32 to vector<8x32xf32>
    %49 = arith.minimumf %45, %48 : vector<8x32xf32>
    %50 = math.exp %49 : vector<8x32xf32>
    %cst_20 = arith.constant 1.000000e+00 : f32
    %51 = vector.broadcast %cst_20 : f32 to vector<8x32xf32>
    %52 = arith.addf %51, %50 : vector<8x32xf32>
    %53 = math.log %52 : vector<8x32xf32>
    %54 = arith.select %47, %45, %53 : vector<8x32xi1>, vector<8x32xf32>
    %c0_i32 = arith.constant 0 : i32
    %55 = arith.cmpi eq, %arg1, %c0_i32 : i32
    %56 = arith.extui %55 : i1 to i32
    %c0_i32_21 = arith.constant 0 : i32
    %57 = arith.cmpi ne, %56, %c0_i32_21 : i32
    scf.if %57 {
      %cst_198 = arith.constant 0.000000e+00 : f32
      %453 = vector.broadcast %cst_198 : f32 to vector<3x32xf32>
      %c0_199 = arith.constant 0 : index
      %c0_200 = arith.constant 0 : index
      %454 = vector.load %arg25[%c0_199, %c0_200] : memref<3x32xf32, #tpu.memory_space<vmem>>, vector<3x32xf32>
      tpu.vector_store %arg25[%c0_199, %c0_200], %453 {strides = array<i32>} : memref<3x32xf32, #tpu.memory_space<vmem>>, vector<3x32xf32>,
    } else {
    }
    %c0_22 = arith.constant 0 : index
    %c0_23 = arith.constant 0 : index
    %58 = vector.load %arg25[%c0_22, %c0_23] : memref<3x32xf32, #tpu.memory_space<vmem>>, vector<3x32xf32>
    %c0_24 = arith.constant 0 : index
    %c0_25 = arith.constant 0 : index
    %59 = vector.load %arg21[%c0_24, %c0_25] : memref<11x32xf32, #tpu.memory_space<vmem>>, vector<3x32xf32>
    tpu.vector_store %arg21[%c0_24, %c0_25], %58 {strides = array<i32>} : memref<11x32xf32, #tpu.memory_space<vmem>>, vector<3x32xf32>,
    %c3 = arith.constant 3 : index
    %c0_26 = arith.constant 0 : index
    %60 = vector.load %arg21[%c3, %c0_26] : memref<11x32xf32, #tpu.memory_space<vmem>>, vector<8x32xf32>
    tpu.vector_store %arg21[%c3, %c0_26], %25 {strides = array<i32>} : memref<11x32xf32, #tpu.memory_space<vmem>>, vector<8x32xf32>,
    %61 = vector.extract_strided_slice %25 {offsets = [5, 0], sizes = [3, 32], strides = [1, 1]} : vector<8x32xf32> to vector<3x32xf32>
    %c0_27 = arith.constant 0 : index
    %c0_28 = arith.constant 0 : index
    %62 = vector.load %arg25[%c0_27, %c0_28] : memref<3x32xf32, #tpu.memory_space<vmem>>, vector<3x32xf32>
    tpu.vector_store %arg25[%c0_27, %c0_28], %61 {strides = array<i32>} : memref<3x32xf32, #tpu.memory_space<vmem>>, vector<3x32xf32>,
    %c0_29 = arith.constant 0 : index
    %c0_30 = arith.constant 0 : index
    %63 = vector.load %arg21[%c0_29, %c0_30] : memref<11x32xf32, #tpu.memory_space<vmem>>, vector<8x32xf32>
    %c0_31 = arith.constant 0 : index
    %c0_32 = arith.constant 0 : index
    %64 = vector.load %arg8[%c0_31, %c0_32] : memref<4x32xf32, #tpu.memory_space<vmem>>, vector<1x32xf32>
    %65 = vector.broadcast %64 : vector<1x32xf32> to vector<8x32xf32>
    %66 = arith.mulf %63, %65 : vector<8x32xf32>
    %c1_33 = arith.constant 1 : index
    %c0_34 = arith.constant 0 : index
    %67 = vector.load %arg21[%c1_33, %c0_34] : memref<11x32xf32, #tpu.memory_space<vmem>>, vector<8x32xf32>
    %c1_35 = arith.constant 1 : index
    %c0_36 = arith.constant 0 : index
    %68 = vector.load %arg8[%c1_35, %c0_36] : memref<4x32xf32, #tpu.memory_space<vmem>>, vector<1x32xf32>
    %69 = vector.broadcast %68 : vector<1x32xf32> to vector<8x32xf32>
    %70 = arith.mulf %67, %69 : vector<8x32xf32>
    %71 = arith.addf %66, %70 : vector<8x32xf32>
    %c2 = arith.constant 2 : index
    %c0_37 = arith.constant 0 : index
    %72 = vector.load %arg21[%c2, %c0_37] : memref<11x32xf32, #tpu.memory_space<vmem>>, vector<8x32xf32>
    %c2_38 = arith.constant 2 : index
    %c0_39 = arith.constant 0 : index
    %73 = vector.load %arg8[%c2_38, %c0_39] : memref<4x32xf32, #tpu.memory_space<vmem>>, vector<1x32xf32>
    %74 = vector.broadcast %73 : vector<1x32xf32> to vector<8x32xf32>
    %75 = arith.mulf %72, %74 : vector<8x32xf32>
    %76 = arith.addf %71, %75 : vector<8x32xf32>
    %c3_40 = arith.constant 3 : index
    %c0_41 = arith.constant 0 : index
    %77 = vector.load %arg21[%c3_40, %c0_41] : memref<11x32xf32, #tpu.memory_space<vmem>>, vector<8x32xf32>
    %c3_42 = arith.constant 3 : index
    %c0_43 = arith.constant 0 : index
    %78 = vector.load %arg8[%c3_42, %c0_43] : memref<4x32xf32, #tpu.memory_space<vmem>>, vector<1x32xf32>
    %79 = vector.broadcast %78 : vector<1x32xf32> to vector<8x32xf32>
    %80 = arith.mulf %77, %79 : vector<8x32xf32>
    %81 = arith.addf %76, %80 : vector<8x32xf32>
    %cst_44 = arith.constant 0.000000e+00 : f32
    %82 = vector.broadcast %cst_44 : f32 to vector<8x32xf32>
    %83 = arith.subf %82, %81 : vector<8x32xf32>
    %84 = math.exp %83 : vector<8x32xf32>
    %cst_45 = arith.constant 1.000000e+00 : f32
    %85 = vector.broadcast %cst_45 : f32 to vector<8x32xf32>
    %86 = arith.addf %85, %84 : vector<8x32xf32>
    %cst_46 = arith.constant 1.000000e+00 : f32
    %87 = vector.broadcast %cst_46 : f32 to vector<8x32xf32>
    %88 = arith.divf %87, %86 : vector<8x32xf32>
    %89 = arith.mulf %81, %88 : vector<8x32xf32>
    %90 = vector.shape_cast %54 : vector<8x32xf32> to vector<8x1x32xf32>
    %c0_47 = arith.constant 0 : index
    %c0_48 = arith.constant 0 : index
    %91 = vector.load %arg9[%c0_47, %c0_48] : memref<16x32xf32, #tpu.memory_space<vmem>>, vector<16x32xf32>
    %92 = vector.shape_cast %91 : vector<16x32xf32> to vector<1x16x32xf32>
    %93 = vector.broadcast %90 : vector<8x1x32xf32> to vector<8x16x32xf32>
    %94 = vector.broadcast %92 : vector<1x16x32xf32> to vector<8x16x32xf32>
    %95 = arith.mulf %93, %94 : vector<8x16x32xf32>
    %96 = math.exp %95 : vector<8x16x32xf32>
    %c0_49 = arith.constant 0 : index
    %c0_50 = arith.constant 0 : index
    %97 = vector.load %arg11[%c0_49, %c0_50] : memref<16x32xf32, #tpu.memory_space<vmem>>, vector<16x32xf32>
    %98 = vector.shape_cast %97 : vector<16x32xf32> to vector<1x16x32xf32>
    %cst_51 = arith.constant 5.000000e-01 : f32
    %99 = vector.broadcast %cst_51 : f32 to vector<1x16x32xf32>
    %100 = arith.cmpf ogt, %98, %99 : vector<1x16x32xf32>
    %cst_52 = arith.constant 1.000000e+00 : f32
    %101 = vector.broadcast %cst_52 : f32 to vector<8x16x32xf32>
    %102 = arith.subf %96, %101 : vector<8x16x32xf32>
    %c0_53 = arith.constant 0 : index
    %c0_54 = arith.constant 0 : index
    %103 = vector.load %arg10[%c0_53, %c0_54] : memref<16x32xf32, #tpu.memory_space<vmem>>, vector<16x32xf32>
    %104 = vector.shape_cast %103 : vector<16x32xf32> to vector<1x16x32xf32>
    %105 = vector.broadcast %104 : vector<1x16x32xf32> to vector<8x16x32xf32>
    %106 = arith.mulf %102, %105 : vector<8x16x32xf32>
    %107 = vector.shape_cast %100 : vector<1x16x32xi1> to vector<1x16x32xi1>
    %108 = vector.broadcast %107 : vector<1x16x32xi1> to vector<8x16x32xi1>
    %109 = vector.shape_cast %90 : vector<8x1x32xf32> to vector<8x1x32xf32>
    %110 = vector.broadcast %109 : vector<8x1x32xf32> to vector<8x16x32xf32>
    %111 = arith.select %108, %110, %106 : vector<8x16x32xi1>, vector<8x16x32xf32>
    %112 = arith.truncf %96 : vector<8x16x32xf32> to vector<8x16x32xbf16>
    %c0_55 = arith.constant 0 : index
    %c0_56 = arith.constant 0 : index
    %c0_57 = arith.constant 0 : index
    %113 = vector.load %arg22[%c0_55, %c0_56, %c0_57] : memref<8x16x32xbf16, #tpu.memory_space<vmem>>, vector<8x16x32xbf16>
    tpu.vector_store %arg22[%c0_55, %c0_56, %c0_57], %112 {strides = array<i32>} : memref<8x16x32xbf16, #tpu.memory_space<vmem>>, vector<8x16x32xbf16>,
    %114 = vector.shape_cast %89 : vector<8x32xf32> to vector<8x1x32xf32>
    %115 = vector.broadcast %114 : vector<8x1x32xf32> to vector<8x16x32xf32>
    %116 = arith.mulf %111, %115 : vector<8x16x32xf32>
    %117 = arith.truncf %116 : vector<8x16x32xf32> to vector<8x16x32xbf16>
    %c0_58 = arith.constant 0 : index
    %c0_59 = arith.constant 0 : index
    %c0_60 = arith.constant 0 : index
    %118 = vector.load %arg23[%c0_58, %c0_59, %c0_60] : memref<8x16x32xbf16, #tpu.memory_space<vmem>>, vector<8x16x32xbf16>
    tpu.vector_store %arg23[%c0_58, %c0_59, %c0_60], %117 {strides = array<i32>} : memref<8x16x32xbf16, #tpu.memory_space<vmem>>, vector<8x16x32xbf16>,
    %c0_i32_61 = arith.constant 0 : i32
    %119 = arith.cmpi eq, %arg1, %c0_i32_61 : i32
    %120 = arith.extui %119 : i1 to i32
    %c0_i32_62 = arith.constant 0 : i32
    %121 = arith.cmpi ne, %120, %c0_i32_62 : i32
    scf.if %121 {
      %c0_198 = arith.constant 0 : index
      %c0_199 = arith.constant 0 : index
      %c0_200 = arith.constant 0 : index
      %453 = vector.load %arg23[%c0_198, %c0_199, %c0_200] : memref<8x16x32xbf16, #tpu.memory_space<vmem>>, vector<1x16x32xbf16>
      %454 = vector.shape_cast %453 : vector<1x16x32xbf16> to vector<16x32xbf16>
      %455 = arith.extf %454 : vector<16x32xbf16> to vector<16x32xf32>
      %c0_201 = arith.constant 0 : index
      %c0_202 = arith.constant 0 : index
      %456 = vector.load %arg24[%c0_201, %c0_202] : memref<16x32xf32, #tpu.memory_space<vmem>>, vector<16x32xf32>
      tpu.vector_store %arg24[%c0_201, %c0_202], %455 {strides = array<i32>} : memref<16x32xf32, #tpu.memory_space<vmem>>, vector<16x32xf32>,
    } else {
    }
    %c0_63 = arith.constant 0 : index
    %c0_64 = arith.constant 0 : index
    %122 = vector.load %arg24[%c0_63, %c0_64] : memref<16x32xf32, #tpu.memory_space<vmem>>, vector<16x32xf32>
    %c0_i32_65 = arith.constant 0 : i32
    %123 = arith.index_cast %c0_i32_65 : i32 to index
    %c0_66 = arith.constant 0 : index
    %c0_67 = arith.constant 0 : index
    %124 = vector.load %arg23[%123, %c0_66, %c0_67] : memref<8x16x32xbf16, #tpu.memory_space<vmem>>, vector<1x16x32xbf16>
    %125 = vector.shape_cast %124 : vector<1x16x32xbf16> to vector<16x32xbf16>
    %126 = arith.extf %125 : vector<16x32xbf16> to vector<16x32xf32>
    %127 = arith.index_cast %c0_i32_65 : i32 to index
    %c0_68 = arith.constant 0 : index
    %c0_69 = arith.constant 0 : index
    %128 = vector.load %arg22[%127, %c0_68, %c0_69] : memref<8x16x32xbf16, #tpu.memory_space<vmem>>, vector<1x16x32xbf16>
    %129 = vector.shape_cast %128 : vector<1x16x32xbf16> to vector<16x32xbf16>
    %130 = arith.extf %129 : vector<16x32xbf16> to vector<16x32xf32>
    %131 = arith.truncf %122 : vector<16x32xf32> to vector<16x32xbf16>
    %132 = arith.index_cast %c0_i32_65 : i32 to index
    %c0_70 = arith.constant 0 : index
    %c0_71 = arith.constant 0 : index
    %133 = vector.load %arg23[%132, %c0_70, %c0_71] : memref<8x16x32xbf16, #tpu.memory_space<vmem>>, vector<1x16x32xbf16>
    %134 = vector.shape_cast %133 : vector<1x16x32xbf16> to vector<16x32xbf16>
    %135 = vector.shape_cast %131 : vector<16x32xbf16> to vector<1x16x32xbf16>
    tpu.vector_store %arg23[%132, %c0_70, %c0_71], %135 {strides = array<i32>} : memref<8x16x32xbf16, #tpu.memory_space<vmem>>, vector<1x16x32xbf16>,
    %136 = arith.mulf %130, %122 : vector<16x32xf32>
    %137 = arith.addf %136, %126 : vector<16x32xf32>
    %c1_i32 = arith.constant 1 : i32
    %138 = arith.index_cast %c1_i32 : i32 to index
    %c0_72 = arith.constant 0 : index
    %c0_73 = arith.constant 0 : index
    %139 = vector.load %arg23[%138, %c0_72, %c0_73] : memref<8x16x32xbf16, #tpu.memory_space<vmem>>, vector<1x16x32xbf16>
    %140 = vector.shape_cast %139 : vector<1x16x32xbf16> to vector<16x32xbf16>
    %141 = arith.extf %140 : vector<16x32xbf16> to vector<16x32xf32>
    %142 = arith.index_cast %c1_i32 : i32 to index
    %c0_74 = arith.constant 0 : index
    %c0_75 = arith.constant 0 : index
    %143 = vector.load %arg22[%142, %c0_74, %c0_75] : memref<8x16x32xbf16, #tpu.memory_space<vmem>>, vector<1x16x32xbf16>
    %144 = vector.shape_cast %143 : vector<1x16x32xbf16> to vector<16x32xbf16>
    %145 = arith.extf %144 : vector<16x32xbf16> to vector<16x32xf32>
    %146 = arith.truncf %137 : vector<16x32xf32> to vector<16x32xbf16>
    %147 = arith.index_cast %c1_i32 : i32 to index
    %c0_76 = arith.constant 0 : index
    %c0_77 = arith.constant 0 : index
    %148 = vector.load %arg23[%147, %c0_76, %c0_77] : memref<8x16x32xbf16, #tpu.memory_space<vmem>>, vector<1x16x32xbf16>
    %149 = vector.shape_cast %148 : vector<1x16x32xbf16> to vector<16x32xbf16>
    %150 = vector.shape_cast %146 : vector<16x32xbf16> to vector<1x16x32xbf16>
    tpu.vector_store %arg23[%147, %c0_76, %c0_77], %150 {strides = array<i32>} : memref<8x16x32xbf16, #tpu.memory_space<vmem>>, vector<1x16x32xbf16>,
    %151 = arith.mulf %145, %137 : vector<16x32xf32>
    %152 = arith.addf %151, %141 : vector<16x32xf32>
    %c2_i32 = arith.constant 2 : i32
    %153 = arith.index_cast %c2_i32 : i32 to index
    %c0_78 = arith.constant 0 : index
    %c0_79 = arith.constant 0 : index
    %154 = vector.load %arg23[%153, %c0_78, %c0_79] : memref<8x16x32xbf16, #tpu.memory_space<vmem>>, vector<1x16x32xbf16>
    %155 = vector.shape_cast %154 : vector<1x16x32xbf16> to vector<16x32xbf16>
    %156 = arith.extf %155 : vector<16x32xbf16> to vector<16x32xf32>
    %157 = arith.index_cast %c2_i32 : i32 to index
    %c0_80 = arith.constant 0 : index
    %c0_81 = arith.constant 0 : index
    %158 = vector.load %arg22[%157, %c0_80, %c0_81] : memref<8x16x32xbf16, #tpu.memory_space<vmem>>, vector<1x16x32xbf16>
    %159 = vector.shape_cast %158 : vector<1x16x32xbf16> to vector<16x32xbf16>
    %160 = arith.extf %159 : vector<16x32xbf16> to vector<16x32xf32>
    %161 = arith.truncf %152 : vector<16x32xf32> to vector<16x32xbf16>
    %162 = arith.index_cast %c2_i32 : i32 to index
    %c0_82 = arith.constant 0 : index
    %c0_83 = arith.constant 0 : index
    %163 = vector.load %arg23[%162, %c0_82, %c0_83] : memref<8x16x32xbf16, #tpu.memory_space<vmem>>, vector<1x16x32xbf16>
    %164 = vector.shape_cast %163 : vector<1x16x32xbf16> to vector<16x32xbf16>
    %165 = vector.shape_cast %161 : vector<16x32xbf16> to vector<1x16x32xbf16>
    tpu.vector_store %arg23[%162, %c0_82, %c0_83], %165 {strides = array<i32>} : memref<8x16x32xbf16, #tpu.memory_space<vmem>>, vector<1x16x32xbf16>,
    %166 = arith.mulf %160, %152 : vector<16x32xf32>
    %167 = arith.addf %166, %156 : vector<16x32xf32>
    %c3_i32 = arith.constant 3 : i32
    %168 = arith.index_cast %c3_i32 : i32 to index
    %c0_84 = arith.constant 0 : index
    %c0_85 = arith.constant 0 : index
    %169 = vector.load %arg23[%168, %c0_84, %c0_85] : memref<8x16x32xbf16, #tpu.memory_space<vmem>>, vector<1x16x32xbf16>
    %170 = vector.shape_cast %169 : vector<1x16x32xbf16> to vector<16x32xbf16>
    %171 = arith.extf %170 : vector<16x32xbf16> to vector<16x32xf32>
    %172 = arith.index_cast %c3_i32 : i32 to index
    %c0_86 = arith.constant 0 : index
    %c0_87 = arith.constant 0 : index
    %173 = vector.load %arg22[%172, %c0_86, %c0_87] : memref<8x16x32xbf16, #tpu.memory_space<vmem>>, vector<1x16x32xbf16>
    %174 = vector.shape_cast %173 : vector<1x16x32xbf16> to vector<16x32xbf16>
    %175 = arith.extf %174 : vector<16x32xbf16> to vector<16x32xf32>
    %176 = arith.truncf %167 : vector<16x32xf32> to vector<16x32xbf16>
    %177 = arith.index_cast %c3_i32 : i32 to index
    %c0_88 = arith.constant 0 : index
    %c0_89 = arith.constant 0 : index
    %178 = vector.load %arg23[%177, %c0_88, %c0_89] : memref<8x16x32xbf16, #tpu.memory_space<vmem>>, vector<1x16x32xbf16>
    %179 = vector.shape_cast %178 : vector<1x16x32xbf16> to vector<16x32xbf16>
    %180 = vector.shape_cast %176 : vector<16x32xbf16> to vector<1x16x32xbf16>
    tpu.vector_store %arg23[%177, %c0_88, %c0_89], %180 {strides = array<i32>} : memref<8x16x32xbf16, #tpu.memory_space<vmem>>, vector<1x16x32xbf16>,
    %181 = arith.mulf %175, %167 : vector<16x32xf32>
    %182 = arith.addf %181, %171 : vector<16x32xf32>
    %c4_i32 = arith.constant 4 : i32
    %183 = arith.index_cast %c4_i32 : i32 to index
    %c0_90 = arith.constant 0 : index
    %c0_91 = arith.constant 0 : index
    %184 = vector.load %arg23[%183, %c0_90, %c0_91] : memref<8x16x32xbf16, #tpu.memory_space<vmem>>, vector<1x16x32xbf16>
    %185 = vector.shape_cast %184 : vector<1x16x32xbf16> to vector<16x32xbf16>
    %186 = arith.extf %185 : vector<16x32xbf16> to vector<16x32xf32>
    %187 = arith.index_cast %c4_i32 : i32 to index
    %c0_92 = arith.constant 0 : index
    %c0_93 = arith.constant 0 : index
    %188 = vector.load %arg22[%187, %c0_92, %c0_93] : memref<8x16x32xbf16, #tpu.memory_space<vmem>>, vector<1x16x32xbf16>
    %189 = vector.shape_cast %188 : vector<1x16x32xbf16> to vector<16x32xbf16>
    %190 = arith.extf %189 : vector<16x32xbf16> to vector<16x32xf32>
    %191 = arith.truncf %182 : vector<16x32xf32> to vector<16x32xbf16>
    %192 = arith.index_cast %c4_i32 : i32 to index
    %c0_94 = arith.constant 0 : index
    %c0_95 = arith.constant 0 : index
    %193 = vector.load %arg23[%192, %c0_94, %c0_95] : memref<8x16x32xbf16, #tpu.memory_space<vmem>>, vector<1x16x32xbf16>
    %194 = vector.shape_cast %193 : vector<1x16x32xbf16> to vector<16x32xbf16>
    %195 = vector.shape_cast %191 : vector<16x32xbf16> to vector<1x16x32xbf16>
    tpu.vector_store %arg23[%192, %c0_94, %c0_95], %195 {strides = array<i32>} : memref<8x16x32xbf16, #tpu.memory_space<vmem>>, vector<1x16x32xbf16>,
    %196 = arith.mulf %190, %182 : vector<16x32xf32>
    %197 = arith.addf %196, %186 : vector<16x32xf32>
    %c5_i32 = arith.constant 5 : i32
    %198 = arith.index_cast %c5_i32 : i32 to index
    %c0_96 = arith.constant 0 : index
    %c0_97 = arith.constant 0 : index
    %199 = vector.load %arg23[%198, %c0_96, %c0_97] : memref<8x16x32xbf16, #tpu.memory_space<vmem>>, vector<1x16x32xbf16>
    %200 = vector.shape_cast %199 : vector<1x16x32xbf16> to vector<16x32xbf16>
    %201 = arith.extf %200 : vector<16x32xbf16> to vector<16x32xf32>
    %202 = arith.index_cast %c5_i32 : i32 to index
    %c0_98 = arith.constant 0 : index
    %c0_99 = arith.constant 0 : index
    %203 = vector.load %arg22[%202, %c0_98, %c0_99] : memref<8x16x32xbf16, #tpu.memory_space<vmem>>, vector<1x16x32xbf16>
    %204 = vector.shape_cast %203 : vector<1x16x32xbf16> to vector<16x32xbf16>
    %205 = arith.extf %204 : vector<16x32xbf16> to vector<16x32xf32>
    %206 = arith.truncf %197 : vector<16x32xf32> to vector<16x32xbf16>
    %207 = arith.index_cast %c5_i32 : i32 to index
    %c0_100 = arith.constant 0 : index
    %c0_101 = arith.constant 0 : index
    %208 = vector.load %arg23[%207, %c0_100, %c0_101] : memref<8x16x32xbf16, #tpu.memory_space<vmem>>, vector<1x16x32xbf16>
    %209 = vector.shape_cast %208 : vector<1x16x32xbf16> to vector<16x32xbf16>
    %210 = vector.shape_cast %206 : vector<16x32xbf16> to vector<1x16x32xbf16>
    tpu.vector_store %arg23[%207, %c0_100, %c0_101], %210 {strides = array<i32>} : memref<8x16x32xbf16, #tpu.memory_space<vmem>>, vector<1x16x32xbf16>,
    %211 = arith.mulf %205, %197 : vector<16x32xf32>
    %212 = arith.addf %211, %201 : vector<16x32xf32>
    %c6_i32 = arith.constant 6 : i32
    %213 = arith.index_cast %c6_i32 : i32 to index
    %c0_102 = arith.constant 0 : index
    %c0_103 = arith.constant 0 : index
    %214 = vector.load %arg23[%213, %c0_102, %c0_103] : memref<8x16x32xbf16, #tpu.memory_space<vmem>>, vector<1x16x32xbf16>
    %215 = vector.shape_cast %214 : vector<1x16x32xbf16> to vector<16x32xbf16>
    %216 = arith.extf %215 : vector<16x32xbf16> to vector<16x32xf32>
    %217 = arith.index_cast %c6_i32 : i32 to index
    %c0_104 = arith.constant 0 : index
    %c0_105 = arith.constant 0 : index
    %218 = vector.load %arg22[%217, %c0_104, %c0_105] : memref<8x16x32xbf16, #tpu.memory_space<vmem>>, vector<1x16x32xbf16>
    %219 = vector.shape_cast %218 : vector<1x16x32xbf16> to vector<16x32xbf16>
    %220 = arith.extf %219 : vector<16x32xbf16> to vector<16x32xf32>
    %221 = arith.truncf %212 : vector<16x32xf32> to vector<16x32xbf16>
    %222 = arith.index_cast %c6_i32 : i32 to index
    %c0_106 = arith.constant 0 : index
    %c0_107 = arith.constant 0 : index
    %223 = vector.load %arg23[%222, %c0_106, %c0_107] : memref<8x16x32xbf16, #tpu.memory_space<vmem>>, vector<1x16x32xbf16>
    %224 = vector.shape_cast %223 : vector<1x16x32xbf16> to vector<16x32xbf16>
    %225 = vector.shape_cast %221 : vector<16x32xbf16> to vector<1x16x32xbf16>
    tpu.vector_store %arg23[%222, %c0_106, %c0_107], %225 {strides = array<i32>} : memref<8x16x32xbf16, #tpu.memory_space<vmem>>, vector<1x16x32xbf16>,
    %226 = arith.mulf %220, %212 : vector<16x32xf32>
    %227 = arith.addf %226, %216 : vector<16x32xf32>
    %c7_i32 = arith.constant 7 : i32
    %228 = arith.index_cast %c7_i32 : i32 to index
    %c0_108 = arith.constant 0 : index
    %c0_109 = arith.constant 0 : index
    %229 = vector.load %arg23[%228, %c0_108, %c0_109] : memref<8x16x32xbf16, #tpu.memory_space<vmem>>, vector<1x16x32xbf16>
    %230 = vector.shape_cast %229 : vector<1x16x32xbf16> to vector<16x32xbf16>
    %231 = arith.extf %230 : vector<16x32xbf16> to vector<16x32xf32>
    %232 = arith.index_cast %c7_i32 : i32 to index
    %c0_110 = arith.constant 0 : index
    %c0_111 = arith.constant 0 : index
    %233 = vector.load %arg22[%232, %c0_110, %c0_111] : memref<8x16x32xbf16, #tpu.memory_space<vmem>>, vector<1x16x32xbf16>
    %234 = vector.shape_cast %233 : vector<1x16x32xbf16> to vector<16x32xbf16>
    %235 = arith.extf %234 : vector<16x32xbf16> to vector<16x32xf32>
    %236 = arith.truncf %227 : vector<16x32xf32> to vector<16x32xbf16>
    %237 = arith.index_cast %c7_i32 : i32 to index
    %c0_112 = arith.constant 0 : index
    %c0_113 = arith.constant 0 : index
    %238 = vector.load %arg23[%237, %c0_112, %c0_113] : memref<8x16x32xbf16, #tpu.memory_space<vmem>>, vector<1x16x32xbf16>
    %239 = vector.shape_cast %238 : vector<1x16x32xbf16> to vector<16x32xbf16>
    %240 = vector.shape_cast %236 : vector<16x32xbf16> to vector<1x16x32xbf16>
    tpu.vector_store %arg23[%237, %c0_112, %c0_113], %240 {strides = array<i32>} : memref<8x16x32xbf16, #tpu.memory_space<vmem>>, vector<1x16x32xbf16>,
    %241 = arith.mulf %235, %227 : vector<16x32xf32>
    %242 = arith.addf %241, %231 : vector<16x32xf32>
    %c8_i32 = arith.constant 8 : i32
    %c0_114 = arith.constant 0 : index
    %c0_115 = arith.constant 0 : index
    %243 = vector.load %arg24[%c0_114, %c0_115] : memref<16x32xf32, #tpu.memory_space<vmem>>, vector<16x32xf32>
    tpu.vector_store %arg24[%c0_114, %c0_115], %242 {strides = array<i32>} : memref<16x32xf32, #tpu.memory_space<vmem>>, vector<16x32xf32>,
    %244 = vector.extract_strided_slice %31 {offsets = [0, 0], sizes = [8, 1], strides = [1, 1]} : vector<8x16xf32> to vector<8x1xf32>
    %c0_116 = arith.constant 0 : index
    %c0_117 = arith.constant 0 : index
    %c0_118 = arith.constant 0 : index
    %245 = vector.load %arg23[%c0_116, %c0_117, %c0_118] : memref<8x16x32xbf16, #tpu.memory_space<vmem>>, vector<8x1x32xbf16>
    %246 = vector.shape_cast %245 : vector<8x1x32xbf16> to vector<8x32xbf16>
    %247 = arith.extf %246 : vector<8x32xbf16> to vector<8x32xf32>
    %248 = vector.broadcast %244 : vector<8x1xf32> to vector<8x32xf32>
    %249 = arith.mulf %248, %247 : vector<8x32xf32>
    %250 = vector.extract_strided_slice %31 {offsets = [0, 1], sizes = [8, 1], strides = [1, 1]} : vector<8x16xf32> to vector<8x1xf32>
    %c0_119 = arith.constant 0 : index
    %c1_120 = arith.constant 1 : index
    %c0_121 = arith.constant 0 : index
    %251 = vector.load %arg23[%c0_119, %c1_120, %c0_121] : memref<8x16x32xbf16, #tpu.memory_space<vmem>>, vector<8x1x32xbf16>
    %252 = vector.shape_cast %251 : vector<8x1x32xbf16> to vector<8x32xbf16>
    %253 = arith.extf %252 : vector<8x32xbf16> to vector<8x32xf32>
    %254 = vector.broadcast %250 : vector<8x1xf32> to vector<8x32xf32>
    %255 = arith.mulf %254, %253 : vector<8x32xf32>
    %256 = arith.addf %249, %255 : vector<8x32xf32>
    %257 = vector.extract_strided_slice %31 {offsets = [0, 2], sizes = [8, 1], strides = [1, 1]} : vector<8x16xf32> to vector<8x1xf32>
    %c0_122 = arith.constant 0 : index
    %c2_123 = arith.constant 2 : index
    %c0_124 = arith.constant 0 : index
    %258 = vector.load %arg23[%c0_122, %c2_123, %c0_124] : memref<8x16x32xbf16, #tpu.memory_space<vmem>>, vector<8x1x32xbf16>
    %259 = vector.shape_cast %258 : vector<8x1x32xbf16> to vector<8x32xbf16>
    %260 = arith.extf %259 : vector<8x32xbf16> to vector<8x32xf32>
    %261 = vector.broadcast %257 : vector<8x1xf32> to vector<8x32xf32>
    %262 = arith.mulf %261, %260 : vector<8x32xf32>
    %263 = arith.addf %256, %262 : vector<8x32xf32>
    %264 = vector.extract_strided_slice %31 {offsets = [0, 3], sizes = [8, 1], strides = [1, 1]} : vector<8x16xf32> to vector<8x1xf32>
    %c0_125 = arith.constant 0 : index
    %c3_126 = arith.constant 3 : index
    %c0_127 = arith.constant 0 : index
    %265 = vector.load %arg23[%c0_125, %c3_126, %c0_127] : memref<8x16x32xbf16, #tpu.memory_space<vmem>>, vector<8x1x32xbf16>
    %266 = vector.shape_cast %265 : vector<8x1x32xbf16> to vector<8x32xbf16>
    %267 = arith.extf %266 : vector<8x32xbf16> to vector<8x32xf32>
    %268 = vector.broadcast %264 : vector<8x1xf32> to vector<8x32xf32>
    %269 = arith.mulf %268, %267 : vector<8x32xf32>
    %270 = arith.addf %263, %269 : vector<8x32xf32>
    %271 = vector.extract_strided_slice %31 {offsets = [0, 4], sizes = [8, 1], strides = [1, 1]} : vector<8x16xf32> to vector<8x1xf32>
    %c0_128 = arith.constant 0 : index
    %c4 = arith.constant 4 : index
    %c0_129 = arith.constant 0 : index
    %272 = vector.load %arg23[%c0_128, %c4, %c0_129] : memref<8x16x32xbf16, #tpu.memory_space<vmem>>, vector<8x1x32xbf16>
    %273 = vector.shape_cast %272 : vector<8x1x32xbf16> to vector<8x32xbf16>
    %274 = arith.extf %273 : vector<8x32xbf16> to vector<8x32xf32>
    %275 = vector.broadcast %271 : vector<8x1xf32> to vector<8x32xf32>
    %276 = arith.mulf %275, %274 : vector<8x32xf32>
    %277 = arith.addf %270, %276 : vector<8x32xf32>
    %278 = vector.extract_strided_slice %31 {offsets = [0, 5], sizes = [8, 1], strides = [1, 1]} : vector<8x16xf32> to vector<8x1xf32>
    %c0_130 = arith.constant 0 : index
    %c5 = arith.constant 5 : index
    %c0_131 = arith.constant 0 : index
    %279 = vector.load %arg23[%c0_130, %c5, %c0_131] : memref<8x16x32xbf16, #tpu.memory_space<vmem>>, vector<8x1x32xbf16>
    %280 = vector.shape_cast %279 : vector<8x1x32xbf16> to vector<8x32xbf16>
    %281 = arith.extf %280 : vector<8x32xbf16> to vector<8x32xf32>
    %282 = vector.broadcast %278 : vector<8x1xf32> to vector<8x32xf32>
    %283 = arith.mulf %282, %281 : vector<8x32xf32>
    %284 = arith.addf %277, %283 : vector<8x32xf32>
    %285 = vector.extract_strided_slice %31 {offsets = [0, 6], sizes = [8, 1], strides = [1, 1]} : vector<8x16xf32> to vector<8x1xf32>
    %c0_132 = arith.constant 0 : index
    %c6 = arith.constant 6 : index
    %c0_133 = arith.constant 0 : index
    %286 = vector.load %arg23[%c0_132, %c6, %c0_133] : memref<8x16x32xbf16, #tpu.memory_space<vmem>>, vector<8x1x32xbf16>
    %287 = vector.shape_cast %286 : vector<8x1x32xbf16> to vector<8x32xbf16>
    %288 = arith.extf %287 : vector<8x32xbf16> to vector<8x32xf32>
    %289 = vector.broadcast %285 : vector<8x1xf32> to vector<8x32xf32>
    %290 = arith.mulf %289, %288 : vector<8x32xf32>
    %291 = arith.addf %284, %290 : vector<8x32xf32>
    %292 = vector.extract_strided_slice %31 {offsets = [0, 7], sizes = [8, 1], strides = [1, 1]} : vector<8x16xf32> to vector<8x1xf32>
    %c0_134 = arith.constant 0 : index
    %c7 = arith.constant 7 : index
    %c0_135 = arith.constant 0 : index
    %293 = vector.load %arg23[%c0_134, %c7, %c0_135] : memref<8x16x32xbf16, #tpu.memory_space<vmem>>, vector<8x1x32xbf16>
    %294 = vector.shape_cast %293 : vector<8x1x32xbf16> to vector<8x32xbf16>
    %295 = arith.extf %294 : vector<8x32xbf16> to vector<8x32xf32>
    %296 = vector.broadcast %292 : vector<8x1xf32> to vector<8x32xf32>
    %297 = arith.mulf %296, %295 : vector<8x32xf32>
    %298 = arith.addf %291, %297 : vector<8x32xf32>
    %299 = vector.extract_strided_slice %31 {offsets = [0, 8], sizes = [8, 1], strides = [1, 1]} : vector<8x16xf32> to vector<8x1xf32>
    %c0_136 = arith.constant 0 : index
    %c8 = arith.constant 8 : index
    %c0_137 = arith.constant 0 : index
    %300 = vector.load %arg23[%c0_136, %c8, %c0_137] : memref<8x16x32xbf16, #tpu.memory_space<vmem>>, vector<8x1x32xbf16>
    %301 = vector.shape_cast %300 : vector<8x1x32xbf16> to vector<8x32xbf16>
    %302 = arith.extf %301 : vector<8x32xbf16> to vector<8x32xf32>
    %303 = vector.broadcast %299 : vector<8x1xf32> to vector<8x32xf32>
    %304 = arith.mulf %303, %302 : vector<8x32xf32>
    %305 = arith.addf %298, %304 : vector<8x32xf32>
    %306 = vector.extract_strided_slice %31 {offsets = [0, 9], sizes = [8, 1], strides = [1, 1]} : vector<8x16xf32> to vector<8x1xf32>
    %c0_138 = arith.constant 0 : index
    %c9 = arith.constant 9 : index
    %c0_139 = arith.constant 0 : index
    %307 = vector.load %arg23[%c0_138, %c9, %c0_139] : memref<8x16x32xbf16, #tpu.memory_space<vmem>>, vector<8x1x32xbf16>
    %308 = vector.shape_cast %307 : vector<8x1x32xbf16> to vector<8x32xbf16>
    %309 = arith.extf %308 : vector<8x32xbf16> to vector<8x32xf32>
    %310 = vector.broadcast %306 : vector<8x1xf32> to vector<8x32xf32>
    %311 = arith.mulf %310, %309 : vector<8x32xf32>
    %312 = arith.addf %305, %311 : vector<8x32xf32>
    %313 = vector.extract_strided_slice %31 {offsets = [0, 10], sizes = [8, 1], strides = [1, 1]} : vector<8x16xf32> to vector<8x1xf32>
    %c0_140 = arith.constant 0 : index
    %c10 = arith.constant 10 : index
    %c0_141 = arith.constant 0 : index
    %314 = vector.load %arg23[%c0_140, %c10, %c0_141] : memref<8x16x32xbf16, #tpu.memory_space<vmem>>, vector<8x1x32xbf16>
    %315 = vector.shape_cast %314 : vector<8x1x32xbf16> to vector<8x32xbf16>
    %316 = arith.extf %315 : vector<8x32xbf16> to vector<8x32xf32>
    %317 = vector.broadcast %313 : vector<8x1xf32> to vector<8x32xf32>
    %318 = arith.mulf %317, %316 : vector<8x32xf32>
    %319 = arith.addf %312, %318 : vector<8x32xf32>
    %320 = vector.extract_strided_slice %31 {offsets = [0, 11], sizes = [8, 1], strides = [1, 1]} : vector<8x16xf32> to vector<8x1xf32>
    %c0_142 = arith.constant 0 : index
    %c11 = arith.constant 11 : index
    %c0_143 = arith.constant 0 : index
    %321 = vector.load %arg23[%c0_142, %c11, %c0_143] : memref<8x16x32xbf16, #tpu.memory_space<vmem>>, vector<8x1x32xbf16>
    %322 = vector.shape_cast %321 : vector<8x1x32xbf16> to vector<8x32xbf16>
    %323 = arith.extf %322 : vector<8x32xbf16> to vector<8x32xf32>
    %324 = vector.broadcast %320 : vector<8x1xf32> to vector<8x32xf32>
    %325 = arith.mulf %324, %323 : vector<8x32xf32>
    %326 = arith.addf %319, %325 : vector<8x32xf32>
    %327 = vector.extract_strided_slice %31 {offsets = [0, 12], sizes = [8, 1], strides = [1, 1]} : vector<8x16xf32> to vector<8x1xf32>
    %c0_144 = arith.constant 0 : index
    %c12 = arith.constant 12 : index
    %c0_145 = arith.constant 0 : index
    %328 = vector.load %arg23[%c0_144, %c12, %c0_145] : memref<8x16x32xbf16, #tpu.memory_space<vmem>>, vector<8x1x32xbf16>
    %329 = vector.shape_cast %328 : vector<8x1x32xbf16> to vector<8x32xbf16>
    %330 = arith.extf %329 : vector<8x32xbf16> to vector<8x32xf32>
    %331 = vector.broadcast %327 : vector<8x1xf32> to vector<8x32xf32>
    %332 = arith.mulf %331, %330 : vector<8x32xf32>
    %333 = arith.addf %326, %332 : vector<8x32xf32>
    %334 = vector.extract_strided_slice %31 {offsets = [0, 13], sizes = [8, 1], strides = [1, 1]} : vector<8x16xf32> to vector<8x1xf32>
    %c0_146 = arith.constant 0 : index
    %c13 = arith.constant 13 : index
    %c0_147 = arith.constant 0 : index
    %335 = vector.load %arg23[%c0_146, %c13, %c0_147] : memref<8x16x32xbf16, #tpu.memory_space<vmem>>, vector<8x1x32xbf16>
    %336 = vector.shape_cast %335 : vector<8x1x32xbf16> to vector<8x32xbf16>
    %337 = arith.extf %336 : vector<8x32xbf16> to vector<8x32xf32>
    %338 = vector.broadcast %334 : vector<8x1xf32> to vector<8x32xf32>
    %339 = arith.mulf %338, %337 : vector<8x32xf32>
    %340 = arith.addf %333, %339 : vector<8x32xf32>
    %341 = vector.extract_strided_slice %31 {offsets = [0, 14], sizes = [8, 1], strides = [1, 1]} : vector<8x16xf32> to vector<8x1xf32>
    %c0_148 = arith.constant 0 : index
    %c14 = arith.constant 14 : index
    %c0_149 = arith.constant 0 : index
    %342 = vector.load %arg23[%c0_148, %c14, %c0_149] : memref<8x16x32xbf16, #tpu.memory_space<vmem>>, vector<8x1x32xbf16>
    %343 = vector.shape_cast %342 : vector<8x1x32xbf16> to vector<8x32xbf16>
    %344 = arith.extf %343 : vector<8x32xbf16> to vector<8x32xf32>
    %345 = vector.broadcast %341 : vector<8x1xf32> to vector<8x32xf32>
    %346 = arith.mulf %345, %344 : vector<8x32xf32>
    %347 = arith.addf %340, %346 : vector<8x32xf32>
    %348 = vector.extract_strided_slice %31 {offsets = [0, 15], sizes = [8, 1], strides = [1, 1]} : vector<8x16xf32> to vector<8x1xf32>
    %c0_150 = arith.constant 0 : index
    %c15 = arith.constant 15 : index
    %c0_151 = arith.constant 0 : index
    %349 = vector.load %arg23[%c0_150, %c15, %c0_151] : memref<8x16x32xbf16, #tpu.memory_space<vmem>>, vector<8x1x32xbf16>
    %350 = vector.shape_cast %349 : vector<8x1x32xbf16> to vector<8x32xbf16>
    %351 = arith.extf %350 : vector<8x32xbf16> to vector<8x32xf32>
    %352 = vector.broadcast %348 : vector<8x1xf32> to vector<8x32xf32>
    %353 = arith.mulf %352, %351 : vector<8x32xf32>
    %354 = arith.addf %347, %353 : vector<8x32xf32>
    %c0_152 = arith.constant 0 : index
    %c0_153 = arith.constant 0 : index
    %355 = vector.load %arg12[%c0_152, %c0_153] : memref<1x32xf32, #tpu.memory_space<vmem>>, vector<1x32xf32>
    %356 = vector.broadcast %355 : vector<1x32xf32> to vector<8x32xf32>
    %357 = arith.mulf %89, %356 : vector<8x32xf32>
    %358 = arith.addf %354, %357 : vector<8x32xf32>
    %cst_154 = arith.constant 0.000000e+00 : f32
    %359 = vector.broadcast %cst_154 : f32 to vector<8x32xf32>
    %360 = arith.subf %359, %29 : vector<8x32xf32>
    %361 = math.exp %360 : vector<8x32xf32>
    %cst_155 = arith.constant 1.000000e+00 : f32
    %362 = vector.broadcast %cst_155 : f32 to vector<8x32xf32>
    %363 = arith.addf %362, %361 : vector<8x32xf32>
    %cst_156 = arith.constant 1.000000e+00 : f32
    %364 = vector.broadcast %cst_156 : f32 to vector<8x32xf32>
    %365 = arith.divf %364, %363 : vector<8x32xf32>
    %366 = arith.mulf %29, %365 : vector<8x32xf32>
    %367 = arith.mulf %358, %366 : vector<8x32xf32>
    %368 = arith.truncf %367 : vector<8x32xf32> to vector<8x32xbf16>
    %c0_157 = arith.constant 0 : index
    %c0_158 = arith.constant 0 : index
    %369 = vector.load %arg13[%c0_157, %c0_158] : memref<32x32xbf16, #tpu.memory_space<vmem>>, vector<32x32xbf16>
    %cst_159 = arith.constant dense<0.000000e+00> : vector<8x32xf32>
    %370 = tpu.matmul %368, %369, %cst_159 {dimension_numbers = #tpu.dot_dimension_numbers<[1], [0], [0], [1], [0, 0, 1, 1], [], []>} : vector<8x32xbf16>, vector<32x32xbf16>, vector<8x32xf32> -> vector<8x32xf32>
    %371 = arith.addf %1, %370 : vector<8x32xf32>
    %c0_160 = arith.constant 0 : index
    %c0_161 = arith.constant 0 : index
    %372 = vector.load %arg14[%c0_160, %c0_161] : memref<1x32xf32, #tpu.memory_space<vmem>>, vector<1x32xf32>
    %c0_162 = arith.constant 0 : index
    %c0_163 = arith.constant 0 : index
    %373 = vector.load %arg15[%c0_162, %c0_163] : memref<1x32xf32, #tpu.memory_space<vmem>>, vector<1x32xf32>
    %cst_164 = arith.constant dense<0.000000e+00> : vector<8xf32>
    %374 = vector.multi_reduction <add>, %371, %cst_164 [1] : vector<8x32xf32> to vector<8xf32>
    %375 = vector.shape_cast %374 : vector<8xf32> to vector<8x1xf32>
    %cst_165 = arith.constant 3.200000e+01 : f32
    %376 = vector.broadcast %cst_165 : f32 to vector<8x1xf32>
    %377 = arith.divf %375, %376 : vector<8x1xf32>
    %378 = vector.broadcast %377 : vector<8x1xf32> to vector<8x32xf32>
    %379 = arith.subf %371, %378 : vector<8x32xf32>
    %380 = arith.mulf %379, %379 : vector<8x32xf32>
    %cst_166 = arith.constant dense<0.000000e+00> : vector<8xf32>
    %381 = vector.multi_reduction <add>, %380, %cst_166 [1] : vector<8x32xf32> to vector<8xf32>
    %382 = vector.shape_cast %381 : vector<8xf32> to vector<8x1xf32>
    %cst_167 = arith.constant 3.200000e+01 : f32
    %383 = vector.broadcast %cst_167 : f32 to vector<8x1xf32>
    %384 = arith.divf %382, %383 : vector<8x1xf32>
    %385 = vector.broadcast %377 : vector<8x1xf32> to vector<8x32xf32>
    %386 = arith.subf %371, %385 : vector<8x32xf32>
    %cst_168 = arith.constant 9.99999974E-6 : f32
    %387 = vector.broadcast %cst_168 : f32 to vector<8x1xf32>
    %388 = arith.addf %384, %387 : vector<8x1xf32>
    %389 = math.rsqrt %388 : vector<8x1xf32>
    %390 = vector.broadcast %389 : vector<8x1xf32> to vector<8x32xf32>
    %391 = arith.mulf %386, %390 : vector<8x32xf32>
    %392 = vector.broadcast %372 : vector<1x32xf32> to vector<8x32xf32>
    %393 = arith.mulf %391, %392 : vector<8x32xf32>
    %394 = vector.broadcast %373 : vector<1x32xf32> to vector<8x32xf32>
    %395 = arith.addf %393, %394 : vector<8x32xf32>
    %396 = arith.truncf %395 : vector<8x32xf32> to vector<8x32xbf16>
    %c0_169 = arith.constant 0 : index
    %c0_170 = arith.constant 0 : index
    %397 = vector.load %arg16[%c0_169, %c0_170] : memref<32x128xbf16, #tpu.memory_space<vmem>>, vector<32x128xbf16>
    %cst_171 = arith.constant dense<0.000000e+00> : vector<8x128xf32>
    %398 = tpu.matmul %396, %397, %cst_171 {dimension_numbers = #tpu.dot_dimension_numbers<[1], [0], [0], [1], [0, 0, 1, 1], [], []>} : vector<8x32xbf16>, vector<32x128xbf16>, vector<8x128xf32> -> vector<8x128xf32>
    %c0_172 = arith.constant 0 : index
    %c0_173 = arith.constant 0 : index
    %399 = vector.load %arg17[%c0_172, %c0_173] : memref<1x128xf32, #tpu.memory_space<vmem>>, vector<1x128xf32>
    %400 = vector.broadcast %399 : vector<1x128xf32> to vector<8x128xf32>
    %401 = arith.addf %398, %400 : vector<8x128xf32>
    %cst_174 = arith.constant 5.000000e-01 : f32
    %402 = vector.broadcast %cst_174 : f32 to vector<8x128xf32>
    %403 = arith.mulf %402, %401 : vector<8x128xf32>
    %cst_175 = arith.constant 0.707106769 : f32
    %404 = vector.broadcast %cst_175 : f32 to vector<8x128xf32>
    %405 = arith.mulf %401, %404 : vector<8x128xf32>
    %cst_176 = arith.constant 0.000000e+00 : f32
    %406 = vector.broadcast %cst_176 : f32 to vector<8x128xf32>
    %407 = arith.cmpf oge, %405, %406 : vector<8x128xf32>
    %cst_177 = arith.constant 1.000000e+00 : f32
    %cst_178 = arith.constant -1.000000e+00 : f32
    %408 = vector.broadcast %cst_177 : f32 to vector<8x128xf32>
    %409 = vector.broadcast %cst_178 : f32 to vector<8x128xf32>
    %410 = arith.select %407, %408, %409 : vector<8x128xi1>, vector<8x128xf32>
    %411 = math.absf %405 : vector<8x128xf32>
    %cst_179 = arith.constant 0.327591091 : f32
    %412 = vector.broadcast %cst_179 : f32 to vector<8x128xf32>
    %413 = arith.mulf %412, %411 : vector<8x128xf32>
    %cst_180 = arith.constant 1.000000e+00 : f32
    %414 = vector.broadcast %cst_180 : f32 to vector<8x128xf32>
    %415 = arith.addf %414, %413 : vector<8x128xf32>
    %cst_181 = arith.constant 1.000000e+00 : f32
    %416 = vector.broadcast %cst_181 : f32 to vector<8x128xf32>
    %417 = arith.divf %416, %415 : vector<8x128xf32>
    %cst_182 = arith.constant 1.06140542 : f32
    %418 = vector.broadcast %cst_182 : f32 to vector<8x128xf32>
    %419 = arith.mulf %418, %417 : vector<8x128xf32>
    %cst_183 = arith.constant -1.45315206 : f32
    %420 = vector.broadcast %cst_183 : f32 to vector<8x128xf32>
    %421 = arith.addf %419, %420 : vector<8x128xf32>
    %422 = arith.mulf %421, %417 : vector<8x128xf32>
    %cst_184 = arith.constant 1.42141378 : f32
    %423 = vector.broadcast %cst_184 : f32 to vector<8x128xf32>
    %424 = arith.addf %422, %423 : vector<8x128xf32>
    %425 = arith.mulf %424, %417 : vector<8x128xf32>
    %cst_185 = arith.constant -0.284496725 : f32
    %426 = vector.broadcast %cst_185 : f32 to vector<8x128xf32>
    %427 = arith.addf %425, %426 : vector<8x128xf32>
    %428 = arith.mulf %427, %417 : vector<8x128xf32>
    %cst_186 = arith.constant 0.254829586 : f32
    %429 = vector.broadcast %cst_186 : f32 to vector<8x128xf32>
    %430 = arith.addf %428, %429 : vector<8x128xf32>
    %431 = arith.mulf %430, %417 : vector<8x128xf32>
    %cst_187 = arith.constant 0.000000e+00 : f32
    %432 = vector.broadcast %cst_187 : f32 to vector<8x128xf32>
    %433 = arith.subf %432, %411 : vector<8x128xf32>
    %434 = arith.mulf %433, %411 : vector<8x128xf32>
    %435 = math.exp %434 : vector<8x128xf32>
    %436 = arith.mulf %431, %435 : vector<8x128xf32>
    %cst_188 = arith.constant 1.000000e+00 : f32
    %437 = vector.broadcast %cst_188 : f32 to vector<8x128xf32>
    %438 = arith.subf %437, %436 : vector<8x128xf32>
    %439 = arith.mulf %410, %438 : vector<8x128xf32>
    %cst_189 = arith.constant 1.000000e+00 : f32
    %440 = vector.broadcast %cst_189 : f32 to vector<8x128xf32>
    %441 = arith.addf %440, %439 : vector<8x128xf32>
    %442 = arith.mulf %403, %441 : vector<8x128xf32>
    %443 = arith.truncf %442 : vector<8x128xf32> to vector<8x128xbf16>
    %c0_190 = arith.constant 0 : index
    %c0_191 = arith.constant 0 : index
    %444 = vector.load %arg18[%c0_190, %c0_191] : memref<128x32xbf16, #tpu.memory_space<vmem>>, vector<128x32xbf16>
    %cst_192 = arith.constant dense<0.000000e+00> : vector<8x32xf32>
    %445 = tpu.matmul %443, %444, %cst_192 {dimension_numbers = #tpu.dot_dimension_numbers<[1], [0], [0], [1], [0, 0, 1, 1], [], []>} : vector<8x128xbf16>, vector<128x32xbf16>, vector<8x32xf32> -> vector<8x32xf32>
    %c0_193 = arith.constant 0 : index
    %c0_194 = arith.constant 0 : index
    %446 = vector.load %arg19[%c0_193, %c0_194] : memref<1x32xf32, #tpu.memory_space<vmem>>, vector<1x32xf32>
    %447 = vector.broadcast %446 : vector<1x32xf32> to vector<8x32xf32>
    %448 = arith.addf %445, %447 : vector<8x32xf32>
    %449 = arith.addf %371, %448 : vector<8x32xf32>
    %c0_195 = arith.constant 0 : index
    %c0_196 = arith.constant 0 : index
    %c0_197 = arith.constant 0 : index
    %450 = vector.load %arg20[%c0_195, %c0_196, %c0_197] : memref<1x8x32xf32, #tpu.memory_space<vmem>>, vector<1x8x32xf32>
    %451 = vector.shape_cast %450 : vector<1x8x32xf32> to vector<8x32xf32>
    %452 = vector.shape_cast %449 : vector<8x32xf32> to vector<1x8x32xf32>
    tpu.vector_store %arg20[%c0_195, %c0_196, %c0_197], %452 {strides = array<i32>} : memref<1x8x32xf32, #tpu.memory_space<vmem>>, vector<1x8x32xf32>,
    return
  }
  func.func @transform_0(%arg0: i32, %arg1: i32) -> (i32, i32, i32) {
    %c0_i32 = arith.constant 0 : i32
    %c0_i32_0 = arith.constant 0 : i32
    return %arg0, %arg1, %c0_i32 : i32, i32, i32
  }
  func.func @transform_1(%arg0: i32, %arg1: i32) -> (i32, i32) {
    %c0_i32 = arith.constant 0 : i32
    %c0_i32_0 = arith.constant 0 : i32
    %c0_i32_1 = arith.constant 0 : i32
    return %c0_i32, %c0_i32_0 : i32, i32
  }
  func.func @transform_2(%arg0: i32, %arg1: i32) -> (i32, i32) {
    %c0_i32 = arith.constant 0 : i32
    %c0_i32_0 = arith.constant 0 : i32
    %c0_i32_1 = arith.constant 0 : i32
    return %c0_i32, %c0_i32_0 : i32, i32
  }
  func.func @transform_3(%arg0: i32, %arg1: i32) -> (i32, i32) {
    %c0_i32 = arith.constant 0 : i32
    %c0_i32_0 = arith.constant 0 : i32
    %c0_i32_1 = arith.constant 0 : i32
    return %c0_i32, %c0_i32_0 : i32, i32
  }
  func.func @transform_4(%arg0: i32, %arg1: i32) -> (i32, i32) {
    %c0_i32 = arith.constant 0 : i32
    %c0_i32_0 = arith.constant 0 : i32
    %c0_i32_1 = arith.constant 0 : i32
    return %c0_i32, %c0_i32_0 : i32, i32
  }
  func.func @transform_5(%arg0: i32, %arg1: i32) -> (i32, i32) {
    %c0_i32 = arith.constant 0 : i32
    %c0_i32_0 = arith.constant 0 : i32
    %c0_i32_1 = arith.constant 0 : i32
    return %c0_i32, %c0_i32_0 : i32, i32
  }
  func.func @transform_6(%arg0: i32, %arg1: i32) -> (i32, i32) {
    %c0_i32 = arith.constant 0 : i32
    %c0_i32_0 = arith.constant 0 : i32
    %c0_i32_1 = arith.constant 0 : i32
    return %c0_i32, %c0_i32_0 : i32, i32
  }
  func.func @transform_7(%arg0: i32, %arg1: i32) -> (i32, i32) {
    %c0_i32 = arith.constant 0 : i32
    %c0_i32_0 = arith.constant 0 : i32
    %c0_i32_1 = arith.constant 0 : i32
    return %c0_i32, %c0_i32_0 : i32, i32
  }
  func.func @transform_8(%arg0: i32, %arg1: i32) -> (i32, i32) {
    %c0_i32 = arith.constant 0 : i32
    %c0_i32_0 = arith.constant 0 : i32
    %c0_i32_1 = arith.constant 0 : i32
    return %c0_i32, %c0_i32_0 : i32, i32
  }
  func.func @transform_9(%arg0: i32, %arg1: i32) -> (i32, i32) {
    %c0_i32 = arith.constant 0 : i32
    %c0_i32_0 = arith.constant 0 : i32
    %c0_i32_1 = arith.constant 0 : i32
    return %c0_i32, %c0_i32_0 : i32, i32
  }
  func.func @transform_10(%arg0: i32, %arg1: i32) -> (i32, i32) {
    %c0_i32 = arith.constant 0 : i32
    %c0_i32_0 = arith.constant 0 : i32
    %c0_i32_1 = arith.constant 0 : i32
    return %c0_i32, %c0_i32_0 : i32, i32
  }
  func.func @transform_11(%arg0: i32, %arg1: i32) -> (i32, i32) {
    %c0_i32 = arith.constant 0 : i32
    %c0_i32_0 = arith.constant 0 : i32
    %c0_i32_1 = arith.constant 0 : i32
    return %c0_i32, %c0_i32_0 : i32, i32
  }
  func.func @transform_12(%arg0: i32, %arg1: i32) -> (i32, i32) {
    %c0_i32 = arith.constant 0 : i32
    %c0_i32_0 = arith.constant 0 : i32
    %c0_i32_1 = arith.constant 0 : i32
    return %c0_i32, %c0_i32_0 : i32, i32
  }
  func.func @transform_13(%arg0: i32, %arg1: i32) -> (i32, i32) {
    %c0_i32 = arith.constant 0 : i32
    %c0_i32_0 = arith.constant 0 : i32
    %c0_i32_1 = arith.constant 0 : i32
    return %c0_i32, %c0_i32_0 : i32, i32
  }
  func.func @transform_14(%arg0: i32, %arg1: i32) -> (i32, i32) {
    %c0_i32 = arith.constant 0 : i32
    %c0_i32_0 = arith.constant 0 : i32
    %c0_i32_1 = arith.constant 0 : i32
    return %c0_i32, %c0_i32_0 : i32, i32
  }
  func.func @transform_15(%arg0: i32, %arg1: i32) -> (i32, i32) {
    %c0_i32 = arith.constant 0 : i32
    %c0_i32_0 = arith.constant 0 : i32
    %c0_i32_1 = arith.constant 0 : i32
    return %c0_i32, %c0_i32_0 : i32, i32
  }
  func.func @transform_16(%arg0: i32, %arg1: i32) -> (i32, i32) {
    %c0_i32 = arith.constant 0 : i32
    %c0_i32_0 = arith.constant 0 : i32
    %c0_i32_1 = arith.constant 0 : i32
    return %c0_i32, %c0_i32_0 : i32, i32
  }
  func.func @transform_17(%arg0: i32, %arg1: i32) -> (i32, i32) {
    %c0_i32 = arith.constant 0 : i32
    %c0_i32_0 = arith.constant 0 : i32
    %c0_i32_1 = arith.constant 0 : i32
    return %c0_i32, %c0_i32_0 : i32, i32
  }
  func.func @transform_18(%arg0: i32, %arg1: i32) -> (i32, i32, i32) {
    %c0_i32 = arith.constant 0 : i32
    %c0_i32_0 = arith.constant 0 : i32
    return %arg0, %arg1, %c0_i32 : i32, i32, i32
  }
}

module attributes {stable_mosaic.version = 11 : i64} {
  func.func @kernel(%arg0: i32, %arg1: i32, %arg2: memref<1x8x32xf32, #tpu.memory_space<vmem>>, %arg3: memref<1x32xf32, #tpu.memory_space<vmem>>, %arg4: memref<1x32xf32, #tpu.memory_space<vmem>>, %arg5: memref<32x50xbf16, #tpu.memory_space<vmem>>, %arg6: memref<2x32xf32, #tpu.memory_space<vmem>>, %arg7: memref<1x32xf32, #tpu.memory_space<vmem>>, %arg8: memref<4x32xf32, #tpu.memory_space<vmem>>, %arg9: memref<16x32xf32, #tpu.memory_space<vmem>>, %arg10: memref<16x32xf32, #tpu.memory_space<vmem>>, %arg11: memref<16x32xf32, #tpu.memory_space<vmem>>, %arg12: memref<1x32xf32, #tpu.memory_space<vmem>>, %arg13: memref<32x32xbf16, #tpu.memory_space<vmem>>, %arg14: memref<1x32xf32, #tpu.memory_space<vmem>>, %arg15: memref<1x32xf32, #tpu.memory_space<vmem>>, %arg16: memref<32x128xbf16, #tpu.memory_space<vmem>>, %arg17: memref<1x128xf32, #tpu.memory_space<vmem>>, %arg18: memref<128x32xbf16, #tpu.memory_space<vmem>>, %arg19: memref<1x32xf32, #tpu.memory_space<vmem>>, %arg20: memref<1x8x32xf32, #tpu.memory_space<vmem>>, %arg21: memref<11x32xf32, #tpu.memory_space<vmem>>, %arg22: memref<8x16x32xbf16, #tpu.memory_space<vmem>>, %arg23: memref<8x16x32xbf16, #tpu.memory_space<vmem>>, %arg24: memref<16x32xf32, #tpu.memory_space<vmem>>, %arg25: memref<3x32xf32, #tpu.memory_space<vmem>>) attributes {dimension_semantics = [#tpu.dimension_semantics<parallel>, #tpu.dimension_semantics<arbitrary>], iteration_bounds = array<i64: 2, 2>, scalar_prefetch = 0 : i64, scratch_operands = 5 : i64, tpu.core_type = #tpu.core_type<tc>, window_params = [{transform_indices = @transform_0, window_bounds = array<i64: 1, 8, 32>}, {pipeline_mode = #tpu.pipeline_mode<synchronous>, transform_indices = @transform_1, window_bounds = array<i64: 1, 32>}, {pipeline_mode = #tpu.pipeline_mode<synchronous>, transform_indices = @transform_2, window_bounds = array<i64: 1, 32>}, {pipeline_mode = #tpu.pipeline_mode<synchronous>, transform_indices = @transform_3, window_bounds = array<i64: 32, 50>}, {pipeline_mode = #tpu.pipeline_mode<synchronous>, transform_indices = @transform_4, window_bounds = array<i64: 2, 32>}, {pipeline_mode = #tpu.pipeline_mode<synchronous>, transform_indices = @transform_5, window_bounds = array<i64: 1, 32>}, {pipeline_mode = #tpu.pipeline_mode<synchronous>, transform_indices = @transform_6, window_bounds = array<i64: 4, 32>}, {pipeline_mode = #tpu.pipeline_mode<synchronous>, transform_indices = @transform_7, window_bounds = array<i64: 16, 32>}, {pipeline_mode = #tpu.pipeline_mode<synchronous>, transform_indices = @transform_8, window_bounds = array<i64: 16, 32>}, {pipeline_mode = #tpu.pipeline_mode<synchronous>, transform_indices = @transform_9, window_bounds = array<i64: 16, 32>}, {pipeline_mode = #tpu.pipeline_mode<synchronous>, transform_indices = @transform_10, window_bounds = array<i64: 1, 32>}, {pipeline_mode = #tpu.pipeline_mode<synchronous>, transform_indices = @transform_11, window_bounds = array<i64: 32, 32>}, {pipeline_mode = #tpu.pipeline_mode<synchronous>, transform_indices = @transform_12, window_bounds = array<i64: 1, 32>}, {pipeline_mode = #tpu.pipeline_mode<synchronous>, transform_indices = @transform_13, window_bounds = array<i64: 1, 32>}, {pipeline_mode = #tpu.pipeline_mode<synchronous>, transform_indices = @transform_14, window_bounds = array<i64: 32, 128>}, {pipeline_mode = #tpu.pipeline_mode<synchronous>, transform_indices = @transform_15, window_bounds = array<i64: 1, 128>}, {pipeline_mode = #tpu.pipeline_mode<synchronous>, transform_indices = @transform_16, window_bounds = array<i64: 128, 32>}, {pipeline_mode = #tpu.pipeline_mode<synchronous>, transform_indices = @transform_17, window_bounds = array<i64: 1, 32>}, {transform_indices = @transform_18, window_bounds = array<i64: 1, 8, 32>}]} {
    %c0 = arith.constant 0 : index
    %c0_0 = arith.constant 0 : index
    %c0_1 = arith.constant 0 : index
    %0 = vector.load %arg2[%c0, %c0_0, %c0_1] : memref<1x8x32xf32, #tpu.memory_space<vmem>>, vector<1x8x32xf32>
    %1 = vector.shape_cast %0 : vector<1x8x32xf32> to vector<8x32xf32>
    %c0_2 = arith.constant 0 : index
    %c0_3 = arith.constant 0 : index
    %2 = vector.load %arg3[%c0_2, %c0_3] : memref<1x32xf32, #tpu.memory_space<vmem>>, vector<1x32xf32>
    %c0_4 = arith.constant 0 : index
    %c0_5 = arith.constant 0 : index
    %3 = vector.load %arg4[%c0_4, %c0_5] : memref<1x32xf32, #tpu.memory_space<vmem>>, vector<1x32xf32>
    %cst = arith.constant dense<0.000000e+00> : vector<8xf32>
    %4 = vector.multi_reduction <add>, %1, %cst [1] : vector<8x32xf32> to vector<8xf32>
    %5 = vector.shape_cast %4 : vector<8xf32> to vector<8x1xf32>
    %cst_6 = arith.constant 3.200000e+01 : f32
    %6 = vector.broadcast %cst_6 : f32 to vector<8x1xf32>
    %7 = arith.divf %5, %6 : vector<8x1xf32>
    %8 = vector.broadcast %7 : vector<8x1xf32> to vector<8x32xf32>
    %9 = arith.subf %1, %8 : vector<8x32xf32>
    %10 = arith.mulf %9, %9 : vector<8x32xf32>
    %cst_7 = arith.constant dense<0.000000e+00> : vector<8xf32>
    %11 = vector.multi_reduction <add>, %10, %cst_7 [1] : vector<8x32xf32> to vector<8xf32>
    %12 = vector.shape_cast %11 : vector<8xf32> to vector<8x1xf32>
    %cst_8 = arith.constant 3.200000e+01 : f32
    %13 = vector.broadcast %cst_8 : f32 to vector<8x1xf32>
    %14 = arith.divf %12, %13 : vector<8x1xf32>
    %15 = vector.broadcast %7 : vector<8x1xf32> to vector<8x32xf32>
    %16 = arith.subf %1, %15 : vector<8x32xf32>
    %cst_9 = arith.constant 9.99999974E-6 : f32
    %17 = vector.broadcast %cst_9 : f32 to vector<8x1xf32>
    %18 = arith.addf %14, %17 : vector<8x1xf32>
    %19 = math.rsqrt %18 : vector<8x1xf32>
    %20 = vector.broadcast %19 : vector<8x1xf32> to vector<8x32xf32>
    %21 = arith.mulf %16, %20 : vector<8x32xf32>
    %22 = vector.broadcast %2 : vector<1x32xf32> to vector<8x32xf32>
    %23 = arith.mulf %21, %22 : vector<8x32xf32>
    %24 = vector.broadcast %3 : vector<1x32xf32> to vector<8x32xf32>
    %25 = arith.addf %23, %24 : vector<8x32xf32>
    %26 = arith.truncf %25 : vector<8x32xf32> to vector<8x32xbf16>
    %c0_10 = arith.constant 0 : index
    %c0_11 = arith.constant 0 : index
    %27 = vector.load %arg5[%c0_10, %c0_11] : memref<32x50xbf16, #tpu.memory_space<vmem>>, vector<32x50xbf16>
    %cst_12 = arith.constant dense<0.000000e+00> : vector<8x50xf32>
    %28 = tpu.matmul %26, %27, %cst_12 {dimension_numbers = #tpu.dot_dimension_numbers<[1], [0], [0], [1], [0, 0, 1, 1], [], []>} : vector<8x32xbf16>, vector<32x50xbf16>, vector<8x50xf32> -> vector<8x50xf32>
    %29 = vector.extract_strided_slice %28 {offsets = [0, 0], sizes = [8, 32], strides = [1, 1]} : vector<8x50xf32> to vector<8x32xf32>
    %30 = vector.extract_strided_slice %28 {offsets = [0, 32], sizes = [8, 2], strides = [1, 1]} : vector<8x50xf32> to vector<8x2xf32>
    %31 = vector.extract_strided_slice %28 {offsets = [0, 34], sizes = [8, 16], strides = [1, 1]} : vector<8x50xf32> to vector<8x16xf32>
    %32 = vector.extract_strided_slice %30 {offsets = [0, 0], sizes = [8, 1], strides = [1, 1]} : vector<8x2xf32> to vector<8x1xf32>
    %c0_13 = arith.constant 0 : index
    %c0_14 = arith.constant 0 : index
    %33 = vector.load %arg6[%c0_13, %c0_14] : memref<2x32xf32, #tpu.memory_space<vmem>>, vector<1x32xf32>
    %34 = vector.broadcast %32 : vector<8x1xf32> to vector<8x32xf32>
    %35 = vector.broadcast %33 : vector<1x32xf32> to vector<8x32xf32>
    %36 = arith.mulf %34, %35 : vector<8x32xf32>
    %37 = vector.extract_strided_slice %30 {offsets = [0, 1], sizes = [8, 1], strides = [1, 1]} : vector<8x2xf32> to vector<8x1xf32>
    %c1 = arith.constant 1 : index
    %c0_15 = arith.constant 0 : index
    %38 = vector.load %arg6[%c1, %c0_15] : memref<2x32xf32, #tpu.memory_space<vmem>>, vector<1x32xf32>
    %39 = vector.broadcast %37 : vector<8x1xf32> to vector<8x32xf32>
    %40 = vector.broadcast %38 : vector<1x32xf32> to vector<8x32xf32>
    %41 = arith.mulf %39, %40 : vector<8x32xf32>
    %42 = arith.addf %36, %41 : vector<8x32xf32>
    %c0_16 = arith.constant 0 : index
    %c0_17 = arith.constant 0 : index
    %43 = vector.load %arg7[%c0_16, %c0_17] : memref<1x32xf32, #tpu.memory_space<vmem>>, vector<1x32xf32>
    %44 = vector.broadcast %43 : vector<1x32xf32> to vector<8x32xf32>
    %45 = arith.addf %42, %44 : vector<8x32xf32>
    %cst_18 = arith.constant 2.000000e+01 : f32
    %46 = vector.broadcast %cst_18 : f32 to vector<8x32xf32>
    %47 = arith.cmpf ogt, %45, %46 : vector<8x32xf32>
    %cst_19 = arith.constant 2.000000e+01 : f32
    %48 = vector.broadcast %cst_19 : f32 to vector<8x32xf32>
    %49 = arith.minimumf %45, %48 : vector<8x32xf32>
    %50 = math.exp %49 : vector<8x32xf32>
    %cst_20 = arith.constant 1.000000e+00 : f32
    %51 = vector.broadcast %cst_20 : f32 to vector<8x32xf32>
    %52 = arith.addf %51, %50 : vector<8x32xf32>
    %53 = math.log %52 : vector<8x32xf32>
    %54 = arith.select %47, %45, %53 : vector<8x32xi1>, vector<8x32xf32>
    %c0_i32 = arith.constant 0 : i32
    %55 = arith.cmpi eq, %arg1, %c0_i32 : i32
    %56 = arith.extui %55 : i1 to i32
    %c0_i32_21 = arith.constant 0 : i32
    %57 = arith.cmpi ne, %56, %c0_i32_21 : i32
    scf.if %57 {
      %cst_198 = arith.constant 0.000000e+00 : f32
      %453 = vector.broadcast %cst_198 : f32 to vector<3x32xf32>
      %c0_199 = arith.constant 0 : index
      %c0_200 = arith.constant 0 : index
      %454 = vector.load %arg25[%c0_199, %c0_200] : memref<3x32xf32, #tpu.memory_space<vmem>>, vector<3x32xf32>
      tpu.vector_store %arg25[%c0_199, %c0_200], %453 {strides = array<i32>} : memref<3x32xf32, #tpu.memory_space<vmem>>, vector<3x32xf32>,
    } else {
    }
    %c0_22 = arith.constant 0 : index
    %c0_23 = arith.constant 0 : index
    %58 = vector.load %arg25[%c0_22, %c0_23] : memref<3x32xf32, #tpu.memory_space<vmem>>, vector<3x32xf32>
    %c0_24 = arith.constant 0 : index
    %c0_25 = arith.constant 0 : index
    %59 = vector.load %arg21[%c0_24, %c0_25] : memref<11x32xf32, #tpu.memory_space<vmem>>, vector<3x32xf32>
    tpu.vector_store %arg21[%c0_24, %c0_25], %58 {strides = array<i32>} : memref<11x32xf32, #tpu.memory_space<vmem>>, vector<3x32xf32>,
    %c3 = arith.constant 3 : index
    %c0_26 = arith.constant 0 : index
    %60 = vector.load %arg21[%c3, %c0_26] : memref<11x32xf32, #tpu.memory_space<vmem>>, vector<8x32xf32>
    tpu.vector_store %arg21[%c3, %c0_26], %25 {strides = array<i32>} : memref<11x32xf32, #tpu.memory_space<vmem>>, vector<8x32xf32>,
    %61 = vector.extract_strided_slice %25 {offsets = [5, 0], sizes = [3, 32], strides = [1, 1]} : vector<8x32xf32> to vector<3x32xf32>
    %c0_27 = arith.constant 0 : index
    %c0_28 = arith.constant 0 : index
    %62 = vector.load %arg25[%c0_27, %c0_28] : memref<3x32xf32, #tpu.memory_space<vmem>>, vector<3x32xf32>
    tpu.vector_store %arg25[%c0_27, %c0_28], %61 {strides = array<i32>} : memref<3x32xf32, #tpu.memory_space<vmem>>, vector<3x32xf32>,
    %c0_29 = arith.constant 0 : index
    %c0_30 = arith.constant 0 : index
    %63 = vector.load %arg21[%c0_29, %c0_30] : memref<11x32xf32, #tpu.memory_space<vmem>>, vector<8x32xf32>
    %c0_31 = arith.constant 0 : index
    %c0_32 = arith.constant 0 : index
    %64 = vector.load %arg8[%c0_31, %c0_32] : memref<4x32xf32, #tpu.memory_space<vmem>>, vector<1x32xf32>
    %65 = vector.broadcast %64 : vector<1x32xf32> to vector<8x32xf32>
    %66 = arith.mulf %63, %65 : vector<8x32xf32>
    %c1_33 = arith.constant 1 : index
    %c0_34 = arith.constant 0 : index
    %67 = vector.load %arg21[%c1_33, %c0_34] : memref<11x32xf32, #tpu.memory_space<vmem>>, vector<8x32xf32>
    %c1_35 = arith.constant 1 : index
    %c0_36 = arith.constant 0 : index
    %68 = vector.load %arg8[%c1_35, %c0_36] : memref<4x32xf32, #tpu.memory_space<vmem>>, vector<1x32xf32>
    %69 = vector.broadcast %68 : vector<1x32xf32> to vector<8x32xf32>
    %70 = arith.mulf %67, %69 : vector<8x32xf32>
    %71 = arith.addf %66, %70 : vector<8x32xf32>
    %c2 = arith.constant 2 : index
    %c0_37 = arith.constant 0 : index
    %72 = vector.load %arg21[%c2, %c0_37] : memref<11x32xf32, #tpu.memory_space<vmem>>, vector<8x32xf32>
    %c2_38 = arith.constant 2 : index
    %c0_39 = arith.constant 0 : index
    %73 = vector.load %arg8[%c2_38, %c0_39] : memref<4x32xf32, #tpu.memory_space<vmem>>, vector<1x32xf32>
    %74 = vector.broadcast %73 : vector<1x32xf32> to vector<8x32xf32>
    %75 = arith.mulf %72, %74 : vector<8x32xf32>
    %76 = arith.addf %71, %75 : vector<8x32xf32>
    %c3_40 = arith.constant 3 : index
    %c0_41 = arith.constant 0 : index
    %77 = vector.load %arg21[%c3_40, %c0_41] : memref<11x32xf32, #tpu.memory_space<vmem>>, vector<8x32xf32>
    %c3_42 = arith.constant 3 : index
    %c0_43 = arith.constant 0 : index
    %78 = vector.load %arg8[%c3_42, %c0_43] : memref<4x32xf32, #tpu.memory_space<vmem>>, vector<1x32xf32>
    %79 = vector.broadcast %78 : vector<1x32xf32> to vector<8x32xf32>
    %80 = arith.mulf %77, %79 : vector<8x32xf32>
    %81 = arith.addf %76, %80 : vector<8x32xf32>
    %cst_44 = arith.constant 0.000000e+00 : f32
    %82 = vector.broadcast %cst_44 : f32 to vector<8x32xf32>
    %83 = arith.subf %82, %81 : vector<8x32xf32>
    %84 = math.exp %83 : vector<8x32xf32>
    %cst_45 = arith.constant 1.000000e+00 : f32
    %85 = vector.broadcast %cst_45 : f32 to vector<8x32xf32>
    %86 = arith.addf %85, %84 : vector<8x32xf32>
    %cst_46 = arith.constant 1.000000e+00 : f32
    %87 = vector.broadcast %cst_46 : f32 to vector<8x32xf32>
    %88 = arith.divf %87, %86 : vector<8x32xf32>
    %89 = arith.mulf %81, %88 : vector<8x32xf32>
    %90 = vector.shape_cast %54 : vector<8x32xf32> to vector<8x1x32xf32>
    %c0_47 = arith.constant 0 : index
    %c0_48 = arith.constant 0 : index
    %91 = vector.load %arg9[%c0_47, %c0_48] : memref<16x32xf32, #tpu.memory_space<vmem>>, vector<16x32xf32>
    %92 = vector.shape_cast %91 : vector<16x32xf32> to vector<1x16x32xf32>
    %93 = vector.broadcast %90 : vector<8x1x32xf32> to vector<8x16x32xf32>
    %94 = vector.broadcast %92 : vector<1x16x32xf32> to vector<8x16x32xf32>
    %95 = arith.mulf %93, %94 : vector<8x16x32xf32>
    %96 = math.exp %95 : vector<8x16x32xf32>
    %c0_49 = arith.constant 0 : index
    %c0_50 = arith.constant 0 : index
    %97 = vector.load %arg11[%c0_49, %c0_50] : memref<16x32xf32, #tpu.memory_space<vmem>>, vector<16x32xf32>
    %98 = vector.shape_cast %97 : vector<16x32xf32> to vector<1x16x32xf32>
    %cst_51 = arith.constant 5.000000e-01 : f32
    %99 = vector.broadcast %cst_51 : f32 to vector<1x16x32xf32>
    %100 = arith.cmpf ogt, %98, %99 : vector<1x16x32xf32>
    %cst_52 = arith.constant 1.000000e+00 : f32
    %101 = vector.broadcast %cst_52 : f32 to vector<8x16x32xf32>
    %102 = arith.subf %96, %101 : vector<8x16x32xf32>
    %c0_53 = arith.constant 0 : index
    %c0_54 = arith.constant 0 : index
    %103 = vector.load %arg10[%c0_53, %c0_54] : memref<16x32xf32, #tpu.memory_space<vmem>>, vector<16x32xf32>
    %104 = vector.shape_cast %103 : vector<16x32xf32> to vector<1x16x32xf32>
    %105 = vector.broadcast %104 : vector<1x16x32xf32> to vector<8x16x32xf32>
    %106 = arith.mulf %102, %105 : vector<8x16x32xf32>
    %107 = vector.shape_cast %100 : vector<1x16x32xi1> to vector<1x16x32xi1>
    %108 = vector.broadcast %107 : vector<1x16x32xi1> to vector<8x16x32xi1>
    %109 = vector.shape_cast %90 : vector<8x1x32xf32> to vector<8x1x32xf32>
    %110 = vector.broadcast %109 : vector<8x1x32xf32> to vector<8x16x32xf32>
    %111 = arith.select %108, %110, %106 : vector<8x16x32xi1>, vector<8x16x32xf32>
    %112 = arith.truncf %96 : vector<8x16x32xf32> to vector<8x16x32xbf16>
    %c0_55 = arith.constant 0 : index
    %c0_56 = arith.constant 0 : index
    %c0_57 = arith.constant 0 : index
    %113 = vector.load %arg22[%c0_55, %c0_56, %c0_57] : memref<8x16x32xbf16, #tpu.memory_space<vmem>>, vector<8x16x32xbf16>
    tpu.vector_store %arg22[%c0_55, %c0_56, %c0_57], %112 {strides = array<i32>} : memref<8x16x32xbf16, #tpu.memory_space<vmem>>, vector<8x16x32xbf16>,
    %114 = vector.shape_cast %89 : vector<8x32xf32> to vector<8x1x32xf32>
    %115 = vector.broadcast %114 : vector<8x1x32xf32> to vector<8x16x32xf32>
    %116 = arith.mulf %111, %115 : vector<8x16x32xf32>
    %117 = arith.truncf %116 : vector<8x16x32xf32> to vector<8x16x32xbf16>
    %c0_58 = arith.constant 0 : index
    %c0_59 = arith.constant 0 : index
    %c0_60 = arith.constant 0 : index
    %118 = vector.load %arg23[%c0_58, %c0_59, %c0_60] : memref<8x16x32xbf16, #tpu.memory_space<vmem>>, vector<8x16x32xbf16>
    tpu.vector_store %arg23[%c0_58, %c0_59, %c0_60], %117 {strides = array<i32>} : memref<8x16x32xbf16, #tpu.memory_space<vmem>>, vector<8x16x32xbf16>,
    %c0_i32_61 = arith.constant 0 : i32
    %119 = arith.cmpi eq, %arg1, %c0_i32_61 : i32
    %120 = arith.extui %119 : i1 to i32
    %c0_i32_62 = arith.constant 0 : i32
    %121 = arith.cmpi ne, %120, %c0_i32_62 : i32
    scf.if %121 {
      %c0_198 = arith.constant 0 : index
      %c0_199 = arith.constant 0 : index
      %c0_200 = arith.constant 0 : index
      %453 = vector.load %arg23[%c0_198, %c0_199, %c0_200] : memref<8x16x32xbf16, #tpu.memory_space<vmem>>, vector<1x16x32xbf16>
      %454 = vector.shape_cast %453 : vector<1x16x32xbf16> to vector<16x32xbf16>
      %455 = arith.extf %454 : vector<16x32xbf16> to vector<16x32xf32>
      %c0_201 = arith.constant 0 : index
      %c0_202 = arith.constant 0 : index
      %456 = vector.load %arg24[%c0_201, %c0_202] : memref<16x32xf32, #tpu.memory_space<vmem>>, vector<16x32xf32>
      tpu.vector_store %arg24[%c0_201, %c0_202], %455 {strides = array<i32>} : memref<16x32xf32, #tpu.memory_space<vmem>>, vector<16x32xf32>,
    } else {
    }
    %c0_63 = arith.constant 0 : index
    %c0_64 = arith.constant 0 : index
    %122 = vector.load %arg24[%c0_63, %c0_64] : memref<16x32xf32, #tpu.memory_space<vmem>>, vector<16x32xf32>
    %c0_i32_65 = arith.constant 0 : i32
    %123 = arith.index_cast %c0_i32_65 : i32 to index
    %c0_66 = arith.constant 0 : index
    %c0_67 = arith.constant 0 : index
    %124 = vector.load %arg23[%123, %c0_66, %c0_67] : memref<8x16x32xbf16, #tpu.memory_space<vmem>>, vector<1x16x32xbf16>
    %125 = vector.shape_cast %124 : vector<1x16x32xbf16> to vector<16x32xbf16>
    %126 = arith.extf %125 : vector<16x32xbf16> to vector<16x32xf32>
    %127 = arith.index_cast %c0_i32_65 : i32 to index
    %c0_68 = arith.constant 0 : index
    %c0_69 = arith.constant 0 : index
    %128 = vector.load %arg22[%127, %c0_68, %c0_69] : memref<8x16x32xbf16, #tpu.memory_space<vmem>>, vector<1x16x32xbf16>
    %129 = vector.shape_cast %128 : vector<1x16x32xbf16> to vector<16x32xbf16>
    %130 = arith.extf %129 : vector<16x32xbf16> to vector<16x32xf32>
    %131 = arith.truncf %122 : vector<16x32xf32> to vector<16x32xbf16>
    %132 = arith.index_cast %c0_i32_65 : i32 to index
    %c0_70 = arith.constant 0 : index
    %c0_71 = arith.constant 0 : index
    %133 = vector.load %arg23[%132, %c0_70, %c0_71] : memref<8x16x32xbf16, #tpu.memory_space<vmem>>, vector<1x16x32xbf16>
    %134 = vector.shape_cast %133 : vector<1x16x32xbf16> to vector<16x32xbf16>
    %135 = vector.shape_cast %131 : vector<16x32xbf16> to vector<1x16x32xbf16>
    tpu.vector_store %arg23[%132, %c0_70, %c0_71], %135 {strides = array<i32>} : memref<8x16x32xbf16, #tpu.memory_space<vmem>>, vector<1x16x32xbf16>,
    %136 = arith.mulf %130, %122 : vector<16x32xf32>
    %137 = arith.addf %136, %126 : vector<16x32xf32>
    %c1_i32 = arith.constant 1 : i32
    %138 = arith.index_cast %c1_i32 : i32 to index
    %c0_72 = arith.constant 0 : index
    %c0_73 = arith.constant 0 : index
    %139 = vector.load %arg23[%138, %c0_72, %c0_73] : memref<8x16x32xbf16, #tpu.memory_space<vmem>>, vector<1x16x32xbf16>
    %140 = vector.shape_cast %139 : vector<1x16x32xbf16> to vector<16x32xbf16>
    %141 = arith.extf %140 : vector<16x32xbf16> to vector<16x32xf32>
    %142 = arith.index_cast %c1_i32 : i32 to index
    %c0_74 = arith.constant 0 : index
    %c0_75 = arith.constant 0 : index
    %143 = vector.load %arg22[%142, %c0_74, %c0_75] : memref<8x16x32xbf16, #tpu.memory_space<vmem>>, vector<1x16x32xbf16>
    %144 = vector.shape_cast %143 : vector<1x16x32xbf16> to vector<16x32xbf16>
    %145 = arith.extf %144 : vector<16x32xbf16> to vector<16x32xf32>
    %146 = arith.truncf %137 : vector<16x32xf32> to vector<16x32xbf16>
    %147 = arith.index_cast %c1_i32 : i32 to index
    %c0_76 = arith.constant 0 : index
    %c0_77 = arith.constant 0 : index
    %148 = vector.load %arg23[%147, %c0_76, %c0_77] : memref<8x16x32xbf16, #tpu.memory_space<vmem>>, vector<1x16x32xbf16>
    %149 = vector.shape_cast %148 : vector<1x16x32xbf16> to vector<16x32xbf16>
    %150 = vector.shape_cast %146 : vector<16x32xbf16> to vector<1x16x32xbf16>
    tpu.vector_store %arg23[%147, %c0_76, %c0_77], %150 {strides = array<i32>} : memref<8x16x32xbf16, #tpu.memory_space<vmem>>, vector<1x16x32xbf16>,
    %151 = arith.mulf %145, %137 : vector<16x32xf32>
    %152 = arith.addf %151, %141 : vector<16x32xf32>
    %c2_i32 = arith.constant 2 : i32
    %153 = arith.index_cast %c2_i32 : i32 to index
    %c0_78 = arith.constant 0 : index
    %c0_79 = arith.constant 0 : index
    %154 = vector.load %arg23[%153, %c0_78, %c0_79] : memref<8x16x32xbf16, #tpu.memory_space<vmem>>, vector<1x16x32xbf16>
    %155 = vector.shape_cast %154 : vector<1x16x32xbf16> to vector<16x32xbf16>
    %156 = arith.extf %155 : vector<16x32xbf16> to vector<16x32xf32>
    %157 = arith.index_cast %c2_i32 : i32 to index
    %c0_80 = arith.constant 0 : index
    %c0_81 = arith.constant 0 : index
    %158 = vector.load %arg22[%157, %c0_80, %c0_81] : memref<8x16x32xbf16, #tpu.memory_space<vmem>>, vector<1x16x32xbf16>
    %159 = vector.shape_cast %158 : vector<1x16x32xbf16> to vector<16x32xbf16>
    %160 = arith.extf %159 : vector<16x32xbf16> to vector<16x32xf32>
    %161 = arith.truncf %152 : vector<16x32xf32> to vector<16x32xbf16>
    %162 = arith.index_cast %c2_i32 : i32 to index
    %c0_82 = arith.constant 0 : index
    %c0_83 = arith.constant 0 : index
    %163 = vector.load %arg23[%162, %c0_82, %c0_83] : memref<8x16x32xbf16, #tpu.memory_space<vmem>>, vector<1x16x32xbf16>
    %164 = vector.shape_cast %163 : vector<1x16x32xbf16> to vector<16x32xbf16>
    %165 = vector.shape_cast %161 : vector<16x32xbf16> to vector<1x16x32xbf16>
    tpu.vector_store %arg23[%162, %c0_82, %c0_83], %165 {strides = array<i32>} : memref<8x16x32xbf16, #tpu.memory_space<vmem>>, vector<1x16x32xbf16>,
    %166 = arith.mulf %160, %152 : vector<16x32xf32>
    %167 = arith.addf %166, %156 : vector<16x32xf32>
    %c3_i32 = arith.constant 3 : i32
    %168 = arith.index_cast %c3_i32 : i32 to index
    %c0_84 = arith.constant 0 : index
    %c0_85 = arith.constant 0 : index
    %169 = vector.load %arg23[%168, %c0_84, %c0_85] : memref<8x16x32xbf16, #tpu.memory_space<vmem>>, vector<1x16x32xbf16>
    %170 = vector.shape_cast %169 : vector<1x16x32xbf16> to vector<16x32xbf16>
    %171 = arith.extf %170 : vector<16x32xbf16> to vector<16x32xf32>
    %172 = arith.index_cast %c3_i32 : i32 to index
    %c0_86 = arith.constant 0 : index
    %c0_87 = arith.constant 0 : index
    %173 = vector.load %arg22[%172, %c0_86, %c0_87] : memref<8x16x32xbf16, #tpu.memory_space<vmem>>, vector<1x16x32xbf16>
    %174 = vector.shape_cast %173 : vector<1x16x32xbf16> to vector<16x32xbf16>
    %175 = arith.extf %174 : vector<16x32xbf16> to vector<16x32xf32>
    %176 = arith.truncf %167 : vector<16x32xf32> to vector<16x32xbf16>
    %177 = arith.index_cast %c3_i32 : i32 to index
    %c0_88 = arith.constant 0 : index
    %c0_89 = arith.constant 0 : index
    %178 = vector.load %arg23[%177, %c0_88, %c0_89] : memref<8x16x32xbf16, #tpu.memory_space<vmem>>, vector<1x16x32xbf16>
    %179 = vector.shape_cast %178 : vector<1x16x32xbf16> to vector<16x32xbf16>
    %180 = vector.shape_cast %176 : vector<16x32xbf16> to vector<1x16x32xbf16>
    tpu.vector_store %arg23[%177, %c0_88, %c0_89], %180 {strides = array<i32>} : memref<8x16x32xbf16, #tpu.memory_space<vmem>>, vector<1x16x32xbf16>,
    %181 = arith.mulf %175, %167 : vector<16x32xf32>
    %182 = arith.addf %181, %171 : vector<16x32xf32>
    %c4_i32 = arith.constant 4 : i32
    %183 = arith.index_cast %c4_i32 : i32 to index
    %c0_90 = arith.constant 0 : index
    %c0_91 = arith.constant 0 : index
    %184 = vector.load %arg23[%183, %c0_90, %c0_91] : memref<8x16x32xbf16, #tpu.memory_space<vmem>>, vector<1x16x32xbf16>
    %185 = vector.shape_cast %184 : vector<1x16x32xbf16> to vector<16x32xbf16>
    %186 = arith.extf %185 : vector<16x32xbf16> to vector<16x32xf32>
    %187 = arith.index_cast %c4_i32 : i32 to index
    %c0_92 = arith.constant 0 : index
    %c0_93 = arith.constant 0 : index
    %188 = vector.load %arg22[%187, %c0_92, %c0_93] : memref<8x16x32xbf16, #tpu.memory_space<vmem>>, vector<1x16x32xbf16>
    %189 = vector.shape_cast %188 : vector<1x16x32xbf16> to vector<16x32xbf16>
    %190 = arith.extf %189 : vector<16x32xbf16> to vector<16x32xf32>
    %191 = arith.truncf %182 : vector<16x32xf32> to vector<16x32xbf16>
    %192 = arith.index_cast %c4_i32 : i32 to index
    %c0_94 = arith.constant 0 : index
    %c0_95 = arith.constant 0 : index
    %193 = vector.load %arg23[%192, %c0_94, %c0_95] : memref<8x16x32xbf16, #tpu.memory_space<vmem>>, vector<1x16x32xbf16>
    %194 = vector.shape_cast %193 : vector<1x16x32xbf16> to vector<16x32xbf16>
    %195 = vector.shape_cast %191 : vector<16x32xbf16> to vector<1x16x32xbf16>
    tpu.vector_store %arg23[%192, %c0_94, %c0_95], %195 {strides = array<i32>} : memref<8x16x32xbf16, #tpu.memory_space<vmem>>, vector<1x16x32xbf16>,
    %196 = arith.mulf %190, %182 : vector<16x32xf32>
    %197 = arith.addf %196, %186 : vector<16x32xf32>
    %c5_i32 = arith.constant 5 : i32
    %198 = arith.index_cast %c5_i32 : i32 to index
    %c0_96 = arith.constant 0 : index
    %c0_97 = arith.constant 0 : index
    %199 = vector.load %arg23[%198, %c0_96, %c0_97] : memref<8x16x32xbf16, #tpu.memory_space<vmem>>, vector<1x16x32xbf16>
    %200 = vector.shape_cast %199 : vector<1x16x32xbf16> to vector<16x32xbf16>
    %201 = arith.extf %200 : vector<16x32xbf16> to vector<16x32xf32>
    %202 = arith.index_cast %c5_i32 : i32 to index
    %c0_98 = arith.constant 0 : index
    %c0_99 = arith.constant 0 : index
    %203 = vector.load %arg22[%202, %c0_98, %c0_99] : memref<8x16x32xbf16, #tpu.memory_space<vmem>>, vector<1x16x32xbf16>
    %204 = vector.shape_cast %203 : vector<1x16x32xbf16> to vector<16x32xbf16>
    %205 = arith.extf %204 : vector<16x32xbf16> to vector<16x32xf32>
    %206 = arith.truncf %197 : vector<16x32xf32> to vector<16x32xbf16>
    %207 = arith.index_cast %c5_i32 : i32 to index
    %c0_100 = arith.constant 0 : index
    %c0_101 = arith.constant 0 : index
    %208 = vector.load %arg23[%207, %c0_100, %c0_101] : memref<8x16x32xbf16, #tpu.memory_space<vmem>>, vector<1x16x32xbf16>
    %209 = vector.shape_cast %208 : vector<1x16x32xbf16> to vector<16x32xbf16>
    %210 = vector.shape_cast %206 : vector<16x32xbf16> to vector<1x16x32xbf16>
    tpu.vector_store %arg23[%207, %c0_100, %c0_101], %210 {strides = array<i32>} : memref<8x16x32xbf16, #tpu.memory_space<vmem>>, vector<1x16x32xbf16>,
    %211 = arith.mulf %205, %197 : vector<16x32xf32>
    %212 = arith.addf %211, %201 : vector<16x32xf32>
    %c6_i32 = arith.constant 6 : i32
    %213 = arith.index_cast %c6_i32 : i32 to index
    %c0_102 = arith.constant 0 : index
    %c0_103 = arith.constant 0 : index
    %214 = vector.load %arg23[%213, %c0_102, %c0_103] : memref<8x16x32xbf16, #tpu.memory_space<vmem>>, vector<1x16x32xbf16>
    %215 = vector.shape_cast %214 : vector<1x16x32xbf16> to vector<16x32xbf16>
    %216 = arith.extf %215 : vector<16x32xbf16> to vector<16x32xf32>
    %217 = arith.index_cast %c6_i32 : i32 to index
    %c0_104 = arith.constant 0 : index
    %c0_105 = arith.constant 0 : index
    %218 = vector.load %arg22[%217, %c0_104, %c0_105] : memref<8x16x32xbf16, #tpu.memory_space<vmem>>, vector<1x16x32xbf16>
    %219 = vector.shape_cast %218 : vector<1x16x32xbf16> to vector<16x32xbf16>
    %220 = arith.extf %219 : vector<16x32xbf16> to vector<16x32xf32>
    %221 = arith.truncf %212 : vector<16x32xf32> to vector<16x32xbf16>
    %222 = arith.index_cast %c6_i32 : i32 to index
    %c0_106 = arith.constant 0 : index
    %c0_107 = arith.constant 0 : index
    %223 = vector.load %arg23[%222, %c0_106, %c0_107] : memref<8x16x32xbf16, #tpu.memory_space<vmem>>, vector<1x16x32xbf16>
    %224 = vector.shape_cast %223 : vector<1x16x32xbf16> to vector<16x32xbf16>
    %225 = vector.shape_cast %221 : vector<16x32xbf16> to vector<1x16x32xbf16>
    tpu.vector_store %arg23[%222, %c0_106, %c0_107], %225 {strides = array<i32>} : memref<8x16x32xbf16, #tpu.memory_space<vmem>>, vector<1x16x32xbf16>,
    %226 = arith.mulf %220, %212 : vector<16x32xf32>
    %227 = arith.addf %226, %216 : vector<16x32xf32>
    %c7_i32 = arith.constant 7 : i32
    %228 = arith.index_cast %c7_i32 : i32 to index
    %c0_108 = arith.constant 0 : index
    %c0_109 = arith.constant 0 : index
    %229 = vector.load %arg23[%228, %c0_108, %c0_109] : memref<8x16x32xbf16, #tpu.memory_space<vmem>>, vector<1x16x32xbf16>
    %230 = vector.shape_cast %229 : vector<1x16x32xbf16> to vector<16x32xbf16>
    %231 = arith.extf %230 : vector<16x32xbf16> to vector<16x32xf32>
    %232 = arith.index_cast %c7_i32 : i32 to index
    %c0_110 = arith.constant 0 : index
    %c0_111 = arith.constant 0 : index
    %233 = vector.load %arg22[%232, %c0_110, %c0_111] : memref<8x16x32xbf16, #tpu.memory_space<vmem>>, vector<1x16x32xbf16>
    %234 = vector.shape_cast %233 : vector<1x16x32xbf16> to vector<16x32xbf16>
    %235 = arith.extf %234 : vector<16x32xbf16> to vector<16x32xf32>
    %236 = arith.truncf %227 : vector<16x32xf32> to vector<16x32xbf16>
    %237 = arith.index_cast %c7_i32 : i32 to index
    %c0_112 = arith.constant 0 : index
    %c0_113 = arith.constant 0 : index
    %238 = vector.load %arg23[%237, %c0_112, %c0_113] : memref<8x16x32xbf16, #tpu.memory_space<vmem>>, vector<1x16x32xbf16>
    %239 = vector.shape_cast %238 : vector<1x16x32xbf16> to vector<16x32xbf16>
    %240 = vector.shape_cast %236 : vector<16x32xbf16> to vector<1x16x32xbf16>
    tpu.vector_store %arg23[%237, %c0_112, %c0_113], %240 {strides = array<i32>} : memref<8x16x32xbf16, #tpu.memory_space<vmem>>, vector<1x16x32xbf16>,
    %241 = arith.mulf %235, %227 : vector<16x32xf32>
    %242 = arith.addf %241, %231 : vector<16x32xf32>
    %c8_i32 = arith.constant 8 : i32
    %c0_114 = arith.constant 0 : index
    %c0_115 = arith.constant 0 : index
    %243 = vector.load %arg24[%c0_114, %c0_115] : memref<16x32xf32, #tpu.memory_space<vmem>>, vector<16x32xf32>
    tpu.vector_store %arg24[%c0_114, %c0_115], %242 {strides = array<i32>} : memref<16x32xf32, #tpu.memory_space<vmem>>, vector<16x32xf32>,
    %244 = vector.extract_strided_slice %31 {offsets = [0, 0], sizes = [8, 1], strides = [1, 1]} : vector<8x16xf32> to vector<8x1xf32>
    %c0_116 = arith.constant 0 : index
    %c0_117 = arith.constant 0 : index
    %c0_118 = arith.constant 0 : index
    %245 = vector.load %arg23[%c0_116, %c0_117, %c0_118] : memref<8x16x32xbf16, #tpu.memory_space<vmem>>, vector<8x1x32xbf16>
    %246 = vector.shape_cast %245 : vector<8x1x32xbf16> to vector<8x32xbf16>
    %247 = arith.extf %246 : vector<8x32xbf16> to vector<8x32xf32>
    %248 = vector.broadcast %244 : vector<8x1xf32> to vector<8x32xf32>
    %249 = arith.mulf %248, %247 : vector<8x32xf32>
    %250 = vector.extract_strided_slice %31 {offsets = [0, 1], sizes = [8, 1], strides = [1, 1]} : vector<8x16xf32> to vector<8x1xf32>
    %c0_119 = arith.constant 0 : index
    %c1_120 = arith.constant 1 : index
    %c0_121 = arith.constant 0 : index
    %251 = vector.load %arg23[%c0_119, %c1_120, %c0_121] : memref<8x16x32xbf16, #tpu.memory_space<vmem>>, vector<8x1x32xbf16>
    %252 = vector.shape_cast %251 : vector<8x1x32xbf16> to vector<8x32xbf16>
    %253 = arith.extf %252 : vector<8x32xbf16> to vector<8x32xf32>
    %254 = vector.broadcast %250 : vector<8x1xf32> to vector<8x32xf32>
    %255 = arith.mulf %254, %253 : vector<8x32xf32>
    %256 = arith.addf %249, %255 : vector<8x32xf32>
    %257 = vector.extract_strided_slice %31 {offsets = [0, 2], sizes = [8, 1], strides = [1, 1]} : vector<8x16xf32> to vector<8x1xf32>
    %c0_122 = arith.constant 0 : index
    %c2_123 = arith.constant 2 : index
    %c0_124 = arith.constant 0 : index
    %258 = vector.load %arg23[%c0_122, %c2_123, %c0_124] : memref<8x16x32xbf16, #tpu.memory_space<vmem>>, vector<8x1x32xbf16>
    %259 = vector.shape_cast %258 : vector<8x1x32xbf16> to vector<8x32xbf16>
    %260 = arith.extf %259 : vector<8x32xbf16> to vector<8x32xf32>
    %261 = vector.broadcast %257 : vector<8x1xf32> to vector<8x32xf32>
    %262 = arith.mulf %261, %260 : vector<8x32xf32>
    %263 = arith.addf %256, %262 : vector<8x32xf32>
    %264 = vector.extract_strided_slice %31 {offsets = [0, 3], sizes = [8, 1], strides = [1, 1]} : vector<8x16xf32> to vector<8x1xf32>
    %c0_125 = arith.constant 0 : index
    %c3_126 = arith.constant 3 : index
    %c0_127 = arith.constant 0 : index
    %265 = vector.load %arg23[%c0_125, %c3_126, %c0_127] : memref<8x16x32xbf16, #tpu.memory_space<vmem>>, vector<8x1x32xbf16>
    %266 = vector.shape_cast %265 : vector<8x1x32xbf16> to vector<8x32xbf16>
    %267 = arith.extf %266 : vector<8x32xbf16> to vector<8x32xf32>
    %268 = vector.broadcast %264 : vector<8x1xf32> to vector<8x32xf32>
    %269 = arith.mulf %268, %267 : vector<8x32xf32>
    %270 = arith.addf %263, %269 : vector<8x32xf32>
    %271 = vector.extract_strided_slice %31 {offsets = [0, 4], sizes = [8, 1], strides = [1, 1]} : vector<8x16xf32> to vector<8x1xf32>
    %c0_128 = arith.constant 0 : index
    %c4 = arith.constant 4 : index
    %c0_129 = arith.constant 0 : index
    %272 = vector.load %arg23[%c0_128, %c4, %c0_129] : memref<8x16x32xbf16, #tpu.memory_space<vmem>>, vector<8x1x32xbf16>
    %273 = vector.shape_cast %272 : vector<8x1x32xbf16> to vector<8x32xbf16>
    %274 = arith.extf %273 : vector<8x32xbf16> to vector<8x32xf32>
    %275 = vector.broadcast %271 : vector<8x1xf32> to vector<8x32xf32>
    %276 = arith.mulf %275, %274 : vector<8x32xf32>
    %277 = arith.addf %270, %276 : vector<8x32xf32>
    %278 = vector.extract_strided_slice %31 {offsets = [0, 5], sizes = [8, 1], strides = [1, 1]} : vector<8x16xf32> to vector<8x1xf32>
    %c0_130 = arith.constant 0 : index
    %c5 = arith.constant 5 : index
    %c0_131 = arith.constant 0 : index
    %279 = vector.load %arg23[%c0_130, %c5, %c0_131] : memref<8x16x32xbf16, #tpu.memory_space<vmem>>, vector<8x1x32xbf16>
    %280 = vector.shape_cast %279 : vector<8x1x32xbf16> to vector<8x32xbf16>
    %281 = arith.extf %280 : vector<8x32xbf16> to vector<8x32xf32>
    %282 = vector.broadcast %278 : vector<8x1xf32> to vector<8x32xf32>
    %283 = arith.mulf %282, %281 : vector<8x32xf32>
    %284 = arith.addf %277, %283 : vector<8x32xf32>
    %285 = vector.extract_strided_slice %31 {offsets = [0, 6], sizes = [8, 1], strides = [1, 1]} : vector<8x16xf32> to vector<8x1xf32>
    %c0_132 = arith.constant 0 : index
    %c6 = arith.constant 6 : index
    %c0_133 = arith.constant 0 : index
    %286 = vector.load %arg23[%c0_132, %c6, %c0_133] : memref<8x16x32xbf16, #tpu.memory_space<vmem>>, vector<8x1x32xbf16>
    %287 = vector.shape_cast %286 : vector<8x1x32xbf16> to vector<8x32xbf16>
    %288 = arith.extf %287 : vector<8x32xbf16> to vector<8x32xf32>
    %289 = vector.broadcast %285 : vector<8x1xf32> to vector<8x32xf32>
    %290 = arith.mulf %289, %288 : vector<8x32xf32>
    %291 = arith.addf %284, %290 : vector<8x32xf32>
    %292 = vector.extract_strided_slice %31 {offsets = [0, 7], sizes = [8, 1], strides = [1, 1]} : vector<8x16xf32> to vector<8x1xf32>
    %c0_134 = arith.constant 0 : index
    %c7 = arith.constant 7 : index
    %c0_135 = arith.constant 0 : index
    %293 = vector.load %arg23[%c0_134, %c7, %c0_135] : memref<8x16x32xbf16, #tpu.memory_space<vmem>>, vector<8x1x32xbf16>
    %294 = vector.shape_cast %293 : vector<8x1x32xbf16> to vector<8x32xbf16>
    %295 = arith.extf %294 : vector<8x32xbf16> to vector<8x32xf32>
    %296 = vector.broadcast %292 : vector<8x1xf32> to vector<8x32xf32>
    %297 = arith.mulf %296, %295 : vector<8x32xf32>
    %298 = arith.addf %291, %297 : vector<8x32xf32>
    %299 = vector.extract_strided_slice %31 {offsets = [0, 8], sizes = [8, 1], strides = [1, 1]} : vector<8x16xf32> to vector<8x1xf32>
    %c0_136 = arith.constant 0 : index
    %c8 = arith.constant 8 : index
    %c0_137 = arith.constant 0 : index
    %300 = vector.load %arg23[%c0_136, %c8, %c0_137] : memref<8x16x32xbf16, #tpu.memory_space<vmem>>, vector<8x1x32xbf16>
    %301 = vector.shape_cast %300 : vector<8x1x32xbf16> to vector<8x32xbf16>
    %302 = arith.extf %301 : vector<8x32xbf16> to vector<8x32xf32>
    %303 = vector.broadcast %299 : vector<8x1xf32> to vector<8x32xf32>
    %304 = arith.mulf %303, %302 : vector<8x32xf32>
    %305 = arith.addf %298, %304 : vector<8x32xf32>
    %306 = vector.extract_strided_slice %31 {offsets = [0, 9], sizes = [8, 1], strides = [1, 1]} : vector<8x16xf32> to vector<8x1xf32>
    %c0_138 = arith.constant 0 : index
    %c9 = arith.constant 9 : index
    %c0_139 = arith.constant 0 : index
    %307 = vector.load %arg23[%c0_138, %c9, %c0_139] : memref<8x16x32xbf16, #tpu.memory_space<vmem>>, vector<8x1x32xbf16>
    %308 = vector.shape_cast %307 : vector<8x1x32xbf16> to vector<8x32xbf16>
    %309 = arith.extf %308 : vector<8x32xbf16> to vector<8x32xf32>
    %310 = vector.broadcast %306 : vector<8x1xf32> to vector<8x32xf32>
    %311 = arith.mulf %310, %309 : vector<8x32xf32>
    %312 = arith.addf %305, %311 : vector<8x32xf32>
    %313 = vector.extract_strided_slice %31 {offsets = [0, 10], sizes = [8, 1], strides = [1, 1]} : vector<8x16xf32> to vector<8x1xf32>
    %c0_140 = arith.constant 0 : index
    %c10 = arith.constant 10 : index
    %c0_141 = arith.constant 0 : index
    %314 = vector.load %arg23[%c0_140, %c10, %c0_141] : memref<8x16x32xbf16, #tpu.memory_space<vmem>>, vector<8x1x32xbf16>
    %315 = vector.shape_cast %314 : vector<8x1x32xbf16> to vector<8x32xbf16>
    %316 = arith.extf %315 : vector<8x32xbf16> to vector<8x32xf32>
    %317 = vector.broadcast %313 : vector<8x1xf32> to vector<8x32xf32>
    %318 = arith.mulf %317, %316 : vector<8x32xf32>
    %319 = arith.addf %312, %318 : vector<8x32xf32>
    %320 = vector.extract_strided_slice %31 {offsets = [0, 11], sizes = [8, 1], strides = [1, 1]} : vector<8x16xf32> to vector<8x1xf32>
    %c0_142 = arith.constant 0 : index
    %c11 = arith.constant 11 : index
    %c0_143 = arith.constant 0 : index
    %321 = vector.load %arg23[%c0_142, %c11, %c0_143] : memref<8x16x32xbf16, #tpu.memory_space<vmem>>, vector<8x1x32xbf16>
    %322 = vector.shape_cast %321 : vector<8x1x32xbf16> to vector<8x32xbf16>
    %323 = arith.extf %322 : vector<8x32xbf16> to vector<8x32xf32>
    %324 = vector.broadcast %320 : vector<8x1xf32> to vector<8x32xf32>
    %325 = arith.mulf %324, %323 : vector<8x32xf32>
    %326 = arith.addf %319, %325 : vector<8x32xf32>
    %327 = vector.extract_strided_slice %31 {offsets = [0, 12], sizes = [8, 1], strides = [1, 1]} : vector<8x16xf32> to vector<8x1xf32>
    %c0_144 = arith.constant 0 : index
    %c12 = arith.constant 12 : index
    %c0_145 = arith.constant 0 : index
    %328 = vector.load %arg23[%c0_144, %c12, %c0_145] : memref<8x16x32xbf16, #tpu.memory_space<vmem>>, vector<8x1x32xbf16>
    %329 = vector.shape_cast %328 : vector<8x1x32xbf16> to vector<8x32xbf16>
    %330 = arith.extf %329 : vector<8x32xbf16> to vector<8x32xf32>
    %331 = vector.broadcast %327 : vector<8x1xf32> to vector<8x32xf32>
    %332 = arith.mulf %331, %330 : vector<8x32xf32>
    %333 = arith.addf %326, %332 : vector<8x32xf32>
    %334 = vector.extract_strided_slice %31 {offsets = [0, 13], sizes = [8, 1], strides = [1, 1]} : vector<8x16xf32> to vector<8x1xf32>
    %c0_146 = arith.constant 0 : index
    %c13 = arith.constant 13 : index
    %c0_147 = arith.constant 0 : index
    %335 = vector.load %arg23[%c0_146, %c13, %c0_147] : memref<8x16x32xbf16, #tpu.memory_space<vmem>>, vector<8x1x32xbf16>
    %336 = vector.shape_cast %335 : vector<8x1x32xbf16> to vector<8x32xbf16>
    %337 = arith.extf %336 : vector<8x32xbf16> to vector<8x32xf32>
    %338 = vector.broadcast %334 : vector<8x1xf32> to vector<8x32xf32>
    %339 = arith.mulf %338, %337 : vector<8x32xf32>
    %340 = arith.addf %333, %339 : vector<8x32xf32>
    %341 = vector.extract_strided_slice %31 {offsets = [0, 14], sizes = [8, 1], strides = [1, 1]} : vector<8x16xf32> to vector<8x1xf32>
    %c0_148 = arith.constant 0 : index
    %c14 = arith.constant 14 : index
    %c0_149 = arith.constant 0 : index
    %342 = vector.load %arg23[%c0_148, %c14, %c0_149] : memref<8x16x32xbf16, #tpu.memory_space<vmem>>, vector<8x1x32xbf16>
    %343 = vector.shape_cast %342 : vector<8x1x32xbf16> to vector<8x32xbf16>
    %344 = arith.extf %343 : vector<8x32xbf16> to vector<8x32xf32>
    %345 = vector.broadcast %341 : vector<8x1xf32> to vector<8x32xf32>
    %346 = arith.mulf %345, %344 : vector<8x32xf32>
    %347 = arith.addf %340, %346 : vector<8x32xf32>
    %348 = vector.extract_strided_slice %31 {offsets = [0, 15], sizes = [8, 1], strides = [1, 1]} : vector<8x16xf32> to vector<8x1xf32>
    %c0_150 = arith.constant 0 : index
    %c15 = arith.constant 15 : index
    %c0_151 = arith.constant 0 : index
    %349 = vector.load %arg23[%c0_150, %c15, %c0_151] : memref<8x16x32xbf16, #tpu.memory_space<vmem>>, vector<8x1x32xbf16>
    %350 = vector.shape_cast %349 : vector<8x1x32xbf16> to vector<8x32xbf16>
    %351 = arith.extf %350 : vector<8x32xbf16> to vector<8x32xf32>
    %352 = vector.broadcast %348 : vector<8x1xf32> to vector<8x32xf32>
    %353 = arith.mulf %352, %351 : vector<8x32xf32>
    %354 = arith.addf %347, %353 : vector<8x32xf32>
    %c0_152 = arith.constant 0 : index
    %c0_153 = arith.constant 0 : index
    %355 = vector.load %arg12[%c0_152, %c0_153] : memref<1x32xf32, #tpu.memory_space<vmem>>, vector<1x32xf32>
    %356 = vector.broadcast %355 : vector<1x32xf32> to vector<8x32xf32>
    %357 = arith.mulf %89, %356 : vector<8x32xf32>
    %358 = arith.addf %354, %357 : vector<8x32xf32>
    %cst_154 = arith.constant 0.000000e+00 : f32
    %359 = vector.broadcast %cst_154 : f32 to vector<8x32xf32>
    %360 = arith.subf %359, %29 : vector<8x32xf32>
    %361 = math.exp %360 : vector<8x32xf32>
    %cst_155 = arith.constant 1.000000e+00 : f32
    %362 = vector.broadcast %cst_155 : f32 to vector<8x32xf32>
    %363 = arith.addf %362, %361 : vector<8x32xf32>
    %cst_156 = arith.constant 1.000000e+00 : f32
    %364 = vector.broadcast %cst_156 : f32 to vector<8x32xf32>
    %365 = arith.divf %364, %363 : vector<8x32xf32>
    %366 = arith.mulf %29, %365 : vector<8x32xf32>
    %367 = arith.mulf %358, %366 : vector<8x32xf32>
    %368 = arith.truncf %367 : vector<8x32xf32> to vector<8x32xbf16>
    %c0_157 = arith.constant 0 : index
    %c0_158 = arith.constant 0 : index
    %369 = vector.load %arg13[%c0_157, %c0_158] : memref<32x32xbf16, #tpu.memory_space<vmem>>, vector<32x32xbf16>
    %cst_159 = arith.constant dense<0.000000e+00> : vector<8x32xf32>
    %370 = tpu.matmul %368, %369, %cst_159 {dimension_numbers = #tpu.dot_dimension_numbers<[1], [0], [0], [1], [0, 0, 1, 1], [], []>} : vector<8x32xbf16>, vector<32x32xbf16>, vector<8x32xf32> -> vector<8x32xf32>
    %371 = arith.addf %1, %370 : vector<8x32xf32>
    %c0_160 = arith.constant 0 : index
    %c0_161 = arith.constant 0 : index
    %372 = vector.load %arg14[%c0_160, %c0_161] : memref<1x32xf32, #tpu.memory_space<vmem>>, vector<1x32xf32>
    %c0_162 = arith.constant 0 : index
    %c0_163 = arith.constant 0 : index
    %373 = vector.load %arg15[%c0_162, %c0_163] : memref<1x32xf32, #tpu.memory_space<vmem>>, vector<1x32xf32>
    %cst_164 = arith.constant dense<0.000000e+00> : vector<8xf32>
    %374 = vector.multi_reduction <add>, %371, %cst_164 [1] : vector<8x32xf32> to vector<8xf32>
    %375 = vector.shape_cast %374 : vector<8xf32> to vector<8x1xf32>
    %cst_165 = arith.constant 3.200000e+01 : f32
    %376 = vector.broadcast %cst_165 : f32 to vector<8x1xf32>
    %377 = arith.divf %375, %376 : vector<8x1xf32>
    %378 = vector.broadcast %377 : vector<8x1xf32> to vector<8x32xf32>
    %379 = arith.subf %371, %378 : vector<8x32xf32>
    %380 = arith.mulf %379, %379 : vector<8x32xf32>
    %cst_166 = arith.constant dense<0.000000e+00> : vector<8xf32>
    %381 = vector.multi_reduction <add>, %380, %cst_166 [1] : vector<8x32xf32> to vector<8xf32>
    %382 = vector.shape_cast %381 : vector<8xf32> to vector<8x1xf32>
    %cst_167 = arith.constant 3.200000e+01 : f32
    %383 = vector.broadcast %cst_167 : f32 to vector<8x1xf32>
    %384 = arith.divf %382, %383 : vector<8x1xf32>
    %385 = vector.broadcast %377 : vector<8x1xf32> to vector<8x32xf32>
    %386 = arith.subf %371, %385 : vector<8x32xf32>
    %cst_168 = arith.constant 9.99999974E-6 : f32
    %387 = vector.broadcast %cst_168 : f32 to vector<8x1xf32>
    %388 = arith.addf %384, %387 : vector<8x1xf32>
    %389 = math.rsqrt %388 : vector<8x1xf32>
    %390 = vector.broadcast %389 : vector<8x1xf32> to vector<8x32xf32>
    %391 = arith.mulf %386, %390 : vector<8x32xf32>
    %392 = vector.broadcast %372 : vector<1x32xf32> to vector<8x32xf32>
    %393 = arith.mulf %391, %392 : vector<8x32xf32>
    %394 = vector.broadcast %373 : vector<1x32xf32> to vector<8x32xf32>
    %395 = arith.addf %393, %394 : vector<8x32xf32>
    %396 = arith.truncf %395 : vector<8x32xf32> to vector<8x32xbf16>
    %c0_169 = arith.constant 0 : index
    %c0_170 = arith.constant 0 : index
    %397 = vector.load %arg16[%c0_169, %c0_170] : memref<32x128xbf16, #tpu.memory_space<vmem>>, vector<32x128xbf16>
    %cst_171 = arith.constant dense<0.000000e+00> : vector<8x128xf32>
    %398 = tpu.matmul %396, %397, %cst_171 {dimension_numbers = #tpu.dot_dimension_numbers<[1], [0], [0], [1], [0, 0, 1, 1], [], []>} : vector<8x32xbf16>, vector<32x128xbf16>, vector<8x128xf32> -> vector<8x128xf32>
    %c0_172 = arith.constant 0 : index
    %c0_173 = arith.constant 0 : index
    %399 = vector.load %arg17[%c0_172, %c0_173] : memref<1x128xf32, #tpu.memory_space<vmem>>, vector<1x128xf32>
    %400 = vector.broadcast %399 : vector<1x128xf32> to vector<8x128xf32>
    %401 = arith.addf %398, %400 : vector<8x128xf32>
    %cst_174 = arith.constant 5.000000e-01 : f32
    %402 = vector.broadcast %cst_174 : f32 to vector<8x128xf32>
    %403 = arith.mulf %402, %401 : vector<8x128xf32>
    %cst_175 = arith.constant 0.707106769 : f32
    %404 = vector.broadcast %cst_175 : f32 to vector<8x128xf32>
    %405 = arith.mulf %401, %404 : vector<8x128xf32>
    %cst_176 = arith.constant 0.000000e+00 : f32
    %406 = vector.broadcast %cst_176 : f32 to vector<8x128xf32>
    %407 = arith.cmpf oge, %405, %406 : vector<8x128xf32>
    %cst_177 = arith.constant 1.000000e+00 : f32
    %cst_178 = arith.constant -1.000000e+00 : f32
    %408 = vector.broadcast %cst_177 : f32 to vector<8x128xf32>
    %409 = vector.broadcast %cst_178 : f32 to vector<8x128xf32>
    %410 = arith.select %407, %408, %409 : vector<8x128xi1>, vector<8x128xf32>
    %411 = math.absf %405 : vector<8x128xf32>
    %cst_179 = arith.constant 0.327591091 : f32
    %412 = vector.broadcast %cst_179 : f32 to vector<8x128xf32>
    %413 = arith.mulf %412, %411 : vector<8x128xf32>
    %cst_180 = arith.constant 1.000000e+00 : f32
    %414 = vector.broadcast %cst_180 : f32 to vector<8x128xf32>
    %415 = arith.addf %414, %413 : vector<8x128xf32>
    %cst_181 = arith.constant 1.000000e+00 : f32
    %416 = vector.broadcast %cst_181 : f32 to vector<8x128xf32>
    %417 = arith.divf %416, %415 : vector<8x128xf32>
    %cst_182 = arith.constant 1.06140542 : f32
    %418 = vector.broadcast %cst_182 : f32 to vector<8x128xf32>
    %419 = arith.mulf %418, %417 : vector<8x128xf32>
    %cst_183 = arith.constant -1.45315206 : f32
    %420 = vector.broadcast %cst_183 : f32 to vector<8x128xf32>
    %421 = arith.addf %419, %420 : vector<8x128xf32>
    %422 = arith.mulf %421, %417 : vector<8x128xf32>
    %cst_184 = arith.constant 1.42141378 : f32
    %423 = vector.broadcast %cst_184 : f32 to vector<8x128xf32>
    %424 = arith.addf %422, %423 : vector<8x128xf32>
    %425 = arith.mulf %424, %417 : vector<8x128xf32>
    %cst_185 = arith.constant -0.284496725 : f32
    %426 = vector.broadcast %cst_185 : f32 to vector<8x128xf32>
    %427 = arith.addf %425, %426 : vector<8x128xf32>
    %428 = arith.mulf %427, %417 : vector<8x128xf32>
    %cst_186 = arith.constant 0.254829586 : f32
    %429 = vector.broadcast %cst_186 : f32 to vector<8x128xf32>
    %430 = arith.addf %428, %429 : vector<8x128xf32>
    %431 = arith.mulf %430, %417 : vector<8x128xf32>
    %cst_187 = arith.constant 0.000000e+00 : f32
    %432 = vector.broadcast %cst_187 : f32 to vector<8x128xf32>
    %433 = arith.subf %432, %411 : vector<8x128xf32>
    %434 = arith.mulf %433, %411 : vector<8x128xf32>
    %435 = math.exp %434 : vector<8x128xf32>
    %436 = arith.mulf %431, %435 : vector<8x128xf32>
    %cst_188 = arith.constant 1.000000e+00 : f32
    %437 = vector.broadcast %cst_188 : f32 to vector<8x128xf32>
    %438 = arith.subf %437, %436 : vector<8x128xf32>
    %439 = arith.mulf %410, %438 : vector<8x128xf32>
    %cst_189 = arith.constant 1.000000e+00 : f32
    %440 = vector.broadcast %cst_189 : f32 to vector<8x128xf32>
    %441 = arith.addf %440, %439 : vector<8x128xf32>
    %442 = arith.mulf %403, %441 : vector<8x128xf32>
    %443 = arith.truncf %442 : vector<8x128xf32> to vector<8x128xbf16>
    %c0_190 = arith.constant 0 : index
    %c0_191 = arith.constant 0 : index
    %444 = vector.load %arg18[%c0_190, %c0_191] : memref<128x32xbf16, #tpu.memory_space<vmem>>, vector<128x32xbf16>
    %cst_192 = arith.constant dense<0.000000e+00> : vector<8x32xf32>
    %445 = tpu.matmul %443, %444, %cst_192 {dimension_numbers = #tpu.dot_dimension_numbers<[1], [0], [0], [1], [0, 0, 1, 1], [], []>} : vector<8x128xbf16>, vector<128x32xbf16>, vector<8x32xf32> -> vector<8x32xf32>
    %c0_193 = arith.constant 0 : index
    %c0_194 = arith.constant 0 : index
    %446 = vector.load %arg19[%c0_193, %c0_194] : memref<1x32xf32, #tpu.memory_space<vmem>>, vector<1x32xf32>
    %447 = vector.broadcast %446 : vector<1x32xf32> to vector<8x32xf32>
    %448 = arith.addf %445, %447 : vector<8x32xf32>
    %449 = arith.addf %371, %448 : vector<8x32xf32>
    %c0_195 = arith.constant 0 : index
    %c0_196 = arith.constant 0 : index
    %c0_197 = arith.constant 0 : index
    %450 = vector.load %arg20[%c0_195, %c0_196, %c0_197] : memref<1x8x32xf32, #tpu.memory_space<vmem>>, vector<1x8x32xf32>
    %451 = vector.shape_cast %450 : vector<1x8x32xf32> to vector<8x32xf32>
    %452 = vector.shape_cast %449 : vector<8x32xf32> to vector<1x8x32xf32>
    tpu.vector_store %arg20[%c0_195, %c0_196, %c0_197], %452 {strides = array<i32>} : memref<1x8x32xf32, #tpu.memory_space<vmem>>, vector<1x8x32xf32>,
    return
  }
  func.func @transform_0(%arg0: i32, %arg1: i32) -> (i32, i32, i32) {
    %c0_i32 = arith.constant 0 : i32
    %c0_i32_0 = arith.constant 0 : i32
    return %arg0, %arg1, %c0_i32 : i32, i32, i32
  }
  func.func @transform_1(%arg0: i32, %arg1: i32) -> (i32, i32) {
    %c0_i32 = arith.constant 0 : i32
    %c0_i32_0 = arith.constant 0 : i32
    %c0_i32_1 = arith.constant 0 : i32
    return %c0_i32, %c0_i32_0 : i32, i32
  }
  func.func @transform_2(%arg0: i32, %arg1: i32) -> (i32, i32) {
    %c0_i32 = arith.constant 0 : i32
    %c0_i32_0 = arith.constant 0 : i32
    %c0_i32_1 = arith.constant 0 : i32
    return %c0_i32, %c0_i32_0 : i32, i32
  }
  func.func @transform_3(%arg0: i32, %arg1: i32) -> (i32, i32) {
    %c0_i32 = arith.constant 0 : i32
    %c0_i32_0 = arith.constant 0 : i32
    %c0_i32_1 = arith.constant 0 : i32
    return %c0_i32, %c0_i32_0 : i32, i32
  }
  func.func @transform_4(%arg0: i32, %arg1: i32) -> (i32, i32) {
    %c0_i32 = arith.constant 0 : i32
    %c0_i32_0 = arith.constant 0 : i32
    %c0_i32_1 = arith.constant 0 : i32
    return %c0_i32, %c0_i32_0 : i32, i32
  }
  func.func @transform_5(%arg0: i32, %arg1: i32) -> (i32, i32) {
    %c0_i32 = arith.constant 0 : i32
    %c0_i32_0 = arith.constant 0 : i32
    %c0_i32_1 = arith.constant 0 : i32
    return %c0_i32, %c0_i32_0 : i32, i32
  }
  func.func @transform_6(%arg0: i32, %arg1: i32) -> (i32, i32) {
    %c0_i32 = arith.constant 0 : i32
    %c0_i32_0 = arith.constant 0 : i32
    %c0_i32_1 = arith.constant 0 : i32
    return %c0_i32, %c0_i32_0 : i32, i32
  }
  func.func @transform_7(%arg0: i32, %arg1: i32) -> (i32, i32) {
    %c0_i32 = arith.constant 0 : i32
    %c0_i32_0 = arith.constant 0 : i32
    %c0_i32_1 = arith.constant 0 : i32
    return %c0_i32, %c0_i32_0 : i32, i32
  }
  func.func @transform_8(%arg0: i32, %arg1: i32) -> (i32, i32) {
    %c0_i32 = arith.constant 0 : i32
    %c0_i32_0 = arith.constant 0 : i32
    %c0_i32_1 = arith.constant 0 : i32
    return %c0_i32, %c0_i32_0 : i32, i32
  }
  func.func @transform_9(%arg0: i32, %arg1: i32) -> (i32, i32) {
    %c0_i32 = arith.constant 0 : i32
    %c0_i32_0 = arith.constant 0 : i32
    %c0_i32_1 = arith.constant 0 : i32
    return %c0_i32, %c0_i32_0 : i32, i32
  }
  func.func @transform_10(%arg0: i32, %arg1: i32) -> (i32, i32) {
    %c0_i32 = arith.constant 0 : i32
    %c0_i32_0 = arith.constant 0 : i32
    %c0_i32_1 = arith.constant 0 : i32
    return %c0_i32, %c0_i32_0 : i32, i32
  }
  func.func @transform_11(%arg0: i32, %arg1: i32) -> (i32, i32) {
    %c0_i32 = arith.constant 0 : i32
    %c0_i32_0 = arith.constant 0 : i32
    %c0_i32_1 = arith.constant 0 : i32
    return %c0_i32, %c0_i32_0 : i32, i32
  }
  func.func @transform_12(%arg0: i32, %arg1: i32) -> (i32, i32) {
    %c0_i32 = arith.constant 0 : i32
    %c0_i32_0 = arith.constant 0 : i32
    %c0_i32_1 = arith.constant 0 : i32
    return %c0_i32, %c0_i32_0 : i32, i32
  }
  func.func @transform_13(%arg0: i32, %arg1: i32) -> (i32, i32) {
    %c0_i32 = arith.constant 0 : i32
    %c0_i32_0 = arith.constant 0 : i32
    %c0_i32_1 = arith.constant 0 : i32
    return %c0_i32, %c0_i32_0 : i32, i32
  }
  func.func @transform_14(%arg0: i32, %arg1: i32) -> (i32, i32) {
    %c0_i32 = arith.constant 0 : i32
    %c0_i32_0 = arith.constant 0 : i32
    %c0_i32_1 = arith.constant 0 : i32
    return %c0_i32, %c0_i32_0 : i32, i32
  }
  func.func @transform_15(%arg0: i32, %arg1: i32) -> (i32, i32) {
    %c0_i32 = arith.constant 0 : i32
    %c0_i32_0 = arith.constant 0 : i32
    %c0_i32_1 = arith.constant 0 : i32
    return %c0_i32, %c0_i32_0 : i32, i32
  }
  func.func @transform_16(%arg0: i32, %arg1: i32) -> (i32, i32) {
    %c0_i32 = arith.constant 0 : i32
    %c0_i32_0 = arith.constant 0 : i32
    %c0_i32_1 = arith.constant 0 : i32
    return %c0_i32, %c0_i32_0 : i32, i32
  }
  func.func @transform_17(%arg0: i32, %arg1: i32) -> (i32, i32) {
    %c0_i32 = arith.constant 0 : i32
    %c0_i32_0 = arith.constant 0 : i32
    %c0_i32_1 = arith.constant 0 : i32
    return %c0_i32, %c0_i32_0 : i32, i32
  }
  func.func @transform_18(%arg0: i32, %arg1: i32) -> (i32, i32, i32) {
    %c0_i32 = arith.constant 0 : i32
    %c0_i32_0 = arith.constant 0 : i32
    return %arg0, %arg1, %c0_i32 : i32, i32, i32
  }
}

</mosaic_0001>

<llo_original>
// kernel: tpu_custom_call.1
$region0: #{tpu_custom_call.1}
  #allocation0 [shape = 'u32[]', space=smem, size = 0x4, offset = 0x4, fixed_abs, tag = 'smem constant byte address 0x4 - core index']
  #allocation1 [shape = 'u32[72,128]{1,0:T(1,128)}', space=vmem, size = 0x9000, scoped, tag = 'internal scratch']
  #allocation2 [shape = 'f32[11,32]{1,0:T(8,128)}', space=vmem, size = 0x2000, scoped, tag = 'scratch operand']
  #allocation3 [shape = 'bf16[8,16,32]{2,1,0:T(8,128)(2,1)}', space=vmem, size = 0x8000, scoped, tag = 'scratch operand']
  #allocation4 [shape = 'bf16[8,16,32]{2,1,0:T(8,128)(2,1)}', space=vmem, size = 0x8000, scoped, tag = 'scratch operand']
  #allocation5 [shape = 'f32[16,32]{1,0:T(8,128)}', space=vmem, size = 0x2000, scoped, tag = 'scratch operand']
  #allocation6 [shape = 'f32[3,32]{1,0:T(4,128)}', space=vmem, size = 0x800, scoped, tag = 'scratch operand']
  %s0 = inlined_call_operand.vmem [shape: f32[2,16,32], index: 0, kind: input, shape index: {}]
  %s1 = inlined_call_operand.hbm [shape: f32[1,32], index: 1, kind: input, shape index: {}]
  %s2 = inlined_call_operand.hbm [shape: f32[1,32], index: 2, kind: input, shape index: {}]
  %s3 = inlined_call_operand.vmem [shape: bf16[32,50], index: 3, kind: input, shape index: {}]
  %s4 = inlined_call_operand.hbm [shape: f32[2,32], index: 4, kind: input, shape index: {}]
  %s5 = inlined_call_operand.hbm [shape: f32[1,32], index: 5, kind: input, shape index: {}]
  %s6 = inlined_call_operand.vmem [shape: f32[4,32], index: 6, kind: input, shape index: {}]
  %s7 = inlined_call_operand.vmem [shape: f32[16,32], index: 7, kind: input, shape index: {}]
  %s8 = inlined_call_operand.vmem [shape: f32[16,32], index: 8, kind: input, shape index: {}]
  %s9 = inlined_call_operand.hbm [shape: f32[16,32], index: 9, kind: input, shape index: {}]
  %s10 = inlined_call_operand.vmem [shape: f32[1,32], index: 10, kind: input, shape index: {}]
  %s11 = inlined_call_operand.hbm [shape: bf16[32,32], index: 11, kind: input, shape index: {}]
  %s12 = inlined_call_operand.vmem [shape: f32[1,32], index: 12, kind: input, shape index: {}]
  %s13 = inlined_call_operand.vmem [shape: f32[1,32], index: 13, kind: input, shape index: {}]
  %s14 = inlined_call_operand.hbm [shape: bf16[32,128], index: 14, kind: input, shape index: {}]
  %s15 = inlined_call_operand.vmem [shape: f32[1,128], index: 15, kind: input, shape index: {}]
  %s16 = inlined_call_operand.vmem [shape: bf16[128,32], index: 16, kind: input, shape index: {}]
  %s17 = inlined_call_operand.vmem [shape: f32[1,32], index: 17, kind: input, shape index: {}]
  %s18 = inlined_call_operand.hbm [shape: f32[2,16,32], index: 18, kind: output, shape index: {}]
  %s19 = sld [smem:[#allocation0]]
  $region141: #{tpu_custom_call.1} parent=0
    _
  %s21 = ssub.s32 1, %s19
  %s22 = scalar_select 0, %s21, %s19
  $region1: #{tpu_custom_call.1} parent=0
    #allocation7 [shape = 'u8[512]{0}', space=vmem, size = 0x400, scoped, tag = 'input window, operand 1, single buffered']
    #allocation8 [shape = 's32[2]{0}', space=sflag, size = 0x8, scoped, tag = 'scoped memory for tpu_custom_call.1']
    #allocation9 [shape = 's32[2]{0}', space=sflag, size = 0x8, scoped, tag = 'scoped memory for tpu_custom_call.1']
    #allocation10 [shape = 'u8[512]{0}', space=vmem, size = 0x400, scoped, tag = 'input window, operand 2, single buffered']
    #allocation11 [shape = 's32[1]{0}', space=sflag, size = 0x4, scoped, tag = 'scoped memory for tpu_custom_call.1']
    #allocation12 [shape = 'u8[1024]{0}', space=vmem, size = 0x400, scoped, tag = 'input window, operand 4, single buffered']
    #allocation13 [shape = 'u8[512]{0}', space=vmem, size = 0x400, scoped, tag = 'input window, operand 5, single buffered']
    #allocation14 [shape = 's32[1]{0}', space=sflag, size = 0x4, scoped, tag = 'scoped memory for tpu_custom_call.1']
    #allocation15 [shape = 'u8[8192]{0}', space=vmem, size = 0x2000, scoped, tag = 'input window, operand 9, single buffered']
    #allocation16 [shape = 'u8[8192]{0}', space=vmem, size = 0x2000, scoped, tag = 'input window, operand 11, single buffered']
    #allocation17 [shape = 's32[1]{0}', space=sflag, size = 0x4, scoped, tag = 'scoped memory for tpu_custom_call.1']
    #allocation18 [shape = 'u8[8192]{0}', space=vmem, size = 0x2000, scoped, tag = 'input window, operand 14, single buffered']
    #allocation19 [shape = 'u8[8192]{0}', space=vmem, size = 0x2000, scoped, tag = 'output window, operand 0']
    %23 = vsyncpa [#allocation8], 0
    %24 = vsyncpa [#allocation11], 0
    %25 = vsyncpa [#allocation14], 0
    %26 = vsyncpa [#allocation17], 0
    %27 = vsyncpa [#allocation9], 0
    %s28 = scalar_lea.sflag [#allocation9], 1
    %29 = vsyncpa %s28, 0
    loop: start=0, step=1, limit=6
    $region2: #{tpu_custom_call.1} parent=1 // loop_pre_header
      _
    $region3: #{tpu_custom_call.1} parent=1 // loop_header
      %s31 = sphi 0, %s35
      %p32 = scmp.ge.s32.totalorder %s31, 6
      %s38 = sphi 0, %s50
      %s39 = sphi 0, %s46
      %s40 = sphi 0, %s38
      %s41 = sphi 0, %s39
      %s42 = sphi 0, %s40
      %s43 = sphi 0, %s41
      %s55 = sphi 0, %s57
      %s58 = sphi 0, %s55
      %s59 = sphi 0, %s58
      %s75 = sphi 0, %s59
      %s79 = sphi 0, %s79
      %s81 = sphi 0, %s79
      %s82 = sphi 0, %s81
      %s96 = sphi 0, %s82
      %s100 = sphi 0, %s100
      %s102 = sphi 0, %s100
      %s103 = sphi 0, %s102
      %s117 = sphi 0, %s103
      %s121 = sphi 0, %s121
      %s123 = sphi 0, %s121
      %s124 = sphi 0, %s123
      %s138 = sphi 0, %s124
      %s142 = sphi 0, %s142
      %s144 = sphi 0, %s142
      %s145 = sphi 0, %s144
      %s159 = sphi 0, %s145
      %s163 = sphi 0, %s163
      %s165 = sphi 0, %s163
      %s166 = sphi 0, %s165
      %s180 = sphi 0, %s166
      %s184 = sphi 0, %s184
      %s186 = sphi 0, %s184
      %s187 = sphi 0, %s186
      %s201 = sphi 0, %s187
      %s205 = sphi 0, %s205
      %s207 = sphi 0, %s205
      %s208 = sphi 0, %s207
      %s222 = sphi 0, %s208
      %s226 = sphi 0, %s226
      %s228 = sphi 0, %s226
      %s229 = sphi 0, %s228
      %s243 = sphi 0, %s229
      %s247 = sphi 0, %s247
      %s249 = sphi 0, %s247
      %s250 = sphi 0, %s249
      %s264 = sphi 0, %s250
      %s268 = sphi 0, %s268
      %s270 = sphi 0, %s268
      %s271 = sphi 0, %s270
      %s285 = sphi 0, %s271
      %s289 = sphi 0, %s289
      %s291 = sphi 0, %s289
      %s292 = sphi 0, %s291
      %s306 = sphi 0, %s292
      %s310 = sphi 0, %s310
      %s312 = sphi 0, %s310
      %s313 = sphi 0, %s312
      %s327 = sphi 0, %s313
      %s331 = sphi 0, %s331
      %s333 = sphi 0, %s331
      %s334 = sphi 0, %s333
      %s348 = sphi 0, %s334
      %s352 = sphi 0, %s352
      %s354 = sphi 0, %s352
      %s355 = sphi 0, %s354
      %s369 = sphi 0, %s355
      %s373 = sphi 0, %s373
      %s375 = sphi 0, %s373
      %s376 = sphi 0, %s375
      %s390 = sphi 0, %s376
      %s394 = sphi 0, %s394
      %s396 = sphi 0, %s394
      %s397 = sphi 0, %s396
      %s411 = sphi 0, %s397
      %s415 = sphi 0, %s415
      %s417 = sphi 0, %s415
      %s418 = sphi 0, %s417
      %s432 = sphi 0, %s418
      %s440 = sphi 0, %s442
      %s443 = sphi 0, %s440
      %s444 = sphi 0, %s443
      %s460 = sphi 0, %s444
    $region4: #{tpu_custom_call.1} parent=1 // loop_header_branch
      %34 = sbr.rel (%p32) target = $region8
    $region5: #{tpu_custom_call.1} parent=1 // loop_body
      %s36 = ssub.s32 %s31, 1
      %s37 = ssub.s32 %s31, 2
      %s44 = sadd.s32 1, %s39
      %p45 = scmp.ge.s32.totalorder %s44, 2
      %s46 = scalar_select %p45, 0, %s44
      %s47 = sadd.s32 1, %s38
      %s48 = scalar_select %p45, %s47, %s38
      %p49 = scmp.ge.s32.totalorder %s48, 2
      %s50 = scalar_select %p49, 0, %s48
      %s51 = ssub.s32 %s38, %s50
      %s52 = ssub.s32 %s39, %s46
      %s53 = sor.u32 %s51, %s52
      %p54 = scmp.eq.s32.totalorder %s53, 0
      %s56 = sadd.s32 %s55, 1
      %s57 = scalar_select %p54, %s55, %s56
      %p60 = pneg %p54
      %p61 = scmp.eq.s32.totalorder %s31, 3
      %p62 = por %p60, %p61
      %p63 = scmp.ne.s32.totalorder %s55, %s58
      %p64 = scmp.eq.s32.totalorder %s31, 0
      %p65 = por %p63, %p64
      %p66 = scmp.ne.s32.totalorder %s55, %s58
      %p67 = scmp.eq.s32.totalorder %s36, 3
      %p68 = por %p66, %p67
      %p69 = scmp.ne.s32.totalorder %s58, %s59
      %p70 = scmp.eq.s32.totalorder %s36, 0
      %p71 = por %p69, %p70
      %p72 = scmp.ne.s32.totalorder %s58, %s59
      %p73 = scmp.eq.s32.totalorder %s37, 3
      %p74 = por %p72, %p73
      %p76 = scmp.ne.s32.totalorder %s59, %s75
      %p77 = scmp.eq.s32.totalorder %s37, 0
      %p78 = por %p76, %p77
      %s80 = sadd.s32 %s79, 1
      %p83 = scmp.eq.s32.totalorder %s31, 3
      %p84 = scmp.ne.s32.totalorder %s79, %s81
      %p85 = scmp.eq.s32.totalorder %s31, 0
      %p86 = por %p84, %p85
      %p87 = scmp.ne.s32.totalorder %s79, %s81
      %p88 = scmp.eq.s32.totalorder %s36, 3
      %p89 = por %p87, %p88
      %p90 = scmp.ne.s32.totalorder %s81, %s82
      %p91 = scmp.eq.s32.totalorder %s36, 0
      %p92 = por %p90, %p91
      %p93 = scmp.ne.s32.totalorder %s81, %s82
      %p94 = scmp.eq.s32.totalorder %s37, 3
      %p95 = por %p93, %p94
      %p97 = scmp.ne.s32.totalorder %s82, %s96
      %p98 = scmp.eq.s32.totalorder %s37, 0
      %p99 = por %p97, %p98
      %s101 = sadd.s32 %s100, 1
      %p104 = scmp.eq.s32.totalorder %s31, 3
      %p105 = scmp.ne.s32.totalorder %s100, %s102
      %p106 = scmp.eq.s32.totalorder %s31, 0
      %p107 = por %p105, %p106
      %p108 = scmp.ne.s32.totalorder %s100, %s102
      %p109 = scmp.eq.s32.totalorder %s36, 3
      %p110 = por %p108, %p109
      %p111 = scmp.ne.s32.totalorder %s102, %s103
      %p112 = scmp.eq.s32.totalorder %s36, 0
      %p113 = por %p111, %p112
      %p114 = scmp.ne.s32.totalorder %s102, %s103
      %p115 = scmp.eq.s32.totalorder %s37, 3
      %p116 = por %p114, %p115
      %p118 = scmp.ne.s32.totalorder %s103, %s117
      %p119 = scmp.eq.s32.totalorder %s37, 0
      %p120 = por %p118, %p119
      %s122 = sadd.s32 %s121, 1
      %p125 = scmp.eq.s32.totalorder %s31, 3
      %p126 = scmp.ne.s32.totalorder %s121, %s123
      %p127 = scmp.eq.s32.totalorder %s31, 0
      %p128 = por %p126, %p127
      %p129 = scmp.ne.s32.totalorder %s121, %s123
      %p130 = scmp.eq.s32.totalorder %s36, 3
      %p131 = por %p129, %p130
      %p132 = scmp.ne.s32.totalorder %s123, %s124
      %p133 = scmp.eq.s32.totalorder %s36, 0
      %p134 = por %p132, %p133
      %p135 = scmp.ne.s32.totalorder %s123, %s124
      %p136 = scmp.eq.s32.totalorder %s37, 3
      %p137 = por %p135, %p136
      %p139 = scmp.ne.s32.totalorder %s124, %s138
      %p140 = scmp.eq.s32.totalorder %s37, 0
      %p141 = por %p139, %p140
      %s143 = sadd.s32 %s142, 1
      %p146 = scmp.eq.s32.totalorder %s31, 3
      %p147 = scmp.ne.s32.totalorder %s142, %s144
      %p148 = scmp.eq.s32.totalorder %s31, 0
      %p149 = por %p147, %p148
      %p150 = scmp.ne.s32.totalorder %s142, %s144
      %p151 = scmp.eq.s32.totalorder %s36, 3
      %p152 = por %p150, %p151
      %p153 = scmp.ne.s32.totalorder %s144, %s145
      %p154 = scmp.eq.s32.totalorder %s36, 0
      %p155 = por %p153, %p154
      %p156 = scmp.ne.s32.totalorder %s144, %s145
      %p157 = scmp.eq.s32.totalorder %s37, 3
      %p158 = por %p156, %p157
      %p160 = scmp.ne.s32.totalorder %s145, %s159
      %p161 = scmp.eq.s32.totalorder %s37, 0
      %p162 = por %p160, %p161
      %s164 = sadd.s32 %s163, 1
      %p167 = scmp.eq.s32.totalorder %s31, 3
      %p168 = scmp.ne.s32.totalorder %s163, %s165
      %p169 = scmp.eq.s32.totalorder %s31, 0
      %p170 = por %p168, %p169
      %p171 = scmp.ne.s32.totalorder %s163, %s165
      %p172 = scmp.eq.s32.totalorder %s36, 3
      %p173 = por %p171, %p172
      %p174 = scmp.ne.s32.totalorder %s165, %s166
      %p175 = scmp.eq.s32.totalorder %s36, 0
      %p176 = por %p174, %p175
      %p177 = scmp.ne.s32.totalorder %s165, %s166
      %p178 = scmp.eq.s32.totalorder %s37, 3
      %p179 = por %p177, %p178
      %p181 = scmp.ne.s32.totalorder %s166, %s180
      %p182 = scmp.eq.s32.totalorder %s37, 0
      %p183 = por %p181, %p182
      %s185 = sadd.s32 %s184, 1
      %p188 = scmp.eq.s32.totalorder %s31, 3
      %p189 = scmp.ne.s32.totalorder %s184, %s186
      %p190 = scmp.eq.s32.totalorder %s31, 0
      %p191 = por %p189, %p190
      %p192 = scmp.ne.s32.totalorder %s184, %s186
      %p193 = scmp.eq.s32.totalorder %s36, 3
      %p194 = por %p192, %p193
      %p195 = scmp.ne.s32.totalorder %s186, %s187
      %p196 = scmp.eq.s32.totalorder %s36, 0
      %p197 = por %p195, %p196
      %p198 = scmp.ne.s32.totalorder %s186, %s187
      %p199 = scmp.eq.s32.totalorder %s37, 3
      %p200 = por %p198, %p199
      %p202 = scmp.ne.s32.totalorder %s187, %s201
      %p203 = scmp.eq.s32.totalorder %s37, 0
      %p204 = por %p202, %p203
      %s206 = sadd.s32 %s205, 1
      %p209 = scmp.eq.s32.totalorder %s31, 3
      %p210 = scmp.ne.s32.totalorder %s205, %s207
      %p211 = scmp.eq.s32.totalorder %s31, 0
      %p212 = por %p210, %p211
      %p213 = scmp.ne.s32.totalorder %s205, %s207
      %p214 = scmp.eq.s32.totalorder %s36, 3
      %p215 = por %p213, %p214
      %p216 = scmp.ne.s32.totalorder %s207, %s208
      %p217 = scmp.eq.s32.totalorder %s36, 0
      %p218 = por %p216, %p217
      %p219 = scmp.ne.s32.totalorder %s207, %s208
      %p220 = scmp.eq.s32.totalorder %s37, 3
      %p221 = por %p219, %p220
      %p223 = scmp.ne.s32.totalorder %s208, %s222
      %p224 = scmp.eq.s32.totalorder %s37, 0
      %p225 = por %p223, %p224
      %s227 = sadd.s32 %s226, 1
      %p230 = scmp.eq.s32.totalorder %s31, 3
      %p231 = scmp.ne.s32.totalorder %s226, %s228
      %p232 = scmp.eq.s32.totalorder %s31, 0
      %p233 = por %p231, %p232
      %p234 = scmp.ne.s32.totalorder %s226, %s228
      %p235 = scmp.eq.s32.totalorder %s36, 3
      %p236 = por %p234, %p235
      %p237 = scmp.ne.s32.totalorder %s228, %s229
      %p238 = scmp.eq.s32.totalorder %s36, 0
      %p239 = por %p237, %p238
      %p240 = scmp.ne.s32.totalorder %s228, %s229
      %p241 = scmp.eq.s32.totalorder %s37, 3
      %p242 = por %p240, %p241
      %p244 = scmp.ne.s32.totalorder %s229, %s243
      %p245 = scmp.eq.s32.totalorder %s37, 0
      %p246 = por %p244, %p245
      %s248 = sadd.s32 %s247, 1
      %p251 = scmp.eq.s32.totalorder %s31, 3
      %p252 = scmp.ne.s32.totalorder %s247, %s249
      %p253 = scmp.eq.s32.totalorder %s31, 0
      %p254 = por %p252, %p253
      %p255 = scmp.ne.s32.totalorder %s247, %s249
      %p256 = scmp.eq.s32.totalorder %s36, 3
      %p257 = por %p255, %p256
      %p258 = scmp.ne.s32.totalorder %s249, %s250
      %p259 = scmp.eq.s32.totalorder %s36, 0
      %p260 = por %p258, %p259
      %p261 = scmp.ne.s32.totalorder %s249, %s250
      %p262 = scmp.eq.s32.totalorder %s37, 3
      %p263 = por %p261, %p262
      %p265 = scmp.ne.s32.totalorder %s250, %s264
      %p266 = scmp.eq.s32.totalorder %s37, 0
      %p267 = por %p265, %p266
      %s269 = sadd.s32 %s268, 1
      %p272 = scmp.eq.s32.totalorder %s31, 3
      %p273 = scmp.ne.s32.totalorder %s268, %s270
      %p274 = scmp.eq.s32.totalorder %s31, 0
      %p275 = por %p273, %p274
      %p276 = scmp.ne.s32.totalorder %s268, %s270
      %p277 = scmp.eq.s32.totalorder %s36, 3
      %p278 = por %p276, %p277
      %p279 = scmp.ne.s32.totalorder %s270, %s271
      %p280 = scmp.eq.s32.totalorder %s36, 0
      %p281 = por %p279, %p280
      %p282 = scmp.ne.s32.totalorder %s270, %s271
      %p283 = scmp.eq.s32.totalorder %s37, 3
      %p284 = por %p282, %p283
      %p286 = scmp.ne.s32.totalorder %s271, %s285
      %p287 = scmp.eq.s32.totalorder %s37, 0
      %p288 = por %p286, %p287
      %s290 = sadd.s32 %s289, 1
      %p293 = scmp.eq.s32.totalorder %s31, 3
      %p294 = scmp.ne.s32.totalorder %s289, %s291
      %p295 = scmp.eq.s32.totalorder %s31, 0
      %p296 = por %p294, %p295
      %p297 = scmp.ne.s32.totalorder %s289, %s291
      %p298 = scmp.eq.s32.totalorder %s36, 3
      %p299 = por %p297, %p298
      %p300 = scmp.ne.s32.totalorder %s291, %s292
      %p301 = scmp.eq.s32.totalorder %s36, 0
      %p302 = por %p300, %p301
      %p303 = scmp.ne.s32.totalorder %s291, %s292
      %p304 = scmp.eq.s32.totalorder %s37, 3
      %p305 = por %p303, %p304
      %p307 = scmp.ne.s32.totalorder %s292, %s306
      %p308 = scmp.eq.s32.totalorder %s37, 0
      %p309 = por %p307, %p308
      %s311 = sadd.s32 %s310, 1
      %p314 = scmp.eq.s32.totalorder %s31, 3
      %p315 = scmp.ne.s32.totalorder %s310, %s312
      %p316 = scmp.eq.s32.totalorder %s31, 0
      %p317 = por %p315, %p316
      %p318 = scmp.ne.s32.totalorder %s310, %s312
      %p319 = scmp.eq.s32.totalorder %s36, 3
      %p320 = por %p318, %p319
      %p321 = scmp.ne.s32.totalorder %s312, %s313
      %p322 = scmp.eq.s32.totalorder %s36, 0
      %p323 = por %p321, %p322
      %p324 = scmp.ne.s32.totalorder %s312, %s313
      %p325 = scmp.eq.s32.totalorder %s37, 3
      %p326 = por %p324, %p325
      %p328 = scmp.ne.s32.totalorder %s313, %s327
      %p329 = scmp.eq.s32.totalorder %s37, 0
      %p330 = por %p328, %p329
      %s332 = sadd.s32 %s331, 1
      %p335 = scmp.eq.s32.totalorder %s31, 3
      %p336 = scmp.ne.s32.totalorder %s331, %s333
      %p337 = scmp.eq.s32.totalorder %s31, 0
      %p338 = por %p336, %p337
      %p339 = scmp.ne.s32.totalorder %s331, %s333
      %p340 = scmp.eq.s32.totalorder %s36, 3
      %p341 = por %p339, %p340
      %p342 = scmp.ne.s32.totalorder %s333, %s334
      %p343 = scmp.eq.s32.totalorder %s36, 0
      %p344 = por %p342, %p343
      %p345 = scmp.ne.s32.totalorder %s333, %s334
      %p346 = scmp.eq.s32.totalorder %s37, 3
      %p347 = por %p345, %p346
      %p349 = scmp.ne.s32.totalorder %s334, %s348
      %p350 = scmp.eq.s32.totalorder %s37, 0
      %p351 = por %p349, %p350
      %s353 = sadd.s32 %s352, 1
      %p356 = scmp.eq.s32.totalorder %s31, 3
      %p357 = scmp.ne.s32.totalorder %s352, %s354
      %p358 = scmp.eq.s32.totalorder %s31, 0
      %p359 = por %p357, %p358
      %p360 = scmp.ne.s32.totalorder %s352, %s354
      %p361 = scmp.eq.s32.totalorder %s36, 3
      %p362 = por %p360, %p361
      %p363 = scmp.ne.s32.totalorder %s354, %s355
      %p364 = scmp.eq.s32.totalorder %s36, 0
      %p365 = por %p363, %p364
      %p366 = scmp.ne.s32.totalorder %s354, %s355
      %p367 = scmp.eq.s32.totalorder %s37, 3
      %p368 = por %p366, %p367
      %p370 = scmp.ne.s32.totalorder %s355, %s369
      %p371 = scmp.eq.s32.totalorder %s37, 0
      %p372 = por %p370, %p371
      %s374 = sadd.s32 %s373, 1
      %p377 = scmp.eq.s32.totalorder %s31, 3
      %p378 = scmp.ne.s32.totalorder %s373, %s375
      %p379 = scmp.eq.s32.totalorder %s31, 0
      %p380 = por %p378, %p379
      %p381 = scmp.ne.s32.totalorder %s373, %s375
      %p382 = scmp.eq.s32.totalorder %s36, 3
      %p383 = por %p381, %p382
      %p384 = scmp.ne.s32.totalorder %s375, %s376
      %p385 = scmp.eq.s32.totalorder %s36, 0
      %p386 = por %p384, %p385
      %p387 = scmp.ne.s32.totalorder %s375, %s376
      %p388 = scmp.eq.s32.totalorder %s37, 3
      %p389 = por %p387, %p388
      %p391 = scmp.ne.s32.totalorder %s376, %s390
      %p392 = scmp.eq.s32.totalorder %s37, 0
      %p393 = por %p391, %p392
      %s395 = sadd.s32 %s394, 1
      %p398 = scmp.eq.s32.totalorder %s31, 3
      %p399 = scmp.ne.s32.totalorder %s394, %s396
      %p400 = scmp.eq.s32.totalorder %s31, 0
      %p401 = por %p399, %p400
      %p402 = scmp.ne.s32.totalorder %s394, %s396
      %p403 = scmp.eq.s32.totalorder %s36, 3
      %p404 = por %p402, %p403
      %p405 = scmp.ne.s32.totalorder %s396, %s397
      %p406 = scmp.eq.s32.totalorder %s36, 0
      %p407 = por %p405, %p406
      %p408 = scmp.ne.s32.totalorder %s396, %s397
      %p409 = scmp.eq.s32.totalorder %s37, 3
      %p410 = por %p408, %p409
      %p412 = scmp.ne.s32.totalorder %s397, %s411
      %p413 = scmp.eq.s32.totalorder %s37, 0
      %p414 = por %p412, %p413
      %s416 = sadd.s32 %s415, 1
      %p419 = scmp.eq.s32.totalorder %s31, 3
      %p420 = scmp.ne.s32.totalorder %s415, %s417
      %p421 = scmp.eq.s32.totalorder %s31, 0
      %p422 = por %p420, %p421
      %p423 = scmp.ne.s32.totalorder %s415, %s417
      %p424 = scmp.eq.s32.totalorder %s36, 3
      %p425 = por %p423, %p424
      %p426 = scmp.ne.s32.totalorder %s417, %s418
      %p427 = scmp.eq.s32.totalorder %s36, 0
      %p428 = por %p426, %p427
      %p429 = scmp.ne.s32.totalorder %s417, %s418
      %p430 = scmp.eq.s32.totalorder %s37, 3
      %p431 = por %p429, %p430
      %p433 = scmp.ne.s32.totalorder %s418, %s432
      %p434 = scmp.eq.s32.totalorder %s37, 0
      %p435 = por %p433, %p434
      %s436 = ssub.s32 %s38, %s50
      %s437 = ssub.s32 %s39, %s46
      %s438 = sor.u32 %s436, %s437
      %p439 = scmp.eq.s32.totalorder %s438, 0
      %s441 = sadd.s32 %s440, 1
      %s442 = scalar_select %p439, %s440, %s441
      %p445 = pneg %p439
      %p446 = scmp.eq.s32.totalorder %s31, 3
      %p447 = por %p445, %p446
      %p448 = scmp.ne.s32.totalorder %s440, %s443
      %p449 = scmp.eq.s32.totalorder %s31, 0
      %p450 = por %p448, %p449
      %p451 = scmp.ne.s32.totalorder %s440, %s443
      %p452 = scmp.eq.s32.totalorder %s36, 3
      %p453 = por %p451, %p452
      %p454 = scmp.ne.s32.totalorder %s443, %s444
      %p455 = scmp.eq.s32.totalorder %s36, 0
      %p456 = por %p454, %p455
      %p457 = scmp.ne.s32.totalorder %s443, %s444
      %p458 = scmp.eq.s32.totalorder %s37, 3
      %p459 = por %p457, %p458
      %p461 = scmp.ne.s32.totalorder %s444, %s460
      %p462 = scmp.eq.s32.totalorder %s37, 0
      %p463 = por %p461, %p462
      %p464 = scmp.le.s32.totalorder 1, %s31
      %p465 = scmp.lt.s32.totalorder %s31, 5
      %p466 = pnand %p464, %p465
      %p467 = pneg %p466
      // Predicated region
      $region9: #{tpu_custom_call.1} parent=5 // pred_check
        _
      $region10: #{tpu_custom_call.1} parent=5 // pred_check_branch
        %469 = sbr.rel (%p466) target = $region12
      $region11: #{tpu_custom_call.1} parent=5 // pred_region
        %s470 = ssub.s32 %s31, 1
        // Predicated region
        $region13: #{tpu_custom_call.1} parent=11 // pred_check
          %p471 = pneg %p92
        $region14: #{tpu_custom_call.1} parent=11 // pred_check_branch
          %473 = sbr.rel (%p471) target = $region16
        $region15: #{tpu_custom_call.1} parent=11 // pred_region
          %475 = vsyncadd [#allocation8], 0
          %s477 = sshll.u32 %s1, 4
          %s478 = int_to_ptr.hbm [resolvable:$true] %s477
          %s479 = sshll.u32 [#allocation7], 4
          %s480 = int_to_ptr.vmem [resolvable:$true] %s479
          %482 = dma.hbm_to_vmem [thread:$0]  %s478, 16, %s480, [#allocation8]
        $region16: #{tpu_custom_call.1} parent=11 // pred_fallthru
          _
        // Predicated region
        $region17: #{tpu_custom_call.1} parent=11 // pred_check
          %p483 = pneg %p113
        $region18: #{tpu_custom_call.1} parent=11 // pred_check_branch
          %485 = sbr.rel (%p483) target = $region20
        $region19: #{tpu_custom_call.1} parent=11 // pred_region
          %487 = vsyncadd [#allocation11], 0
          %s489 = sshll.u32 %s2, 4
          %s490 = int_to_ptr.hbm [resolvable:$true] %s489
          %s491 = sshll.u32 [#allocation10], 4
          %s492 = int_to_ptr.vmem [resolvable:$true] %s491
          %494 = dma.hbm_to_vmem [thread:$0]  %s490, 16, %s492, [#allocation11]
        $region20: #{tpu_custom_call.1} parent=11 // pred_fallthru
          _
        // Predicated region
        $region21: #{tpu_custom_call.1} parent=11 // pred_check
          %p495 = pneg %p134
        $region22: #{tpu_custom_call.1} parent=11 // pred_check_branch
          %497 = sbr.rel (%p495) target = $region24
        $region23: #{tpu_custom_call.1} parent=11 // pred_region
          _
        $region24: #{tpu_custom_call.1} parent=11 // pred_fallthru
          _
        // Predicated region
        $region25: #{tpu_custom_call.1} parent=11 // pred_check
          %p498 = pneg %p155
        $region26: #{tpu_custom_call.1} parent=11 // pred_check_branch
          %500 = sbr.rel (%p498) target = $region28
        $region27: #{tpu_custom_call.1} parent=11 // pred_region
          %502 = vsyncadd [#allocation11], 0
          %s504 = sshll.u32 %s4, 4
          %s505 = int_to_ptr.hbm [resolvable:$true] %s504
          %s506 = sshll.u32 [#allocation12], 4
          %s507 = int_to_ptr.vmem [resolvable:$true] %s506
          %509 = dma.hbm_to_vmem [thread:$0]  %s505, 32, %s507, [#allocation11]
        $region28: #{tpu_custom_call.1} parent=11 // pred_fallthru
          _
        // Predicated region
        $region29: #{tpu_custom_call.1} parent=11 // pred_check
          %p510 = pneg %p176
        $region30: #{tpu_custom_call.1} parent=11 // pred_check_branch
          %512 = sbr.rel (%p510) target = $region32
        $region31: #{tpu_custom_call.1} parent=11 // pred_region
          %514 = vsyncadd [#allocation14], 0
          %s516 = sshll.u32 %s5, 4
          %s517 = int_to_ptr.hbm [resolvable:$true] %s516
          %s518 = sshll.u32 [#allocation13], 4
          %s519 = int_to_ptr.vmem [resolvable:$true] %s518
          %521 = dma.hbm_to_vmem [thread:$0]  %s517, 16, %s519, [#allocation14]
        $region32: #{tpu_custom_call.1} parent=11 // pred_fallthru
          _
        // Predicated region
        $region33: #{tpu_custom_call.1} parent=11 // pred_check
          %p522 = pneg %p197
        $region34: #{tpu_custom_call.1} parent=11 // pred_check_branch
          %524 = sbr.rel (%p522) target = $region36
        $region35: #{tpu_custom_call.1} parent=11 // pred_region
          _
        $region36: #{tpu_custom_call.1} parent=11 // pred_fallthru
          _
        // Predicated region
        $region37: #{tpu_custom_call.1} parent=11 // pred_check
          %p525 = pneg %p218
        $region38: #{tpu_custom_call.1} parent=11 // pred_check_branch
          %527 = sbr.rel (%p525) target = $region40
        $region39: #{tpu_custom_call.1} parent=11 // pred_region
          _
        $region40: #{tpu_custom_call.1} parent=11 // pred_fallthru
          _
        // Predicated region
        $region41: #{tpu_custom_call.1} parent=11 // pred_check
          %p528 = pneg %p239
        $region42: #{tpu_custom_call.1} parent=11 // pred_check_branch
          %530 = sbr.rel (%p528) target = $region44
        $region43: #{tpu_custom_call.1} parent=11 // pred_region
          _
        $region44: #{tpu_custom_call.1} parent=11 // pred_fallthru
          _
        // Predicated region
        $region45: #{tpu_custom_call.1} parent=11 // pred_check
          %p531 = pneg %p260
        $region46: #{tpu_custom_call.1} parent=11 // pred_check_branch
          %533 = sbr.rel (%p531) target = $region48
        $region47: #{tpu_custom_call.1} parent=11 // pred_region
          %535 = vsyncadd [#allocation14], 0
          %s536 = sshll.u32 %s9, 4
          %s537 = int_to_ptr.hbm [resolvable:$true] %s536
          %s538 = sshll.u32 [#allocation15], 4
          %s539 = int_to_ptr.vmem [resolvable:$true] %s538
          %544 = dma.hbm_to_vmem [thread:$0]  %s537, 256, %s539, [#allocation14], 128, 128, 8
        $region48: #{tpu_custom_call.1} parent=11 // pred_fallthru
          _
        // Predicated region
        $region49: #{tpu_custom_call.1} parent=11 // pred_check
          %p545 = pneg %p281
        $region50: #{tpu_custom_call.1} parent=11 // pred_check_branch
          %547 = sbr.rel (%p545) target = $region52
        $region51: #{tpu_custom_call.1} parent=11 // pred_region
          _
        $region52: #{tpu_custom_call.1} parent=11 // pred_fallthru
          _
        // Predicated region
        $region53: #{tpu_custom_call.1} parent=11 // pred_check
          %p548 = pneg %p302
        $region54: #{tpu_custom_call.1} parent=11 // pred_check_branch
          %550 = sbr.rel (%p548) target = $region56
        $region55: #{tpu_custom_call.1} parent=11 // pred_region
          %552 = vsyncadd [#allocation17], 0
          %s553 = sshll.u32 %s11, 4
          %s554 = int_to_ptr.hbm [resolvable:$true] %s553
          %s555 = sshll.u32 [#allocation16], 4
          %s556 = int_to_ptr.vmem [resolvable:$true] %s555
          %561 = dma.hbm_to_vmem [thread:$0]  %s554, 256, %s556, [#allocation17], 64, 64, 4
        $region56: #{tpu_custom_call.1} parent=11 // pred_fallthru
          _
        // Predicated region
        $region57: #{tpu_custom_call.1} parent=11 // pred_check
          %p562 = pneg %p323
        $region58: #{tpu_custom_call.1} parent=11 // pred_check_branch
          %564 = sbr.rel (%p562) target = $region60
        $region59: #{tpu_custom_call.1} parent=11 // pred_region
          _
        $region60: #{tpu_custom_call.1} parent=11 // pred_fallthru
          _
        // Predicated region
        $region61: #{tpu_custom_call.1} parent=11 // pred_check
          %p565 = pneg %p344
        $region62: #{tpu_custom_call.1} parent=11 // pred_check_branch
          %567 = sbr.rel (%p565) target = $region64
        $region63: #{tpu_custom_call.1} parent=11 // pred_region
          _
        $region64: #{tpu_custom_call.1} parent=11 // pred_fallthru
          _
        // Predicated region
        $region65: #{tpu_custom_call.1} parent=11 // pred_check
          %p568 = pneg %p365
        $region66: #{tpu_custom_call.1} parent=11 // pred_check_branch
          %570 = sbr.rel (%p568) target = $region68
        $region67: #{tpu_custom_call.1} parent=11 // pred_region
          %572 = vsyncadd [#allocation17], 0
          %s573 = sshll.u32 %s14, 4
          %s574 = int_to_ptr.hbm [resolvable:$true] %s573
          %s575 = sshll.u32 [#allocation18], 4
          %s576 = int_to_ptr.vmem [resolvable:$true] %s575
          %581 = dma.hbm_to_vmem [thread:$0]  %s574, 256, %s576, [#allocation17], 64, 64, 4
        $region68: #{tpu_custom_call.1} parent=11 // pred_fallthru
          _
        // Predicated region
        $region69: #{tpu_custom_call.1} parent=11 // pred_check
          %p582 = pneg %p386
        $region70: #{tpu_custom_call.1} parent=11 // pred_check_branch
          %584 = sbr.rel (%p582) target = $region72
        $region71: #{tpu_custom_call.1} parent=11 // pred_region
          _
        $region72: #{tpu_custom_call.1} parent=11 // pred_fallthru
          _
        // Predicated region
        $region73: #{tpu_custom_call.1} parent=11 // pred_check
          %p585 = pneg %p407
        $region74: #{tpu_custom_call.1} parent=11 // pred_check_branch
          %587 = sbr.rel (%p585) target = $region76
        $region75: #{tpu_custom_call.1} parent=11 // pred_region
          _
        $region76: #{tpu_custom_call.1} parent=11 // pred_fallthru
          _
        // Predicated region
        $region77: #{tpu_custom_call.1} parent=11 // pred_check
          %p588 = pneg %p428
        $region78: #{tpu_custom_call.1} parent=11 // pred_check_branch
          %590 = sbr.rel (%p588) target = $region80
        $region79: #{tpu_custom_call.1} parent=11 // pred_region
          _
        $region80: #{tpu_custom_call.1} parent=11 // pred_fallthru
          _
      $region12: #{tpu_custom_call.1} parent=5 // pred_fallthru
        _
      %p591 = scmp.lt.s32.totalorder %s31, 4
      // Predicated region
      $region81: #{tpu_custom_call.1} parent=5 // pred_check
        %p592 = pneg %p591
      $region82: #{tpu_custom_call.1} parent=5 // pred_check_branch
        %594 = sbr.rel (%p592) target = $region84
      $region83: #{tpu_custom_call.1} parent=5 // pred_region
        // Predicated region
        $region85: #{tpu_custom_call.1} parent=83 // pred_check
          %p595 = pneg %p65
        $region86: #{tpu_custom_call.1} parent=83 // pred_check_branch
          %597 = sbr.rel (%p595) target = $region88
        $region87: #{tpu_custom_call.1} parent=83 // pred_region
          %p598 = scmp.lt.s32.totalorder %s38, 1
          %s599 = scalar_select %p598, %s38, 1
          %p600 = scmp.lt.s32.totalorder %s39, 1
          %s601 = scalar_select %p600, %s39, 1
          %s602 = smul.addr %s599, 2
          %s603 = sadd.s32 %s601, %s602
          %s604 = smul.addr %s603, 8
          %s605 = scalar_lea.vmem %s0, %s604
        $region88: #{tpu_custom_call.1} parent=83 // pred_fallthru
          _
      $region84: #{tpu_custom_call.1} parent=5 // pred_fallthru
        _
      %p606 = scmp.le.s32.totalorder 1, %s31
      %p607 = scmp.lt.s32.totalorder %s31, 5
      %p608 = pnand %p606, %p607
      %p609 = pneg %p608
      // Predicated region
      $region89: #{tpu_custom_call.1} parent=5 // pred_check
        _
      $region90: #{tpu_custom_call.1} parent=5 // pred_check_branch
        %611 = sbr.rel (%p608) target = $region92
      $region91: #{tpu_custom_call.1} parent=5 // pred_region
        %s612 = ssub.s32 %s31, 1
        // Predicated region
        $region93: #{tpu_custom_call.1} parent=91 // pred_check
          %p613 = pneg %p92
        $region94: #{tpu_custom_call.1} parent=91 // pred_check_branch
          %615 = sbr.rel (%p613) target = $region96
        $region95: #{tpu_custom_call.1} parent=91 // pred_region
          %617 = dma.done [#allocation8], 16
        $region96: #{tpu_custom_call.1} parent=91 // pred_fallthru
          _
        // Predicated region
        $region97: #{tpu_custom_call.1} parent=91 // pred_check
          %p618 = pneg %p113
        $region98: #{tpu_custom_call.1} parent=91 // pred_check_branch
          %620 = sbr.rel (%p618) target = $region100
        $region99: #{tpu_custom_call.1} parent=91 // pred_region
          %622 = dma.done [#allocation11], 16
        $region100: #{tpu_custom_call.1} parent=91 // pred_fallthru
          _
        // Predicated region
        $region101: #{tpu_custom_call.1} parent=91 // pred_check
          %p623 = pneg %p155
        $region102: #{tpu_custom_call.1} parent=91 // pred_check_branch
          %625 = sbr.rel (%p623) target = $region104
        $region103: #{tpu_custom_call.1} parent=91 // pred_region
          %627 = dma.done [#allocation11], 32
        $region104: #{tpu_custom_call.1} parent=91 // pred_fallthru
          _
        // Predicated region
        $region105: #{tpu_custom_call.1} parent=91 // pred_check
          %p628 = pneg %p176
        $region106: #{tpu_custom_call.1} parent=91 // pred_check_branch
          %630 = sbr.rel (%p628) target = $region108
        $region107: #{tpu_custom_call.1} parent=91 // pred_region
          %632 = dma.done [#allocation14], 16
        $region108: #{tpu_custom_call.1} parent=91 // pred_fallthru
          _
        // Predicated region
        $region109: #{tpu_custom_call.1} parent=91 // pred_check
          %p633 = pneg %p260
        $region110: #{tpu_custom_call.1} parent=91 // pred_check_branch
          %635 = sbr.rel (%p633) target = $region112
        $region111: #{tpu_custom_call.1} parent=91 // pred_region
          %637 = dma.done [#allocation14], 256
        $region112: #{tpu_custom_call.1} parent=91 // pred_fallthru
          _
        // Predicated region
        $region113: #{tpu_custom_call.1} parent=91 // pred_check
          %p638 = pneg %p302
        $region114: #{tpu_custom_call.1} parent=91 // pred_check_branch
          %640 = sbr.rel (%p638) target = $region116
        $region115: #{tpu_custom_call.1} parent=91 // pred_region
          %642 = dma.done [#allocation17], 256
        $region116: #{tpu_custom_call.1} parent=91 // pred_fallthru
          _
        // Predicated region
        $region117: #{tpu_custom_call.1} parent=91 // pred_check
          %p643 = pneg %p365
        $region118: #{tpu_custom_call.1} parent=91 // pred_check_branch
          %645 = sbr.rel (%p643) target = $region120
        $region119: #{tpu_custom_call.1} parent=91 // pred_region
          %647 = dma.done [#allocation17], 256
        $region120: #{tpu_custom_call.1} parent=91 // pred_fallthru
          _
        %p648 = scmp.lt.s32.totalorder %s40, 1
        %s649 = scalar_select %p648, %s40, 1
        %p650 = scmp.lt.s32.totalorder %s41, 1
        %s651 = scalar_select %p650, %s41, 1
        %s652 = smul.addr %s649, 2
        %s653 = sadd.s32 %s651, %s652
        %s654 = smul.addr %s653, 8
        %s655 = scalar_lea.vmem %s0, %s654
        %p656 = pneg %p71
        %p657 = pneg %p68
        %p658 = pneg %p92
        %p659 = pneg %p89
        %p660 = pneg %p113
        %p661 = pneg %p110
        %p662 = pneg %p134
        %p663 = pneg %p131
        %p664 = pneg %p155
        %p665 = pneg %p152
        %p666 = pneg %p176
        %p667 = pneg %p173
        %p668 = pneg %p197
        %p669 = pneg %p194
        %p670 = pneg %p218
        %p671 = pneg %p215
        %p672 = pneg %p239
        %p673 = pneg %p236
        %p674 = pneg %p260
        %p675 = pneg %p257
        %p676 = pneg %p281
        %p677 = pneg %p278
        %p678 = pneg %p302
        %p679 = pneg %p299
        %p680 = pneg %p323
        %p681 = pneg %p320
        %p682 = pneg %p344
        %p683 = pneg %p341
        %p684 = pneg %p365
        %p685 = pneg %p362
        %p686 = pneg %p386
        %p687 = pneg %p383
        %p688 = pneg %p407
        %p689 = pneg %p404
        %p690 = pneg %p428
        %p691 = pneg %p425
        %p692 = pneg %p456
        %p693 = pneg %p453
        %s694 = sand.u32 %s443, 1
        %s695 = scalar_lea.sflag [#allocation9], %s694
        %s696 = sand.u32 %s443, 1
        %s697 = smul.addr %s696, 8
        %s698 = scalar_lea.vmem [#allocation19], %s697
        %p699 = scmp.lt.s32.totalorder %s40, 1
        %s700 = scalar_select %p699, %s40, 1
        %p701 = scmp.lt.s32.totalorder %s41, 1
        %s702 = scalar_select %p701, %s41, 1
        %s703 = smul.addr %s700, 2
        %s704 = sadd.s32 %s702, %s703
        %s705 = smul.addr %s704, 8
        %s706 = scalar_lea.vmem %s0, %s705
        %v708 = vld [vmem:[%s706] sm:$0xff]
        %v709 = vld [vmem:[#allocation7] sm:$0x1]
        %v710 = vld [vmem:[#allocation10] sm:$0x1]
        %vm711 = vcmask 261120
        %v712 = vsel %vm711, %v708, 0.0
        %713 = vadd.xlane.f32.xlu0 %v712
        %v714 = vpop.xlane.xlu0 %713
        %v715 = vrcp.pop 32.0
        %v716 = vmul.f32 32.0, %v715
        %v717 = vsub.f32 1.0, %v716
        %v718 = vmul.f32 %v715, %v717
        %v719 = vadd.f32 %v715, %v718
        %vm720 = vweird.f32 %v715
        %v721 = vsel %vm720, %v715, %v719
        %v722 = vmul.f32 %v714, %v721
        %v723 = vsub.f32 %v708, %v722
        %v724 = vmul.f32 %v723, %v723
        %v725 = vsel %vm711, %v724, 0.0
        %726 = vadd.xlane.f32.xlu0 %v725
        %v727 = vpop.xlane.xlu0 %726
        %v728 = vmul.f32 %v727, %v721
        %v729 = vadd.f32 %v728, 1e-05
        %v730 = vrsqrt.pop %v729
        %v731 = vmul.f32 %v730, %v729
        %v732 = vmul.f32 %v731, %v730
        %v733 = vmul.f32 0.5, %v732
        %v734 = vsub.f32 1.5, %v733
        %v735 = vmul.f32 %v730, %v734
        %vm736 = vweird.f32 %v729
        %vm737 = vweird.f32 %v730
        %vm738 = vmor %vm736, %vm737
        %v739 = vsel %vm738, %v730, %v735
        %v740 = vmul.f32 %v723, %v739
        %v742 = vperm.slane %v709, 0
        %v744 = vmul.f32 %v740, %v742
        %v746 = vperm.slane %v710, 0
        %v748 = vadd.f32 %v744, %v746
        %v749 = vpack.c.bf16 %v748, %v748
        %v750 = vld [vmem:[%s3] sm:$0xf]
        %v751 = vld [vmem:[%s3 + $0x4] sm:$0xf]
        %v752 = vld [vmem:[%s3 + $0x8] sm:$0xf]
        %v753 = vld [vmem:[%s3 + $0xc] sm:$0xf]
        %v758 = vunpack.c.l.b16 %v750
        %v759 = vunpack.c.l.b16 %v751
        %v760 = vunpack.c.l.b16 %v752
        %v761 = vunpack.c.l.b16 %v753
        %v762 = vpack.c.b16 %v759, %v758
        %v763 = vpack.c.b16 %v761, %v760
        %v767 = vsel %vm711, %v749, 0
        %769 = vmatpush.bf16.msra.mxu0 0
        %770 = vmatpush.bf16.msra.mxu0 0
        %771 = vmatpush.bf16.msra.mxu0 0
        %772 = vmatpush.bf16.msra.mxu0 0
        %773 = vmatpush.bf16.msra.mxu0 0
        %774 = vmatpush.bf16.msra.mxu0 0
        %775 = vmatpush.bf16.msra.mxu0 %v763
        %776 = vmatpush.bf16.msra.mxu0 %v762
        %777 = vmatmul.bf16.gmra.mxu0 %v767
        %v778 = vpop.f32.mrf.mxu0
        %v779 = vadd.f32 0.0, %v778
        %v780 = vpop.f32.mrf.mxu0
        %781 = vdwg.mxu0
        %v782 = vld [vmem:[#allocation12] sm:$0x1]
        %784 = vset.pattern.permute.xlu0 32
        %785 = vperm.xlu0 %784, %v779
        %v786 = vpop.permute.xlu0 %785
        %v788 = vperm.slane %v782, 0
        %v789 = vmul.f32 %v786, %v788
        %v790 = vld [vmem:[#allocation12 + $0x1] sm:$0x1]
        %791 = vset.pattern.permute.xlu0 33
        %792 = vperm.xlu0 %791, %v779
        %v793 = vpop.permute.xlu0 %792
        %v795 = vperm.slane %v790, 0
        %v796 = vmul.f32 %v793, %v795
        %v797 = vadd.f32 %v789, %v796
        %v798 = vld [vmem:[#allocation13] sm:$0x1]
        %v800 = vperm.slane %v798, 0
        %v802 = vadd.f32 %v797, %v800
        %vm803 = vcmp.gt.f32.partialorder %v802, 20.0
        %v804 = vmin.f32 %v802, 20.0
        %v805 = vmul.f32 %v804, 1.442695
        %v806 = vpow.pop %v805
        %v807 = vadd.f32 %v806, 1.0
        %v808 = vlog2.pop %v807
        %v809 = vmul.f32 %v808, 0.6931472
        %v810 = vsel %vm803, %v802, %v809
        %p811 = scmp.eq.s32.totalorder %s41, 0
        // Predicated region
        $region121: #{tpu_custom_call.1} parent=91 // pred_check
          %p812 = pneg %p811
        $region122: #{tpu_custom_call.1} parent=91 // pred_check_branch
          %814 = sbr.rel (%p812) target = $region124
        $region123: #{tpu_custom_call.1} parent=91 // pred_region
          %vm815 = vcmask 256000
          %816 = vst.msk [vmem:[#allocation6] sm:$0x7] %vm815, 0.0
        $region124: #{tpu_custom_call.1} parent=91 // pred_fallthru
          _
        %v817 = vld [vmem:[#allocation6] sm:$0x7]
        %vm818 = vcmask 256000
        %819 = vst.msk [vmem:[#allocation2] sm:$0x7] %vm818, %v817
        %820 = vst.msk [vmem:[#allocation2 + $0x3] sm:$0xff] %vm711, %v748
        %vm821 = vcmask 261125
        %822 = vst.msk [vmem:[#allocation6 - $0x5] sm:$0xe0] %vm821, %v748
        %v823 = vld [vmem:[#allocation2] sm:$0xff]
        %v824 = vld [vmem:[%s6] sm:$0x1]
        %v825 = vperm.slane %v824, 0
        %v826 = vmul.f32 %v823, %v825
        %v827 = vld [vmem:[#allocation2 + $0x1] sm:$0xff]
        %v828 = vld [vmem:[%s6 + $0x1] sm:$0x1]
        %v829 = vperm.slane %v828, 0
        %v830 = vmul.f32 %v827, %v829
        %v831 = vadd.f32 %v826, %v830
        %v832 = vld [vmem:[#allocation2 + $0x2] sm:$0xff]
        %v833 = vld [vmem:[%s6 + $0x2] sm:$0x1]
        %v834 = vperm.slane %v833, 0
        %v835 = vmul.f32 %v832, %v834
        %v836 = vadd.f32 %v831, %v835
        %v837 = vld [vmem:[#allocation2 + $0x3] sm:$0xff]
        %v838 = vld [vmem:[%s6 + $0x3] sm:$0x1]
        %v839 = vperm.slane %v838, 0
        %v840 = vmul.f32 %v837, %v839
        %v841 = vadd.f32 %v836, %v840
        %v842 = vsub.f32 0.0, %v841
        %v843 = vmul.f32 %v842, 1.442695
        %v844 = vpow.pop %v843
        %v845 = vadd.f32 %v844, 1.0
        %v846 = vrcp.pop %v845
        %v847 = vmul.f32 %v845, %v846
        %v848 = vsub.f32 1.0, %v847
        %v849 = vmul.f32 %v846, %v848
        %v850 = vadd.f32 %v846, %v849
        %vm851 = vweird.f32 %v845
        %vm852 = vweird.f32 %v846
        %vm853 = vmor %vm851, %vm852
        %v854 = vsel %vm853, %v846, %v850
        %v855 = vand.u32 2147483647, %v845
        %vm856 = vcmp.eq.f32.partialorder %v855, 8.507059e+37
        %v857 = vand.u32 %v845, 2147483648
        %v858 = vor.u32 1.1754944e-38, %v857
        %v859 = vsel %vm856, %v858, %v854
        %v860 = vmul.f32 1.0, %v859
        %v861 = vmul.f32 %v841, %v860
        %v863 = vrot.slane %v810, 1
        %v864 = vrot.slane %v810, 2
        %v865 = vrot.slane %v810, 3
        %v866 = vrot.slane %v810, 4
        %v867 = vrot.slane %v810, 5
        %v868 = vrot.slane %v810, 6
        %v869 = vrot.slane %v810, 7
        %v870 = vld [vmem:[%s7] sm:$0xff]
        %v871 = vld [vmem:[%s7 + $0x8] sm:$0xff]
        %v872 = vperm.slane %v810, 0
        %v873 = vperm.slane %v863, 0
        %v874 = vperm.slane %v864, 0
        %v875 = vperm.slane %v865, 0
        %v876 = vperm.slane %v866, 0
        %v877 = vperm.slane %v867, 0
        %v878 = vperm.slane %v868, 0
        %v879 = vperm.slane %v869, 0
        %v888 = vmul.f32 %v872, %v870
        %v889 = vmul.f32 %v872, %v871
        %v890 = vmul.f32 %v873, %v870
        %v891 = vmul.f32 %v873, %v871
        %v892 = vmul.f32 %v874, %v870
        %v893 = vmul.f32 %v874, %v871
        %v894 = vmul.f32 %v875, %v870
        %v895 = vmul.f32 %v875, %v871
        %v896 = vmul.f32 %v876, %v870
        %v897 = vmul.f32 %v876, %v871
        %v898 = vmul.f32 %v877, %v870
        %v899 = vmul.f32 %v877, %v871
        %v900 = vmul.f32 %v878, %v870
        %v901 = vmul.f32 %v878, %v871
        %v902 = vmul.f32 %v879, %v870
        %v903 = vmul.f32 %v879, %v871
        %v904 = vmul.f32 %v888, 1.442695
        %v905 = vpow.pop %v904
        %v906 = vmul.f32 %v889, 1.442695
        %v907 = vpow.pop %v906
        %v908 = vmul.f32 %v890, 1.442695
        %v909 = vpow.pop %v908
        %v910 = vmul.f32 %v891, 1.442695
        %v911 = vpow.pop %v910
        %v912 = vmul.f32 %v892, 1.442695
        %v913 = vpow.pop %v912
        %v914 = vmul.f32 %v893, 1.442695
        %v915 = vpow.pop %v914
        %v916 = vmul.f32 %v894, 1.442695
        %v917 = vpow.pop %v916
        %v918 = vmul.f32 %v895, 1.442695
        %v919 = vpow.pop %v918
        %v920 = vmul.f32 %v896, 1.442695
        %v921 = vpow.pop %v920
        %v922 = vmul.f32 %v897, 1.442695
        %v923 = vpow.pop %v922
        %v924 = vmul.f32 %v898, 1.442695
        %v925 = vpow.pop %v924
        %v926 = vmul.f32 %v899, 1.442695
        %v927 = vpow.pop %v926
        %v928 = vmul.f32 %v900, 1.442695
        %v929 = vpow.pop %v928
        %v930 = vmul.f32 %v901, 1.442695
        %v931 = vpow.pop %v930
        %v932 = vmul.f32 %v902, 1.442695
        %v933 = vpow.pop %v932
        %v934 = vmul.f32 %v903, 1.442695
        %v935 = vpow.pop %v934
        %v936 = vld [vmem:[#allocation15] sm:$0xff]
        %v937 = vld [vmem:[#allocation15 + $0x8] sm:$0xff]
        %vm938 = vcmp.gt.f32.partialorder %v936, 0.5
        %vm939 = vcmp.gt.f32.partialorder %v937, 0.5
        %v940 = vsub.f32 %v905, 1.0
        %v941 = vsub.f32 %v907, 1.0
        %v942 = vsub.f32 %v909, 1.0
        %v943 = vsub.f32 %v911, 1.0
        %v944 = vsub.f32 %v913, 1.0
        %v945 = vsub.f32 %v915, 1.0
        %v946 = vsub.f32 %v917, 1.0
        %v947 = vsub.f32 %v919, 1.0
        %v948 = vsub.f32 %v921, 1.0
        %v949 = vsub.f32 %v923, 1.0
        %v950 = vsub.f32 %v925, 1.0
        %v951 = vsub.f32 %v927, 1.0
        %v952 = vsub.f32 %v929, 1.0
        %v953 = vsub.f32 %v931, 1.0
        %v954 = vsub.f32 %v933, 1.0
        %v955 = vsub.f32 %v935, 1.0
        %v956 = vld [vmem:[%s8] sm:$0xff]
        %v957 = vld [vmem:[%s8 + $0x8] sm:$0xff]
        %v958 = vmul.f32 %v940, %v956
        %v959 = vmul.f32 %v941, %v957
        %v960 = vmul.f32 %v942, %v956
        %v961 = vmul.f32 %v943, %v957
        %v962 = vmul.f32 %v944, %v956
        %v963 = vmul.f32 %v945, %v957
        %v964 = vmul.f32 %v946, %v956
        %v965 = vmul.f32 %v947, %v957
        %v966 = vmul.f32 %v948, %v956
        %v967 = vmul.f32 %v949, %v957
        %v968 = vmul.f32 %v950, %v956
        %v969 = vmul.f32 %v951, %v957
        %v970 = vmul.f32 %v952, %v956
        %v971 = vmul.f32 %v953, %v957
        %v972 = vmul.f32 %v954, %v956
        %v973 = vmul.f32 %v955, %v957
        %v974 = vsel %vm938, 1, 0
        %v975 = vsel %vm939, 1, 0
        %vm976 = vcmp.eq.s32.totalorder %v974, 1
        %vm977 = vcmp.eq.s32.totalorder %v975, 1
        %v978 = vsel %vm976, %v872, %v958
        %v979 = vsel %vm977, %v872, %v959
        %v980 = vsel %vm976, %v873, %v960
        %v981 = vsel %vm977, %v873, %v961
        %v982 = vsel %vm976, %v874, %v962
        %v983 = vsel %vm977, %v874, %v963
        %v984 = vsel %vm976, %v875, %v964
        %v985 = vsel %vm977, %v875, %v965
        %v986 = vsel %vm976, %v876, %v966
        %v987 = vsel %vm977, %v876, %v967
        %v988 = vsel %vm976, %v877, %v968
        %v989 = vsel %vm977, %v877, %v969
        %v990 = vsel %vm976, %v878, %v970
        %v991 = vsel %vm977, %v878, %v971
        %v992 = vsel %vm976, %v879, %v972
        %v993 = vsel %vm977, %v879, %v973
        %v994 = vpack.c.bf16 %v905, %v905
        %v995 = vpack.c.bf16 %v907, %v907
        %v996 = vpack.c.bf16 %v909, %v909
        %v997 = vpack.c.bf16 %v911, %v911
        %v998 = vpack.c.bf16 %v913, %v913
        %v999 = vpack.c.bf16 %v915, %v915
        %v1000 = vpack.c.bf16 %v917, %v917
        %v1001 = vpack.c.bf16 %v919, %v919
        %v1002 = vpack.c.bf16 %v921, %v921
        %v1003 = vpack.c.bf16 %v923, %v923
        %v1004 = vpack.c.bf16 %v925, %v925
        %v1005 = vpack.c.bf16 %v927, %v927
        %v1006 = vpack.c.bf16 %v929, %v929
        %v1007 = vpack.c.bf16 %v931, %v931
        %v1008 = vpack.c.bf16 %v933, %v933
        %v1009 = vpack.c.bf16 %v935, %v935
        %vm1010 = vcmask 257024
        %1011 = vst.msk [vmem:[#allocation3] sm:$0xf] %vm1010, %v994
        %1012 = vst.msk [vmem:[#allocation3 + $0x4] sm:$0xf] %vm1010, %v995
        %1013 = vst.msk [vmem:[#allocation3 + $0x8] sm:$0xf] %vm1010, %v996
        %1014 = vst.msk [vmem:[#allocation3 + $0xc] sm:$0xf] %vm1010, %v997
        %1015 = vst.msk [vmem:[#allocation3 + $0x10] sm:$0xf] %vm1010, %v998
        %1016 = vst.msk [vmem:[#allocation3 + $0x14] sm:$0xf] %vm1010, %v999
        %1017 = vst.msk [vmem:[#allocation3 + $0x18] sm:$0xf] %vm1010, %v1000
        %1018 = vst.msk [vmem:[#allocation3 + $0x1c] sm:$0xf] %vm1010, %v1001
        %1019 = vst.msk [vmem:[#allocation3 + $0x20] sm:$0xf] %vm1010, %v1002
        %1020 = vst.msk [vmem:[#allocation3 + $0x24] sm:$0xf] %vm1010, %v1003
        %1021 = vst.msk [vmem:[#allocation3 + $0x28] sm:$0xf] %vm1010, %v1004
        %1022 = vst.msk [vmem:[#allocation3 + $0x2c] sm:$0xf] %vm1010, %v1005
        %1023 = vst.msk [vmem:[#allocation3 + $0x30] sm:$0xf] %vm1010, %v1006
        %1024 = vst.msk [vmem:[#allocation3 + $0x34] sm:$0xf] %vm1010, %v1007
        %1025 = vst.msk [vmem:[#allocation3 + $0x38] sm:$0xf] %vm1010, %v1008
        %1026 = vst.msk [vmem:[#allocation3 + $0x3c] sm:$0xf] %vm1010, %v1009
        %v1028 = vrot.slane %v861, 1
        %v1029 = vrot.slane %v861, 2
        %v1030 = vrot.slane %v861, 3
        %v1031 = vrot.slane %v861, 4
        %v1032 = vrot.slane %v861, 5
        %v1033 = vrot.slane %v861, 6
        %v1034 = vrot.slane %v861, 7
        %v1035 = vperm.slane %v861, 0
        %v1036 = vperm.slane %v1028, 0
        %v1037 = vperm.slane %v1029, 0
        %v1038 = vperm.slane %v1030, 0
        %v1039 = vperm.slane %v1031, 0
        %v1040 = vperm.slane %v1032, 0
        %v1041 = vperm.slane %v1033, 0
        %v1042 = vperm.slane %v1034, 0
        %v1051 = vmul.f32 %v978, %v1035
        %v1052 = vmul.f32 %v979, %v1035
        %v1053 = vmul.f32 %v980, %v1036
        %v1054 = vmul.f32 %v981, %v1036
        %v1055 = vmul.f32 %v982, %v1037
        %v1056 = vmul.f32 %v983, %v1037
        %v1057 = vmul.f32 %v984, %v1038
        %v1058 = vmul.f32 %v985, %v1038
        %v1059 = vmul.f32 %v986, %v1039
        %v1060 = vmul.f32 %v987, %v1039
        %v1061 = vmul.f32 %v988, %v1040
        %v1062 = vmul.f32 %v989, %v1040
        %v1063 = vmul.f32 %v990, %v1041
        %v1064 = vmul.f32 %v991, %v1041
        %v1065 = vmul.f32 %v992, %v1042
        %v1066 = vmul.f32 %v993, %v1042
        %v1067 = vpack.c.bf16 %v1051, %v1051
        %v1068 = vpack.c.bf16 %v1052, %v1052
        %v1069 = vpack.c.bf16 %v1053, %v1053
        %v1070 = vpack.c.bf16 %v1054, %v1054
        %v1071 = vpack.c.bf16 %v1055, %v1055
        %v1072 = vpack.c.bf16 %v1056, %v1056
        %v1073 = vpack.c.bf16 %v1057, %v1057
        %v1074 = vpack.c.bf16 %v1058, %v1058
        %v1075 = vpack.c.bf16 %v1059, %v1059
        %v1076 = vpack.c.bf16 %v1060, %v1060
        %v1077 = vpack.c.bf16 %v1061, %v1061
        %v1078 = vpack.c.bf16 %v1062, %v1062
        %v1079 = vpack.c.bf16 %v1063, %v1063
        %v1080 = vpack.c.bf16 %v1064, %v1064
        %v1081 = vpack.c.bf16 %v1065, %v1065
        %v1082 = vpack.c.bf16 %v1066, %v1066
        %1083 = vst.msk [vmem:[#allocation4] sm:$0xf] %vm1010, %v1067
        %1084 = vst.msk [vmem:[#allocation4 + $0x4] sm:$0xf] %vm1010, %v1068
        %1085 = vst.msk [vmem:[#allocation4 + $0x8] sm:$0xf] %vm1010, %v1069
        %1086 = vst.msk [vmem:[#allocation4 + $0xc] sm:$0xf] %vm1010, %v1070
        %1087 = vst.msk [vmem:[#allocation4 + $0x10] sm:$0xf] %vm1010, %v1071
        %1088 = vst.msk [vmem:[#allocation4 + $0x14] sm:$0xf] %vm1010, %v1072
        %1089 = vst.msk [vmem:[#allocation4 + $0x18] sm:$0xf] %vm1010, %v1073
        %1090 = vst.msk [vmem:[#allocation4 + $0x1c] sm:$0xf] %vm1010, %v1074
        %1091 = vst.msk [vmem:[#allocation4 + $0x20] sm:$0xf] %vm1010, %v1075
        %1092 = vst.msk [vmem:[#allocation4 + $0x24] sm:$0xf] %vm1010, %v1076
        %1093 = vst.msk [vmem:[#allocation4 + $0x28] sm:$0xf] %vm1010, %v1077
        %1094 = vst.msk [vmem:[#allocation4 + $0x2c] sm:$0xf] %vm1010, %v1078
        %1095 = vst.msk [vmem:[#allocation4 + $0x30] sm:$0xf] %vm1010, %v1079
        %1096 = vst.msk [vmem:[#allocation4 + $0x34] sm:$0xf] %vm1010, %v1080
        %1097 = vst.msk [vmem:[#allocation4 + $0x38] sm:$0xf] %vm1010, %v1081
        %1098 = vst.msk [vmem:[#allocation4 + $0x3c] sm:$0xf] %vm1010, %v1082
        // Predicated region
        $region125: #{tpu_custom_call.1} parent=91 // pred_check
          %p1099 = pneg %p811
        $region126: #{tpu_custom_call.1} parent=91 // pred_check_branch
          %1101 = sbr.rel (%p1099) target = $region128
        $region127: #{tpu_custom_call.1} parent=91 // pred_region
          %v1102 = vld [vmem:[#allocation4] sm:$0xf]
          %v1103 = vld [vmem:[#allocation4 + $0x4] sm:$0xf]
          %v1104 = vunpack.c.l.bf16 %v1102
          %v1105 = vunpack.c.l.bf16 %v1103
          %1106 = vst.msk [vmem:[#allocation5] sm:$0xff] %vm711, %v1104
          %1107 = vst.msk [vmem:[#allocation5 + $0x8] sm:$0xff] %vm711, %v1105
        $region128: #{tpu_custom_call.1} parent=91 // pred_fallthru
          _
        %v1108 = vld [vmem:[#allocation5] sm:$0xff]
        %v1109 = vld [vmem:[#allocation5 + $0x8] sm:$0xff]
        %v1110 = vld [vmem:[#allocation4] sm:$0xf]
        %v1111 = vld [vmem:[#allocation4 + $0x4] sm:$0xf]
        %v1112 = vunpack.c.l.bf16 %v1110
        %v1113 = vunpack.c.l.bf16 %v1111
        %v1114 = vld [vmem:[#allocation3] sm:$0xf]
        %v1115 = vld [vmem:[#allocation3 + $0x4] sm:$0xf]
        %v1116 = vunpack.c.l.bf16 %v1114
        %v1117 = vunpack.c.l.bf16 %v1115
        %v1118 = vpack.c.bf16 %v1108, %v1108
        %v1119 = vpack.c.bf16 %v1109, %v1109
        %1120 = vst.msk [vmem:[#allocation4] sm:$0xf] %vm1010, %v1118
        %1121 = vst.msk [vmem:[#allocation4 + $0x4] sm:$0xf] %vm1010, %v1119
        %v1122 = vmul.f32 %v1116, %v1108
        %v1123 = vmul.f32 %v1117, %v1109
        %v1124 = vadd.f32 %v1122, %v1112
        %v1125 = vadd.f32 %v1123, %v1113
        %s1126 = scalar_lea.vmem [#allocation4], 8
        %v1127 = vld [vmem:[%s1126] sm:$0xf]
        %v1128 = vld [vmem:[%s1126 + $0x4] sm:$0xf]
        %v1129 = vunpack.c.l.bf16 %v1127
        %v1130 = vunpack.c.l.bf16 %v1128
        %s1131 = scalar_lea.vmem [#allocation3], 8
        %v1132 = vld [vmem:[%s1131] sm:$0xf]
        %v1133 = vld [vmem:[%s1131 + $0x4] sm:$0xf]
        %v1134 = vunpack.c.l.bf16 %v1132
        %v1135 = vunpack.c.l.bf16 %v1133
        %v1136 = vpack.c.bf16 %v1124, %v1124
        %v1137 = vpack.c.bf16 %v1125, %v1125
        %1138 = vst.msk [vmem:[%s1126] sm:$0xf] %vm1010, %v1136
        %1139 = vst.msk [vmem:[%s1126 + $0x4] sm:$0xf] %vm1010, %v1137
        %v1140 = vmul.f32 %v1134, %v1124
        %v1141 = vmul.f32 %v1135, %v1125
        %v1142 = vadd.f32 %v1140, %v1129
        %v1143 = vadd.f32 %v1141, %v1130
        %s1144 = scalar_lea.vmem [#allocation4], 16
        %v1145 = vld [vmem:[%s1144] sm:$0xf]
        %v1146 = vld [vmem:[%s1144 + $0x4] sm:$0xf]
        %v1147 = vunpack.c.l.bf16 %v1145
        %v1148 = vunpack.c.l.bf16 %v1146
        %s1149 = scalar_lea.vmem [#allocation3], 16
        %v1150 = vld [vmem:[%s1149] sm:$0xf]
        %v1151 = vld [vmem:[%s1149 + $0x4] sm:$0xf]
        %v1152 = vunpack.c.l.bf16 %v1150
        %v1153 = vunpack.c.l.bf16 %v1151
        %v1154 = vpack.c.bf16 %v1142, %v1142
        %v1155 = vpack.c.bf16 %v1143, %v1143
        %1156 = vst.msk [vmem:[%s1144] sm:$0xf] %vm1010, %v1154
        %1157 = vst.msk [vmem:[%s1144 + $0x4] sm:$0xf] %vm1010, %v1155
        %v1158 = vmul.f32 %v1152, %v1142
        %v1159 = vmul.f32 %v1153, %v1143
        %v1160 = vadd.f32 %v1158, %v1147
        %v1161 = vadd.f32 %v1159, %v1148
        %s1162 = scalar_lea.vmem [#allocation4], 24
        %v1163 = vld [vmem:[%s1162] sm:$0xf]
        %v1164 = vld [vmem:[%s1162 + $0x4] sm:$0xf]
        %v1165 = vunpack.c.l.bf16 %v1163
        %v1166 = vunpack.c.l.bf16 %v1164
        %s1167 = scalar_lea.vmem [#allocation3], 24
        %v1168 = vld [vmem:[%s1167] sm:$0xf]
        %v1169 = vld [vmem:[%s1167 + $0x4] sm:$0xf]
        %v1170 = vunpack.c.l.bf16 %v1168
        %v1171 = vunpack.c.l.bf16 %v1169
        %v1172 = vpack.c.bf16 %v1160, %v1160
        %v1173 = vpack.c.bf16 %v1161, %v1161
        %1174 = vst.msk [vmem:[%s1162] sm:$0xf] %vm1010, %v1172
        %1175 = vst.msk [vmem:[%s1162 + $0x4] sm:$0xf] %vm1010, %v1173
        %v1176 = vmul.f32 %v1170, %v1160
        %v1177 = vmul.f32 %v1171, %v1161
        %v1178 = vadd.f32 %v1176, %v1165
        %v1179 = vadd.f32 %v1177, %v1166
        %s1180 = scalar_lea.vmem [#allocation4], 32
        %v1181 = vld [vmem:[%s1180] sm:$0xf]
        %v1182 = vld [vmem:[%s1180 + $0x4] sm:$0xf]
        %v1183 = vunpack.c.l.bf16 %v1181
        %v1184 = vunpack.c.l.bf16 %v1182
        %s1185 = scalar_lea.vmem [#allocation3], 32
        %v1186 = vld [vmem:[%s1185] sm:$0xf]
        %v1187 = vld [vmem:[%s1185 + $0x4] sm:$0xf]
        %v1188 = vunpack.c.l.bf16 %v1186
        %v1189 = vunpack.c.l.bf16 %v1187
        %v1190 = vpack.c.bf16 %v1178, %v1178
        %v1191 = vpack.c.bf16 %v1179, %v1179
        %1192 = vst.msk [vmem:[%s1180] sm:$0xf] %vm1010, %v1190
        %1193 = vst.msk [vmem:[%s1180 + $0x4] sm:$0xf] %vm1010, %v1191
        %v1194 = vmul.f32 %v1188, %v1178
        %v1195 = vmul.f32 %v1189, %v1179
        %v1196 = vadd.f32 %v1194, %v1183
        %v1197 = vadd.f32 %v1195, %v1184
        %s1198 = scalar_lea.vmem [#allocation4], 40
        %v1199 = vld [vmem:[%s1198] sm:$0xf]
        %v1200 = vld [vmem:[%s1198 + $0x4] sm:$0xf]
        %v1201 = vunpack.c.l.bf16 %v1199
        %v1202 = vunpack.c.l.bf16 %v1200
        %s1203 = scalar_lea.vmem [#allocation3], 40
        %v1204 = vld [vmem:[%s1203] sm:$0xf]
        %v1205 = vld [vmem:[%s1203 + $0x4] sm:$0xf]
        %v1206 = vunpack.c.l.bf16 %v1204
        %v1207 = vunpack.c.l.bf16 %v1205
        %v1208 = vpack.c.bf16 %v1196, %v1196
        %v1209 = vpack.c.bf16 %v1197, %v1197
        %1210 = vst.msk [vmem:[%s1198] sm:$0xf] %vm1010, %v1208
        %1211 = vst.msk [vmem:[%s1198 + $0x4] sm:$0xf] %vm1010, %v1209
        %v1212 = vmul.f32 %v1206, %v1196
        %v1213 = vmul.f32 %v1207, %v1197
        %v1214 = vadd.f32 %v1212, %v1201
        %v1215 = vadd.f32 %v1213, %v1202
        %s1216 = scalar_lea.vmem [#allocation4], 48
        %v1217 = vld [vmem:[%s1216] sm:$0xf]
        %v1218 = vld [vmem:[%s1216 + $0x4] sm:$0xf]
        %v1219 = vunpack.c.l.bf16 %v1217
        %v1220 = vunpack.c.l.bf16 %v1218
        %s1221 = scalar_lea.vmem [#allocation3], 48
        %v1222 = vld [vmem:[%s1221] sm:$0xf]
        %v1223 = vld [vmem:[%s1221 + $0x4] sm:$0xf]
        %v1224 = vunpack.c.l.bf16 %v1222
        %v1225 = vunpack.c.l.bf16 %v1223
        %v1226 = vpack.c.bf16 %v1214, %v1214
        %v1227 = vpack.c.bf16 %v1215, %v1215
        %1228 = vst.msk [vmem:[%s1216] sm:$0xf] %vm1010, %v1226
        %1229 = vst.msk [vmem:[%s1216 + $0x4] sm:$0xf] %vm1010, %v1227
        %v1230 = vmul.f32 %v1224, %v1214
        %v1231 = vmul.f32 %v1225, %v1215
        %v1232 = vadd.f32 %v1230, %v1219
        %v1233 = vadd.f32 %v1231, %v1220
        %s1234 = scalar_lea.vmem [#allocation4], 56
        %v1235 = vld [vmem:[%s1234] sm:$0xf]
        %v1236 = vld [vmem:[%s1234 + $0x4] sm:$0xf]
        %v1237 = vunpack.c.l.bf16 %v1235
        %v1238 = vunpack.c.l.bf16 %v1236
        %s1239 = scalar_lea.vmem [#allocation3], 56
        %v1240 = vld [vmem:[%s1239] sm:$0xf]
        %v1241 = vld [vmem:[%s1239 + $0x4] sm:$0xf]
        %v1242 = vunpack.c.l.bf16 %v1240
        %v1243 = vunpack.c.l.bf16 %v1241
        %v1244 = vpack.c.bf16 %v1232, %v1232
        %v1245 = vpack.c.bf16 %v1233, %v1233
        %1246 = vst.msk [vmem:[%s1234] sm:$0xf] %vm1010, %v1244
        %1247 = vst.msk [vmem:[%s1234 + $0x4] sm:$0xf] %vm1010, %v1245
        %v1248 = vmul.f32 %v1242, %v1232
        %v1249 = vmul.f32 %v1243, %v1233
        %v1250 = vadd.f32 %v1248, %v1237
        %v1251 = vadd.f32 %v1249, %v1238
        %1252 = vst.msk [vmem:[#allocation5] sm:$0xff] %vm711, %v1250
        %1253 = vst.msk [vmem:[#allocation5 + $0x8] sm:$0xff] %vm711, %v1251
        %v1254 = vld [vmem:[#allocation4] sm:$0x1]
        %v1255 = vld [vmem:[#allocation4 + $0x8] sm:$0x1]
        %v1256 = vld [vmem:[#allocation4 + $0x10] sm:$0x1]
        %v1257 = vld [vmem:[#allocation4 + $0x18] sm:$0x1]
        %v1258 = vld [vmem:[#allocation4 + $0x20] sm:$0x1]
        %v1259 = vld [vmem:[#allocation4 + $0x28] sm:$0x1]
        %v1260 = vld [vmem:[#allocation4 + $0x30] sm:$0x1]
        %v1261 = vld [vmem:[#allocation4 + $0x38] sm:$0x1]
        %v1262 = vunpack.c.l.bf16 %v1254
        %v1263 = vunpack.c.l.bf16 %v1255
        %v1264 = vunpack.c.l.bf16 %v1256
        %v1265 = vunpack.c.l.bf16 %v1257
        %v1266 = vunpack.c.l.bf16 %v1258
        %v1267 = vunpack.c.l.bf16 %v1259
        %v1268 = vunpack.c.l.bf16 %v1260
        %v1269 = vunpack.c.l.bf16 %v1261
        %1270 = vset.pattern.permute.xlu0 34
        %1271 = vperm.xlu0 %1270, %v779
        %v1272 = vpop.permute.xlu0 %1271
        %v1282 = vrot.slane %v1263, 7
        %vm1283 = vcmask 1041409
        %v1284 = vsel %vm1283, %v1282, %v1262
        %v1285 = vrot.slane %v1264, 6
        %vm1286 = vcmask 1042434
        %v1287 = vsel %vm1286, %v1285, %v1284
        %v1288 = vrot.slane %v1265, 5
        %vm1289 = vcmask 1043459
        %v1290 = vsel %vm1289, %v1288, %v1287
        %v1291 = vrot.slane %v1266, 4
        %vm1292 = vcmask 1044484
        %v1293 = vsel %vm1292, %v1291, %v1290
        %v1294 = vrot.slane %v1267, 3
        %vm1295 = vcmask 1045509
        %v1296 = vsel %vm1295, %v1294, %v1293
        %v1297 = vrot.slane %v1268, 2
        %vm1298 = vcmask 1046534
        %v1299 = vsel %vm1298, %v1297, %v1296
        %v1300 = vrot.slane %v1269, 1
        %vm1301 = vcmask 1047559
        %v1302 = vsel %vm1301, %v1300, %v1299
        %v1304 = vmul.f32 %v1272, %v1302
        %1305 = vset.pattern.permute.xlu0 35
        %1306 = vperm.xlu0 %1305, %v779
        %v1307 = vpop.permute.xlu0 %1306
        %v1309 = vrot.slane %v1262, 1
        %v1310 = vsel %vm1283, %v1263, %v1309
        %v1311 = vrot.slane %v1264, 7
        %v1312 = vsel %vm1286, %v1311, %v1310
        %v1313 = vrot.slane %v1265, 6
        %v1314 = vsel %vm1289, %v1313, %v1312
        %v1315 = vrot.slane %v1266, 5
        %v1316 = vsel %vm1292, %v1315, %v1314
        %v1317 = vrot.slane %v1267, 4
        %v1318 = vsel %vm1295, %v1317, %v1316
        %v1319 = vrot.slane %v1268, 3
        %v1320 = vsel %vm1298, %v1319, %v1318
        %v1321 = vrot.slane %v1269, 2
        %v1322 = vsel %vm1301, %v1321, %v1320
        %v1324 = vmul.f32 %v1307, %v1322
        %v1325 = vadd.f32 %v1304, %v1324
        %v1326 = vld [vmem:[#allocation4] sm:$0x2]
        %v1327 = vld [vmem:[#allocation4 + $0x8] sm:$0x2]
        %v1328 = vld [vmem:[#allocation4 + $0x10] sm:$0x2]
        %v1329 = vld [vmem:[#allocation4 + $0x18] sm:$0x2]
        %v1330 = vld [vmem:[#allocation4 + $0x20] sm:$0x2]
        %v1331 = vld [vmem:[#allocation4 + $0x28] sm:$0x2]
        %v1332 = vld [vmem:[#allocation4 + $0x30] sm:$0x2]
        %v1333 = vld [vmem:[#allocation4 + $0x38] sm:$0x2]
        %v1334 = vunpack.c.l.bf16 %v1326
        %v1335 = vunpack.c.l.bf16 %v1327
        %v1336 = vunpack.c.l.bf16 %v1328
        %v1337 = vunpack.c.l.bf16 %v1329
        %v1338 = vunpack.c.l.bf16 %v1330
        %v1339 = vunpack.c.l.bf16 %v1331
        %v1340 = vunpack.c.l.bf16 %v1332
        %v1341 = vunpack.c.l.bf16 %v1333
        %1342 = vset.pattern.permute.xlu0 36
        %1343 = vperm.xlu0 %1342, %v779
        %v1344 = vpop.permute.xlu0 %1343
        %v1354 = vrot.slane %v1334, 2
        %v1355 = vrot.slane %v1335, 1
        %v1356 = vsel %vm1283, %v1355, %v1354
        %v1357 = vsel %vm1286, %v1336, %v1356
        %v1358 = vrot.slane %v1337, 7
        %v1359 = vsel %vm1289, %v1358, %v1357
        %v1360 = vrot.slane %v1338, 6
        %v1361 = vsel %vm1292, %v1360, %v1359
        %v1362 = vrot.slane %v1339, 5
        %v1363 = vsel %vm1295, %v1362, %v1361
        %v1364 = vrot.slane %v1340, 4
        %v1365 = vsel %vm1298, %v1364, %v1363
        %v1366 = vrot.slane %v1341, 3
        %v1367 = vsel %vm1301, %v1366, %v1365
        %v1369 = vmul.f32 %v1344, %v1367
        %v1370 = vadd.f32 %v1325, %v1369
        %1371 = vset.pattern.permute.xlu0 37
        %1372 = vperm.xlu0 %1371, %v779
        %v1373 = vpop.permute.xlu0 %1372
        %v1375 = vrot.slane %v1334, 3
        %v1376 = vrot.slane %v1335, 2
        %v1377 = vsel %vm1283, %v1376, %v1375
        %v1378 = vrot.slane %v1336, 1
        %v1379 = vsel %vm1286, %v1378, %v1377
        %v1380 = vsel %vm1289, %v1337, %v1379
        %v1381 = vrot.slane %v1338, 7
        %v1382 = vsel %vm1292, %v1381, %v1380
        %v1383 = vrot.slane %v1339, 6
        %v1384 = vsel %vm1295, %v1383, %v1382
        %v1385 = vrot.slane %v1340, 5
        %v1386 = vsel %vm1298, %v1385, %v1384
        %v1387 = vrot.slane %v1341, 4
        %v1388 = vsel %vm1301, %v1387, %v1386
        %v1390 = vmul.f32 %v1373, %v1388
        %v1391 = vadd.f32 %v1370, %v1390
        %v1392 = vld [vmem:[#allocation4] sm:$0x4]
        %v1393 = vld [vmem:[#allocation4 + $0x8] sm:$0x4]
        %v1394 = vld [vmem:[#allocation4 + $0x10] sm:$0x4]
        %v1395 = vld [vmem:[#allocation4 + $0x18] sm:$0x4]
        %v1396 = vld [vmem:[#allocation4 + $0x20] sm:$0x4]
        %v1397 = vld [vmem:[#allocation4 + $0x28] sm:$0x4]
        %v1398 = vld [vmem:[#allocation4 + $0x30] sm:$0x4]
        %v1399 = vld [vmem:[#allocation4 + $0x38] sm:$0x4]
        %v1400 = vunpack.c.l.bf16 %v1392
        %v1401 = vunpack.c.l.bf16 %v1393
        %v1402 = vunpack.c.l.bf16 %v1394
        %v1403 = vunpack.c.l.bf16 %v1395
        %v1404 = vunpack.c.l.bf16 %v1396
        %v1405 = vunpack.c.l.bf16 %v1397
        %v1406 = vunpack.c.l.bf16 %v1398
        %v1407 = vunpack.c.l.bf16 %v1399
        %1408 = vset.pattern.permute.xlu0 38
        %1409 = vperm.xlu0 %1408, %v779
        %v1410 = vpop.permute.xlu0 %1409
        %v1420 = vrot.slane %v1400, 4
        %v1421 = vrot.slane %v1401, 3
        %v1422 = vsel %vm1283, %v1421, %v1420
        %v1423 = vrot.slane %v1402, 2
        %v1424 = vsel %vm1286, %v1423, %v1422
        %v1425 = vrot.slane %v1403, 1
        %v1426 = vsel %vm1289, %v1425, %v1424
        %v1427 = vsel %vm1292, %v1404, %v1426
        %v1428 = vrot.slane %v1405, 7
        %v1429 = vsel %vm1295, %v1428, %v1427
        %v1430 = vrot.slane %v1406, 6
        %v1431 = vsel %vm1298, %v1430, %v1429
        %v1432 = vrot.slane %v1407, 5
        %v1433 = vsel %vm1301, %v1432, %v1431
        %v1435 = vmul.f32 %v1410, %v1433
        %v1436 = vadd.f32 %v1391, %v1435
        %1437 = vset.pattern.permute.xlu0 39
        %1438 = vperm.xlu0 %1437, %v779
        %v1439 = vpop.permute.xlu0 %1438
        %v1441 = vrot.slane %v1400, 5
        %v1442 = vrot.slane %v1401, 4
        %v1443 = vsel %vm1283, %v1442, %v1441
        %v1444 = vrot.slane %v1402, 3
        %v1445 = vsel %vm1286, %v1444, %v1443
        %v1446 = vrot.slane %v1403, 2
        %v1447 = vsel %vm1289, %v1446, %v1445
        %v1448 = vrot.slane %v1404, 1
        %v1449 = vsel %vm1292, %v1448, %v1447
        %v1450 = vsel %vm1295, %v1405, %v1449
        %v1451 = vrot.slane %v1406, 7
        %v1452 = vsel %vm1298, %v1451, %v1450
        %v1453 = vrot.slane %v1407, 6
        %v1454 = vsel %vm1301, %v1453, %v1452
        %v1456 = vmul.f32 %v1439, %v1454
        %v1457 = vadd.f32 %v1436, %v1456
        %v1458 = vld [vmem:[#allocation4] sm:$0x8]
        %v1459 = vld [vmem:[#allocation4 + $0x8] sm:$0x8]
        %v1460 = vld [vmem:[#allocation4 + $0x10] sm:$0x8]
        %v1461 = vld [vmem:[#allocation4 + $0x18] sm:$0x8]
        %v1462 = vld [vmem:[#allocation4 + $0x20] sm:$0x8]
        %v1463 = vld [vmem:[#allocation4 + $0x28] sm:$0x8]
        %v1464 = vld [vmem:[#allocation4 + $0x30] sm:$0x8]
        %v1465 = vld [vmem:[#allocation4 + $0x38] sm:$0x8]
        %v1466 = vunpack.c.l.bf16 %v1458
        %v1467 = vunpack.c.l.bf16 %v1459
        %v1468 = vunpack.c.l.bf16 %v1460
        %v1469 = vunpack.c.l.bf16 %v1461
        %v1470 = vunpack.c.l.bf16 %v1462
        %v1471 = vunpack.c.l.bf16 %v1463
        %v1472 = vunpack.c.l.bf16 %v1464
        %v1473 = vunpack.c.l.bf16 %v1465
        %1474 = vset.pattern.permute.xlu0 40
        %1475 = vperm.xlu0 %1474, %v779
        %v1476 = vpop.permute.xlu0 %1475
        %v1486 = vrot.slane %v1466, 6
        %v1487 = vrot.slane %v1467, 5
        %v1488 = vsel %vm1283, %v1487, %v1486
        %v1489 = vrot.slane %v1468, 4
        %v1490 = vsel %vm1286, %v1489, %v1488
        %v1491 = vrot.slane %v1469, 3
        %v1492 = vsel %vm1289, %v1491, %v1490
        %v1493 = vrot.slane %v1470, 2
        %v1494 = vsel %vm1292, %v1493, %v1492
        %v1495 = vrot.slane %v1471, 1
        %v1496 = vsel %vm1295, %v1495, %v1494
        %v1497 = vsel %vm1298, %v1472, %v1496
        %v1498 = vrot.slane %v1473, 7
        %v1499 = vsel %vm1301, %v1498, %v1497
        %v1501 = vmul.f32 %v1476, %v1499
        %v1502 = vadd.f32 %v1457, %v1501
        %1503 = vset.pattern.permute.xlu0 41
        %1504 = vperm.xlu0 %1503, %v779
        %v1505 = vpop.permute.xlu0 %1504
        %v1507 = vrot.slane %v1466, 7
        %v1508 = vrot.slane %v1467, 6
        %v1509 = vsel %vm1283, %v1508, %v1507
        %v1510 = vrot.slane %v1468, 5
        %v1511 = vsel %vm1286, %v1510, %v1509
        %v1512 = vrot.slane %v1469, 4
        %v1513 = vsel %vm1289, %v1512, %v1511
        %v1514 = vrot.slane %v1470, 3
        %v1515 = vsel %vm1292, %v1514, %v1513
        %v1516 = vrot.slane %v1471, 2
        %v1517 = vsel %vm1295, %v1516, %v1515
        %v1518 = vrot.slane %v1472, 1
        %v1519 = vsel %vm1298, %v1518, %v1517
        %v1520 = vsel %vm1301, %v1473, %v1519
        %v1522 = vmul.f32 %v1505, %v1520
        %v1523 = vadd.f32 %v1502, %v1522
        %v1524 = vld [vmem:[#allocation4 + $0x4] sm:$0x1]
        %v1525 = vld [vmem:[#allocation4 + $0xc] sm:$0x1]
        %v1526 = vld [vmem:[#allocation4 + $0x14] sm:$0x1]
        %v1527 = vld [vmem:[#allocation4 + $0x1c] sm:$0x1]
        %v1528 = vld [vmem:[#allocation4 + $0x24] sm:$0x1]
        %v1529 = vld [vmem:[#allocation4 + $0x2c] sm:$0x1]
        %v1530 = vld [vmem:[#allocation4 + $0x34] sm:$0x1]
        %v1531 = vld [vmem:[#allocation4 + $0x3c] sm:$0x1]
        %v1532 = vunpack.c.l.bf16 %v1524
        %v1533 = vunpack.c.l.bf16 %v1525
        %v1534 = vunpack.c.l.bf16 %v1526
        %v1535 = vunpack.c.l.bf16 %v1527
        %v1536 = vunpack.c.l.bf16 %v1528
        %v1537 = vunpack.c.l.bf16 %v1529
        %v1538 = vunpack.c.l.bf16 %v1530
        %v1539 = vunpack.c.l.bf16 %v1531
        %1540 = vset.pattern.permute.xlu0 42
        %1541 = vperm.xlu0 %1540, %v779
        %v1542 = vpop.permute.xlu0 %1541
        %v1552 = vrot.slane %v1533, 7
        %v1553 = vsel %vm1283, %v1552, %v1532
        %v1554 = vrot.slane %v1534, 6
        %v1555 = vsel %vm1286, %v1554, %v1553
        %v1556 = vrot.slane %v1535, 5
        %v1557 = vsel %vm1289, %v1556, %v1555
        %v1558 = vrot.slane %v1536, 4
        %v1559 = vsel %vm1292, %v1558, %v1557
        %v1560 = vrot.slane %v1537, 3
        %v1561 = vsel %vm1295, %v1560, %v1559
        %v1562 = vrot.slane %v1538, 2
        %v1563 = vsel %vm1298, %v1562, %v1561
        %v1564 = vrot.slane %v1539, 1
        %v1565 = vsel %vm1301, %v1564, %v1563
        %v1567 = vmul.f32 %v1542, %v1565
        %v1568 = vadd.f32 %v1523, %v1567
        %1569 = vset.pattern.permute.xlu0 43
        %1570 = vperm.xlu0 %1569, %v779
        %v1571 = vpop.permute.xlu0 %1570
        %v1573 = vrot.slane %v1532, 1
        %v1574 = vsel %vm1283, %v1533, %v1573
        %v1575 = vrot.slane %v1534, 7
        %v1576 = vsel %vm1286, %v1575, %v1574
        %v1577 = vrot.slane %v1535, 6
        %v1578 = vsel %vm1289, %v1577, %v1576
        %v1579 = vrot.slane %v1536, 5
        %v1580 = vsel %vm1292, %v1579, %v1578
        %v1581 = vrot.slane %v1537, 4
        %v1582 = vsel %vm1295, %v1581, %v1580
        %v1583 = vrot.slane %v1538, 3
        %v1584 = vsel %vm1298, %v1583, %v1582
        %v1585 = vrot.slane %v1539, 2
        %v1586 = vsel %vm1301, %v1585, %v1584
        %v1588 = vmul.f32 %v1571, %v1586
        %v1589 = vadd.f32 %v1568, %v1588
        %v1590 = vld [vmem:[#allocation4 + $0x4] sm:$0x2]
        %v1591 = vld [vmem:[#allocation4 + $0xc] sm:$0x2]
        %v1592 = vld [vmem:[#allocation4 + $0x14] sm:$0x2]
        %v1593 = vld [vmem:[#allocation4 + $0x1c] sm:$0x2]
        %v1594 = vld [vmem:[#allocation4 + $0x24] sm:$0x2]
        %v1595 = vld [vmem:[#allocation4 + $0x2c] sm:$0x2]
        %v1596 = vld [vmem:[#allocation4 + $0x34] sm:$0x2]
        %v1597 = vld [vmem:[#allocation4 + $0x3c] sm:$0x2]
        %v1598 = vunpack.c.l.bf16 %v1590
        %v1599 = vunpack.c.l.bf16 %v1591
        %v1600 = vunpack.c.l.bf16 %v1592
        %v1601 = vunpack.c.l.bf16 %v1593
        %v1602 = vunpack.c.l.bf16 %v1594
        %v1603 = vunpack.c.l.bf16 %v1595
        %v1604 = vunpack.c.l.bf16 %v1596
        %v1605 = vunpack.c.l.bf16 %v1597
        %1606 = vset.pattern.permute.xlu0 44
        %1607 = vperm.xlu0 %1606, %v779
        %v1608 = vpop.permute.xlu0 %1607
        %v1618 = vrot.slane %v1598, 2
        %v1619 = vrot.slane %v1599, 1
        %v1620 = vsel %vm1283, %v1619, %v1618
        %v1621 = vsel %vm1286, %v1600, %v1620
        %v1622 = vrot.slane %v1601, 7
        %v1623 = vsel %vm1289, %v1622, %v1621
        %v1624 = vrot.slane %v1602, 6
        %v1625 = vsel %vm1292, %v1624, %v1623
        %v1626 = vrot.slane %v1603, 5
        %v1627 = vsel %vm1295, %v1626, %v1625
        %v1628 = vrot.slane %v1604, 4
        %v1629 = vsel %vm1298, %v1628, %v1627
        %v1630 = vrot.slane %v1605, 3
        %v1631 = vsel %vm1301, %v1630, %v1629
        %v1633 = vmul.f32 %v1608, %v1631
        %v1634 = vadd.f32 %v1589, %v1633
        %1635 = vset.pattern.permute.xlu0 45
        %1636 = vperm.xlu0 %1635, %v779
        %v1637 = vpop.permute.xlu0 %1636
        %v1639 = vrot.slane %v1598, 3
        %v1640 = vrot.slane %v1599, 2
        %v1641 = vsel %vm1283, %v1640, %v1639
        %v1642 = vrot.slane %v1600, 1
        %v1643 = vsel %vm1286, %v1642, %v1641
        %v1644 = vsel %vm1289, %v1601, %v1643
        %v1645 = vrot.slane %v1602, 7
        %v1646 = vsel %vm1292, %v1645, %v1644
        %v1647 = vrot.slane %v1603, 6
        %v1648 = vsel %vm1295, %v1647, %v1646
        %v1649 = vrot.slane %v1604, 5
        %v1650 = vsel %vm1298, %v1649, %v1648
        %v1651 = vrot.slane %v1605, 4
        %v1652 = vsel %vm1301, %v1651, %v1650
        %v1654 = vmul.f32 %v1637, %v1652
        %v1655 = vadd.f32 %v1634, %v1654
        %v1656 = vld [vmem:[#allocation4 + $0x4] sm:$0x4]
        %v1657 = vld [vmem:[#allocation4 + $0xc] sm:$0x4]
        %v1658 = vld [vmem:[#allocation4 + $0x14] sm:$0x4]
        %v1659 = vld [vmem:[#allocation4 + $0x1c] sm:$0x4]
        %v1660 = vld [vmem:[#allocation4 + $0x24] sm:$0x4]
        %v1661 = vld [vmem:[#allocation4 + $0x2c] sm:$0x4]
        %v1662 = vld [vmem:[#allocation4 + $0x34] sm:$0x4]
        %v1663 = vld [vmem:[#allocation4 + $0x3c] sm:$0x4]
        %v1664 = vunpack.c.l.bf16 %v1656
        %v1665 = vunpack.c.l.bf16 %v1657
        %v1666 = vunpack.c.l.bf16 %v1658
        %v1667 = vunpack.c.l.bf16 %v1659
        %v1668 = vunpack.c.l.bf16 %v1660
        %v1669 = vunpack.c.l.bf16 %v1661
        %v1670 = vunpack.c.l.bf16 %v1662
        %v1671 = vunpack.c.l.bf16 %v1663
        %1672 = vset.pattern.permute.xlu0 46
        %1673 = vperm.xlu0 %1672, %v779
        %v1674 = vpop.permute.xlu0 %1673
        %v1684 = vrot.slane %v1664, 4
        %v1685 = vrot.slane %v1665, 3
        %v1686 = vsel %vm1283, %v1685, %v1684
        %v1687 = vrot.slane %v1666, 2
        %v1688 = vsel %vm1286, %v1687, %v1686
        %v1689 = vrot.slane %v1667, 1
        %v1690 = vsel %vm1289, %v1689, %v1688
        %v1691 = vsel %vm1292, %v1668, %v1690
        %v1692 = vrot.slane %v1669, 7
        %v1693 = vsel %vm1295, %v1692, %v1691
        %v1694 = vrot.slane %v1670, 6
        %v1695 = vsel %vm1298, %v1694, %v1693
        %v1696 = vrot.slane %v1671, 5
        %v1697 = vsel %vm1301, %v1696, %v1695
        %v1699 = vmul.f32 %v1674, %v1697
        %v1700 = vadd.f32 %v1655, %v1699
        %1701 = vset.pattern.permute.xlu0 47
        %1702 = vperm.xlu0 %1701, %v779
        %v1703 = vpop.permute.xlu0 %1702
        %v1705 = vrot.slane %v1664, 5
        %v1706 = vrot.slane %v1665, 4
        %v1707 = vsel %vm1283, %v1706, %v1705
        %v1708 = vrot.slane %v1666, 3
        %v1709 = vsel %vm1286, %v1708, %v1707
        %v1710 = vrot.slane %v1667, 2
        %v1711 = vsel %vm1289, %v1710, %v1709
        %v1712 = vrot.slane %v1668, 1
        %v1713 = vsel %vm1292, %v1712, %v1711
        %v1714 = vsel %vm1295, %v1669, %v1713
        %v1715 = vrot.slane %v1670, 7
        %v1716 = vsel %vm1298, %v1715, %v1714
        %v1717 = vrot.slane %v1671, 6
        %v1718 = vsel %vm1301, %v1717, %v1716
        %v1720 = vmul.f32 %v1703, %v1718
        %v1721 = vadd.f32 %v1700, %v1720
        %v1722 = vld [vmem:[#allocation4 + $0x4] sm:$0x8]
        %v1723 = vld [vmem:[#allocation4 + $0xc] sm:$0x8]
        %v1724 = vld [vmem:[#allocation4 + $0x14] sm:$0x8]
        %v1725 = vld [vmem:[#allocation4 + $0x1c] sm:$0x8]
        %v1726 = vld [vmem:[#allocation4 + $0x24] sm:$0x8]
        %v1727 = vld [vmem:[#allocation4 + $0x2c] sm:$0x8]
        %v1728 = vld [vmem:[#allocation4 + $0x34] sm:$0x8]
        %v1729 = vld [vmem:[#allocation4 + $0x3c] sm:$0x8]
        %v1730 = vunpack.c.l.bf16 %v1722
        %v1731 = vunpack.c.l.bf16 %v1723
        %v1732 = vunpack.c.l.bf16 %v1724
        %v1733 = vunpack.c.l.bf16 %v1725
        %v1734 = vunpack.c.l.bf16 %v1726
        %v1735 = vunpack.c.l.bf16 %v1727
        %v1736 = vunpack.c.l.bf16 %v1728
        %v1737 = vunpack.c.l.bf16 %v1729
        %1738 = vset.pattern.permute.xlu0 48
        %1739 = vperm.xlu0 %1738, %v779
        %v1740 = vpop.permute.xlu0 %1739
        %v1750 = vrot.slane %v1730, 6
        %v1751 = vrot.slane %v1731, 5
        %v1752 = vsel %vm1283, %v1751, %v1750
        %v1753 = vrot.slane %v1732, 4
        %v1754 = vsel %vm1286, %v1753, %v1752
        %v1755 = vrot.slane %v1733, 3
        %v1756 = vsel %vm1289, %v1755, %v1754
        %v1757 = vrot.slane %v1734, 2
        %v1758 = vsel %vm1292, %v1757, %v1756
        %v1759 = vrot.slane %v1735, 1
        %v1760 = vsel %vm1295, %v1759, %v1758
        %v1761 = vsel %vm1298, %v1736, %v1760
        %v1762 = vrot.slane %v1737, 7
        %v1763 = vsel %vm1301, %v1762, %v1761
        %v1765 = vmul.f32 %v1740, %v1763
        %v1766 = vadd.f32 %v1721, %v1765
        %1767 = vset.pattern.permute.xlu0 49
        %1768 = vperm.xlu0 %1767, %v779
        %v1769 = vpop.permute.xlu0 %1768
        %v1771 = vrot.slane %v1730, 7
        %v1772 = vrot.slane %v1731, 6
        %v1773 = vsel %vm1283, %v1772, %v1771
        %v1774 = vrot.slane %v1732, 5
        %v1775 = vsel %vm1286, %v1774, %v1773
        %v1776 = vrot.slane %v1733, 4
        %v1777 = vsel %vm1289, %v1776, %v1775
        %v1778 = vrot.slane %v1734, 3
        %v1779 = vsel %vm1292, %v1778, %v1777
        %v1780 = vrot.slane %v1735, 2
        %v1781 = vsel %vm1295, %v1780, %v1779
        %v1782 = vrot.slane %v1736, 1
        %v1783 = vsel %vm1298, %v1782, %v1781
        %v1784 = vsel %vm1301, %v1737, %v1783
        %v1786 = vmul.f32 %v1769, %v1784
        %v1787 = vadd.f32 %v1766, %v1786
        %v1788 = vld [vmem:[%s10] sm:$0x1]
        %v1790 = vperm.slane %v1788, 0
        %v1792 = vmul.f32 %v861, %v1790
        %v1793 = vadd.f32 %v1787, %v1792
        %v1794 = vsub.f32 0.0, %v779
        %v1795 = vmul.f32 %v1794, 1.442695
        %v1796 = vpow.pop %v1795
        %v1797 = vadd.f32 %v1796, 1.0
        %v1798 = vrcp.pop %v1797
        %v1799 = vmul.f32 %v1797, %v1798
        %v1800 = vsub.f32 1.0, %v1799
        %v1801 = vmul.f32 %v1798, %v1800
        %v1802 = vadd.f32 %v1798, %v1801
        %vm1803 = vweird.f32 %v1797
        %vm1804 = vweird.f32 %v1798
        %vm1805 = vmor %vm1803, %vm1804
        %v1806 = vsel %vm1805, %v1798, %v1802
        %v1807 = vand.u32 2147483647, %v1797
        %vm1808 = vcmp.eq.f32.partialorder %v1807, 8.507059e+37
        %v1809 = vand.u32 %v1797, 2147483648
        %v1810 = vor.u32 1.1754944e-38, %v1809
        %v1811 = vsel %vm1808, %v1810, %v1806
        %v1812 = vmul.f32 1.0, %v1811
        %v1813 = vmul.f32 %v779, %v1812
        %v1814 = vmul.f32 %v1793, %v1813
        %v1815 = vpack.c.bf16 %v1814, %v1814
        %v1816 = vld [vmem:[#allocation16] sm:$0xf]
        %v1817 = vld [vmem:[#allocation16 + $0x4] sm:$0xf]
        %v1818 = vld [vmem:[#allocation16 + $0x8] sm:$0xf]
        %v1819 = vld [vmem:[#allocation16 + $0xc] sm:$0xf]
        %v1824 = vunpack.c.l.b16 %v1816
        %v1825 = vunpack.c.l.b16 %v1817
        %v1826 = vunpack.c.l.b16 %v1818
        %v1827 = vunpack.c.l.b16 %v1819
        %v1828 = vpack.c.b16 %v1825, %v1824
        %v1829 = vpack.c.b16 %v1827, %v1826
        %v1833 = vsel %vm711, %v1815, 0
        %1835 = vmatpush.bf16.msra.mxu0 0
        %1836 = vmatpush.bf16.msra.mxu0 0
        %1837 = vmatpush.bf16.msra.mxu0 0
        %1838 = vmatpush.bf16.msra.mxu0 0
        %1839 = vmatpush.bf16.msra.mxu0 0
        %1840 = vmatpush.bf16.msra.mxu0 0
        %1841 = vmatpush.bf16.msra.mxu0 %v1829
        %1842 = vmatpush.bf16.msra.mxu0 %v1828
        %1843 = vmatmul.bf16.gmra.mxu0 %v1833
        %v1844 = vpop.f32.mrf.mxu0
        %v1845 = vadd.f32 0.0, %v1844
        %v1846 = vpop.f32.mrf.mxu0
        %1847 = vdwg.mxu0
        %v1848 = vadd.f32 %v708, %v1845
        %v1849 = vld [vmem:[%s12] sm:$0x1]
        %v1850 = vld [vmem:[%s13] sm:$0x1]
        %v1851 = vsel %vm711, %v1848, 0.0
        %1852 = vadd.xlane.f32.xlu0 %v1851
        %v1853 = vpop.xlane.xlu0 %1852
        %v1854 = vmul.f32 %v1853, %v721
        %v1855 = vsub.f32 %v1848, %v1854
        %v1856 = vmul.f32 %v1855, %v1855
        %v1857 = vsel %vm711, %v1856, 0.0
        %1858 = vadd.xlane.f32.xlu0 %v1857
        %v1859 = vpop.xlane.xlu0 %1858
        %v1860 = vmul.f32 %v1859, %v721
        %v1861 = vadd.f32 %v1860, 1e-05
        %v1862 = vrsqrt.pop %v1861
        %v1863 = vmul.f32 %v1862, %v1861
        %v1864 = vmul.f32 %v1863, %v1862
        %v1865 = vmul.f32 0.5, %v1864
        %v1866 = vsub.f32 1.5, %v1865
        %v1867 = vmul.f32 %v1862, %v1866
        %vm1868 = vweird.f32 %v1861
        %vm1869 = vweird.f32 %v1862
        %vm1870 = vmor %vm1868, %vm1869
        %v1871 = vsel %vm1870, %v1862, %v1867
        %v1872 = vmul.f32 %v1855, %v1871
        %v1874 = vperm.slane %v1849, 0
        %v1876 = vmul.f32 %v1872, %v1874
        %v1878 = vperm.slane %v1850, 0
        %v1880 = vadd.f32 %v1876, %v1878
        %v1881 = vpack.c.bf16 %v1880, %v1880
        %v1882 = vld [vmem:[#allocation18] sm:$0xf]
        %v1883 = vld [vmem:[#allocation18 + $0x4] sm:$0xf]
        %v1884 = vld [vmem:[#allocation18 + $0x8] sm:$0xf]
        %v1885 = vld [vmem:[#allocation18 + $0xc] sm:$0xf]
        %v1886 = vld [vmem:[%s15] sm:$0x1]
        %v1888 = vperm.slane %v1886, 0
        %v1894 = vunpack.c.l.b16 %v1882
        %v1895 = vunpack.c.l.b16 %v1883
        %v1896 = vunpack.c.l.b16 %v1884
        %v1897 = vunpack.c.l.b16 %v1885
        %v1898 = vpack.c.b16 %v1895, %v1894
        %v1899 = vpack.c.b16 %v1897, %v1896
        %v1903 = vsel %vm711, %v1881, 0
        %1905 = vmatpush.bf16.msra.mxu0 0
        %1906 = vmatpush.bf16.msra.mxu0 0
        %1907 = vmatpush.bf16.msra.mxu0 0
        %1908 = vmatpush.bf16.msra.mxu0 0
        %1909 = vmatpush.bf16.msra.mxu0 0
        %1910 = vmatpush.bf16.msra.mxu0 0
        %1911 = vmatpush.bf16.msra.mxu0 %v1899
        %1912 = vmatpush.bf16.msra.mxu0 %v1898
        %1913 = vmatmul.bf16.gmra.mxu0 %v1903
        %v1914 = vpop.f32.mrf.mxu0
        %v1915 = vadd.f32 %v1888, %v1914
        %v1916 = vpop.f32.mrf.mxu0
        %1917 = vdwg.mxu0
        %v1918 = vmul.f32 %v1915, 0.5
        %v1919 = vmul.f32 %v1915, 0.70710677
        %vm1920 = vcmp.ge.f32.partialorder %v1919, 0.0
        %v1921 = vsel %vm1920, 1.0, -1.0
        %v1922 = vand.u32 2147483647, %v1919
        %v1923 = vmul.f32 %v1922, 0.3275911
        %v1924 = vadd.f32 %v1923, 1.0
        %v1925 = vrcp.pop %v1924
        %v1926 = vmul.f32 %v1924, %v1925
        %v1927 = vsub.f32 1.0, %v1926
        %v1928 = vmul.f32 %v1925, %v1927
        %v1929 = vadd.f32 %v1925, %v1928
        %vm1930 = vweird.f32 %v1924
        %vm1931 = vweird.f32 %v1925
        %vm1932 = vmor %vm1930, %vm1931
        %v1933 = vsel %vm1932, %v1925, %v1929
        %v1934 = vand.u32 2147483647, %v1924
        %vm1935 = vcmp.eq.f32.partialorder %v1934, 8.507059e+37
        %v1936 = vand.u32 %v1924, 2147483648
        %v1937 = vor.u32 1.1754944e-38, %v1936
        %v1938 = vsel %vm1935, %v1937, %v1933
        %v1939 = vmul.f32 1.0, %v1938
        %v1940 = vmul.f32 %v1939, 1.0614054
        %v1941 = vadd.f32 %v1940, -1.4531521
        %v1942 = vmul.f32 %v1941, %v1939
        %v1943 = vadd.f32 %v1942, 1.4214138
        %v1944 = vmul.f32 %v1943, %v1939
        %v1945 = vadd.f32 %v1944, -0.28449672
        %v1946 = vmul.f32 %v1945, %v1939
        %v1947 = vadd.f32 %v1946, 0.2548296
        %v1948 = vmul.f32 %v1947, %v1939
        %v1949 = vsub.f32 0.0, %v1922
        %v1950 = vmul.f32 %v1949, %v1922
        %v1951 = vmul.f32 %v1950, 1.442695
        %v1952 = vpow.pop %v1951
        %v1953 = vmul.f32 %v1948, %v1952
        %v1954 = vsub.f32 1.0, %v1953
        %v1955 = vmul.f32 %v1921, %v1954
        %v1956 = vadd.f32 %v1955, 1.0
        %v1957 = vmul.f32 %v1918, %v1956
        %v1958 = vpack.c.bf16 %v1957, %v1957
        %v1959 = vld [vmem:[%s16] sm:$0xf]
        %v1960 = vld [vmem:[%s16 + $0x4] sm:$0xf]
        %v1961 = vld [vmem:[%s16 + $0x8] sm:$0xf]
        %v1962 = vld [vmem:[%s16 + $0xc] sm:$0xf]
        %v1963 = vld [vmem:[%s16 + $0x10] sm:$0xf]
        %v1964 = vld [vmem:[%s16 + $0x14] sm:$0xf]
        %v1965 = vld [vmem:[%s16 + $0x18] sm:$0xf]
        %v1966 = vld [vmem:[%s16 + $0x1c] sm:$0xf]
        %v1967 = vld [vmem:[%s16 + $0x20] sm:$0xf]
        %v1968 = vld [vmem:[%s16 + $0x24] sm:$0xf]
        %v1969 = vld [vmem:[%s16 + $0x28] sm:$0xf]
        %v1970 = vld [vmem:[%s16 + $0x2c] sm:$0xf]
        %v1971 = vld [vmem:[%s16 + $0x30] sm:$0xf]
        %v1972 = vld [vmem:[%s16 + $0x34] sm:$0xf]
        %v1973 = vld [vmem:[%s16 + $0x38] sm:$0xf]
        %v1974 = vld [vmem:[%s16 + $0x3c] sm:$0xf]
        %v1975 = vld [vmem:[%s17] sm:$0x1]
        %v1977 = vperm.slane %v1975, 0
        %v1995 = vunpack.c.l.b16 %v1959
        %v1996 = vunpack.c.l.b16 %v1960
        %v1997 = vunpack.c.l.b16 %v1961
        %v1998 = vunpack.c.l.b16 %v1962
        %v1999 = vunpack.c.l.b16 %v1963
        %v2000 = vunpack.c.l.b16 %v1964
        %v2001 = vunpack.c.l.b16 %v1965
        %v2002 = vunpack.c.l.b16 %v1966
        %v2003 = vunpack.c.l.b16 %v1967
        %v2004 = vunpack.c.l.b16 %v1968
        %v2005 = vunpack.c.l.b16 %v1969
        %v2006 = vunpack.c.l.b16 %v1970
        %v2007 = vunpack.c.l.b16 %v1971
        %v2008 = vunpack.c.l.b16 %v1972
        %v2009 = vunpack.c.l.b16 %v1973
        %v2010 = vunpack.c.l.b16 %v1974
        %v2011 = vpack.c.b16 %v1996, %v1995
        %v2012 = vpack.c.b16 %v1998, %v1997
        %v2013 = vpack.c.b16 %v2000, %v1999
        %v2014 = vpack.c.b16 %v2002, %v2001
        %v2015 = vpack.c.b16 %v2004, %v2003
        %v2016 = vpack.c.b16 %v2006, %v2005
        %v2017 = vpack.c.b16 %v2008, %v2007
        %v2018 = vpack.c.b16 %v2010, %v2009
        %2027 = vmatpush.bf16.msra.mxu0 %v2018
        %2028 = vmatpush.bf16.msra.mxu0 %v2017
        %2029 = vmatpush.bf16.msra.mxu0 %v2016
        %2030 = vmatpush.bf16.msra.mxu0 %v2015
        %2031 = vmatpush.bf16.msra.mxu0 %v2014
        %2032 = vmatpush.bf16.msra.mxu0 %v2013
        %2033 = vmatpush.bf16.msra.mxu0 %v2012
        %2034 = vmatpush.bf16.msra.mxu0 %v2011
        %2035 = vmatmul.bf16.gmra.mxu0 %v1958
        %v2036 = vpop.f32.mrf.mxu0
        %v2037 = vadd.f32 %v1977, %v2036
        %v2038 = vpop.f32.mrf.mxu0
        %2039 = vdwg.mxu0
        %v2040 = vadd.f32 %v1848, %v2037
        %2041 = vst.msk [vmem:[%s698] sm:$0xff] %vm711, %v2040
        %s2042 = sand.u32 %s443, 1
        %s2043 = scalar_lea.sflag [#allocation9], %s2042
        %s2044 = sand.u32 %s443, 1
        %s2045 = smul.addr %s2044, 8
        %s2046 = scalar_lea.vmem [#allocation19], %s2045
        // Predicated region
        $region129: #{tpu_custom_call.1} parent=91 // pred_check
          %p2047 = pneg %p453
        $region130: #{tpu_custom_call.1} parent=91 // pred_check_branch
          %2049 = sbr.rel (%p2047) target = $region132
        $region131: #{tpu_custom_call.1} parent=91 // pred_region
          %2051 = vsyncadd %s2043, 0
          %s2052 = smul.addr %s40, 2
          %s2053 = sadd.s32 %s41, %s2052
          %s2054 = smul.addr %s2053, 8
          %s2055 = scalar_lea.hbm %s18, %s2054
          %s2057 = sshll.u32 %s2046, 4
          %s2058 = int_to_ptr.vmem [resolvable:$true] %s2057
          %s2059 = sshll.u32 %s2055, 4
          %s2060 = int_to_ptr.hbm [resolvable:$true] %s2059
          %2062 = dma.vmem_to_hbm [thread:$0]  %s2058, 128, %s2060, %s2043
        $region132: #{tpu_custom_call.1} parent=91 // pred_fallthru
          _
      $region92: #{tpu_custom_call.1} parent=5 // pred_fallthru
        _
      %p2063 = scmp.le.s32.totalorder 2, %s31
      // Predicated region
      $region133: #{tpu_custom_call.1} parent=5 // pred_check
        %p2064 = pneg %p2063
      $region134: #{tpu_custom_call.1} parent=5 // pred_check_branch
        %2066 = sbr.rel (%p2064) target = $region136
      $region135: #{tpu_custom_call.1} parent=5 // pred_region
        %s2067 = ssub.s32 %s31, 2
        // Predicated region
        $region137: #{tpu_custom_call.1} parent=135 // pred_check
          %p2068 = pneg %p459
        $region138: #{tpu_custom_call.1} parent=135 // pred_check_branch
          %2070 = sbr.rel (%p2068) target = $region140
        $region139: #{tpu_custom_call.1} parent=135 // pred_region
          %s2071 = sand.u32 %s444, 1
          %s2072 = scalar_lea.sflag [#allocation9], %s2071
          %s2073 = sand.u32 %s444, 1
          %s2074 = smul.addr %s2073, 8
          %s2075 = scalar_lea.vmem [#allocation19], %s2074
          %2077 = dma.done %s2072, 128
        $region140: #{tpu_custom_call.1} parent=135 // pred_fallthru
          _
      $region136: #{tpu_custom_call.1} parent=5 // pred_fallthru
        _
    $region6: #{tpu_custom_call.1} parent=1 // loop_footer
      %s35 = sadd.s32 1, %s31
    $region7: #{tpu_custom_call.1} parent=1 // loop_footer_branch
      %30 = sbr.rel target = $region3
    $region8: #{tpu_custom_call.1} parent=1 // loop_exit
      _
    %2078 = vsyncpa [#allocation8], 1
    %s2079 = scalar_lea.sflag [#allocation8], 1
    %2080 = vsyncpa %s2079, 1
    %2081 = vsyncpa [#allocation11], 1
    %2082 = vsyncpa [#allocation14], 1
    %2083 = vsyncpa [#allocation17], 1
    %2084 = vsyncpa [#allocation9], 1
    %s2085 = scalar_lea.sflag [#allocation9], 1
    %2086 = vsyncpa %s2085, 1

// kernel: tpu_custom_call.1
$region0: #{tpu_custom_call.1}
  #allocation0 [shape = 'u32[]', space=smem, size = 0x4, offset = 0x4, fixed_abs, tag = 'smem constant byte address 0x4 - core index']
  #allocation1 [shape = 'u32[72,128]{1,0:T(1,128)}', space=vmem, size = 0x9000, scoped, tag = 'internal scratch']
  #allocation2 [shape = 'f32[11,32]{1,0:T(8,128)}', space=vmem, size = 0x2000, scoped, tag = 'scratch operand']
  #allocation3 [shape = 'bf16[8,16,32]{2,1,0:T(8,128)(2,1)}', space=vmem, size = 0x8000, scoped, tag = 'scratch operand']
  #allocation4 [shape = 'bf16[8,16,32]{2,1,0:T(8,128)(2,1)}', space=vmem, size = 0x8000, scoped, tag = 'scratch operand']
  #allocation5 [shape = 'f32[16,32]{1,0:T(8,128)}', space=vmem, size = 0x2000, scoped, tag = 'scratch operand']
  #allocation6 [shape = 'f32[3,32]{1,0:T(4,128)}', space=vmem, size = 0x800, scoped, tag = 'scratch operand']
  %s0 = inlined_call_operand.vmem [shape: f32[2,16,32], index: 0, kind: input, shape index: {}]
  %s1 = inlined_call_operand.hbm [shape: f32[1,32], index: 1, kind: input, shape index: {}]
  %s2 = inlined_call_operand.hbm [shape: f32[1,32], index: 2, kind: input, shape index: {}]
  %s3 = inlined_call_operand.vmem [shape: bf16[32,50], index: 3, kind: input, shape index: {}]
  %s4 = inlined_call_operand.hbm [shape: f32[2,32], index: 4, kind: input, shape index: {}]
  %s5 = inlined_call_operand.hbm [shape: f32[1,32], index: 5, kind: input, shape index: {}]
  %s6 = inlined_call_operand.vmem [shape: f32[4,32], index: 6, kind: input, shape index: {}]
  %s7 = inlined_call_operand.vmem [shape: f32[16,32], index: 7, kind: input, shape index: {}]
  %s8 = inlined_call_operand.vmem [shape: f32[16,32], index: 8, kind: input, shape index: {}]
  %s9 = inlined_call_operand.hbm [shape: f32[16,32], index: 9, kind: input, shape index: {}]
  %s10 = inlined_call_operand.vmem [shape: f32[1,32], index: 10, kind: input, shape index: {}]
  %s11 = inlined_call_operand.hbm [shape: bf16[32,32], index: 11, kind: input, shape index: {}]
  %s12 = inlined_call_operand.vmem [shape: f32[1,32], index: 12, kind: input, shape index: {}]
  %s13 = inlined_call_operand.vmem [shape: f32[1,32], index: 13, kind: input, shape index: {}]
  %s14 = inlined_call_operand.hbm [shape: bf16[32,128], index: 14, kind: input, shape index: {}]
  %s15 = inlined_call_operand.vmem [shape: f32[1,128], index: 15, kind: input, shape index: {}]
  %s16 = inlined_call_operand.vmem [shape: bf16[128,32], index: 16, kind: input, shape index: {}]
  %s17 = inlined_call_operand.vmem [shape: f32[1,32], index: 17, kind: input, shape index: {}]
  %s18 = inlined_call_operand.hbm [shape: f32[2,16,32], index: 18, kind: output, shape index: {}]
  %s19 = sld [smem:[#allocation0]]
  $region141: #{tpu_custom_call.1} parent=0
    _
  %s21 = ssub.s32 1, %s19
  %s22 = scalar_select 0, %s21, %s19
  $region1: #{tpu_custom_call.1} parent=0
    #allocation7 [shape = 'u8[512]{0}', space=vmem, size = 0x400, scoped, tag = 'input window, operand 1, single buffered']
    #allocation8 [shape = 's32[2]{0}', space=sflag, size = 0x8, scoped, tag = 'scoped memory for tpu_custom_call.1']
    #allocation9 [shape = 's32[2]{0}', space=sflag, size = 0x8, scoped, tag = 'scoped memory for tpu_custom_call.1']
    #allocation10 [shape = 'u8[512]{0}', space=vmem, size = 0x400, scoped, tag = 'input window, operand 2, single buffered']
    #allocation11 [shape = 's32[1]{0}', space=sflag, size = 0x4, scoped, tag = 'scoped memory for tpu_custom_call.1']
    #allocation12 [shape = 'u8[1024]{0}', space=vmem, size = 0x400, scoped, tag = 'input window, operand 4, single buffered']
    #allocation13 [shape = 'u8[512]{0}', space=vmem, size = 0x400, scoped, tag = 'input window, operand 5, single buffered']
    #allocation14 [shape = 's32[1]{0}', space=sflag, size = 0x4, scoped, tag = 'scoped memory for tpu_custom_call.1']
    #allocation15 [shape = 'u8[8192]{0}', space=vmem, size = 0x2000, scoped, tag = 'input window, operand 9, single buffered']
    #allocation16 [shape = 'u8[8192]{0}', space=vmem, size = 0x2000, scoped, tag = 'input window, operand 11, single buffered']
    #allocation17 [shape = 's32[1]{0}', space=sflag, size = 0x4, scoped, tag = 'scoped memory for tpu_custom_call.1']
    #allocation18 [shape = 'u8[8192]{0}', space=vmem, size = 0x2000, scoped, tag = 'input window, operand 14, single buffered']
    #allocation19 [shape = 'u8[8192]{0}', space=vmem, size = 0x2000, scoped, tag = 'output window, operand 0']
    %23 = vsyncpa [#allocation8], 0
    %24 = vsyncpa [#allocation11], 0
    %25 = vsyncpa [#allocation14], 0
    %26 = vsyncpa [#allocation17], 0
    %27 = vsyncpa [#allocation9], 0
    %s28 = scalar_lea.sflag [#allocation9], 1
    %29 = vsyncpa %s28, 0
    loop: start=0, step=1, limit=6
    $region2: #{tpu_custom_call.1} parent=1 // loop_pre_header
      _
    $region3: #{tpu_custom_call.1} parent=1 // loop_header
      %s31 = sphi 0, %s35
      %p32 = scmp.ge.s32.totalorder %s31, 6
      %s38 = sphi 0, %s50
      %s39 = sphi 0, %s46
      %s40 = sphi 0, %s38
      %s41 = sphi 0, %s39
      %s42 = sphi 0, %s40
      %s43 = sphi 0, %s41
      %s55 = sphi 0, %s57
      %s58 = sphi 0, %s55
      %s59 = sphi 0, %s58
      %s75 = sphi 0, %s59
      %s79 = sphi 0, %s79
      %s81 = sphi 0, %s79
      %s82 = sphi 0, %s81
      %s96 = sphi 0, %s82
      %s100 = sphi 0, %s100
      %s102 = sphi 0, %s100
      %s103 = sphi 0, %s102
      %s117 = sphi 0, %s103
      %s121 = sphi 0, %s121
      %s123 = sphi 0, %s121
      %s124 = sphi 0, %s123
      %s138 = sphi 0, %s124
      %s142 = sphi 0, %s142
      %s144 = sphi 0, %s142
      %s145 = sphi 0, %s144
      %s159 = sphi 0, %s145
      %s163 = sphi 0, %s163
      %s165 = sphi 0, %s163
      %s166 = sphi 0, %s165
      %s180 = sphi 0, %s166
      %s184 = sphi 0, %s184
      %s186 = sphi 0, %s184
      %s187 = sphi 0, %s186
      %s201 = sphi 0, %s187
      %s205 = sphi 0, %s205
      %s207 = sphi 0, %s205
      %s208 = sphi 0, %s207
      %s222 = sphi 0, %s208
      %s226 = sphi 0, %s226
      %s228 = sphi 0, %s226
      %s229 = sphi 0, %s228
      %s243 = sphi 0, %s229
      %s247 = sphi 0, %s247
      %s249 = sphi 0, %s247
      %s250 = sphi 0, %s249
      %s264 = sphi 0, %s250
      %s268 = sphi 0, %s268
      %s270 = sphi 0, %s268
      %s271 = sphi 0, %s270
      %s285 = sphi 0, %s271
      %s289 = sphi 0, %s289
      %s291 = sphi 0, %s289
      %s292 = sphi 0, %s291
      %s306 = sphi 0, %s292
      %s310 = sphi 0, %s310
      %s312 = sphi 0, %s310
      %s313 = sphi 0, %s312
      %s327 = sphi 0, %s313
      %s331 = sphi 0, %s331
      %s333 = sphi 0, %s331
      %s334 = sphi 0, %s333
      %s348 = sphi 0, %s334
      %s352 = sphi 0, %s352
      %s354 = sphi 0, %s352
      %s355 = sphi 0, %s354
      %s369 = sphi 0, %s355
      %s373 = sphi 0, %s373
      %s375 = sphi 0, %s373
      %s376 = sphi 0, %s375
      %s390 = sphi 0, %s376
      %s394 = sphi 0, %s394
      %s396 = sphi 0, %s394
      %s397 = sphi 0, %s396
      %s411 = sphi 0, %s397
      %s415 = sphi 0, %s415
      %s417 = sphi 0, %s415
      %s418 = sphi 0, %s417
      %s432 = sphi 0, %s418
      %s440 = sphi 0, %s442
      %s443 = sphi 0, %s440
      %s444 = sphi 0, %s443
      %s460 = sphi 0, %s444
    $region4: #{tpu_custom_call.1} parent=1 // loop_header_branch
      %34 = sbr.rel (%p32) target = $region8
    $region5: #{tpu_custom_call.1} parent=1 // loop_body
      %s36 = ssub.s32 %s31, 1
      %s37 = ssub.s32 %s31, 2
      %s44 = sadd.s32 1, %s39
      %p45 = scmp.ge.s32.totalorder %s44, 2
      %s46 = scalar_select %p45, 0, %s44
      %s47 = sadd.s32 1, %s38
      %s48 = scalar_select %p45, %s47, %s38
      %p49 = scmp.ge.s32.totalorder %s48, 2
      %s50 = scalar_select %p49, 0, %s48
      %s51 = ssub.s32 %s38, %s50
      %s52 = ssub.s32 %s39, %s46
      %s53 = sor.u32 %s51, %s52
      %p54 = scmp.eq.s32.totalorder %s53, 0
      %s56 = sadd.s32 %s55, 1
      %s57 = scalar_select %p54, %s55, %s56
      %p60 = pneg %p54
      %p61 = scmp.eq.s32.totalorder %s31, 3
      %p62 = por %p60, %p61
      %p63 = scmp.ne.s32.totalorder %s55, %s58
      %p64 = scmp.eq.s32.totalorder %s31, 0
      %p65 = por %p63, %p64
      %p66 = scmp.ne.s32.totalorder %s55, %s58
      %p67 = scmp.eq.s32.totalorder %s36, 3
      %p68 = por %p66, %p67
      %p69 = scmp.ne.s32.totalorder %s58, %s59
      %p70 = scmp.eq.s32.totalorder %s36, 0
      %p71 = por %p69, %p70
      %p72 = scmp.ne.s32.totalorder %s58, %s59
      %p73 = scmp.eq.s32.totalorder %s37, 3
      %p74 = por %p72, %p73
      %p76 = scmp.ne.s32.totalorder %s59, %s75
      %p77 = scmp.eq.s32.totalorder %s37, 0
      %p78 = por %p76, %p77
      %s80 = sadd.s32 %s79, 1
      %p83 = scmp.eq.s32.totalorder %s31, 3
      %p84 = scmp.ne.s32.totalorder %s79, %s81
      %p85 = scmp.eq.s32.totalorder %s31, 0
      %p86 = por %p84, %p85
      %p87 = scmp.ne.s32.totalorder %s79, %s81
      %p88 = scmp.eq.s32.totalorder %s36, 3
      %p89 = por %p87, %p88
      %p90 = scmp.ne.s32.totalorder %s81, %s82
      %p91 = scmp.eq.s32.totalorder %s36, 0
      %p92 = por %p90, %p91
      %p93 = scmp.ne.s32.totalorder %s81, %s82
      %p94 = scmp.eq.s32.totalorder %s37, 3
      %p95 = por %p93, %p94
      %p97 = scmp.ne.s32.totalorder %s82, %s96
      %p98 = scmp.eq.s32.totalorder %s37, 0
      %p99 = por %p97, %p98
      %s101 = sadd.s32 %s100, 1
      %p104 = scmp.eq.s32.totalorder %s31, 3
      %p105 = scmp.ne.s32.totalorder %s100, %s102
      %p106 = scmp.eq.s32.totalorder %s31, 0
      %p107 = por %p105, %p106
      %p108 = scmp.ne.s32.totalorder %s100, %s102
      %p109 = scmp.eq.s32.totalorder %s36, 3
      %p110 = por %p108, %p109
      %p111 = scmp.ne.s32.totalorder %s102, %s103
      %p112 = scmp.eq.s32.totalorder %s36, 0
      %p113 = por %p111, %p112
      %p114 = scmp.ne.s32.totalorder %s102, %s103
      %p115 = scmp.eq.s32.totalorder %s37, 3
      %p116 = por %p114, %p115
      %p118 = scmp.ne.s32.totalorder %s103, %s117
      %p119 = scmp.eq.s32.totalorder %s37, 0
      %p120 = por %p118, %p119
      %s122 = sadd.s32 %s121, 1
      %p125 = scmp.eq.s32.totalorder %s31, 3
      %p126 = scmp.ne.s32.totalorder %s121, %s123
      %p127 = scmp.eq.s32.totalorder %s31, 0
      %p128 = por %p126, %p127
      %p129 = scmp.ne.s32.totalorder %s121, %s123
      %p130 = scmp.eq.s32.totalorder %s36, 3
      %p131 = por %p129, %p130
      %p132 = scmp.ne.s32.totalorder %s123, %s124
      %p133 = scmp.eq.s32.totalorder %s36, 0
      %p134 = por %p132, %p133
      %p135 = scmp.ne.s32.totalorder %s123, %s124
      %p136 = scmp.eq.s32.totalorder %s37, 3
      %p137 = por %p135, %p136
      %p139 = scmp.ne.s32.totalorder %s124, %s138
      %p140 = scmp.eq.s32.totalorder %s37, 0
      %p141 = por %p139, %p140
      %s143 = sadd.s32 %s142, 1
      %p146 = scmp.eq.s32.totalorder %s31, 3
      %p147 = scmp.ne.s32.totalorder %s142, %s144
      %p148 = scmp.eq.s32.totalorder %s31, 0
      %p149 = por %p147, %p148
      %p150 = scmp.ne.s32.totalorder %s142, %s144
      %p151 = scmp.eq.s32.totalorder %s36, 3
      %p152 = por %p150, %p151
      %p153 = scmp.ne.s32.totalorder %s144, %s145
      %p154 = scmp.eq.s32.totalorder %s36, 0
      %p155 = por %p153, %p154
      %p156 = scmp.ne.s32.totalorder %s144, %s145
      %p157 = scmp.eq.s32.totalorder %s37, 3
      %p158 = por %p156, %p157
      %p160 = scmp.ne.s32.totalorder %s145, %s159
      %p161 = scmp.eq.s32.totalorder %s37, 0
      %p162 = por %p160, %p161
      %s164 = sadd.s32 %s163, 1
      %p167 = scmp.eq.s32.totalorder %s31, 3
      %p168 = scmp.ne.s32.totalorder %s163, %s165
      %p169 = scmp.eq.s32.totalorder %s31, 0
      %p170 = por %p168, %p169
      %p171 = scmp.ne.s32.totalorder %s163, %s165
      %p172 = scmp.eq.s32.totalorder %s36, 3
      %p173 = por %p171, %p172
      %p174 = scmp.ne.s32.totalorder %s165, %s166
      %p175 = scmp.eq.s32.totalorder %s36, 0
      %p176 = por %p174, %p175
      %p177 = scmp.ne.s32.totalorder %s165, %s166
      %p178 = scmp.eq.s32.totalorder %s37, 3
      %p179 = por %p177, %p178
      %p181 = scmp.ne.s32.totalorder %s166, %s180
      %p182 = scmp.eq.s32.totalorder %s37, 0
      %p183 = por %p181, %p182
      %s185 = sadd.s32 %s184, 1
      %p188 = scmp.eq.s32.totalorder %s31, 3
      %p189 = scmp.ne.s32.totalorder %s184, %s186
      %p190 = scmp.eq.s32.totalorder %s31, 0
      %p191 = por %p189, %p190
      %p192 = scmp.ne.s32.totalorder %s184, %s186
      %p193 = scmp.eq.s32.totalorder %s36, 3
      %p194 = por %p192, %p193
      %p195 = scmp.ne.s32.totalorder %s186, %s187
      %p196 = scmp.eq.s32.totalorder %s36, 0
      %p197 = por %p195, %p196
      %p198 = scmp.ne.s32.totalorder %s186, %s187
      %p199 = scmp.eq.s32.totalorder %s37, 3
      %p200 = por %p198, %p199
      %p202 = scmp.ne.s32.totalorder %s187, %s201
      %p203 = scmp.eq.s32.totalorder %s37, 0
      %p204 = por %p202, %p203
      %s206 = sadd.s32 %s205, 1
      %p209 = scmp.eq.s32.totalorder %s31, 3
      %p210 = scmp.ne.s32.totalorder %s205, %s207
      %p211 = scmp.eq.s32.totalorder %s31, 0
      %p212 = por %p210, %p211
      %p213 = scmp.ne.s32.totalorder %s205, %s207
      %p214 = scmp.eq.s32.totalorder %s36, 3
      %p215 = por %p213, %p214
      %p216 = scmp.ne.s32.totalorder %s207, %s208
      %p217 = scmp.eq.s32.totalorder %s36, 0
      %p218 = por %p216, %p217
      %p219 = scmp.ne.s32.totalorder %s207, %s208
      %p220 = scmp.eq.s32.totalorder %s37, 3
      %p221 = por %p219, %p220
      %p223 = scmp.ne.s32.totalorder %s208, %s222
      %p224 = scmp.eq.s32.totalorder %s37, 0
      %p225 = por %p223, %p224
      %s227 = sadd.s32 %s226, 1
      %p230 = scmp.eq.s32.totalorder %s31, 3
      %p231 = scmp.ne.s32.totalorder %s226, %s228
      %p232 = scmp.eq.s32.totalorder %s31, 0
      %p233 = por %p231, %p232
      %p234 = scmp.ne.s32.totalorder %s226, %s228
      %p235 = scmp.eq.s32.totalorder %s36, 3
      %p236 = por %p234, %p235
      %p237 = scmp.ne.s32.totalorder %s228, %s229
      %p238 = scmp.eq.s32.totalorder %s36, 0
      %p239 = por %p237, %p238
      %p240 = scmp.ne.s32.totalorder %s228, %s229
      %p241 = scmp.eq.s32.totalorder %s37, 3
      %p242 = por %p240, %p241
      %p244 = scmp.ne.s32.totalorder %s229, %s243
      %p245 = scmp.eq.s32.totalorder %s37, 0
      %p246 = por %p244, %p245
      %s248 = sadd.s32 %s247, 1
      %p251 = scmp.eq.s32.totalorder %s31, 3
      %p252 = scmp.ne.s32.totalorder %s247, %s249
      %p253 = scmp.eq.s32.totalorder %s31, 0
      %p254 = por %p252, %p253
      %p255 = scmp.ne.s32.totalorder %s247, %s249
      %p256 = scmp.eq.s32.totalorder %s36, 3
      %p257 = por %p255, %p256
      %p258 = scmp.ne.s32.totalorder %s249, %s250
      %p259 = scmp.eq.s32.totalorder %s36, 0
      %p260 = por %p258, %p259
      %p261 = scmp.ne.s32.totalorder %s249, %s250
      %p262 = scmp.eq.s32.totalorder %s37, 3
      %p263 = por %p261, %p262
      %p265 = scmp.ne.s32.totalorder %s250, %s264
      %p266 = scmp.eq.s32.totalorder %s37, 0
      %p267 = por %p265, %p266
      %s269 = sadd.s32 %s268, 1
      %p272 = scmp.eq.s32.totalorder %s31, 3
      %p273 = scmp.ne.s32.totalorder %s268, %s270
      %p274 = scmp.eq.s32.totalorder %s31, 0
      %p275 = por %p273, %p274
      %p276 = scmp.ne.s32.totalorder %s268, %s270
      %p277 = scmp.eq.s32.totalorder %s36, 3
      %p278 = por %p276, %p277
      %p279 = scmp.ne.s32.totalorder %s270, %s271
      %p280 = scmp.eq.s32.totalorder %s36, 0
      %p281 = por %p279, %p280
      %p282 = scmp.ne.s32.totalorder %s270, %s271
      %p283 = scmp.eq.s32.totalorder %s37, 3
      %p284 = por %p282, %p283
      %p286 = scmp.ne.s32.totalorder %s271, %s285
      %p287 = scmp.eq.s32.totalorder %s37, 0
      %p288 = por %p286, %p287
      %s290 = sadd.s32 %s289, 1
      %p293 = scmp.eq.s32.totalorder %s31, 3
      %p294 = scmp.ne.s32.totalorder %s289, %s291
      %p295 = scmp.eq.s32.totalorder %s31, 0
      %p296 = por %p294, %p295
      %p297 = scmp.ne.s32.totalorder %s289, %s291
      %p298 = scmp.eq.s32.totalorder %s36, 3
      %p299 = por %p297, %p298
      %p300 = scmp.ne.s32.totalorder %s291, %s292
      %p301 = scmp.eq.s32.totalorder %s36, 0
      %p302 = por %p300, %p301
      %p303 = scmp.ne.s32.totalorder %s291, %s292
      %p304 = scmp.eq.s32.totalorder %s37, 3
      %p305 = por %p303, %p304
      %p307 = scmp.ne.s32.totalorder %s292, %s306
      %p308 = scmp.eq.s32.totalorder %s37, 0
      %p309 = por %p307, %p308
      %s311 = sadd.s32 %s310, 1
      %p314 = scmp.eq.s32.totalorder %s31, 3
      %p315 = scmp.ne.s32.totalorder %s310, %s312
      %p316 = scmp.eq.s32.totalorder %s31, 0
      %p317 = por %p315, %p316
      %p318 = scmp.ne.s32.totalorder %s310, %s312
      %p319 = scmp.eq.s32.totalorder %s36, 3
      %p320 = por %p318, %p319
      %p321 = scmp.ne.s32.totalorder %s312, %s313
      %p322 = scmp.eq.s32.totalorder %s36, 0
      %p323 = por %p321, %p322
      %p324 = scmp.ne.s32.totalorder %s312, %s313
      %p325 = scmp.eq.s32.totalorder %s37, 3
      %p326 = por %p324, %p325
      %p328 = scmp.ne.s32.totalorder %s313, %s327
      %p329 = scmp.eq.s32.totalorder %s37, 0
      %p330 = por %p328, %p329
      %s332 = sadd.s32 %s331, 1
      %p335 = scmp.eq.s32.totalorder %s31, 3
      %p336 = scmp.ne.s32.totalorder %s331, %s333
      %p337 = scmp.eq.s32.totalorder %s31, 0
      %p338 = por %p336, %p337
      %p339 = scmp.ne.s32.totalorder %s331, %s333
      %p340 = scmp.eq.s32.totalorder %s36, 3
      %p341 = por %p339, %p340
      %p342 = scmp.ne.s32.totalorder %s333, %s334
      %p343 = scmp.eq.s32.totalorder %s36, 0
      %p344 = por %p342, %p343
      %p345 = scmp.ne.s32.totalorder %s333, %s334
      %p346 = scmp.eq.s32.totalorder %s37, 3
      %p347 = por %p345, %p346
      %p349 = scmp.ne.s32.totalorder %s334, %s348
      %p350 = scmp.eq.s32.totalorder %s37, 0
      %p351 = por %p349, %p350
      %s353 = sadd.s32 %s352, 1
      %p356 = scmp.eq.s32.totalorder %s31, 3
      %p357 = scmp.ne.s32.totalorder %s352, %s354
      %p358 = scmp.eq.s32.totalorder %s31, 0
      %p359 = por %p357, %p358
      %p360 = scmp.ne.s32.totalorder %s352, %s354
      %p361 = scmp.eq.s32.totalorder %s36, 3
      %p362 = por %p360, %p361
      %p363 = scmp.ne.s32.totalorder %s354, %s355
      %p364 = scmp.eq.s32.totalorder %s36, 0
      %p365 = por %p363, %p364
      %p366 = scmp.ne.s32.totalorder %s354, %s355
      %p367 = scmp.eq.s32.totalorder %s37, 3
      %p368 = por %p366, %p367
      %p370 = scmp.ne.s32.totalorder %s355, %s369
      %p371 = scmp.eq.s32.totalorder %s37, 0
      %p372 = por %p370, %p371
      %s374 = sadd.s32 %s373, 1
      %p377 = scmp.eq.s32.totalorder %s31, 3
      %p378 = scmp.ne.s32.totalorder %s373, %s375
      %p379 = scmp.eq.s32.totalorder %s31, 0
      %p380 = por %p378, %p379
      %p381 = scmp.ne.s32.totalorder %s373, %s375
      %p382 = scmp.eq.s32.totalorder %s36, 3
      %p383 = por %p381, %p382
      %p384 = scmp.ne.s32.totalorder %s375, %s376
      %p385 = scmp.eq.s32.totalorder %s36, 0
      %p386 = por %p384, %p385
      %p387 = scmp.ne.s32.totalorder %s375, %s376
      %p388 = scmp.eq.s32.totalorder %s37, 3
      %p389 = por %p387, %p388
      %p391 = scmp.ne.s32.totalorder %s376, %s390
      %p392 = scmp.eq.s32.totalorder %s37, 0
      %p393 = por %p391, %p392
      %s395 = sadd.s32 %s394, 1
      %p398 = scmp.eq.s32.totalorder %s31, 3
      %p399 = scmp.ne.s32.totalorder %s394, %s396
      %p400 = scmp.eq.s32.totalorder %s31, 0
      %p401 = por %p399, %p400
      %p402 = scmp.ne.s32.totalorder %s394, %s396
      %p403 = scmp.eq.s32.totalorder %s36, 3
      %p404 = por %p402, %p403
      %p405 = scmp.ne.s32.totalorder %s396, %s397
      %p406 = scmp.eq.s32.totalorder %s36, 0
      %p407 = por %p405, %p406
      %p408 = scmp.ne.s32.totalorder %s396, %s397
      %p409 = scmp.eq.s32.totalorder %s37, 3
      %p410 = por %p408, %p409
      %p412 = scmp.ne.s32.totalorder %s397, %s411
      %p413 = scmp.eq.s32.totalorder %s37, 0
      %p414 = por %p412, %p413
      %s416 = sadd.s32 %s415, 1
      %p419 = scmp.eq.s32.totalorder %s31, 3
      %p420 = scmp.ne.s32.totalorder %s415, %s417
      %p421 = scmp.eq.s32.totalorder %s31, 0
      %p422 = por %p420, %p421
      %p423 = scmp.ne.s32.totalorder %s415, %s417
      %p424 = scmp.eq.s32.totalorder %s36, 3
      %p425 = por %p423, %p424
      %p426 = scmp.ne.s32.totalorder %s417, %s418
      %p427 = scmp.eq.s32.totalorder %s36, 0
      %p428 = por %p426, %p427
      %p429 = scmp.ne.s32.totalorder %s417, %s418
      %p430 = scmp.eq.s32.totalorder %s37, 3
      %p431 = por %p429, %p430
      %p433 = scmp.ne.s32.totalorder %s418, %s432
      %p434 = scmp.eq.s32.totalorder %s37, 0
      %p435 = por %p433, %p434
      %s436 = ssub.s32 %s38, %s50
      %s437 = ssub.s32 %s39, %s46
      %s438 = sor.u32 %s436, %s437
      %p439 = scmp.eq.s32.totalorder %s438, 0
      %s441 = sadd.s32 %s440, 1
      %s442 = scalar_select %p439, %s440, %s441
      %p445 = pneg %p439
      %p446 = scmp.eq.s32.totalorder %s31, 3
      %p447 = por %p445, %p446
      %p448 = scmp.ne.s32.totalorder %s440, %s443
      %p449 = scmp.eq.s32.totalorder %s31, 0
      %p450 = por %p448, %p449
      %p451 = scmp.ne.s32.totalorder %s440, %s443
      %p452 = scmp.eq.s32.totalorder %s36, 3
      %p453 = por %p451, %p452
      %p454 = scmp.ne.s32.totalorder %s443, %s444
      %p455 = scmp.eq.s32.totalorder %s36, 0
      %p456 = por %p454, %p455
      %p457 = scmp.ne.s32.totalorder %s443, %s444
      %p458 = scmp.eq.s32.totalorder %s37, 3
      %p459 = por %p457, %p458
      %p461 = scmp.ne.s32.totalorder %s444, %s460
      %p462 = scmp.eq.s32.totalorder %s37, 0
      %p463 = por %p461, %p462
      %p464 = scmp.le.s32.totalorder 1, %s31
      %p465 = scmp.lt.s32.totalorder %s31, 5
      %p466 = pnand %p464, %p465
      %p467 = pneg %p466
      // Predicated region
      $region9: #{tpu_custom_call.1} parent=5 // pred_check
        _
      $region10: #{tpu_custom_call.1} parent=5 // pred_check_branch
        %469 = sbr.rel (%p466) target = $region12
      $region11: #{tpu_custom_call.1} parent=5 // pred_region
        %s470 = ssub.s32 %s31, 1
        // Predicated region
        $region13: #{tpu_custom_call.1} parent=11 // pred_check
          %p471 = pneg %p92
        $region14: #{tpu_custom_call.1} parent=11 // pred_check_branch
          %473 = sbr.rel (%p471) target = $region16
        $region15: #{tpu_custom_call.1} parent=11 // pred_region
          %475 = vsyncadd [#allocation8], 0
          %s477 = sshll.u32 %s1, 4
          %s478 = int_to_ptr.hbm [resolvable:$true] %s477
          %s479 = sshll.u32 [#allocation7], 4
          %s480 = int_to_ptr.vmem [resolvable:$true] %s479
          %482 = dma.hbm_to_vmem [thread:$0]  %s478, 16, %s480, [#allocation8]
        $region16: #{tpu_custom_call.1} parent=11 // pred_fallthru
          _
        // Predicated region
        $region17: #{tpu_custom_call.1} parent=11 // pred_check
          %p483 = pneg %p113
        $region18: #{tpu_custom_call.1} parent=11 // pred_check_branch
          %485 = sbr.rel (%p483) target = $region20
        $region19: #{tpu_custom_call.1} parent=11 // pred_region
          %487 = vsyncadd [#allocation11], 0
          %s489 = sshll.u32 %s2, 4
          %s490 = int_to_ptr.hbm [resolvable:$true] %s489
          %s491 = sshll.u32 [#allocation10], 4
          %s492 = int_to_ptr.vmem [resolvable:$true] %s491
          %494 = dma.hbm_to_vmem [thread:$0]  %s490, 16, %s492, [#allocation11]
        $region20: #{tpu_custom_call.1} parent=11 // pred_fallthru
          _
        // Predicated region
        $region21: #{tpu_custom_call.1} parent=11 // pred_check
          %p495 = pneg %p134
        $region22: #{tpu_custom_call.1} parent=11 // pred_check_branch
          %497 = sbr.rel (%p495) target = $region24
        $region23: #{tpu_custom_call.1} parent=11 // pred_region
          _
        $region24: #{tpu_custom_call.1} parent=11 // pred_fallthru
          _
        // Predicated region
        $region25: #{tpu_custom_call.1} parent=11 // pred_check
          %p498 = pneg %p155
        $region26: #{tpu_custom_call.1} parent=11 // pred_check_branch
          %500 = sbr.rel (%p498) target = $region28
        $region27: #{tpu_custom_call.1} parent=11 // pred_region
          %502 = vsyncadd [#allocation11], 0
          %s504 = sshll.u32 %s4, 4
          %s505 = int_to_ptr.hbm [resolvable:$true] %s504
          %s506 = sshll.u32 [#allocation12], 4
          %s507 = int_to_ptr.vmem [resolvable:$true] %s506
          %509 = dma.hbm_to_vmem [thread:$0]  %s505, 32, %s507, [#allocation11]
        $region28: #{tpu_custom_call.1} parent=11 // pred_fallthru
          _
        // Predicated region
        $region29: #{tpu_custom_call.1} parent=11 // pred_check
          %p510 = pneg %p176
        $region30: #{tpu_custom_call.1} parent=11 // pred_check_branch
          %512 = sbr.rel (%p510) target = $region32
        $region31: #{tpu_custom_call.1} parent=11 // pred_region
          %514 = vsyncadd [#allocation14], 0
          %s516 = sshll.u32 %s5, 4
          %s517 = int_to_ptr.hbm [resolvable:$true] %s516
          %s518 = sshll.u32 [#allocation13], 4
          %s519 = int_to_ptr.vmem [resolvable:$true] %s518
          %521 = dma.hbm_to_vmem [thread:$0]  %s517, 16, %s519, [#allocation14]
        $region32: #{tpu_custom_call.1} parent=11 // pred_fallthru
          _
        // Predicated region
        $region33: #{tpu_custom_call.1} parent=11 // pred_check
          %p522 = pneg %p197
        $region34: #{tpu_custom_call.1} parent=11 // pred_check_branch
          %524 = sbr.rel (%p522) target = $region36
        $region35: #{tpu_custom_call.1} parent=11 // pred_region
          _
        $region36: #{tpu_custom_call.1} parent=11 // pred_fallthru
          _
        // Predicated region
        $region37: #{tpu_custom_call.1} parent=11 // pred_check
          %p525 = pneg %p218
        $region38: #{tpu_custom_call.1} parent=11 // pred_check_branch
          %527 = sbr.rel (%p525) target = $region40
        $region39: #{tpu_custom_call.1} parent=11 // pred_region
          _
        $region40: #{tpu_custom_call.1} parent=11 // pred_fallthru
          _
        // Predicated region
        $region41: #{tpu_custom_call.1} parent=11 // pred_check
          %p528 = pneg %p239
        $region42: #{tpu_custom_call.1} parent=11 // pred_check_branch
          %530 = sbr.rel (%p528) target = $region44
        $region43: #{tpu_custom_call.1} parent=11 // pred_region
          _
        $region44: #{tpu_custom_call.1} parent=11 // pred_fallthru
          _
        // Predicated region
        $region45: #{tpu_custom_call.1} parent=11 // pred_check
          %p531 = pneg %p260
        $region46: #{tpu_custom_call.1} parent=11 // pred_check_branch
          %533 = sbr.rel (%p531) target = $region48
        $region47: #{tpu_custom_call.1} parent=11 // pred_region
          %535 = vsyncadd [#allocation14], 0
          %s536 = sshll.u32 %s9, 4
          %s537 = int_to_ptr.hbm [resolvable:$true] %s536
          %s538 = sshll.u32 [#allocation15], 4
          %s539 = int_to_ptr.vmem [resolvable:$true] %s538
          %544 = dma.hbm_to_vmem [thread:$0]  %s537, 256, %s539, [#allocation14], 128, 128, 8
        $region48: #{tpu_custom_call.1} parent=11 // pred_fallthru
          _
        // Predicated region
        $region49: #{tpu_custom_call.1} parent=11 // pred_check
          %p545 = pneg %p281
        $region50: #{tpu_custom_call.1} parent=11 // pred_check_branch
          %547 = sbr.rel (%p545) target = $region52
        $region51: #{tpu_custom_call.1} parent=11 // pred_region
          _
        $region52: #{tpu_custom_call.1} parent=11 // pred_fallthru
          _
        // Predicated region
        $region53: #{tpu_custom_call.1} parent=11 // pred_check
          %p548 = pneg %p302
        $region54: #{tpu_custom_call.1} parent=11 // pred_check_branch
          %550 = sbr.rel (%p548) target = $region56
        $region55: #{tpu_custom_call.1} parent=11 // pred_region
          %552 = vsyncadd [#allocation17], 0
          %s553 = sshll.u32 %s11, 4
          %s554 = int_to_ptr.hbm [resolvable:$true] %s553
          %s555 = sshll.u32 [#allocation16], 4
          %s556 = int_to_ptr.vmem [resolvable:$true] %s555
          %561 = dma.hbm_to_vmem [thread:$0]  %s554, 256, %s556, [#allocation17], 64, 64, 4
        $region56: #{tpu_custom_call.1} parent=11 // pred_fallthru
          _
        // Predicated region
        $region57: #{tpu_custom_call.1} parent=11 // pred_check
          %p562 = pneg %p323
        $region58: #{tpu_custom_call.1} parent=11 // pred_check_branch
          %564 = sbr.rel (%p562) target = $region60
        $region59: #{tpu_custom_call.1} parent=11 // pred_region
          _
        $region60: #{tpu_custom_call.1} parent=11 // pred_fallthru
          _
        // Predicated region
        $region61: #{tpu_custom_call.1} parent=11 // pred_check
          %p565 = pneg %p344
        $region62: #{tpu_custom_call.1} parent=11 // pred_check_branch
          %567 = sbr.rel (%p565) target = $region64
        $region63: #{tpu_custom_call.1} parent=11 // pred_region
          _
        $region64: #{tpu_custom_call.1} parent=11 // pred_fallthru
          _
        // Predicated region
        $region65: #{tpu_custom_call.1} parent=11 // pred_check
          %p568 = pneg %p365
        $region66: #{tpu_custom_call.1} parent=11 // pred_check_branch
          %570 = sbr.rel (%p568) target = $region68
        $region67: #{tpu_custom_call.1} parent=11 // pred_region
          %572 = vsyncadd [#allocation17], 0
          %s573 = sshll.u32 %s14, 4
          %s574 = int_to_ptr.hbm [resolvable:$true] %s573
          %s575 = sshll.u32 [#allocation18], 4
          %s576 = int_to_ptr.vmem [resolvable:$true] %s575
          %581 = dma.hbm_to_vmem [thread:$0]  %s574, 256, %s576, [#allocation17], 64, 64, 4
        $region68: #{tpu_custom_call.1} parent=11 // pred_fallthru
          _
        // Predicated region
        $region69: #{tpu_custom_call.1} parent=11 // pred_check
          %p582 = pneg %p386
        $region70: #{tpu_custom_call.1} parent=11 // pred_check_branch
          %584 = sbr.rel (%p582) target = $region72
        $region71: #{tpu_custom_call.1} parent=11 // pred_region
          _
        $region72: #{tpu_custom_call.1} parent=11 // pred_fallthru
          _
        // Predicated region
        $region73: #{tpu_custom_call.1} parent=11 // pred_check
          %p585 = pneg %p407
        $region74: #{tpu_custom_call.1} parent=11 // pred_check_branch
          %587 = sbr.rel (%p585) target = $region76
        $region75: #{tpu_custom_call.1} parent=11 // pred_region
          _
        $region76: #{tpu_custom_call.1} parent=11 // pred_fallthru
          _
        // Predicated region
        $region77: #{tpu_custom_call.1} parent=11 // pred_check
          %p588 = pneg %p428
        $region78: #{tpu_custom_call.1} parent=11 // pred_check_branch
          %590 = sbr.rel (%p588) target = $region80
        $region79: #{tpu_custom_call.1} parent=11 // pred_region
          _
        $region80: #{tpu_custom_call.1} parent=11 // pred_fallthru
          _
      $region12: #{tpu_custom_call.1} parent=5 // pred_fallthru
        _
      %p591 = scmp.lt.s32.totalorder %s31, 4
      // Predicated region
      $region81: #{tpu_custom_call.1} parent=5 // pred_check
        %p592 = pneg %p591
      $region82: #{tpu_custom_call.1} parent=5 // pred_check_branch
        %594 = sbr.rel (%p592) target = $region84
      $region83: #{tpu_custom_call.1} parent=5 // pred_region
        // Predicated region
        $region85: #{tpu_custom_call.1} parent=83 // pred_check
          %p595 = pneg %p65
        $region86: #{tpu_custom_call.1} parent=83 // pred_check_branch
          %597 = sbr.rel (%p595) target = $region88
        $region87: #{tpu_custom_call.1} parent=83 // pred_region
          %p598 = scmp.lt.s32.totalorder %s38, 1
          %s599 = scalar_select %p598, %s38, 1
          %p600 = scmp.lt.s32.totalorder %s39, 1
          %s601 = scalar_select %p600, %s39, 1
          %s602 = smul.addr %s599, 2
          %s603 = sadd.s32 %s601, %s602
          %s604 = smul.addr %s603, 8
          %s605 = scalar_lea.vmem %s0, %s604
        $region88: #{tpu_custom_call.1} parent=83 // pred_fallthru
          _
      $region84: #{tpu_custom_call.1} parent=5 // pred_fallthru
        _
      %p606 = scmp.le.s32.totalorder 1, %s31
      %p607 = scmp.lt.s32.totalorder %s31, 5
      %p608 = pnand %p606, %p607
      %p609 = pneg %p608
      // Predicated region
      $region89: #{tpu_custom_call.1} parent=5 // pred_check
        _
      $region90: #{tpu_custom_call.1} parent=5 // pred_check_branch
        %611 = sbr.rel (%p608) target = $region92
      $region91: #{tpu_custom_call.1} parent=5 // pred_region
        %s612 = ssub.s32 %s31, 1
        // Predicated region
        $region93: #{tpu_custom_call.1} parent=91 // pred_check
          %p613 = pneg %p92
        $region94: #{tpu_custom_call.1} parent=91 // pred_check_branch
          %615 = sbr.rel (%p613) target = $region96
        $region95: #{tpu_custom_call.1} parent=91 // pred_region
          %617 = dma.done [#allocation8], 16
        $region96: #{tpu_custom_call.1} parent=91 // pred_fallthru
          _
        // Predicated region
        $region97: #{tpu_custom_call.1} parent=91 // pred_check
          %p618 = pneg %p113
        $region98: #{tpu_custom_call.1} parent=91 // pred_check_branch
          %620 = sbr.rel (%p618) target = $region100
        $region99: #{tpu_custom_call.1} parent=91 // pred_region
          %622 = dma.done [#allocation11], 16
        $region100: #{tpu_custom_call.1} parent=91 // pred_fallthru
          _
        // Predicated region
        $region101: #{tpu_custom_call.1} parent=91 // pred_check
          %p623 = pneg %p155
        $region102: #{tpu_custom_call.1} parent=91 // pred_check_branch
          %625 = sbr.rel (%p623) target = $region104
        $region103: #{tpu_custom_call.1} parent=91 // pred_region
          %627 = dma.done [#allocation11], 32
        $region104: #{tpu_custom_call.1} parent=91 // pred_fallthru
          _
        // Predicated region
        $region105: #{tpu_custom_call.1} parent=91 // pred_check
          %p628 = pneg %p176
        $region106: #{tpu_custom_call.1} parent=91 // pred_check_branch
          %630 = sbr.rel (%p628) target = $region108
        $region107: #{tpu_custom_call.1} parent=91 // pred_region
          %632 = dma.done [#allocation14], 16
        $region108: #{tpu_custom_call.1} parent=91 // pred_fallthru
          _
        // Predicated region
        $region109: #{tpu_custom_call.1} parent=91 // pred_check
          %p633 = pneg %p260
        $region110: #{tpu_custom_call.1} parent=91 // pred_check_branch
          %635 = sbr.rel (%p633) target = $region112
        $region111: #{tpu_custom_call.1} parent=91 // pred_region
          %637 = dma.done [#allocation14], 256
        $region112: #{tpu_custom_call.1} parent=91 // pred_fallthru
          _
        // Predicated region
        $region113: #{tpu_custom_call.1} parent=91 // pred_check
          %p638 = pneg %p302
        $region114: #{tpu_custom_call.1} parent=91 // pred_check_branch
          %640 = sbr.rel (%p638) target = $region116
        $region115: #{tpu_custom_call.1} parent=91 // pred_region
          %642 = dma.done [#allocation17], 256
        $region116: #{tpu_custom_call.1} parent=91 // pred_fallthru
          _
        // Predicated region
        $region117: #{tpu_custom_call.1} parent=91 // pred_check
          %p643 = pneg %p365
        $region118: #{tpu_custom_call.1} parent=91 // pred_check_branch
          %645 = sbr.rel (%p643) target = $region120
        $region119: #{tpu_custom_call.1} parent=91 // pred_region
          %647 = dma.done [#allocation17], 256
        $region120: #{tpu_custom_call.1} parent=91 // pred_fallthru
          _
        %p648 = scmp.lt.s32.totalorder %s40, 1
        %s649 = scalar_select %p648, %s40, 1
        %p650 = scmp.lt.s32.totalorder %s41, 1
        %s651 = scalar_select %p650, %s41, 1
        %s652 = smul.addr %s649, 2
        %s653 = sadd.s32 %s651, %s652
        %s654 = smul.addr %s653, 8
        %s655 = scalar_lea.vmem %s0, %s654
        %p656 = pneg %p71
        %p657 = pneg %p68
        %p658 = pneg %p92
        %p659 = pneg %p89
        %p660 = pneg %p113
        %p661 = pneg %p110
        %p662 = pneg %p134
        %p663 = pneg %p131
        %p664 = pneg %p155
        %p665 = pneg %p152
        %p666 = pneg %p176
        %p667 = pneg %p173
        %p668 = pneg %p197
        %p669 = pneg %p194
        %p670 = pneg %p218
        %p671 = pneg %p215
        %p672 = pneg %p239
        %p673 = pneg %p236
        %p674 = pneg %p260
        %p675 = pneg %p257
        %p676 = pneg %p281
        %p677 = pneg %p278
        %p678 = pneg %p302
        %p679 = pneg %p299
        %p680 = pneg %p323
        %p681 = pneg %p320
        %p682 = pneg %p344
        %p683 = pneg %p341
        %p684 = pneg %p365
        %p685 = pneg %p362
        %p686 = pneg %p386
        %p687 = pneg %p383
        %p688 = pneg %p407
        %p689 = pneg %p404
        %p690 = pneg %p428
        %p691 = pneg %p425
        %p692 = pneg %p456
        %p693 = pneg %p453
        %s694 = sand.u32 %s443, 1
        %s695 = scalar_lea.sflag [#allocation9], %s694
        %s696 = sand.u32 %s443, 1
        %s697 = smul.addr %s696, 8
        %s698 = scalar_lea.vmem [#allocation19], %s697
        %p699 = scmp.lt.s32.totalorder %s40, 1
        %s700 = scalar_select %p699, %s40, 1
        %p701 = scmp.lt.s32.totalorder %s41, 1
        %s702 = scalar_select %p701, %s41, 1
        %s703 = smul.addr %s700, 2
        %s704 = sadd.s32 %s702, %s703
        %s705 = smul.addr %s704, 8
        %s706 = scalar_lea.vmem %s0, %s705
        %v708 = vld [vmem:[%s706] sm:$0xff]
        %v709 = vld [vmem:[#allocation7] sm:$0x1]
        %v710 = vld [vmem:[#allocation10] sm:$0x1]
        %vm711 = vcmask 261120
        %v712 = vsel %vm711, %v708, 0.0
        %713 = vadd.xlane.f32.xlu0 %v712
        %v714 = vpop.xlane.xlu0 %713
        %v715 = vrcp.pop 32.0
        %v716 = vmul.f32 32.0, %v715
        %v717 = vsub.f32 1.0, %v716
        %v718 = vmul.f32 %v715, %v717
        %v719 = vadd.f32 %v715, %v718
        %vm720 = vweird.f32 %v715
        %v721 = vsel %vm720, %v715, %v719
        %v722 = vmul.f32 %v714, %v721
        %v723 = vsub.f32 %v708, %v722
        %v724 = vmul.f32 %v723, %v723
        %v725 = vsel %vm711, %v724, 0.0
        %726 = vadd.xlane.f32.xlu0 %v725
        %v727 = vpop.xlane.xlu0 %726
        %v728 = vmul.f32 %v727, %v721
        %v729 = vadd.f32 %v728, 1e-05
        %v730 = vrsqrt.pop %v729
        %v731 = vmul.f32 %v730, %v729
        %v732 = vmul.f32 %v731, %v730
        %v733 = vmul.f32 0.5, %v732
        %v734 = vsub.f32 1.5, %v733
        %v735 = vmul.f32 %v730, %v734
        %vm736 = vweird.f32 %v729
        %vm737 = vweird.f32 %v730
        %vm738 = vmor %vm736, %vm737
        %v739 = vsel %vm738, %v730, %v735
        %v740 = vmul.f32 %v723, %v739
        %v742 = vperm.slane %v709, 0
        %v744 = vmul.f32 %v740, %v742
        %v746 = vperm.slane %v710, 0
        %v748 = vadd.f32 %v744, %v746
        %v749 = vpack.c.bf16 %v748, %v748
        %v750 = vld [vmem:[%s3] sm:$0xf]
        %v751 = vld [vmem:[%s3 + $0x4] sm:$0xf]
        %v752 = vld [vmem:[%s3 + $0x8] sm:$0xf]
        %v753 = vld [vmem:[%s3 + $0xc] sm:$0xf]
        %v758 = vunpack.c.l.b16 %v750
        %v759 = vunpack.c.l.b16 %v751
        %v760 = vunpack.c.l.b16 %v752
        %v761 = vunpack.c.l.b16 %v753
        %v762 = vpack.c.b16 %v759, %v758
        %v763 = vpack.c.b16 %v761, %v760
        %v767 = vsel %vm711, %v749, 0
        %769 = vmatpush.bf16.msra.mxu0 0
        %770 = vmatpush.bf16.msra.mxu0 0
        %771 = vmatpush.bf16.msra.mxu0 0
        %772 = vmatpush.bf16.msra.mxu0 0
        %773 = vmatpush.bf16.msra.mxu0 0
        %774 = vmatpush.bf16.msra.mxu0 0
        %775 = vmatpush.bf16.msra.mxu0 %v763
        %776 = vmatpush.bf16.msra.mxu0 %v762
        %777 = vmatmul.bf16.gmra.mxu0 %v767
        %v778 = vpop.f32.mrf.mxu0
        %v779 = vadd.f32 0.0, %v778
        %v780 = vpop.f32.mrf.mxu0
        %781 = vdwg.mxu0
        %v782 = vld [vmem:[#allocation12] sm:$0x1]
        %784 = vset.pattern.permute.xlu0 32
        %785 = vperm.xlu0 %784, %v779
        %v786 = vpop.permute.xlu0 %785
        %v788 = vperm.slane %v782, 0
        %v789 = vmul.f32 %v786, %v788
        %v790 = vld [vmem:[#allocation12 + $0x1] sm:$0x1]
        %791 = vset.pattern.permute.xlu0 33
        %792 = vperm.xlu0 %791, %v779
        %v793 = vpop.permute.xlu0 %792
        %v795 = vperm.slane %v790, 0
        %v796 = vmul.f32 %v793, %v795
        %v797 = vadd.f32 %v789, %v796
        %v798 = vld [vmem:[#allocation13] sm:$0x1]
        %v800 = vperm.slane %v798, 0
        %v802 = vadd.f32 %v797, %v800
        %vm803 = vcmp.gt.f32.partialorder %v802, 20.0
        %v804 = vmin.f32 %v802, 20.0
        %v805 = vmul.f32 %v804, 1.442695
        %v806 = vpow.pop %v805
        %v807 = vadd.f32 %v806, 1.0
        %v808 = vlog2.pop %v807
        %v809 = vmul.f32 %v808, 0.6931472
        %v810 = vsel %vm803, %v802, %v809
        %p811 = scmp.eq.s32.totalorder %s41, 0
        // Predicated region
        $region121: #{tpu_custom_call.1} parent=91 // pred_check
          %p812 = pneg %p811
        $region122: #{tpu_custom_call.1} parent=91 // pred_check_branch
          %814 = sbr.rel (%p812) target = $region124
        $region123: #{tpu_custom_call.1} parent=91 // pred_region
          %vm815 = vcmask 256000
          %816 = vst.msk [vmem:[#allocation6] sm:$0x7] %vm815, 0.0
        $region124: #{tpu_custom_call.1} parent=91 // pred_fallthru
          _
        %v817 = vld [vmem:[#allocation6] sm:$0x7]
        %vm818 = vcmask 256000
        %819 = vst.msk [vmem:[#allocation2] sm:$0x7] %vm818, %v817
        %820 = vst.msk [vmem:[#allocation2 + $0x3] sm:$0xff] %vm711, %v748
        %vm821 = vcmask 261125
        %822 = vst.msk [vmem:[#allocation6 - $0x5] sm:$0xe0] %vm821, %v748
        %v823 = vld [vmem:[#allocation2] sm:$0xff]
        %v824 = vld [vmem:[%s6] sm:$0x1]
        %v825 = vperm.slane %v824, 0
        %v826 = vmul.f32 %v823, %v825
        %v827 = vld [vmem:[#allocation2 + $0x1] sm:$0xff]
        %v828 = vld [vmem:[%s6 + $0x1] sm:$0x1]
        %v829 = vperm.slane %v828, 0
        %v830 = vmul.f32 %v827, %v829
        %v831 = vadd.f32 %v826, %v830
        %v832 = vld [vmem:[#allocation2 + $0x2] sm:$0xff]
        %v833 = vld [vmem:[%s6 + $0x2] sm:$0x1]
        %v834 = vperm.slane %v833, 0
        %v835 = vmul.f32 %v832, %v834
        %v836 = vadd.f32 %v831, %v835
        %v837 = vld [vmem:[#allocation2 + $0x3] sm:$0xff]
        %v838 = vld [vmem:[%s6 + $0x3] sm:$0x1]
        %v839 = vperm.slane %v838, 0
        %v840 = vmul.f32 %v837, %v839
        %v841 = vadd.f32 %v836, %v840
        %v842 = vsub.f32 0.0, %v841
        %v843 = vmul.f32 %v842, 1.442695
        %v844 = vpow.pop %v843
        %v845 = vadd.f32 %v844, 1.0
        %v846 = vrcp.pop %v845
        %v847 = vmul.f32 %v845, %v846
        %v848 = vsub.f32 1.0, %v847
        %v849 = vmul.f32 %v846, %v848
        %v850 = vadd.f32 %v846, %v849
        %vm851 = vweird.f32 %v845
        %vm852 = vweird.f32 %v846
        %vm853 = vmor %vm851, %vm852
        %v854 = vsel %vm853, %v846, %v850
        %v855 = vand.u32 2147483647, %v845
        %vm856 = vcmp.eq.f32.partialorder %v855, 8.507059e+37
        %v857 = vand.u32 %v845, 2147483648
        %v858 = vor.u32 1.1754944e-38, %v857
        %v859 = vsel %vm856, %v858, %v854
        %v860 = vmul.f32 1.0, %v859
        %v861 = vmul.f32 %v841, %v860
        %v863 = vrot.slane %v810, 1
        %v864 = vrot.slane %v810, 2
        %v865 = vrot.slane %v810, 3
        %v866 = vrot.slane %v810, 4
        %v867 = vrot.slane %v810, 5
        %v868 = vrot.slane %v810, 6
        %v869 = vrot.slane %v810, 7
        %v870 = vld [vmem:[%s7] sm:$0xff]
        %v871 = vld [vmem:[%s7 + $0x8] sm:$0xff]
        %v872 = vperm.slane %v810, 0
        %v873 = vperm.slane %v863, 0
        %v874 = vperm.slane %v864, 0
        %v875 = vperm.slane %v865, 0
        %v876 = vperm.slane %v866, 0
        %v877 = vperm.slane %v867, 0
        %v878 = vperm.slane %v868, 0
        %v879 = vperm.slane %v869, 0
        %v888 = vmul.f32 %v872, %v870
        %v889 = vmul.f32 %v872, %v871
        %v890 = vmul.f32 %v873, %v870
        %v891 = vmul.f32 %v873, %v871
        %v892 = vmul.f32 %v874, %v870
        %v893 = vmul.f32 %v874, %v871
        %v894 = vmul.f32 %v875, %v870
        %v895 = vmul.f32 %v875, %v871
        %v896 = vmul.f32 %v876, %v870
        %v897 = vmul.f32 %v876, %v871
        %v898 = vmul.f32 %v877, %v870
        %v899 = vmul.f32 %v877, %v871
        %v900 = vmul.f32 %v878, %v870
        %v901 = vmul.f32 %v878, %v871
        %v902 = vmul.f32 %v879, %v870
        %v903 = vmul.f32 %v879, %v871
        %v904 = vmul.f32 %v888, 1.442695
        %v905 = vpow.pop %v904
        %v906 = vmul.f32 %v889, 1.442695
        %v907 = vpow.pop %v906
        %v908 = vmul.f32 %v890, 1.442695
        %v909 = vpow.pop %v908
        %v910 = vmul.f32 %v891, 1.442695
        %v911 = vpow.pop %v910
        %v912 = vmul.f32 %v892, 1.442695
        %v913 = vpow.pop %v912
        %v914 = vmul.f32 %v893, 1.442695
        %v915 = vpow.pop %v914
        %v916 = vmul.f32 %v894, 1.442695
        %v917 = vpow.pop %v916
        %v918 = vmul.f32 %v895, 1.442695
        %v919 = vpow.pop %v918
        %v920 = vmul.f32 %v896, 1.442695
        %v921 = vpow.pop %v920
        %v922 = vmul.f32 %v897, 1.442695
        %v923 = vpow.pop %v922
        %v924 = vmul.f32 %v898, 1.442695
        %v925 = vpow.pop %v924
        %v926 = vmul.f32 %v899, 1.442695
        %v927 = vpow.pop %v926
        %v928 = vmul.f32 %v900, 1.442695
        %v929 = vpow.pop %v928
        %v930 = vmul.f32 %v901, 1.442695
        %v931 = vpow.pop %v930
        %v932 = vmul.f32 %v902, 1.442695
        %v933 = vpow.pop %v932
        %v934 = vmul.f32 %v903, 1.442695
        %v935 = vpow.pop %v934
        %v936 = vld [vmem:[#allocation15] sm:$0xff]
        %v937 = vld [vmem:[#allocation15 + $0x8] sm:$0xff]
        %vm938 = vcmp.gt.f32.partialorder %v936, 0.5
        %vm939 = vcmp.gt.f32.partialorder %v937, 0.5
        %v940 = vsub.f32 %v905, 1.0
        %v941 = vsub.f32 %v907, 1.0
        %v942 = vsub.f32 %v909, 1.0
        %v943 = vsub.f32 %v911, 1.0
        %v944 = vsub.f32 %v913, 1.0
        %v945 = vsub.f32 %v915, 1.0
        %v946 = vsub.f32 %v917, 1.0
        %v947 = vsub.f32 %v919, 1.0
        %v948 = vsub.f32 %v921, 1.0
        %v949 = vsub.f32 %v923, 1.0
        %v950 = vsub.f32 %v925, 1.0
        %v951 = vsub.f32 %v927, 1.0
        %v952 = vsub.f32 %v929, 1.0
        %v953 = vsub.f32 %v931, 1.0
        %v954 = vsub.f32 %v933, 1.0
        %v955 = vsub.f32 %v935, 1.0
        %v956 = vld [vmem:[%s8] sm:$0xff]
        %v957 = vld [vmem:[%s8 + $0x8] sm:$0xff]
        %v958 = vmul.f32 %v940, %v956
        %v959 = vmul.f32 %v941, %v957
        %v960 = vmul.f32 %v942, %v956
        %v961 = vmul.f32 %v943, %v957
        %v962 = vmul.f32 %v944, %v956
        %v963 = vmul.f32 %v945, %v957
        %v964 = vmul.f32 %v946, %v956
        %v965 = vmul.f32 %v947, %v957
        %v966 = vmul.f32 %v948, %v956
        %v967 = vmul.f32 %v949, %v957
        %v968 = vmul.f32 %v950, %v956
        %v969 = vmul.f32 %v951, %v957
        %v970 = vmul.f32 %v952, %v956
        %v971 = vmul.f32 %v953, %v957
        %v972 = vmul.f32 %v954, %v956
        %v973 = vmul.f32 %v955, %v957
        %v974 = vsel %vm938, 1, 0
        %v975 = vsel %vm939, 1, 0
        %vm976 = vcmp.eq.s32.totalorder %v974, 1
        %vm977 = vcmp.eq.s32.totalorder %v975, 1
        %v978 = vsel %vm976, %v872, %v958
        %v979 = vsel %vm977, %v872, %v959
        %v980 = vsel %vm976, %v873, %v960
        %v981 = vsel %vm977, %v873, %v961
        %v982 = vsel %vm976, %v874, %v962
        %v983 = vsel %vm977, %v874, %v963
        %v984 = vsel %vm976, %v875, %v964
        %v985 = vsel %vm977, %v875, %v965
        %v986 = vsel %vm976, %v876, %v966
        %v987 = vsel %vm977, %v876, %v967
        %v988 = vsel %vm976, %v877, %v968
        %v989 = vsel %vm977, %v877, %v969
        %v990 = vsel %vm976, %v878, %v970
        %v991 = vsel %vm977, %v878, %v971
        %v992 = vsel %vm976, %v879, %v972
        %v993 = vsel %vm977, %v879, %v973
        %v994 = vpack.c.bf16 %v905, %v905
        %v995 = vpack.c.bf16 %v907, %v907
        %v996 = vpack.c.bf16 %v909, %v909
        %v997 = vpack.c.bf16 %v911, %v911
        %v998 = vpack.c.bf16 %v913, %v913
        %v999 = vpack.c.bf16 %v915, %v915
        %v1000 = vpack.c.bf16 %v917, %v917
        %v1001 = vpack.c.bf16 %v919, %v919
        %v1002 = vpack.c.bf16 %v921, %v921
        %v1003 = vpack.c.bf16 %v923, %v923
        %v1004 = vpack.c.bf16 %v925, %v925
        %v1005 = vpack.c.bf16 %v927, %v927
        %v1006 = vpack.c.bf16 %v929, %v929
        %v1007 = vpack.c.bf16 %v931, %v931
        %v1008 = vpack.c.bf16 %v933, %v933
        %v1009 = vpack.c.bf16 %v935, %v935
        %vm1010 = vcmask 257024
        %1011 = vst.msk [vmem:[#allocation3] sm:$0xf] %vm1010, %v994
        %1012 = vst.msk [vmem:[#allocation3 + $0x4] sm:$0xf] %vm1010, %v995
        %1013 = vst.msk [vmem:[#allocation3 + $0x8] sm:$0xf] %vm1010, %v996
        %1014 = vst.msk [vmem:[#allocation3 + $0xc] sm:$0xf] %vm1010, %v997
        %1015 = vst.msk [vmem:[#allocation3 + $0x10] sm:$0xf] %vm1010, %v998
        %1016 = vst.msk [vmem:[#allocation3 + $0x14] sm:$0xf] %vm1010, %v999
        %1017 = vst.msk [vmem:[#allocation3 + $0x18] sm:$0xf] %vm1010, %v1000
        %1018 = vst.msk [vmem:[#allocation3 + $0x1c] sm:$0xf] %vm1010, %v1001
        %1019 = vst.msk [vmem:[#allocation3 + $0x20] sm:$0xf] %vm1010, %v1002
        %1020 = vst.msk [vmem:[#allocation3 + $0x24] sm:$0xf] %vm1010, %v1003
        %1021 = vst.msk [vmem:[#allocation3 + $0x28] sm:$0xf] %vm1010, %v1004
        %1022 = vst.msk [vmem:[#allocation3 + $0x2c] sm:$0xf] %vm1010, %v1005
        %1023 = vst.msk [vmem:[#allocation3 + $0x30] sm:$0xf] %vm1010, %v1006
        %1024 = vst.msk [vmem:[#allocation3 + $0x34] sm:$0xf] %vm1010, %v1007
        %1025 = vst.msk [vmem:[#allocation3 + $0x38] sm:$0xf] %vm1010, %v1008
        %1026 = vst.msk [vmem:[#allocation3 + $0x3c] sm:$0xf] %vm1010, %v1009
        %v1028 = vrot.slane %v861, 1
        %v1029 = vrot.slane %v861, 2
        %v1030 = vrot.slane %v861, 3
        %v1031 = vrot.slane %v861, 4
        %v1032 = vrot.slane %v861, 5
        %v1033 = vrot.slane %v861, 6
        %v1034 = vrot.slane %v861, 7
        %v1035 = vperm.slane %v861, 0
        %v1036 = vperm.slane %v1028, 0
        %v1037 = vperm.slane %v1029, 0
        %v1038 = vperm.slane %v1030, 0
        %v1039 = vperm.slane %v1031, 0
        %v1040 = vperm.slane %v1032, 0
        %v1041 = vperm.slane %v1033, 0
        %v1042 = vperm.slane %v1034, 0
        %v1051 = vmul.f32 %v978, %v1035
        %v1052 = vmul.f32 %v979, %v1035
        %v1053 = vmul.f32 %v980, %v1036
        %v1054 = vmul.f32 %v981, %v1036
        %v1055 = vmul.f32 %v982, %v1037
        %v1056 = vmul.f32 %v983, %v1037
        %v1057 = vmul.f32 %v984, %v1038
        %v1058 = vmul.f32 %v985, %v1038
        %v1059 = vmul.f32 %v986, %v1039
        %v1060 = vmul.f32 %v987, %v1039
        %v1061 = vmul.f32 %v988, %v1040
        %v1062 = vmul.f32 %v989, %v1040
        %v1063 = vmul.f32 %v990, %v1041
        %v1064 = vmul.f32 %v991, %v1041
        %v1065 = vmul.f32 %v992, %v1042
        %v1066 = vmul.f32 %v993, %v1042
        %v1067 = vpack.c.bf16 %v1051, %v1051
        %v1068 = vpack.c.bf16 %v1052, %v1052
        %v1069 = vpack.c.bf16 %v1053, %v1053
        %v1070 = vpack.c.bf16 %v1054, %v1054
        %v1071 = vpack.c.bf16 %v1055, %v1055
        %v1072 = vpack.c.bf16 %v1056, %v1056
        %v1073 = vpack.c.bf16 %v1057, %v1057
        %v1074 = vpack.c.bf16 %v1058, %v1058
        %v1075 = vpack.c.bf16 %v1059, %v1059
        %v1076 = vpack.c.bf16 %v1060, %v1060
        %v1077 = vpack.c.bf16 %v1061, %v1061
        %v1078 = vpack.c.bf16 %v1062, %v1062
        %v1079 = vpack.c.bf16 %v1063, %v1063
        %v1080 = vpack.c.bf16 %v1064, %v1064
        %v1081 = vpack.c.bf16 %v1065, %v1065
        %v1082 = vpack.c.bf16 %v1066, %v1066
        %1083 = vst.msk [vmem:[#allocation4] sm:$0xf] %vm1010, %v1067
        %1084 = vst.msk [vmem:[#allocation4 + $0x4] sm:$0xf] %vm1010, %v1068
        %1085 = vst.msk [vmem:[#allocation4 + $0x8] sm:$0xf] %vm1010, %v1069
        %1086 = vst.msk [vmem:[#allocation4 + $0xc] sm:$0xf] %vm1010, %v1070
        %1087 = vst.msk [vmem:[#allocation4 + $0x10] sm:$0xf] %vm1010, %v1071
        %1088 = vst.msk [vmem:[#allocation4 + $0x14] sm:$0xf] %vm1010, %v1072
        %1089 = vst.msk [vmem:[#allocation4 + $0x18] sm:$0xf] %vm1010, %v1073
        %1090 = vst.msk [vmem:[#allocation4 + $0x1c] sm:$0xf] %vm1010, %v1074
        %1091 = vst.msk [vmem:[#allocation4 + $0x20] sm:$0xf] %vm1010, %v1075
        %1092 = vst.msk [vmem:[#allocation4 + $0x24] sm:$0xf] %vm1010, %v1076
        %1093 = vst.msk [vmem:[#allocation4 + $0x28] sm:$0xf] %vm1010, %v1077
        %1094 = vst.msk [vmem:[#allocation4 + $0x2c] sm:$0xf] %vm1010, %v1078
        %1095 = vst.msk [vmem:[#allocation4 + $0x30] sm:$0xf] %vm1010, %v1079
        %1096 = vst.msk [vmem:[#allocation4 + $0x34] sm:$0xf] %vm1010, %v1080
        %1097 = vst.msk [vmem:[#allocation4 + $0x38] sm:$0xf] %vm1010, %v1081
        %1098 = vst.msk [vmem:[#allocation4 + $0x3c] sm:$0xf] %vm1010, %v1082
        // Predicated region
        $region125: #{tpu_custom_call.1} parent=91 // pred_check
          %p1099 = pneg %p811
        $region126: #{tpu_custom_call.1} parent=91 // pred_check_branch
          %1101 = sbr.rel (%p1099) target = $region128
        $region127: #{tpu_custom_call.1} parent=91 // pred_region
          %v1102 = vld [vmem:[#allocation4] sm:$0xf]
          %v1103 = vld [vmem:[#allocation4 + $0x4] sm:$0xf]
          %v1104 = vunpack.c.l.bf16 %v1102
          %v1105 = vunpack.c.l.bf16 %v1103
          %1106 = vst.msk [vmem:[#allocation5] sm:$0xff] %vm711, %v1104
          %1107 = vst.msk [vmem:[#allocation5 + $0x8] sm:$0xff] %vm711, %v1105
        $region128: #{tpu_custom_call.1} parent=91 // pred_fallthru
          _
        %v1108 = vld [vmem:[#allocation5] sm:$0xff]
        %v1109 = vld [vmem:[#allocation5 + $0x8] sm:$0xff]
        %v1110 = vld [vmem:[#allocation4] sm:$0xf]
        %v1111 = vld [vmem:[#allocation4 + $0x4] sm:$0xf]
        %v1112 = vunpack.c.l.bf16 %v1110
        %v1113 = vunpack.c.l.bf16 %v1111
        %v1114 = vld [vmem:[#allocation3] sm:$0xf]
        %v1115 = vld [vmem:[#allocation3 + $0x4] sm:$0xf]
        %v1116 = vunpack.c.l.bf16 %v1114
        %v1117 = vunpack.c.l.bf16 %v1115
        %v1118 = vpack.c.bf16 %v1108, %v1108
        %v1119 = vpack.c.bf16 %v1109, %v1109
        %1120 = vst.msk [vmem:[#allocation4] sm:$0xf] %vm1010, %v1118
        %1121 = vst.msk [vmem:[#allocation4 + $0x4] sm:$0xf] %vm1010, %v1119
        %v1122 = vmul.f32 %v1116, %v1108
        %v1123 = vmul.f32 %v1117, %v1109
        %v1124 = vadd.f32 %v1122, %v1112
        %v1125 = vadd.f32 %v1123, %v1113
        %s1126 = scalar_lea.vmem [#allocation4], 8
        %v1127 = vld [vmem:[%s1126] sm:$0xf]
        %v1128 = vld [vmem:[%s1126 + $0x4] sm:$0xf]
        %v1129 = vunpack.c.l.bf16 %v1127
        %v1130 = vunpack.c.l.bf16 %v1128
        %s1131 = scalar_lea.vmem [#allocation3], 8
        %v1132 = vld [vmem:[%s1131] sm:$0xf]
        %v1133 = vld [vmem:[%s1131 + $0x4] sm:$0xf]
        %v1134 = vunpack.c.l.bf16 %v1132
        %v1135 = vunpack.c.l.bf16 %v1133
        %v1136 = vpack.c.bf16 %v1124, %v1124
        %v1137 = vpack.c.bf16 %v1125, %v1125
        %1138 = vst.msk [vmem:[%s1126] sm:$0xf] %vm1010, %v1136
        %1139 = vst.msk [vmem:[%s1126 + $0x4] sm:$0xf] %vm1010, %v1137
        %v1140 = vmul.f32 %v1134, %v1124
        %v1141 = vmul.f32 %v1135, %v1125
        %v1142 = vadd.f32 %v1140, %v1129
        %v1143 = vadd.f32 %v1141, %v1130
        %s1144 = scalar_lea.vmem [#allocation4], 16
        %v1145 = vld [vmem:[%s1144] sm:$0xf]
        %v1146 = vld [vmem:[%s1144 + $0x4] sm:$0xf]
        %v1147 = vunpack.c.l.bf16 %v1145
        %v1148 = vunpack.c.l.bf16 %v1146
        %s1149 = scalar_lea.vmem [#allocation3], 16
        %v1150 = vld [vmem:[%s1149] sm:$0xf]
        %v1151 = vld [vmem:[%s1149 + $0x4] sm:$0xf]
        %v1152 = vunpack.c.l.bf16 %v1150
        %v1153 = vunpack.c.l.bf16 %v1151
        %v1154 = vpack.c.bf16 %v1142, %v1142
        %v1155 = vpack.c.bf16 %v1143, %v1143
        %1156 = vst.msk [vmem:[%s1144] sm:$0xf] %vm1010, %v1154
        %1157 = vst.msk [vmem:[%s1144 + $0x4] sm:$0xf] %vm1010, %v1155
        %v1158 = vmul.f32 %v1152, %v1142
        %v1159 = vmul.f32 %v1153, %v1143
        %v1160 = vadd.f32 %v1158, %v1147
        %v1161 = vadd.f32 %v1159, %v1148
        %s1162 = scalar_lea.vmem [#allocation4], 24
        %v1163 = vld [vmem:[%s1162] sm:$0xf]
        %v1164 = vld [vmem:[%s1162 + $0x4] sm:$0xf]
        %v1165 = vunpack.c.l.bf16 %v1163
        %v1166 = vunpack.c.l.bf16 %v1164
        %s1167 = scalar_lea.vmem [#allocation3], 24
        %v1168 = vld [vmem:[%s1167] sm:$0xf]
        %v1169 = vld [vmem:[%s1167 + $0x4] sm:$0xf]
        %v1170 = vunpack.c.l.bf16 %v1168
        %v1171 = vunpack.c.l.bf16 %v1169
        %v1172 = vpack.c.bf16 %v1160, %v1160
        %v1173 = vpack.c.bf16 %v1161, %v1161
        %1174 = vst.msk [vmem:[%s1162] sm:$0xf] %vm1010, %v1172
        %1175 = vst.msk [vmem:[%s1162 + $0x4] sm:$0xf] %vm1010, %v1173
        %v1176 = vmul.f32 %v1170, %v1160
        %v1177 = vmul.f32 %v1171, %v1161
        %v1178 = vadd.f32 %v1176, %v1165
        %v1179 = vadd.f32 %v1177, %v1166
        %s1180 = scalar_lea.vmem [#allocation4], 32
        %v1181 = vld [vmem:[%s1180] sm:$0xf]
        %v1182 = vld [vmem:[%s1180 + $0x4] sm:$0xf]
        %v1183 = vunpack.c.l.bf16 %v1181
        %v1184 = vunpack.c.l.bf16 %v1182
        %s1185 = scalar_lea.vmem [#allocation3], 32
        %v1186 = vld [vmem:[%s1185] sm:$0xf]
        %v1187 = vld [vmem:[%s1185 + $0x4] sm:$0xf]
        %v1188 = vunpack.c.l.bf16 %v1186
        %v1189 = vunpack.c.l.bf16 %v1187
        %v1190 = vpack.c.bf16 %v1178, %v1178
        %v1191 = vpack.c.bf16 %v1179, %v1179
        %1192 = vst.msk [vmem:[%s1180] sm:$0xf] %vm1010, %v1190
        %1193 = vst.msk [vmem:[%s1180 + $0x4] sm:$0xf] %vm1010, %v1191
        %v1194 = vmul.f32 %v1188, %v1178
        %v1195 = vmul.f32 %v1189, %v1179
        %v1196 = vadd.f32 %v1194, %v1183
        %v1197 = vadd.f32 %v1195, %v1184
        %s1198 = scalar_lea.vmem [#allocation4], 40
        %v1199 = vld [vmem:[%s1198] sm:$0xf]
        %v1200 = vld [vmem:[%s1198 + $0x4] sm:$0xf]
        %v1201 = vunpack.c.l.bf16 %v1199
        %v1202 = vunpack.c.l.bf16 %v1200
        %s1203 = scalar_lea.vmem [#allocation3], 40
        %v1204 = vld [vmem:[%s1203] sm:$0xf]
        %v1205 = vld [vmem:[%s1203 + $0x4] sm:$0xf]
        %v1206 = vunpack.c.l.bf16 %v1204
        %v1207 = vunpack.c.l.bf16 %v1205
        %v1208 = vpack.c.bf16 %v1196, %v1196
        %v1209 = vpack.c.bf16 %v1197, %v1197
        %1210 = vst.msk [vmem:[%s1198] sm:$0xf] %vm1010, %v1208
        %1211 = vst.msk [vmem:[%s1198 + $0x4] sm:$0xf] %vm1010, %v1209
        %v1212 = vmul.f32 %v1206, %v1196
        %v1213 = vmul.f32 %v1207, %v1197
        %v1214 = vadd.f32 %v1212, %v1201
        %v1215 = vadd.f32 %v1213, %v1202
        %s1216 = scalar_lea.vmem [#allocation4], 48
        %v1217 = vld [vmem:[%s1216] sm:$0xf]
        %v1218 = vld [vmem:[%s1216 + $0x4] sm:$0xf]
        %v1219 = vunpack.c.l.bf16 %v1217
        %v1220 = vunpack.c.l.bf16 %v1218
        %s1221 = scalar_lea.vmem [#allocation3], 48
        %v1222 = vld [vmem:[%s1221] sm:$0xf]
        %v1223 = vld [vmem:[%s1221 + $0x4] sm:$0xf]
        %v1224 = vunpack.c.l.bf16 %v1222
        %v1225 = vunpack.c.l.bf16 %v1223
        %v1226 = vpack.c.bf16 %v1214, %v1214
        %v1227 = vpack.c.bf16 %v1215, %v1215
        %1228 = vst.msk [vmem:[%s1216] sm:$0xf] %vm1010, %v1226
        %1229 = vst.msk [vmem:[%s1216 + $0x4] sm:$0xf] %vm1010, %v1227
        %v1230 = vmul.f32 %v1224, %v1214
        %v1231 = vmul.f32 %v1225, %v1215
        %v1232 = vadd.f32 %v1230, %v1219
        %v1233 = vadd.f32 %v1231, %v1220
        %s1234 = scalar_lea.vmem [#allocation4], 56
        %v1235 = vld [vmem:[%s1234] sm:$0xf]
        %v1236 = vld [vmem:[%s1234 + $0x4] sm:$0xf]
        %v1237 = vunpack.c.l.bf16 %v1235
        %v1238 = vunpack.c.l.bf16 %v1236
        %s1239 = scalar_lea.vmem [#allocation3], 56
        %v1240 = vld [vmem:[%s1239] sm:$0xf]
        %v1241 = vld [vmem:[%s1239 + $0x4] sm:$0xf]
        %v1242 = vunpack.c.l.bf16 %v1240
        %v1243 = vunpack.c.l.bf16 %v1241
        %v1244 = vpack.c.bf16 %v1232, %v1232
        %v1245 = vpack.c.bf16 %v1233, %v1233
        %1246 = vst.msk [vmem:[%s1234] sm:$0xf] %vm1010, %v1244
        %1247 = vst.msk [vmem:[%s1234 + $0x4] sm:$0xf] %vm1010, %v1245
        %v1248 = vmul.f32 %v1242, %v1232
        %v1249 = vmul.f32 %v1243, %v1233
        %v1250 = vadd.f32 %v1248, %v1237
        %v1251 = vadd.f32 %v1249, %v1238
        %1252 = vst.msk [vmem:[#allocation5] sm:$0xff] %vm711, %v1250
        %1253 = vst.msk [vmem:[#allocation5 + $0x8] sm:$0xff] %vm711, %v1251
        %v1254 = vld [vmem:[#allocation4] sm:$0x1]
        %v1255 = vld [vmem:[#allocation4 + $0x8] sm:$0x1]
        %v1256 = vld [vmem:[#allocation4 + $0x10] sm:$0x1]
        %v1257 = vld [vmem:[#allocation4 + $0x18] sm:$0x1]
        %v1258 = vld [vmem:[#allocation4 + $0x20] sm:$0x1]
        %v1259 = vld [vmem:[#allocation4 + $0x28] sm:$0x1]
        %v1260 = vld [vmem:[#allocation4 + $0x30] sm:$0x1]
        %v1261 = vld [vmem:[#allocation4 + $0x38] sm:$0x1]
        %v1262 = vunpack.c.l.bf16 %v1254
        %v1263 = vunpack.c.l.bf16 %v1255
        %v1264 = vunpack.c.l.bf16 %v1256
        %v1265 = vunpack.c.l.bf16 %v1257
        %v1266 = vunpack.c.l.bf16 %v1258
        %v1267 = vunpack.c.l.bf16 %v1259
        %v1268 = vunpack.c.l.bf16 %v1260
        %v1269 = vunpack.c.l.bf16 %v1261
        %1270 = vset.pattern.permute.xlu0 34
        %1271 = vperm.xlu0 %1270, %v779
        %v1272 = vpop.permute.xlu0 %1271
        %v1282 = vrot.slane %v1263, 7
        %vm1283 = vcmask 1041409
        %v1284 = vsel %vm1283, %v1282, %v1262
        %v1285 = vrot.slane %v1264, 6
        %vm1286 = vcmask 1042434
        %v1287 = vsel %vm1286, %v1285, %v1284
        %v1288 = vrot.slane %v1265, 5
        %vm1289 = vcmask 1043459
        %v1290 = vsel %vm1289, %v1288, %v1287
        %v1291 = vrot.slane %v1266, 4
        %vm1292 = vcmask 1044484
        %v1293 = vsel %vm1292, %v1291, %v1290
        %v1294 = vrot.slane %v1267, 3
        %vm1295 = vcmask 1045509
        %v1296 = vsel %vm1295, %v1294, %v1293
        %v1297 = vrot.slane %v1268, 2
        %vm1298 = vcmask 1046534
        %v1299 = vsel %vm1298, %v1297, %v1296
        %v1300 = vrot.slane %v1269, 1
        %vm1301 = vcmask 1047559
        %v1302 = vsel %vm1301, %v1300, %v1299
        %v1304 = vmul.f32 %v1272, %v1302
        %1305 = vset.pattern.permute.xlu0 35
        %1306 = vperm.xlu0 %1305, %v779
        %v1307 = vpop.permute.xlu0 %1306
        %v1309 = vrot.slane %v1262, 1
        %v1310 = vsel %vm1283, %v1263, %v1309
        %v1311 = vrot.slane %v1264, 7
        %v1312 = vsel %vm1286, %v1311, %v1310
        %v1313 = vrot.slane %v1265, 6
        %v1314 = vsel %vm1289, %v1313, %v1312
        %v1315 = vrot.slane %v1266, 5
        %v1316 = vsel %vm1292, %v1315, %v1314
        %v1317 = vrot.slane %v1267, 4
        %v1318 = vsel %vm1295, %v1317, %v1316
        %v1319 = vrot.slane %v1268, 3
        %v1320 = vsel %vm1298, %v1319, %v1318
        %v1321 = vrot.slane %v1269, 2
        %v1322 = vsel %vm1301, %v1321, %v1320
        %v1324 = vmul.f32 %v1307, %v1322
        %v1325 = vadd.f32 %v1304, %v1324
        %v1326 = vld [vmem:[#allocation4] sm:$0x2]
        %v1327 = vld [vmem:[#allocation4 + $0x8] sm:$0x2]
        %v1328 = vld [vmem:[#allocation4 + $0x10] sm:$0x2]
        %v1329 = vld [vmem:[#allocation4 + $0x18] sm:$0x2]
        %v1330 = vld [vmem:[#allocation4 + $0x20] sm:$0x2]
        %v1331 = vld [vmem:[#allocation4 + $0x28] sm:$0x2]
        %v1332 = vld [vmem:[#allocation4 + $0x30] sm:$0x2]
        %v1333 = vld [vmem:[#allocation4 + $0x38] sm:$0x2]
        %v1334 = vunpack.c.l.bf16 %v1326
        %v1335 = vunpack.c.l.bf16 %v1327
        %v1336 = vunpack.c.l.bf16 %v1328
        %v1337 = vunpack.c.l.bf16 %v1329
        %v1338 = vunpack.c.l.bf16 %v1330
        %v1339 = vunpack.c.l.bf16 %v1331
        %v1340 = vunpack.c.l.bf16 %v1332
        %v1341 = vunpack.c.l.bf16 %v1333
        %1342 = vset.pattern.permute.xlu0 36
        %1343 = vperm.xlu0 %1342, %v779
        %v1344 = vpop.permute.xlu0 %1343
        %v1354 = vrot.slane %v1334, 2
        %v1355 = vrot.slane %v1335, 1
        %v1356 = vsel %vm1283, %v1355, %v1354
        %v1357 = vsel %vm1286, %v1336, %v1356
        %v1358 = vrot.slane %v1337, 7
        %v1359 = vsel %vm1289, %v1358, %v1357
        %v1360 = vrot.slane %v1338, 6
        %v1361 = vsel %vm1292, %v1360, %v1359
        %v1362 = vrot.slane %v1339, 5
        %v1363 = vsel %vm1295, %v1362, %v1361
        %v1364 = vrot.slane %v1340, 4
        %v1365 = vsel %vm1298, %v1364, %v1363
        %v1366 = vrot.slane %v1341, 3
        %v1367 = vsel %vm1301, %v1366, %v1365
        %v1369 = vmul.f32 %v1344, %v1367
        %v1370 = vadd.f32 %v1325, %v1369
        %1371 = vset.pattern.permute.xlu0 37
        %1372 = vperm.xlu0 %1371, %v779
        %v1373 = vpop.permute.xlu0 %1372
        %v1375 = vrot.slane %v1334, 3
        %v1376 = vrot.slane %v1335, 2
        %v1377 = vsel %vm1283, %v1376, %v1375
        %v1378 = vrot.slane %v1336, 1
        %v1379 = vsel %vm1286, %v1378, %v1377
        %v1380 = vsel %vm1289, %v1337, %v1379
        %v1381 = vrot.slane %v1338, 7
        %v1382 = vsel %vm1292, %v1381, %v1380
        %v1383 = vrot.slane %v1339, 6
        %v1384 = vsel %vm1295, %v1383, %v1382
        %v1385 = vrot.slane %v1340, 5
        %v1386 = vsel %vm1298, %v1385, %v1384
        %v1387 = vrot.slane %v1341, 4
        %v1388 = vsel %vm1301, %v1387, %v1386
        %v1390 = vmul.f32 %v1373, %v1388
        %v1391 = vadd.f32 %v1370, %v1390
        %v1392 = vld [vmem:[#allocation4] sm:$0x4]
        %v1393 = vld [vmem:[#allocation4 + $0x8] sm:$0x4]
        %v1394 = vld [vmem:[#allocation4 + $0x10] sm:$0x4]
        %v1395 = vld [vmem:[#allocation4 + $0x18] sm:$0x4]
        %v1396 = vld [vmem:[#allocation4 + $0x20] sm:$0x4]
        %v1397 = vld [vmem:[#allocation4 + $0x28] sm:$0x4]
        %v1398 = vld [vmem:[#allocation4 + $0x30] sm:$0x4]
        %v1399 = vld [vmem:[#allocation4 + $0x38] sm:$0x4]
        %v1400 = vunpack.c.l.bf16 %v1392
        %v1401 = vunpack.c.l.bf16 %v1393
        %v1402 = vunpack.c.l.bf16 %v1394
        %v1403 = vunpack.c.l.bf16 %v1395
        %v1404 = vunpack.c.l.bf16 %v1396
        %v1405 = vunpack.c.l.bf16 %v1397
        %v1406 = vunpack.c.l.bf16 %v1398
        %v1407 = vunpack.c.l.bf16 %v1399
        %1408 = vset.pattern.permute.xlu0 38
        %1409 = vperm.xlu0 %1408, %v779
        %v1410 = vpop.permute.xlu0 %1409
        %v1420 = vrot.slane %v1400, 4
        %v1421 = vrot.slane %v1401, 3
        %v1422 = vsel %vm1283, %v1421, %v1420
        %v1423 = vrot.slane %v1402, 2
        %v1424 = vsel %vm1286, %v1423, %v1422
        %v1425 = vrot.slane %v1403, 1
        %v1426 = vsel %vm1289, %v1425, %v1424
        %v1427 = vsel %vm1292, %v1404, %v1426
        %v1428 = vrot.slane %v1405, 7
        %v1429 = vsel %vm1295, %v1428, %v1427
        %v1430 = vrot.slane %v1406, 6
        %v1431 = vsel %vm1298, %v1430, %v1429
        %v1432 = vrot.slane %v1407, 5
        %v1433 = vsel %vm1301, %v1432, %v1431
        %v1435 = vmul.f32 %v1410, %v1433
        %v1436 = vadd.f32 %v1391, %v1435
        %1437 = vset.pattern.permute.xlu0 39
        %1438 = vperm.xlu0 %1437, %v779
        %v1439 = vpop.permute.xlu0 %1438
        %v1441 = vrot.slane %v1400, 5
        %v1442 = vrot.slane %v1401, 4
        %v1443 = vsel %vm1283, %v1442, %v1441
        %v1444 = vrot.slane %v1402, 3
        %v1445 = vsel %vm1286, %v1444, %v1443
        %v1446 = vrot.slane %v1403, 2
        %v1447 = vsel %vm1289, %v1446, %v1445
        %v1448 = vrot.slane %v1404, 1
        %v1449 = vsel %vm1292, %v1448, %v1447
        %v1450 = vsel %vm1295, %v1405, %v1449
        %v1451 = vrot.slane %v1406, 7
        %v1452 = vsel %vm1298, %v1451, %v1450
        %v1453 = vrot.slane %v1407, 6
        %v1454 = vsel %vm1301, %v1453, %v1452
        %v1456 = vmul.f32 %v1439, %v1454
        %v1457 = vadd.f32 %v1436, %v1456
        %v1458 = vld [vmem:[#allocation4] sm:$0x8]
        %v1459 = vld [vmem:[#allocation4 + $0x8] sm:$0x8]
        %v1460 = vld [vmem:[#allocation4 + $0x10] sm:$0x8]
        %v1461 = vld [vmem:[#allocation4 + $0x18] sm:$0x8]
        %v1462 = vld [vmem:[#allocation4 + $0x20] sm:$0x8]
        %v1463 = vld [vmem:[#allocation4 + $0x28] sm:$0x8]
        %v1464 = vld [vmem:[#allocation4 + $0x30] sm:$0x8]
        %v1465 = vld [vmem:[#allocation4 + $0x38] sm:$0x8]
        %v1466 = vunpack.c.l.bf16 %v1458
        %v1467 = vunpack.c.l.bf16 %v1459
        %v1468 = vunpack.c.l.bf16 %v1460
        %v1469 = vunpack.c.l.bf16 %v1461
        %v1470 = vunpack.c.l.bf16 %v1462
        %v1471 = vunpack.c.l.bf16 %v1463
        %v1472 = vunpack.c.l.bf16 %v1464
        %v1473 = vunpack.c.l.bf16 %v1465
        %1474 = vset.pattern.permute.xlu0 40
        %1475 = vperm.xlu0 %1474, %v779
        %v1476 = vpop.permute.xlu0 %1475
        %v1486 = vrot.slane %v1466, 6
        %v1487 = vrot.slane %v1467, 5
        %v1488 = vsel %vm1283, %v1487, %v1486
        %v1489 = vrot.slane %v1468, 4
        %v1490 = vsel %vm1286, %v1489, %v1488
        %v1491 = vrot.slane %v1469, 3
        %v1492 = vsel %vm1289, %v1491, %v1490
        %v1493 = vrot.slane %v1470, 2
        %v1494 = vsel %vm1292, %v1493, %v1492
        %v1495 = vrot.slane %v1471, 1
        %v1496 = vsel %vm1295, %v1495, %v1494
        %v1497 = vsel %vm1298, %v1472, %v1496
        %v1498 = vrot.slane %v1473, 7
        %v1499 = vsel %vm1301, %v1498, %v1497
        %v1501 = vmul.f32 %v1476, %v1499
        %v1502 = vadd.f32 %v1457, %v1501
        %1503 = vset.pattern.permute.xlu0 41
        %1504 = vperm.xlu0 %1503, %v779
        %v1505 = vpop.permute.xlu0 %1504
        %v1507 = vrot.slane %v1466, 7
        %v1508 = vrot.slane %v1467, 6
        %v1509 = vsel %vm1283, %v1508, %v1507
        %v1510 = vrot.slane %v1468, 5
        %v1511 = vsel %vm1286, %v1510, %v1509
        %v1512 = vrot.slane %v1469, 4
        %v1513 = vsel %vm1289, %v1512, %v1511
        %v1514 = vrot.slane %v1470, 3
        %v1515 = vsel %vm1292, %v1514, %v1513
        %v1516 = vrot.slane %v1471, 2
        %v1517 = vsel %vm1295, %v1516, %v1515
        %v1518 = vrot.slane %v1472, 1
        %v1519 = vsel %vm1298, %v1518, %v1517
        %v1520 = vsel %vm1301, %v1473, %v1519
        %v1522 = vmul.f32 %v1505, %v1520
        %v1523 = vadd.f32 %v1502, %v1522
        %v1524 = vld [vmem:[#allocation4 + $0x4] sm:$0x1]
        %v1525 = vld [vmem:[#allocation4 + $0xc] sm:$0x1]
        %v1526 = vld [vmem:[#allocation4 + $0x14] sm:$0x1]
        %v1527 = vld [vmem:[#allocation4 + $0x1c] sm:$0x1]
        %v1528 = vld [vmem:[#allocation4 + $0x24] sm:$0x1]
        %v1529 = vld [vmem:[#allocation4 + $0x2c] sm:$0x1]
        %v1530 = vld [vmem:[#allocation4 + $0x34] sm:$0x1]
        %v1531 = vld [vmem:[#allocation4 + $0x3c] sm:$0x1]
        %v1532 = vunpack.c.l.bf16 %v1524
        %v1533 = vunpack.c.l.bf16 %v1525
        %v1534 = vunpack.c.l.bf16 %v1526
        %v1535 = vunpack.c.l.bf16 %v1527
        %v1536 = vunpack.c.l.bf16 %v1528
        %v1537 = vunpack.c.l.bf16 %v1529
        %v1538 = vunpack.c.l.bf16 %v1530
        %v1539 = vunpack.c.l.bf16 %v1531
        %1540 = vset.pattern.permute.xlu0 42
        %1541 = vperm.xlu0 %1540, %v779
        %v1542 = vpop.permute.xlu0 %1541
        %v1552 = vrot.slane %v1533, 7
        %v1553 = vsel %vm1283, %v1552, %v1532
        %v1554 = vrot.slane %v1534, 6
        %v1555 = vsel %vm1286, %v1554, %v1553
        %v1556 = vrot.slane %v1535, 5
        %v1557 = vsel %vm1289, %v1556, %v1555
        %v1558 = vrot.slane %v1536, 4
        %v1559 = vsel %vm1292, %v1558, %v1557
        %v1560 = vrot.slane %v1537, 3
        %v1561 = vsel %vm1295, %v1560, %v1559
        %v1562 = vrot.slane %v1538, 2
        %v1563 = vsel %vm1298, %v1562, %v1561
        %v1564 = vrot.slane %v1539, 1
        %v1565 = vsel %vm1301, %v1564, %v1563
        %v1567 = vmul.f32 %v1542, %v1565
        %v1568 = vadd.f32 %v1523, %v1567
        %1569 = vset.pattern.permute.xlu0 43
        %1570 = vperm.xlu0 %1569, %v779
        %v1571 = vpop.permute.xlu0 %1570
        %v1573 = vrot.slane %v1532, 1
        %v1574 = vsel %vm1283, %v1533, %v1573
        %v1575 = vrot.slane %v1534, 7
        %v1576 = vsel %vm1286, %v1575, %v1574
        %v1577 = vrot.slane %v1535, 6
        %v1578 = vsel %vm1289, %v1577, %v1576
        %v1579 = vrot.slane %v1536, 5
        %v1580 = vsel %vm1292, %v1579, %v1578
        %v1581 = vrot.slane %v1537, 4
        %v1582 = vsel %vm1295, %v1581, %v1580
        %v1583 = vrot.slane %v1538, 3
        %v1584 = vsel %vm1298, %v1583, %v1582
        %v1585 = vrot.slane %v1539, 2
        %v1586 = vsel %vm1301, %v1585, %v1584
        %v1588 = vmul.f32 %v1571, %v1586
        %v1589 = vadd.f32 %v1568, %v1588
        %v1590 = vld [vmem:[#allocation4 + $0x4] sm:$0x2]
        %v1591 = vld [vmem:[#allocation4 + $0xc] sm:$0x2]
        %v1592 = vld [vmem:[#allocation4 + $0x14] sm:$0x2]
        %v1593 = vld [vmem:[#allocation4 + $0x1c] sm:$0x2]
        %v1594 = vld [vmem:[#allocation4 + $0x24] sm:$0x2]
        %v1595 = vld [vmem:[#allocation4 + $0x2c] sm:$0x2]
        %v1596 = vld [vmem:[#allocation4 + $0x34] sm:$0x2]
        %v1597 = vld [vmem:[#allocation4 + $0x3c] sm:$0x2]
        %v1598 = vunpack.c.l.bf16 %v1590
        %v1599 = vunpack.c.l.bf16 %v1591
        %v1600 = vunpack.c.l.bf16 %v1592
        %v1601 = vunpack.c.l.bf16 %v1593
        %v1602 = vunpack.c.l.bf16 %v1594
        %v1603 = vunpack.c.l.bf16 %v1595
        %v1604 = vunpack.c.l.bf16 %v1596
        %v1605 = vunpack.c.l.bf16 %v1597
        %1606 = vset.pattern.permute.xlu0 44
        %1607 = vperm.xlu0 %1606, %v779
        %v1608 = vpop.permute.xlu0 %1607
        %v1618 = vrot.slane %v1598, 2
        %v1619 = vrot.slane %v1599, 1
        %v1620 = vsel %vm1283, %v1619, %v1618
        %v1621 = vsel %vm1286, %v1600, %v1620
        %v1622 = vrot.slane %v1601, 7
        %v1623 = vsel %vm1289, %v1622, %v1621
        %v1624 = vrot.slane %v1602, 6
        %v1625 = vsel %vm1292, %v1624, %v1623
        %v1626 = vrot.slane %v1603, 5
        %v1627 = vsel %vm1295, %v1626, %v1625
        %v1628 = vrot.slane %v1604, 4
        %v1629 = vsel %vm1298, %v1628, %v1627
        %v1630 = vrot.slane %v1605, 3
        %v1631 = vsel %vm1301, %v1630, %v1629
        %v1633 = vmul.f32 %v1608, %v1631
        %v1634 = vadd.f32 %v1589, %v1633
        %1635 = vset.pattern.permute.xlu0 45
        %1636 = vperm.xlu0 %1635, %v779
        %v1637 = vpop.permute.xlu0 %1636
        %v1639 = vrot.slane %v1598, 3
        %v1640 = vrot.slane %v1599, 2
        %v1641 = vsel %vm1283, %v1640, %v1639
        %v1642 = vrot.slane %v1600, 1
        %v1643 = vsel %vm1286, %v1642, %v1641
        %v1644 = vsel %vm1289, %v1601, %v1643
        %v1645 = vrot.slane %v1602, 7
        %v1646 = vsel %vm1292, %v1645, %v1644
        %v1647 = vrot.slane %v1603, 6
        %v1648 = vsel %vm1295, %v1647, %v1646
        %v1649 = vrot.slane %v1604, 5
        %v1650 = vsel %vm1298, %v1649, %v1648
        %v1651 = vrot.slane %v1605, 4
        %v1652 = vsel %vm1301, %v1651, %v1650
        %v1654 = vmul.f32 %v1637, %v1652
        %v1655 = vadd.f32 %v1634, %v1654
        %v1656 = vld [vmem:[#allocation4 + $0x4] sm:$0x4]
        %v1657 = vld [vmem:[#allocation4 + $0xc] sm:$0x4]
        %v1658 = vld [vmem:[#allocation4 + $0x14] sm:$0x4]
        %v1659 = vld [vmem:[#allocation4 + $0x1c] sm:$0x4]
        %v1660 = vld [vmem:[#allocation4 + $0x24] sm:$0x4]
        %v1661 = vld [vmem:[#allocation4 + $0x2c] sm:$0x4]
        %v1662 = vld [vmem:[#allocation4 + $0x34] sm:$0x4]
        %v1663 = vld [vmem:[#allocation4 + $0x3c] sm:$0x4]
        %v1664 = vunpack.c.l.bf16 %v1656
        %v1665 = vunpack.c.l.bf16 %v1657
        %v1666 = vunpack.c.l.bf16 %v1658
        %v1667 = vunpack.c.l.bf16 %v1659
        %v1668 = vunpack.c.l.bf16 %v1660
        %v1669 = vunpack.c.l.bf16 %v1661
        %v1670 = vunpack.c.l.bf16 %v1662
        %v1671 = vunpack.c.l.bf16 %v1663
        %1672 = vset.pattern.permute.xlu0 46
        %1673 = vperm.xlu0 %1672, %v779
        %v1674 = vpop.permute.xlu0 %1673
        %v1684 = vrot.slane %v1664, 4
        %v1685 = vrot.slane %v1665, 3
        %v1686 = vsel %vm1283, %v1685, %v1684
        %v1687 = vrot.slane %v1666, 2
        %v1688 = vsel %vm1286, %v1687, %v1686
        %v1689 = vrot.slane %v1667, 1
        %v1690 = vsel %vm1289, %v1689, %v1688
        %v1691 = vsel %vm1292, %v1668, %v1690
        %v1692 = vrot.slane %v1669, 7
        %v1693 = vsel %vm1295, %v1692, %v1691
        %v1694 = vrot.slane %v1670, 6
        %v1695 = vsel %vm1298, %v1694, %v1693
        %v1696 = vrot.slane %v1671, 5
        %v1697 = vsel %vm1301, %v1696, %v1695
        %v1699 = vmul.f32 %v1674, %v1697
        %v1700 = vadd.f32 %v1655, %v1699
        %1701 = vset.pattern.permute.xlu0 47
        %1702 = vperm.xlu0 %1701, %v779
        %v1703 = vpop.permute.xlu0 %1702
        %v1705 = vrot.slane %v1664, 5
        %v1706 = vrot.slane %v1665, 4
        %v1707 = vsel %vm1283, %v1706, %v1705
        %v1708 = vrot.slane %v1666, 3
        %v1709 = vsel %vm1286, %v1708, %v1707
        %v1710 = vrot.slane %v1667, 2
        %v1711 = vsel %vm1289, %v1710, %v1709
        %v1712 = vrot.slane %v1668, 1
        %v1713 = vsel %vm1292, %v1712, %v1711
        %v1714 = vsel %vm1295, %v1669, %v1713
        %v1715 = vrot.slane %v1670, 7
        %v1716 = vsel %vm1298, %v1715, %v1714
        %v1717 = vrot.slane %v1671, 6
        %v1718 = vsel %vm1301, %v1717, %v1716
        %v1720 = vmul.f32 %v1703, %v1718
        %v1721 = vadd.f32 %v1700, %v1720
        %v1722 = vld [vmem:[#allocation4 + $0x4] sm:$0x8]
        %v1723 = vld [vmem:[#allocation4 + $0xc] sm:$0x8]
        %v1724 = vld [vmem:[#allocation4 + $0x14] sm:$0x8]
        %v1725 = vld [vmem:[#allocation4 + $0x1c] sm:$0x8]
        %v1726 = vld [vmem:[#allocation4 + $0x24] sm:$0x8]
        %v1727 = vld [vmem:[#allocation4 + $0x2c] sm:$0x8]
        %v1728 = vld [vmem:[#allocation4 + $0x34] sm:$0x8]
        %v1729 = vld [vmem:[#allocation4 + $0x3c] sm:$0x8]
        %v1730 = vunpack.c.l.bf16 %v1722
        %v1731 = vunpack.c.l.bf16 %v1723
        %v1732 = vunpack.c.l.bf16 %v1724
        %v1733 = vunpack.c.l.bf16 %v1725
        %v1734 = vunpack.c.l.bf16 %v1726
        %v1735 = vunpack.c.l.bf16 %v1727
        %v1736 = vunpack.c.l.bf16 %v1728
        %v1737 = vunpack.c.l.bf16 %v1729
        %1738 = vset.pattern.permute.xlu0 48
        %1739 = vperm.xlu0 %1738, %v779
        %v1740 = vpop.permute.xlu0 %1739
        %v1750 = vrot.slane %v1730, 6
        %v1751 = vrot.slane %v1731, 5
        %v1752 = vsel %vm1283, %v1751, %v1750
        %v1753 = vrot.slane %v1732, 4
        %v1754 = vsel %vm1286, %v1753, %v1752
        %v1755 = vrot.slane %v1733, 3
        %v1756 = vsel %vm1289, %v1755, %v1754
        %v1757 = vrot.slane %v1734, 2
        %v1758 = vsel %vm1292, %v1757, %v1756
        %v1759 = vrot.slane %v1735, 1
        %v1760 = vsel %vm1295, %v1759, %v1758
        %v1761 = vsel %vm1298, %v1736, %v1760
        %v1762 = vrot.slane %v1737, 7
        %v1763 = vsel %vm1301, %v1762, %v1761
        %v1765 = vmul.f32 %v1740, %v1763
        %v1766 = vadd.f32 %v1721, %v1765
        %1767 = vset.pattern.permute.xlu0 49
        %1768 = vperm.xlu0 %1767, %v779
        %v1769 = vpop.permute.xlu0 %1768
        %v1771 = vrot.slane %v1730, 7
        %v1772 = vrot.slane %v1731, 6
        %v1773 = vsel %vm1283, %v1772, %v1771
        %v1774 = vrot.slane %v1732, 5
        %v1775 = vsel %vm1286, %v1774, %v1773
        %v1776 = vrot.slane %v1733, 4
        %v1777 = vsel %vm1289, %v1776, %v1775
        %v1778 = vrot.slane %v1734, 3
        %v1779 = vsel %vm1292, %v1778, %v1777
        %v1780 = vrot.slane %v1735, 2
        %v1781 = vsel %vm1295, %v1780, %v1779
        %v1782 = vrot.slane %v1736, 1
        %v1783 = vsel %vm1298, %v1782, %v1781
        %v1784 = vsel %vm1301, %v1737, %v1783
        %v1786 = vmul.f32 %v1769, %v1784
        %v1787 = vadd.f32 %v1766, %v1786
        %v1788 = vld [vmem:[%s10] sm:$0x1]
        %v1790 = vperm.slane %v1788, 0
        %v1792 = vmul.f32 %v861, %v1790
        %v1793 = vadd.f32 %v1787, %v1792
        %v1794 = vsub.f32 0.0, %v779
        %v1795 = vmul.f32 %v1794, 1.442695
        %v1796 = vpow.pop %v1795
        %v1797 = vadd.f32 %v1796, 1.0
        %v1798 = vrcp.pop %v1797
        %v1799 = vmul.f32 %v1797, %v1798
        %v1800 = vsub.f32 1.0, %v1799
        %v1801 = vmul.f32 %v1798, %v1800
        %v1802 = vadd.f32 %v1798, %v1801
        %vm1803 = vweird.f32 %v1797
        %vm1804 = vweird.f32 %v1798
        %vm1805 = vmor %vm1803, %vm1804
        %v1806 = vsel %vm1805, %v1798, %v1802
        %v1807 = vand.u32 2147483647, %v1797
        %vm1808 = vcmp.eq.f32.partialorder %v1807, 8.507059e+37
        %v1809 = vand.u32 %v1797, 2147483648
        %v1810 = vor.u32 1.1754944e-38, %v1809
        %v1811 = vsel %vm1808, %v1810, %v1806
        %v1812 = vmul.f32 1.0, %v1811
        %v1813 = vmul.f32 %v779, %v1812
        %v1814 = vmul.f32 %v1793, %v1813
        %v1815 = vpack.c.bf16 %v1814, %v1814
        %v1816 = vld [vmem:[#allocation16] sm:$0xf]
        %v1817 = vld [vmem:[#allocation16 + $0x4] sm:$0xf]
        %v1818 = vld [vmem:[#allocation16 + $0x8] sm:$0xf]
        %v1819 = vld [vmem:[#allocation16 + $0xc] sm:$0xf]
        %v1824 = vunpack.c.l.b16 %v1816
        %v1825 = vunpack.c.l.b16 %v1817
        %v1826 = vunpack.c.l.b16 %v1818
        %v1827 = vunpack.c.l.b16 %v1819
        %v1828 = vpack.c.b16 %v1825, %v1824
        %v1829 = vpack.c.b16 %v1827, %v1826
        %v1833 = vsel %vm711, %v1815, 0
        %1835 = vmatpush.bf16.msra.mxu0 0
        %1836 = vmatpush.bf16.msra.mxu0 0
        %1837 = vmatpush.bf16.msra.mxu0 0
        %1838 = vmatpush.bf16.msra.mxu0 0
        %1839 = vmatpush.bf16.msra.mxu0 0
        %1840 = vmatpush.bf16.msra.mxu0 0
        %1841 = vmatpush.bf16.msra.mxu0 %v1829
        %1842 = vmatpush.bf16.msra.mxu0 %v1828
        %1843 = vmatmul.bf16.gmra.mxu0 %v1833
        %v1844 = vpop.f32.mrf.mxu0
        %v1845 = vadd.f32 0.0, %v1844
        %v1846 = vpop.f32.mrf.mxu0
        %1847 = vdwg.mxu0
        %v1848 = vadd.f32 %v708, %v1845
        %v1849 = vld [vmem:[%s12] sm:$0x1]
        %v1850 = vld [vmem:[%s13] sm:$0x1]
        %v1851 = vsel %vm711, %v1848, 0.0
        %1852 = vadd.xlane.f32.xlu0 %v1851
        %v1853 = vpop.xlane.xlu0 %1852
        %v1854 = vmul.f32 %v1853, %v721
        %v1855 = vsub.f32 %v1848, %v1854
        %v1856 = vmul.f32 %v1855, %v1855
        %v1857 = vsel %vm711, %v1856, 0.0
        %1858 = vadd.xlane.f32.xlu0 %v1857
        %v1859 = vpop.xlane.xlu0 %1858
        %v1860 = vmul.f32 %v1859, %v721
        %v1861 = vadd.f32 %v1860, 1e-05
        %v1862 = vrsqrt.pop %v1861
        %v1863 = vmul.f32 %v1862, %v1861
        %v1864 = vmul.f32 %v1863, %v1862
        %v1865 = vmul.f32 0.5, %v1864
        %v1866 = vsub.f32 1.5, %v1865
        %v1867 = vmul.f32 %v1862, %v1866
        %vm1868 = vweird.f32 %v1861
        %vm1869 = vweird.f32 %v1862
        %vm1870 = vmor %vm1868, %vm1869
        %v1871 = vsel %vm1870, %v1862, %v1867
        %v1872 = vmul.f32 %v1855, %v1871
        %v1874 = vperm.slane %v1849, 0
        %v1876 = vmul.f32 %v1872, %v1874
        %v1878 = vperm.slane %v1850, 0
        %v1880 = vadd.f32 %v1876, %v1878
        %v1881 = vpack.c.bf16 %v1880, %v1880
        %v1882 = vld [vmem:[#allocation18] sm:$0xf]
        %v1883 = vld [vmem:[#allocation18 + $0x4] sm:$0xf]
        %v1884 = vld [vmem:[#allocation18 + $0x8] sm:$0xf]
        %v1885 = vld [vmem:[#allocation18 + $0xc] sm:$0xf]
        %v1886 = vld [vmem:[%s15] sm:$0x1]
        %v1888 = vperm.slane %v1886, 0
        %v1894 = vunpack.c.l.b16 %v1882
        %v1895 = vunpack.c.l.b16 %v1883
        %v1896 = vunpack.c.l.b16 %v1884
        %v1897 = vunpack.c.l.b16 %v1885
        %v1898 = vpack.c.b16 %v1895, %v1894
        %v1899 = vpack.c.b16 %v1897, %v1896
        %v1903 = vsel %vm711, %v1881, 0
        %1905 = vmatpush.bf16.msra.mxu0 0
        %1906 = vmatpush.bf16.msra.mxu0 0
        %1907 = vmatpush.bf16.msra.mxu0 0
        %1908 = vmatpush.bf16.msra.mxu0 0
        %1909 = vmatpush.bf16.msra.mxu0 0
        %1910 = vmatpush.bf16.msra.mxu0 0
        %1911 = vmatpush.bf16.msra.mxu0 %v1899
        %1912 = vmatpush.bf16.msra.mxu0 %v1898
        %1913 = vmatmul.bf16.gmra.mxu0 %v1903
        %v1914 = vpop.f32.mrf.mxu0
        %v1915 = vadd.f32 %v1888, %v1914
        %v1916 = vpop.f32.mrf.mxu0
        %1917 = vdwg.mxu0
        %v1918 = vmul.f32 %v1915, 0.5
        %v1919 = vmul.f32 %v1915, 0.70710677
        %vm1920 = vcmp.ge.f32.partialorder %v1919, 0.0
        %v1921 = vsel %vm1920, 1.0, -1.0
        %v1922 = vand.u32 2147483647, %v1919
        %v1923 = vmul.f32 %v1922, 0.3275911
        %v1924 = vadd.f32 %v1923, 1.0
        %v1925 = vrcp.pop %v1924
        %v1926 = vmul.f32 %v1924, %v1925
        %v1927 = vsub.f32 1.0, %v1926
        %v1928 = vmul.f32 %v1925, %v1927
        %v1929 = vadd.f32 %v1925, %v1928
        %vm1930 = vweird.f32 %v1924
        %vm1931 = vweird.f32 %v1925
        %vm1932 = vmor %vm1930, %vm1931
        %v1933 = vsel %vm1932, %v1925, %v1929
        %v1934 = vand.u32 2147483647, %v1924
        %vm1935 = vcmp.eq.f32.partialorder %v1934, 8.507059e+37
        %v1936 = vand.u32 %v1924, 2147483648
        %v1937 = vor.u32 1.1754944e-38, %v1936
        %v1938 = vsel %vm1935, %v1937, %v1933
        %v1939 = vmul.f32 1.0, %v1938
        %v1940 = vmul.f32 %v1939, 1.0614054
        %v1941 = vadd.f32 %v1940, -1.4531521
        %v1942 = vmul.f32 %v1941, %v1939
        %v1943 = vadd.f32 %v1942, 1.4214138
        %v1944 = vmul.f32 %v1943, %v1939
        %v1945 = vadd.f32 %v1944, -0.28449672
        %v1946 = vmul.f32 %v1945, %v1939
        %v1947 = vadd.f32 %v1946, 0.2548296
        %v1948 = vmul.f32 %v1947, %v1939
        %v1949 = vsub.f32 0.0, %v1922
        %v1950 = vmul.f32 %v1949, %v1922
        %v1951 = vmul.f32 %v1950, 1.442695
        %v1952 = vpow.pop %v1951
        %v1953 = vmul.f32 %v1948, %v1952
        %v1954 = vsub.f32 1.0, %v1953
        %v1955 = vmul.f32 %v1921, %v1954
        %v1956 = vadd.f32 %v1955, 1.0
        %v1957 = vmul.f32 %v1918, %v1956
        %v1958 = vpack.c.bf16 %v1957, %v1957
        %v1959 = vld [vmem:[%s16] sm:$0xf]
        %v1960 = vld [vmem:[%s16 + $0x4] sm:$0xf]
        %v1961 = vld [vmem:[%s16 + $0x8] sm:$0xf]
        %v1962 = vld [vmem:[%s16 + $0xc] sm:$0xf]
        %v1963 = vld [vmem:[%s16 + $0x10] sm:$0xf]
        %v1964 = vld [vmem:[%s16 + $0x14] sm:$0xf]
        %v1965 = vld [vmem:[%s16 + $0x18] sm:$0xf]
        %v1966 = vld [vmem:[%s16 + $0x1c] sm:$0xf]
        %v1967 = vld [vmem:[%s16 + $0x20] sm:$0xf]
        %v1968 = vld [vmem:[%s16 + $0x24] sm:$0xf]
        %v1969 = vld [vmem:[%s16 + $0x28] sm:$0xf]
        %v1970 = vld [vmem:[%s16 + $0x2c] sm:$0xf]
        %v1971 = vld [vmem:[%s16 + $0x30] sm:$0xf]
        %v1972 = vld [vmem:[%s16 + $0x34] sm:$0xf]
        %v1973 = vld [vmem:[%s16 + $0x38] sm:$0xf]
        %v1974 = vld [vmem:[%s16 + $0x3c] sm:$0xf]
        %v1975 = vld [vmem:[%s17] sm:$0x1]
        %v1977 = vperm.slane %v1975, 0
        %v1995 = vunpack.c.l.b16 %v1959
        %v1996 = vunpack.c.l.b16 %v1960
        %v1997 = vunpack.c.l.b16 %v1961
        %v1998 = vunpack.c.l.b16 %v1962
        %v1999 = vunpack.c.l.b16 %v1963
        %v2000 = vunpack.c.l.b16 %v1964
        %v2001 = vunpack.c.l.b16 %v1965
        %v2002 = vunpack.c.l.b16 %v1966
        %v2003 = vunpack.c.l.b16 %v1967
        %v2004 = vunpack.c.l.b16 %v1968
        %v2005 = vunpack.c.l.b16 %v1969
        %v2006 = vunpack.c.l.b16 %v1970
        %v2007 = vunpack.c.l.b16 %v1971
        %v2008 = vunpack.c.l.b16 %v1972
        %v2009 = vunpack.c.l.b16 %v1973
        %v2010 = vunpack.c.l.b16 %v1974
        %v2011 = vpack.c.b16 %v1996, %v1995
        %v2012 = vpack.c.b16 %v1998, %v1997
        %v2013 = vpack.c.b16 %v2000, %v1999
        %v2014 = vpack.c.b16 %v2002, %v2001
        %v2015 = vpack.c.b16 %v2004, %v2003
        %v2016 = vpack.c.b16 %v2006, %v2005
        %v2017 = vpack.c.b16 %v2008, %v2007
        %v2018 = vpack.c.b16 %v2010, %v2009
        %2027 = vmatpush.bf16.msra.mxu0 %v2018
        %2028 = vmatpush.bf16.msra.mxu0 %v2017
        %2029 = vmatpush.bf16.msra.mxu0 %v2016
        %2030 = vmatpush.bf16.msra.mxu0 %v2015
        %2031 = vmatpush.bf16.msra.mxu0 %v2014
        %2032 = vmatpush.bf16.msra.mxu0 %v2013
        %2033 = vmatpush.bf16.msra.mxu0 %v2012
        %2034 = vmatpush.bf16.msra.mxu0 %v2011
        %2035 = vmatmul.bf16.gmra.mxu0 %v1958
        %v2036 = vpop.f32.mrf.mxu0
        %v2037 = vadd.f32 %v1977, %v2036
        %v2038 = vpop.f32.mrf.mxu0
        %2039 = vdwg.mxu0
        %v2040 = vadd.f32 %v1848, %v2037
        %2041 = vst.msk [vmem:[%s698] sm:$0xff] %vm711, %v2040
        %s2042 = sand.u32 %s443, 1
        %s2043 = scalar_lea.sflag [#allocation9], %s2042
        %s2044 = sand.u32 %s443, 1
        %s2045 = smul.addr %s2044, 8
        %s2046 = scalar_lea.vmem [#allocation19], %s2045
        // Predicated region
        $region129: #{tpu_custom_call.1} parent=91 // pred_check
          %p2047 = pneg %p453
        $region130: #{tpu_custom_call.1} parent=91 // pred_check_branch
          %2049 = sbr.rel (%p2047) target = $region132
        $region131: #{tpu_custom_call.1} parent=91 // pred_region
          %2051 = vsyncadd %s2043, 0
          %s2052 = smul.addr %s40, 2
          %s2053 = sadd.s32 %s41, %s2052
          %s2054 = smul.addr %s2053, 8
          %s2055 = scalar_lea.hbm %s18, %s2054
          %s2057 = sshll.u32 %s2046, 4
          %s2058 = int_to_ptr.vmem [resolvable:$true] %s2057
          %s2059 = sshll.u32 %s2055, 4
          %s2060 = int_to_ptr.hbm [resolvable:$true] %s2059
          %2062 = dma.vmem_to_hbm [thread:$0]  %s2058, 128, %s2060, %s2043
        $region132: #{tpu_custom_call.1} parent=91 // pred_fallthru
          _
      $region92: #{tpu_custom_call.1} parent=5 // pred_fallthru
        _
      %p2063 = scmp.le.s32.totalorder 2, %s31
      // Predicated region
      $region133: #{tpu_custom_call.1} parent=5 // pred_check
        %p2064 = pneg %p2063
      $region134: #{tpu_custom_call.1} parent=5 // pred_check_branch
        %2066 = sbr.rel (%p2064) target = $region136
      $region135: #{tpu_custom_call.1} parent=5 // pred_region
        %s2067 = ssub.s32 %s31, 2
        // Predicated region
        $region137: #{tpu_custom_call.1} parent=135 // pred_check
          %p2068 = pneg %p459
        $region138: #{tpu_custom_call.1} parent=135 // pred_check_branch
          %2070 = sbr.rel (%p2068) target = $region140
        $region139: #{tpu_custom_call.1} parent=135 // pred_region
          %s2071 = sand.u32 %s444, 1
          %s2072 = scalar_lea.sflag [#allocation9], %s2071
          %s2073 = sand.u32 %s444, 1
          %s2074 = smul.addr %s2073, 8
          %s2075 = scalar_lea.vmem [#allocation19], %s2074
          %2077 = dma.done %s2072, 128
        $region140: #{tpu_custom_call.1} parent=135 // pred_fallthru
          _
      $region136: #{tpu_custom_call.1} parent=5 // pred_fallthru
        _
    $region6: #{tpu_custom_call.1} parent=1 // loop_footer
      %s35 = sadd.s32 1, %s31
    $region7: #{tpu_custom_call.1} parent=1 // loop_footer_branch
      %30 = sbr.rel target = $region3
    $region8: #{tpu_custom_call.1} parent=1 // loop_exit
      _
    %2078 = vsyncpa [#allocation8], 1
    %s2079 = scalar_lea.sflag [#allocation8], 1
    %2080 = vsyncpa %s2079, 1
    %2081 = vsyncpa [#allocation11], 1
    %2082 = vsyncpa [#allocation14], 1
    %2083 = vsyncpa [#allocation17], 1
    %2084 = vsyncpa [#allocation9], 1
    %s2085 = scalar_lea.sflag [#allocation9], 1
    %2086 = vsyncpa %s2085, 1

</llo_original>
